<compile_context>
chip_gen: v7x
topology: tpu7x:2x2x1
jax: 0.10.0
libtpu: 0.0.40
codegen_flags: <defaults>
</compile_context>

<pallas_src>
import functools

import jax
import jax.numpy as jnp
from jax import lax
from jax.experimental import pallas as pl
from jax.experimental.pallas import tpu as pltpu

BN_EPS = 1e-5


@functools.lru_cache(maxsize=None)
def _vmem_limit_bytes():
    """Generation-aware scoped-VMEM cap (~3/4 of physical, <= 100 MiB)."""
    cap = 64 * 1024 * 1024                       # conservative fallback (v7x-sized)
    try:
        cap = int(pltpu.get_tpu_info().vmem_capacity_bytes)
    except Exception:
        pass
    return min((cap * 3) // 4, 100 * 1024 * 1024)


def _mosaic(*dims):
    return pltpu.CompilerParams(dimension_semantics=dims,
                                vmem_limit_bytes=_vmem_limit_bytes())


def _tile_targets():
    big = _vmem_limit_bytes() >= 80 * 1024 * 1024      # v5e/v6e (128 MiB VMEM)
    return dict(time=512 if big else 256,              # K1-K3 time tiles
                rows=2048 if big else 1024,            # K4 row tiles
                gru=256 if big else 128)               # K5 N tiles


def _pick_tile(n, target, align=8):
    """Largest multiple of `align` <= target that divides n exactly, else n."""
    if n <= target:
        return n
    tile = (target // align) * align
    while tile >= align:
        if n % tile == 0:
            return tile
        tile -= align
    return n


# ---------------------------------------------------------------------------
# K1: fused 16-way conv bank (in-kernel im2col) + bias + ReLU + BN-stat accum
# ---------------------------------------------------------------------------
def _bank_kernel(xp_ref, w_ref, b_ref, z_ref, s_ref, q_ref, *, ntaps, tt):
    i = pl.program_id(1)

    @pl.when(i == 0)
    def _():
        s_ref[...] = jnp.zeros_like(s_ref)
        q_ref[...] = jnp.zeros_like(q_ref)

    t0 = pl.multiple_of(i * tt, tt)
    win = xp_ref[0, pl.ds(t0, tt + ntaps - 1), :]           # (tt+K-1, E) halo window
    u = jnp.concatenate([win[j:j + tt, :] for j in range(ntaps)], axis=-1)
    y = jnp.dot(u.astype(jnp.bfloat16), w_ref[...],
                preferred_element_type=jnp.float32) + b_ref[...]
    y = jnp.maximum(y, 0.0)                                 # conv + bias + ReLU (pre-BN)
    z_ref[0] = y.astype(z_ref.dtype)
    s_ref[0] += jnp.sum(y, axis=0, keepdims=True)
    q_ref[0] += jnp.sum(y * y, axis=0, keepdims=True)


def conv_bank(x_pad, w_big, b_big, *, ntaps, tt, T):
    B, Tp, E = x_pad.shape
    kcin, KC = w_big.shape
    kern = functools.partial(_bank_kernel, ntaps=ntaps, tt=tt)
    flops = 2 * B * T * kcin * KC
    bytes_acc = x_pad.size * 4 + w_big.size * 2 + B * T * KC * 2 + 2 * B * KC * 4
    return pl.pallas_call(
        kern,
        out_shape=(jax.ShapeDtypeStruct((B, T, KC), jnp.bfloat16),
                   jax.ShapeDtypeStruct((B, 1, KC), jnp.float32),
                   jax.ShapeDtypeStruct((B, 1, KC), jnp.float32)),
        grid=(B, T // tt),
        in_specs=[pl.BlockSpec((1, Tp, E), lambda b, t: (b, 0, 0)),   # resident per batch
                  pl.BlockSpec((kcin, KC), lambda b, t: (0, 0)),
                  pl.BlockSpec((1, KC), lambda b, t: (0, 0))],
        out_specs=(pl.BlockSpec((1, tt, KC), lambda b, t: (b, t, 0)),
                   pl.BlockSpec((1, 1, KC), lambda b, t: (b, 0, 0)),
                   pl.BlockSpec((1, 1, KC), lambda b, t: (b, 0, 0))),
        compiler_params=_mosaic("parallel", "arbitrary"),
        cost_estimate=pl.CostEstimate(flops=int(flops), transcendentals=0,
                                      bytes_accessed=int(bytes_acc)),
    )(x_pad, w_big, b_big)


# ---------------------------------------------------------------------------
# K2/K3: BN affine + (maxpool | extra ReLU) + fused 3-tap conv + bias + ReLU
#        + BN-stat accumulation, time-tiled with a 3-row halo side input.
# ---------------------------------------------------------------------------
def _conv3_kernel(x_ref, hl_ref, sc_ref, sh_ref, w_ref, b_ref,
                  y_ref, s_ref, q_ref, *, pool, tt):
    i = pl.program_id(1)
    nt = pl.num_programs(1)

    @pl.when(i == 0)
    def _():
        s_ref[...] = jnp.zeros_like(s_ref)
        q_ref[...] = jnp.zeros_like(q_ref)

    first = i == 0
    last = i == nt - 1
    sc = sc_ref[...]
    sh = sh_ref[...]
    xt = x_ref[0].astype(jnp.float32) * sc + sh              # BN affine, tile rows
    hl = hl_ref[0, 0].astype(jnp.float32) * sc + sh          # rows [t0-2, t0-1, t0+tt]

    if pool:
        # MaxPool1d(kernel=2, stride=1, pad=1)[:, :-1]: pooled[t] = max(z[t], z[t-1])
        neg = jnp.full((1, xt.shape[1]), -1e30, jnp.float32)
        l2 = jnp.where(first, neg, hl[0:1])
        l1 = jnp.where(first, neg, hl[1:2])
        cur = jnp.concatenate([l1, xt, hl[2:3]], axis=0)      # z[t0-1 .. t0+tt]
        prev = jnp.concatenate([l2, l1, xt], axis=0)          # z[t0-2 .. t0+tt-1]
        ext = jnp.maximum(cur, prev)                          # pooled[t0-1 .. t0+tt]
    else:
        ext = jnp.concatenate([hl[1:2], xt, hl[2:3]], axis=0)
        ext = jnp.maximum(ext, 0.0)                           # extra F.relu before proj2

    C = b_ref.shape[-1]
    # one fused (tt+2, CIN) x (CIN, 3C) matmul; recombine shifted narrow outputs
    Y = jnp.dot(ext.astype(jnp.bfloat16), w_ref[...],
                preferred_element_type=jnp.float32)
    zrow = jnp.zeros((1, 3 * C), jnp.float32)
    top = jnp.where(first, zrow, Y[0:1])                      # conv zero-pad at t = -1
    bot = jnp.where(last, zrow, Y[tt + 1:tt + 2])             # conv zero-pad at t = T
    Yf = jnp.concatenate([top, Y[1:tt + 1], bot], axis=0)
    acc = (Yf[0:tt, 0:C] + Yf[1:tt + 1, C:2 * C] + Yf[2:tt + 2, 2 * C:3 * C]
           + b_ref[...])
    y = jnp.maximum(acc, 0.0)                                 # conv + bias + ReLU (pre-BN)
    y_ref[0] = y.astype(y_ref.dtype)
    s_ref[0] += jnp.sum(y, axis=0, keepdims=True)
    q_ref[0] += jnp.sum(y * y, axis=0, keepdims=True)


def conv3_stage(xin, halo, sc, sh, w_cat, bias, *, pool, tt, out_dtype):
    B, T, CIN = xin.shape
    C = bias.shape[-1]
    n_t = T // tt
    kern = functools.partial(_conv3_kernel, pool=pool, tt=tt)
    flops = 2 * B * (T + 2 * n_t) * CIN * 3 * C
    bytes_acc = (xin.size * xin.dtype.itemsize + halo.size * halo.dtype.itemsize
                 + w_cat.size * 2 + B * T * C * jnp.dtype(out_dtype).itemsize)
    return pl.pallas_call(
        kern,
        out_shape=(jax.ShapeDtypeStruct((B, T, C), out_dtype),
                   jax.ShapeDtypeStruct((B, 1, C), jnp.float32),
                   jax.ShapeDtypeStruct((B, 1, C), jnp.float32)),
        grid=(B, n_t),
        in_specs=[pl.BlockSpec((1, tt, CIN), lambda b, i: (b, i, 0)),
                  pl.BlockSpec((1, 1, 3, CIN), lambda b, i: (b, i, 0, 0)),
                  pl.BlockSpec((1, CIN), lambda b, i: (0, 0)),
                  pl.BlockSpec((1, CIN), lambda b, i: (0, 0)),
                  pl.BlockSpec((CIN, 3 * C), lambda b, i: (0, 0)),
                  pl.BlockSpec((1, C), lambda b, i: (0, 0))],
        out_specs=(pl.BlockSpec((1, tt, C), lambda b, i: (b, i, 0)),
                   pl.BlockSpec((1, 1, C), lambda b, i: (b, 0, 0)),
                   pl.BlockSpec((1, 1, C), lambda b, i: (b, 0, 0))),
        compiler_params=_mosaic("parallel", "arbitrary"),
        cost_estimate=pl.CostEstimate(flops=int(flops), transcendentals=0,
                                      bytes_accessed=int(bytes_acc)),
    )(xin, halo, sc, sh, w_cat, bias)


# ---------------------------------------------------------------------------
# K4: proj2-BN + residual + before_highway + 4 fused-W Highway layers
#     + GRU input projection (Wih_fwd || Wih_bwd) hoisted out of the scan
# ---------------------------------------------------------------------------
def _highway_gi_kernel(p2_ref, x_ref, sc_ref, sh_ref, wbh_ref, bbh_ref,
                       whw_ref, bhw_ref, wih_ref, bih_ref, gi_ref,
                       *, use_bh, n_layers):
    H = whw_ref.shape[1]
    h = p2_ref[...] * sc_ref[...] + sh_ref[...] + x_ref[...]      # proj2 BN + residual
    if use_bh:
        h = jnp.dot(h.astype(jnp.bfloat16), wbh_ref[...],
                    preferred_element_type=jnp.float32) + bbh_ref[...]
    for i in range(n_layers):                                     # 4 Highway layers
        hz = jnp.dot(h.astype(jnp.bfloat16), whw_ref[i],
                     preferred_element_type=jnp.float32) + bhw_ref[i]
        hh = jnp.maximum(hz[:, :H], 0.0)
        tg = jax.nn.sigmoid(hz[:, H:])
        h = hh * tg + h * (1.0 - tg)
    gi = jnp.dot(h.astype(jnp.bfloat16), wih_ref[...],            # gi = h @ [Wih_f|Wih_b]
                 preferred_element_type=jnp.float32) + bih_ref[...]
    gi_ref[...] = gi.astype(gi_ref.dtype)


def highway_gi(p2_flat, x_flat, sc2, sh2, wbh, bbh, whw, bhw, wih, bih,
               use_bh, *, rt):
    R, E = p2_flat.shape
    half = whw.shape[1]
    H2 = whw.shape[2]
    GIW = wih.shape[1]
    n_r = R // rt
    kern = functools.partial(_highway_gi_kernel, use_bh=use_bh,
                             n_layers=int(whw.shape[0]))
    full2 = lambda r: (0, 0)
    full3 = lambda r: (0, 0, 0)
    return pl.pallas_call(
        kern,
        out_shape=jax.ShapeDtypeStruct((R, GIW), jnp.bfloat16),
        grid=(n_r,),
        in_specs=[pl.BlockSpec((rt, E), lambda r: (r, 0)),
                  pl.BlockSpec((rt, E), lambda r: (r, 0)),
                  pl.BlockSpec((1, E), full2),
                  pl.BlockSpec((1, E), full2),
                  pl.BlockSpec((E, half), full2),
                  pl.BlockSpec((1, half), full2),
                  pl.BlockSpec((whw.shape[0], half, H2), full3),
                  pl.BlockSpec((whw.shape[0], 1, H2), full3),
                  pl.BlockSpec((half, GIW), full2),
                  pl.BlockSpec((1, GIW), full2)],
        out_specs=pl.BlockSpec((rt, GIW), lambda r: (r, 0)),
        compiler_params=_mosaic("parallel"),
    )(p2_flat, x_flat, sc2, sh2, wbh, bbh, whw, bhw, wih, bih)


# ---------------------------------------------------------------------------
# K5: fused bidirectional GRU recurrence (gate order [r, z, n], h0 = 0).
#     The reference feeds a batch_first (B, T, H) tensor to a seq-first nn.GRU,
#     so the scan runs over axis 0 (batch) and T acts as the GRU batch — kept.
#     Both directions share one block-diagonal Whh matmul per step; gridded
#     over independent N (=T) tiles; single fused (L, N, 2H) output.
# ---------------------------------------------------------------------------
def _bigru_kernel(gi_ref, whh_ref, bhh_ref, o_ref):
    L = gi_ref.shape[0]
    N = gi_ref.shape[1]
    H = whh_ref.shape[0] // 2

    def cell(gi3, gh3, h_prev):
        r = jax.nn.sigmoid(gi3[:, :H] + gh3[:, :H])
        z = jax.nn.sigmoid(gi3[:, H:2 * H] + gh3[:, H:2 * H])
        n = jnp.tanh(gi3[:, 2 * H:] + r * gh3[:, 2 * H:])
        return (1.0 - z) * n + z * h_prev

    def body(t, h):
        # one block-diagonal matmul covers both directions: gh = [h_f|h_b] @ Whh_bd
        gh = jnp.dot(h.astype(jnp.bfloat16), whh_ref[...],
                     preferred_element_type=jnp.float32) + bhh_ref[...]
        g_f = gi_ref[t].astype(jnp.float32)                   # (N, 6H): [fwd | bwd]
        g_b = gi_ref[L - 1 - t].astype(jnp.float32)
        h_f = cell(g_f[:, :3 * H], gh[:, :3 * H], h[:, :H])
        h_b = cell(g_b[:, 3 * H:], gh[:, 3 * H:], h[:, H:])
        o_ref[t, :, 0:H] = h_f
        o_ref[L - 1 - t, :, H:2 * H] = h_b
        return jnp.concatenate([h_f, h_b], axis=1)

    h0 = jnp.zeros((N, 2 * H), jnp.float32)
    lax.fori_loop(0, L, body, h0)


def bigru(gi, whh_bd, bhh_cat, *, tn):
    L, N, G = gi.shape
    H = whh_bd.shape[0] // 2
    flops = 2 * L * N * (2 * H) * (6 * H)
    bytes_acc = gi.size * gi.dtype.itemsize + L * N * 2 * H * 4 + whh_bd.size * 2
    return pl.pallas_call(
        _bigru_kernel,
        out_shape=jax.ShapeDtypeStruct((L, N, 2 * H), jnp.float32),
        grid=(N // tn,),
        in_specs=[pl.BlockSpec((L, tn, G), lambda n: (0, n, 0)),
                  pl.BlockSpec((2 * H, 6 * H), lambda n: (0, 0)),
                  pl.BlockSpec((1, 6 * H), lambda n: (0, 0))],
        out_specs=pl.BlockSpec((L, tn, 2 * H), lambda n: (0, n, 0)),
        compiler_params=_mosaic("parallel"),
        cost_estimate=pl.CostEstimate(flops=int(flops),
                                      transcendentals=int(3 * L * N * 2 * H),
                                      bytes_accessed=int(bytes_acc)),
    )(gi, whh_bd, bhh_cat)


# ---------------------------------------------------------------------------
# BatchNorm batch statistics -> fused scale/shift (training-mode, biased var)
# ---------------------------------------------------------------------------
def _bn_affine(s, q, count, gamma, beta):
    mean = jnp.sum(s, axis=0) / count
    var = jnp.maximum(jnp.sum(q, axis=0) / count - mean * mean, 0.0)
    scale = gamma * lax.rsqrt(var + BN_EPS)
    shift = beta - mean * scale
    return scale, shift


# ---------------------------------------------------------------------------
# Parameter init (deterministic, synthetic) + fusion into kernel-ready layout
# ---------------------------------------------------------------------------
def init_encoder_params(key, input_channel, K=16, depth=256, conv_channel=128):
    half = depth // 2
    keys = iter(jax.random.split(key, 256))

    def nrm(shape, scale=0.05):
        return scale * jax.random.normal(next(keys), shape, dtype=jnp.float32)

    p = {'bank': []}
    for k in range(1, K + 1):
        p['bank'].append(dict(
            w=nrm((k, input_channel, conv_channel)),      # (tap, Cin, Cout)
            b=nrm((1, conv_channel)),
            g=1.0 + nrm((1, conv_channel)),
            beta=nrm((1, conv_channel)),
        ))
    p['proj1'] = dict(w=nrm((3, K * conv_channel, conv_channel)),
                      b=nrm((1, conv_channel)),
                      g=1.0 + nrm((1, conv_channel)),
                      beta=nrm((1, conv_channel)))
    p['proj2'] = dict(w=nrm((3, conv_channel, input_channel)),
                      b=nrm((1, input_channel)),
                      g=1.0 + nrm((1, input_channel)),
                      beta=nrm((1, input_channel)))
    p['before_highway'] = dict(w=nrm((input_channel, half)), b=nrm((1, half)))
    p['highway'] = [dict(w1=nrm((half, half)), b1=nrm((1, half)),
                         w2=nrm((half, half)),
                         b2=jnp.full((1, half), -1.0, jnp.float32))  # nn.init.constant_(-1.0)
                    for _ in range(4)]

    def gru_params():
        return dict(wih=nrm((half, 3 * half)), whh=nrm((half, 3 * half)),
                    bih=nrm((1, 3 * half)), bhh=nrm((1, 3 * half)))

    p['gru_fwd'] = gru_params()
    p['gru_bwd'] = gru_params()
    return p


def fuse_encoder_params(p, input_channel):
    """Build the stacked / zero-masked bf16 weights the fused kernels consume."""
    K = len(p['bank'])
    cin = input_channel
    conv_ch = p['bank'][0]['w'].shape[2]
    half = p['before_highway']['w'].shape[1]
    center = (K - 1) // 2          # left pad of the widest ('same') kernel
    w_bank = jnp.zeros((K * cin, K * conv_ch), jnp.float32)
    for kidx in range(K):
        k = kidx + 1
        lpad = (k - 1) // 2        # PyTorch 'same': left=(k-1)//2, extra pad right
        wk = p['bank'][kidx]['w']
        for tap in range(k):
            j = tap + center - lpad
            w_bank = w_bank.at[j * cin:(j + 1) * cin,
                               kidx * conv_ch:(kidx + 1) * conv_ch].set(wk[tap])
    cat = lambda key: jnp.concatenate([p['bank'][i][key] for i in range(K)], axis=1)

    def taps_cat(w3):              # (3, CIN, C) -> (CIN, 3C) [w0 | w1 | w2], bf16
        return jnp.concatenate([w3[0], w3[1], w3[2]], axis=-1).astype(jnp.bfloat16)

    whh_bd = jnp.zeros((2 * half, 6 * half), jnp.float32)
    whh_bd = whh_bd.at[:half, :3 * half].set(p['gru_fwd']['whh'])
    whh_bd = whh_bd.at[half:, 3 * half:].set(p['gru_bwd']['whh'])

    return dict(
        w_bank=w_bank.astype(jnp.bfloat16), b_bank=cat('b'),
        g_bank=cat('g'), beta_bank=cat('beta'),
        w_p1=taps_cat(p['proj1']['w']), b_p1=p['proj1']['b'],
        g_p1=p['proj1']['g'], beta_p1=p['proj1']['beta'],
        w_p2=taps_cat(p['proj2']['w']), b_p2=p['proj2']['b'],
        g_p2=p['proj2']['g'], beta_p2=p['proj2']['beta'],
        w_bh=p['before_highway']['w'].astype(jnp.bfloat16),
        b_bh=p['before_highway']['b'],
        w_hw=jnp.stack([jnp.concatenate([l['w1'], l['w2']], axis=1)
                        for l in p['highway']]).astype(jnp.bfloat16),   # (4, half, 2*half)
        b_hw=jnp.stack([jnp.concatenate([l['b1'], l['b2']], axis=1)
                        for l in p['highway']]),                        # (4, 1, 2*half)
        w_ih=jnp.concatenate([p['gru_fwd']['wih'], p['gru_bwd']['wih']],
                             axis=1).astype(jnp.bfloat16),
        b_ih=jnp.concatenate([p['gru_fwd']['bih'], p['gru_bwd']['bih']], axis=1),
        whh_bd=whh_bd.astype(jnp.bfloat16),                             # block-diag
        bhh_cat=jnp.concatenate([p['gru_fwd']['bhh'], p['gru_bwd']['bhh']], axis=1),
    )


# ---------------------------------------------------------------------------
# Full forward pass
# ---------------------------------------------------------------------------
def encoder_forward(fp, x, input_lengths=None):
    del input_lengths                         # accepted but unused, as in the reference
    B, T, E = x.shape
    ntaps = fp['w_bank'].shape[0] // E        # == K (kernel sizes 1..K)
    left = (ntaps - 1) // 2
    right = ntaps - 1 - left
    tgt = _tile_targets()
    tt = _pick_tile(T, tgt['time'])
    n_t = T // tt

    # K1: conv bank (im2col built in-kernel from the padded input; no HBM blowup)
    x_pad = jnp.pad(x, ((0, 0), (left, right), (0, 0)))
    z, s_b, q_b = conv_bank(x_pad, fp['w_bank'], fp['b_bank'], ntaps=ntaps, tt=tt, T=T)
    sc_b, sh_b = _bn_affine(s_b, q_b, float(B * T), fp['g_bank'], fp['beta_bank'])

    # per-tile halo rows [t0-2, t0-1, t0+tt] for the maxpool / 3-tap convs
    starts = jnp.arange(n_t, dtype=jnp.int32) * tt
    hidx = jnp.clip(jnp.stack([starts - 2, starts - 1, starts + tt], axis=1), 0, T - 1)

    # K2: bank BN + maxpool + proj1 conv/ReLU (+ proj1 stats)
    z_halo = jnp.take(z, hidx, axis=1)
    p1, s1, q1 = conv3_stage(z, z_halo, sc_b, sh_b, fp['w_p1'], fp['b_p1'],
                             pool=True, tt=tt, out_dtype=jnp.bfloat16)
    sc1, sh1 = _bn_affine(s1, q1, float(B * T), fp['g_p1'], fp['beta_p1'])

    # K3: proj1 BN + extra F.relu + proj2 conv/ReLU (+ proj2 stats)
    p1_halo = jnp.take(p1, hidx, axis=1)
    p2, s2, q2 = conv3_stage(p1, p1_halo, sc1, sh1, fp['w_p2'], fp['b_p2'],
                             pool=False, tt=tt, out_dtype=jnp.float32)
    sc2, sh2 = _bn_affine(s2, q2, float(B * T), fp['g_p2'], fp['beta_p2'])

    # K4: proj2 BN + residual + before_highway + 4 Highway + GRU input projection
    half = fp['w_hw'].shape[1]
    use_bh = (E != half)
    rt = _pick_tile(B * T, tgt['rows'])
    gi = highway_gi(p2.reshape(B * T, E), x.reshape(B * T, E), sc2, sh2,
                    fp['w_bh'], fp['b_bh'], fp['w_hw'], fp['b_hw'],
                    fp['w_ih'], fp['b_ih'], use_bh, rt=rt)

    # K5: bidirectional GRU recurrence (scan over axis 0, as the reference does)
    gi = gi.reshape(B, T, -1)
    tn = _pick_tile(T, tgt['gru'])
    return bigru(gi, fp['whh_bd'], fp['bhh_cat'], tn=tn)      # (B, T, depth)


if __name__ == "__main__":
    B, T, E = 2, 8, 4          # batch, sequence, embedding (input_channel)
    DEPTH = 256                # module default -> half_depth = 128

    key = jax.random.PRNGKey(0)
    k_param, k_x = jax.random.split(key)
    params = init_encoder_params(k_param, input_channel=E, K=16, depth=DEPTH)
    fp = fuse_encoder_params(params, input_channel=E)
    x = jax.random.normal(k_x, (B, T, E), dtype=jnp.float32)
    input_lengths = jnp.full((B,), T, dtype=jnp.int32)

    fwd = jax.jit(encoder_forward)
    out = fwd(fp, x, input_lengths)
    out = jax.block_until_ready(out)

    assert out.shape == (B, T, DEPTH), out.shape
    assert bool(jnp.all(jnp.isfinite(out)))
    print("KERNEL_OK")
</pallas_src>

<mosaic_0001>
module attributes {stable_mosaic.version = 11 : i64} {
  func.func @_bank_kernel(%arg0: i32, %arg1: i32, %arg2: memref<1x23x4xf32, #tpu.memory_space<vmem>>, %arg3: memref<64x2048xbf16, #tpu.memory_space<vmem>>, %arg4: memref<1x2048xf32, #tpu.memory_space<vmem>>, %arg5: memref<1x8x2048xbf16, #tpu.memory_space<vmem>>, %arg6: memref<1x1x2048xf32, #tpu.memory_space<vmem>>, %arg7: memref<1x1x2048xf32, #tpu.memory_space<vmem>>) attributes {dimension_semantics = [#tpu.dimension_semantics<parallel>, #tpu.dimension_semantics<arbitrary>], iteration_bounds = array<i64: 2, 1>, scalar_prefetch = 0 : i64, scratch_operands = 0 : i64, tpu.core_type = #tpu.core_type<tc>, window_params = [{transform_indices = @transform_0, window_bounds = array<i64: 1, 23, 4>}, {pipeline_mode = #tpu.pipeline_mode<synchronous>, transform_indices = @transform_1, window_bounds = array<i64: 64, 2048>}, {pipeline_mode = #tpu.pipeline_mode<synchronous>, transform_indices = @transform_2, window_bounds = array<i64: 1, 2048>}, {transform_indices = @transform_3, window_bounds = array<i64: 1, 8, 2048>}, {transform_indices = @transform_4, window_bounds = array<i64: 1, 1, 2048>}, {transform_indices = @transform_5, window_bounds = array<i64: 1, 1, 2048>}]} {
    %c0_i32 = arith.constant 0 : i32
    %0 = arith.cmpi eq, %arg1, %c0_i32 : i32
    %1 = arith.extui %0 : i1 to i32
    %c0_i32_0 = arith.constant 0 : i32
    %2 = arith.cmpi ne, %1, %c0_i32_0 : i32
    scf.if %2 {
      %cst_24 = arith.constant 0.000000e+00 : f32
      %54 = vector.broadcast %cst_24 : f32 to vector<1x1x2048xf32>
      %c0_25 = arith.constant 0 : index
      %c0_26 = arith.constant 0 : index
      %c0_27 = arith.constant 0 : index
      %55 = vector.load %arg6[%c0_25, %c0_26, %c0_27] : memref<1x1x2048xf32, #tpu.memory_space<vmem>>, vector<1x1x2048xf32>
      tpu.vector_store %arg6[%c0_25, %c0_26, %c0_27], %54 {strides = array<i32>} : memref<1x1x2048xf32, #tpu.memory_space<vmem>>, vector<1x1x2048xf32>,
      %cst_28 = arith.constant 0.000000e+00 : f32
      %56 = vector.broadcast %cst_28 : f32 to vector<1x1x2048xf32>
      %c0_29 = arith.constant 0 : index
      %c0_30 = arith.constant 0 : index
      %c0_31 = arith.constant 0 : index
      %57 = vector.load %arg7[%c0_29, %c0_30, %c0_31] : memref<1x1x2048xf32, #tpu.memory_space<vmem>>, vector<1x1x2048xf32>
      tpu.vector_store %arg7[%c0_29, %c0_30, %c0_31], %56 {strides = array<i32>} : memref<1x1x2048xf32, #tpu.memory_space<vmem>>, vector<1x1x2048xf32>,
    } else {
    }
    %c8_i32 = arith.constant 8 : i32
    %3 = arith.muli %arg1, %c8_i32 : i32
    %4 = tpu.assume_multiple %3, 8 : i32
    %c0 = arith.constant 0 : index
    %5 = arith.index_cast %4 : i32 to index
    %c0_1 = arith.constant 0 : index
    %6 = vector.load %arg2[%c0, %5, %c0_1] : memref<1x23x4xf32, #tpu.memory_space<vmem>>, vector<1x23x4xf32>
    %7 = vector.shape_cast %6 : vector<1x23x4xf32> to vector<23x4xf32>
    %8 = vector.extract_strided_slice %7 {offsets = [0, 0], sizes = [8, 4], strides = [1, 1]} : vector<23x4xf32> to vector<8x4xf32>
    %9 = vector.extract_strided_slice %7 {offsets = [1, 0], sizes = [8, 4], strides = [1, 1]} : vector<23x4xf32> to vector<8x4xf32>
    %10 = vector.extract_strided_slice %7 {offsets = [2, 0], sizes = [8, 4], strides = [1, 1]} : vector<23x4xf32> to vector<8x4xf32>
    %11 = vector.extract_strided_slice %7 {offsets = [3, 0], sizes = [8, 4], strides = [1, 1]} : vector<23x4xf32> to vector<8x4xf32>
    %12 = vector.extract_strided_slice %7 {offsets = [4, 0], sizes = [8, 4], strides = [1, 1]} : vector<23x4xf32> to vector<8x4xf32>
    %13 = vector.extract_strided_slice %7 {offsets = [5, 0], sizes = [8, 4], strides = [1, 1]} : vector<23x4xf32> to vector<8x4xf32>
    %14 = vector.extract_strided_slice %7 {offsets = [6, 0], sizes = [8, 4], strides = [1, 1]} : vector<23x4xf32> to vector<8x4xf32>
    %15 = vector.extract_strided_slice %7 {offsets = [7, 0], sizes = [8, 4], strides = [1, 1]} : vector<23x4xf32> to vector<8x4xf32>
    %16 = vector.extract_strided_slice %7 {offsets = [8, 0], sizes = [8, 4], strides = [1, 1]} : vector<23x4xf32> to vector<8x4xf32>
    %17 = vector.extract_strided_slice %7 {offsets = [9, 0], sizes = [8, 4], strides = [1, 1]} : vector<23x4xf32> to vector<8x4xf32>
    %18 = vector.extract_strided_slice %7 {offsets = [10, 0], sizes = [8, 4], strides = [1, 1]} : vector<23x4xf32> to vector<8x4xf32>
    %19 = vector.extract_strided_slice %7 {offsets = [11, 0], sizes = [8, 4], strides = [1, 1]} : vector<23x4xf32> to vector<8x4xf32>
    %20 = vector.extract_strided_slice %7 {offsets = [12, 0], sizes = [8, 4], strides = [1, 1]} : vector<23x4xf32> to vector<8x4xf32>
    %21 = vector.extract_strided_slice %7 {offsets = [13, 0], sizes = [8, 4], strides = [1, 1]} : vector<23x4xf32> to vector<8x4xf32>
    %22 = vector.extract_strided_slice %7 {offsets = [14, 0], sizes = [8, 4], strides = [1, 1]} : vector<23x4xf32> to vector<8x4xf32>
    %23 = vector.extract_strided_slice %7 {offsets = [15, 0], sizes = [8, 4], strides = [1, 1]} : vector<23x4xf32> to vector<8x4xf32>
    %24 = tpu.concatenate %8, %9, %10, %11, %12, %13, %14, %15, %16, %17, %18, %19, %20, %21, %22, %23 in 1 : vector<8x4xf32>, vector<8x4xf32>, vector<8x4xf32>, vector<8x4xf32>, vector<8x4xf32>, vector<8x4xf32>, vector<8x4xf32>, vector<8x4xf32>, vector<8x4xf32>, vector<8x4xf32>, vector<8x4xf32>, vector<8x4xf32>, vector<8x4xf32>, vector<8x4xf32>, vector<8x4xf32>, vector<8x4xf32> -> vector<8x64xf32>
    %25 = arith.truncf %24 : vector<8x64xf32> to vector<8x64xbf16>
    %c0_2 = arith.constant 0 : index
    %c0_3 = arith.constant 0 : index
    %26 = vector.load %arg3[%c0_2, %c0_3] : memref<64x2048xbf16, #tpu.memory_space<vmem>>, vector<64x2048xbf16>
    %cst = arith.constant dense<0.000000e+00> : vector<8x2048xf32>
    %27 = tpu.matmul %25, %26, %cst {dimension_numbers = #tpu.dot_dimension_numbers<[1], [0], [0], [1], [0, 0, 1, 1], [], []>} : vector<8x64xbf16>, vector<64x2048xbf16>, vector<8x2048xf32> -> vector<8x2048xf32>
    %c0_4 = arith.constant 0 : index
    %c0_5 = arith.constant 0 : index
    %28 = vector.load %arg4[%c0_4, %c0_5] : memref<1x2048xf32, #tpu.memory_space<vmem>>, vector<1x2048xf32>
    %29 = vector.broadcast %28 : vector<1x2048xf32> to vector<8x2048xf32>
    %30 = arith.addf %27, %29 : vector<8x2048xf32>
    %cst_6 = arith.constant 0.000000e+00 : f32
    %31 = vector.broadcast %cst_6 : f32 to vector<8x2048xf32>
    %32 = arith.maximumf %30, %31 : vector<8x2048xf32>
    %33 = arith.truncf %32 : vector<8x2048xf32> to vector<8x2048xbf16>
    %c0_7 = arith.constant 0 : index
    %c0_8 = arith.constant 0 : index
    %c0_9 = arith.constant 0 : index
    %34 = vector.load %arg5[%c0_7, %c0_8, %c0_9] : memref<1x8x2048xbf16, #tpu.memory_space<vmem>>, vector<1x8x2048xbf16>
    %35 = vector.shape_cast %34 : vector<1x8x2048xbf16> to vector<8x2048xbf16>
    %36 = vector.shape_cast %33 : vector<8x2048xbf16> to vector<1x8x2048xbf16>
    tpu.vector_store %arg5[%c0_7, %c0_8, %c0_9], %36 {strides = array<i32>} : memref<1x8x2048xbf16, #tpu.memory_space<vmem>>, vector<1x8x2048xbf16>,
    %c0_10 = arith.constant 0 : index
    %c0_11 = arith.constant 0 : index
    %c0_12 = arith.constant 0 : index
    %37 = vector.load %arg6[%c0_10, %c0_11, %c0_12] : memref<1x1x2048xf32, #tpu.memory_space<vmem>>, vector<1x1x2048xf32>
    %38 = vector.shape_cast %37 : vector<1x1x2048xf32> to vector<1x2048xf32>
    %cst_13 = arith.constant dense<0.000000e+00> : vector<2048xf32>
    %39 = vector.multi_reduction <add>, %32, %cst_13 [0] : vector<8x2048xf32> to vector<2048xf32>
    %40 = vector.shape_cast %39 : vector<2048xf32> to vector<1x2048xf32>
    %41 = arith.addf %38, %40 : vector<1x2048xf32>
    %c0_14 = arith.constant 0 : index
    %c0_15 = arith.constant 0 : index
    %c0_16 = arith.constant 0 : index
    %42 = vector.load %arg6[%c0_14, %c0_15, %c0_16] : memref<1x1x2048xf32, #tpu.memory_space<vmem>>, vector<1x1x2048xf32>
    %43 = vector.shape_cast %42 : vector<1x1x2048xf32> to vector<1x2048xf32>
    %44 = vector.shape_cast %41 : vector<1x2048xf32> to vector<1x1x2048xf32>
    tpu.vector_store %arg6[%c0_14, %c0_15, %c0_16], %44 {strides = array<i32>} : memref<1x1x2048xf32, #tpu.memory_space<vmem>>, vector<1x1x2048xf32>,
    %c0_17 = arith.constant 0 : index
    %c0_18 = arith.constant 0 : index
    %c0_19 = arith.constant 0 : index
    %45 = vector.load %arg7[%c0_17, %c0_18, %c0_19] : memref<1x1x2048xf32, #tpu.memory_space<vmem>>, vector<1x1x2048xf32>
    %46 = vector.shape_cast %45 : vector<1x1x2048xf32> to vector<1x2048xf32>
    %47 = arith.mulf %32, %32 : vector<8x2048xf32>
    %cst_20 = arith.constant dense<0.000000e+00> : vector<2048xf32>
    %48 = vector.multi_reduction <add>, %47, %cst_20 [0] : vector<8x2048xf32> to vector<2048xf32>
    %49 = vector.shape_cast %48 : vector<2048xf32> to vector<1x2048xf32>
    %50 = arith.addf %46, %49 : vector<1x2048xf32>
    %c0_21 = arith.constant 0 : index
    %c0_22 = arith.constant 0 : index
    %c0_23 = arith.constant 0 : index
    %51 = vector.load %arg7[%c0_21, %c0_22, %c0_23] : memref<1x1x2048xf32, #tpu.memory_space<vmem>>, vector<1x1x2048xf32>
    %52 = vector.shape_cast %51 : vector<1x1x2048xf32> to vector<1x2048xf32>
    %53 = vector.shape_cast %50 : vector<1x2048xf32> to vector<1x1x2048xf32>
    tpu.vector_store %arg7[%c0_21, %c0_22, %c0_23], %53 {strides = array<i32>} : memref<1x1x2048xf32, #tpu.memory_space<vmem>>, vector<1x1x2048xf32>,
    return
  }
  func.func @transform_0(%arg0: i32, %arg1: i32) -> (i32, i32, i32) {
    %c0_i32 = arith.constant 0 : i32
    %c0_i32_0 = arith.constant 0 : i32
    %c0_i32_1 = arith.constant 0 : i32
    return %arg0, %c0_i32, %c0_i32_0 : i32, i32, i32
  }
  func.func @transform_1(%arg0: i32, %arg1: i32) -> (i32, i32) {
    %c0_i32 = arith.constant 0 : i32
    %c0_i32_0 = arith.constant 0 : i32
    %c0_i32_1 = arith.constant 0 : i32
    return %c0_i32, %c0_i32_0 : i32, i32
  }
  func.func @transform_2(%arg0: i32, %arg1: i32) -> (i32, i32) {
    %c0_i32 = arith.constant 0 : i32
    %c0_i32_0 = arith.constant 0 : i32
    %c0_i32_1 = arith.constant 0 : i32
    return %c0_i32, %c0_i32_0 : i32, i32
  }
  func.func @transform_3(%arg0: i32, %arg1: i32) -> (i32, i32, i32) {
    %c0_i32 = arith.constant 0 : i32
    %c0_i32_0 = arith.constant 0 : i32
    return %arg0, %arg1, %c0_i32 : i32, i32, i32
  }
  func.func @transform_4(%arg0: i32, %arg1: i32) -> (i32, i32, i32) {
    %c0_i32 = arith.constant 0 : i32
    %c0_i32_0 = arith.constant 0 : i32
    %c0_i32_1 = arith.constant 0 : i32
    return %arg0, %c0_i32, %c0_i32_0 : i32, i32, i32
  }
  func.func @transform_5(%arg0: i32, %arg1: i32) -> (i32, i32, i32) {
    %c0_i32 = arith.constant 0 : i32
    %c0_i32_0 = arith.constant 0 : i32
    %c0_i32_1 = arith.constant 0 : i32
    return %arg0, %c0_i32, %c0_i32_0 : i32, i32, i32
  }
}

module attributes {stable_mosaic.version = 11 : i64} {
  func.func @_conv3_kernel(%arg0: i32, %arg1: i32, %arg2: memref<1x8x2048xbf16, #tpu.memory_space<vmem>>, %arg3: memref<1x1x3x2048xbf16, #tpu.memory_space<vmem>>, %arg4: memref<1x2048xf32, #tpu.memory_space<vmem>>, %arg5: memref<1x2048xf32, #tpu.memory_space<vmem>>, %arg6: memref<2048x384xbf16, #tpu.memory_space<vmem>>, %arg7: memref<1x128xf32, #tpu.memory_space<vmem>>, %arg8: memref<1x8x128xbf16, #tpu.memory_space<vmem>>, %arg9: memref<1x1x128xf32, #tpu.memory_space<vmem>>, %arg10: memref<1x1x128xf32, #tpu.memory_space<vmem>>) attributes {dimension_semantics = [#tpu.dimension_semantics<parallel>, #tpu.dimension_semantics<arbitrary>], iteration_bounds = array<i64: 2, 1>, scalar_prefetch = 0 : i64, scratch_operands = 0 : i64, tpu.core_type = #tpu.core_type<tc>, window_params = [{transform_indices = @transform_0, window_bounds = array<i64: 1, 8, 2048>}, {transform_indices = @transform_1, window_bounds = array<i64: 1, 1, 3, 2048>}, {pipeline_mode = #tpu.pipeline_mode<synchronous>, transform_indices = @transform_2, window_bounds = array<i64: 1, 2048>}, {pipeline_mode = #tpu.pipeline_mode<synchronous>, transform_indices = @transform_3, window_bounds = array<i64: 1, 2048>}, {pipeline_mode = #tpu.pipeline_mode<synchronous>, transform_indices = @transform_4, window_bounds = array<i64: 2048, 384>}, {pipeline_mode = #tpu.pipeline_mode<synchronous>, transform_indices = @transform_5, window_bounds = array<i64: 1, 128>}, {transform_indices = @transform_6, window_bounds = array<i64: 1, 8, 128>}, {transform_indices = @transform_7, window_bounds = array<i64: 1, 1, 128>}, {transform_indices = @transform_8, window_bounds = array<i64: 1, 1, 128>}]} {
    %c0_i32 = arith.constant 0 : i32
    %0 = arith.cmpi eq, %arg1, %c0_i32 : i32
    %1 = arith.extui %0 : i1 to i32
    %c0_i32_0 = arith.constant 0 : i32
    %2 = arith.cmpi ne, %1, %c0_i32_0 : i32
    scf.if %2 {
      %cst_37 = arith.constant 0.000000e+00 : f32
      %71 = vector.broadcast %cst_37 : f32 to vector<1x1x128xf32>
      %c0_38 = arith.constant 0 : index
      %c0_39 = arith.constant 0 : index
      %c0_40 = arith.constant 0 : index
      %72 = vector.load %arg9[%c0_38, %c0_39, %c0_40] : memref<1x1x128xf32, #tpu.memory_space<vmem>>, vector<1x1x128xf32>
      tpu.vector_store %arg9[%c0_38, %c0_39, %c0_40], %71 {strides = array<i32>} : memref<1x1x128xf32, #tpu.memory_space<vmem>>, vector<1x1x128xf32>,
      %cst_41 = arith.constant 0.000000e+00 : f32
      %73 = vector.broadcast %cst_41 : f32 to vector<1x1x128xf32>
      %c0_42 = arith.constant 0 : index
      %c0_43 = arith.constant 0 : index
      %c0_44 = arith.constant 0 : index
      %74 = vector.load %arg10[%c0_42, %c0_43, %c0_44] : memref<1x1x128xf32, #tpu.memory_space<vmem>>, vector<1x1x128xf32>
      tpu.vector_store %arg10[%c0_42, %c0_43, %c0_44], %73 {strides = array<i32>} : memref<1x1x128xf32, #tpu.memory_space<vmem>>, vector<1x1x128xf32>,
    } else {
    }
    %c0_i32_1 = arith.constant 0 : i32
    %3 = arith.cmpi eq, %arg1, %c0_i32_1 : i32
    %c0_i32_2 = arith.constant 0 : i32
    %4 = arith.cmpi eq, %arg1, %c0_i32_2 : i32
    %c0 = arith.constant 0 : index
    %c0_3 = arith.constant 0 : index
    %5 = vector.load %arg4[%c0, %c0_3] : memref<1x2048xf32, #tpu.memory_space<vmem>>, vector<1x2048xf32>
    %c0_4 = arith.constant 0 : index
    %c0_5 = arith.constant 0 : index
    %6 = vector.load %arg5[%c0_4, %c0_5] : memref<1x2048xf32, #tpu.memory_space<vmem>>, vector<1x2048xf32>
    %c0_6 = arith.constant 0 : index
    %c0_7 = arith.constant 0 : index
    %c0_8 = arith.constant 0 : index
    %7 = vector.load %arg2[%c0_6, %c0_7, %c0_8] : memref<1x8x2048xbf16, #tpu.memory_space<vmem>>, vector<1x8x2048xbf16>
    %8 = vector.shape_cast %7 : vector<1x8x2048xbf16> to vector<8x2048xbf16>
    %9 = arith.extf %8 : vector<8x2048xbf16> to vector<8x2048xf32>
    %10 = vector.broadcast %5 : vector<1x2048xf32> to vector<8x2048xf32>
    %11 = arith.mulf %9, %10 : vector<8x2048xf32>
    %12 = vector.broadcast %6 : vector<1x2048xf32> to vector<8x2048xf32>
    %13 = arith.addf %11, %12 : vector<8x2048xf32>
    %c0_9 = arith.constant 0 : index
    %c0_10 = arith.constant 0 : index
    %c0_11 = arith.constant 0 : index
    %c0_12 = arith.constant 0 : index
    %14 = vector.load %arg3[%c0_9, %c0_10, %c0_11, %c0_12] : memref<1x1x3x2048xbf16, #tpu.memory_space<vmem>>, vector<1x1x3x2048xbf16>
    %15 = vector.shape_cast %14 : vector<1x1x3x2048xbf16> to vector<3x2048xbf16>
    %16 = arith.extf %15 : vector<3x2048xbf16> to vector<3x2048xf32>
    %17 = vector.broadcast %5 : vector<1x2048xf32> to vector<3x2048xf32>
    %18 = arith.mulf %16, %17 : vector<3x2048xf32>
    %19 = vector.broadcast %6 : vector<1x2048xf32> to vector<3x2048xf32>
    %20 = arith.addf %18, %19 : vector<3x2048xf32>
    %cst = arith.constant -1.000000e+30 : f32
    %21 = vector.broadcast %cst : f32 to vector<1x2048xf32>
    %22 = vector.extract_strided_slice %20 {offsets = [0, 0], sizes = [1, 2048], strides = [1, 1]} : vector<3x2048xf32> to vector<1x2048xf32>
    %23 = arith.select %3, %21, %22 : vector<1x2048xf32>
    %24 = vector.extract_strided_slice %20 {offsets = [1, 0], sizes = [1, 2048], strides = [1, 1]} : vector<3x2048xf32> to vector<1x2048xf32>
    %25 = arith.select %3, %21, %24 : vector<1x2048xf32>
    %26 = vector.extract_strided_slice %20 {offsets = [2, 0], sizes = [1, 2048], strides = [1, 1]} : vector<3x2048xf32> to vector<1x2048xf32>
    %27 = tpu.concatenate %25, %13, %26 in 0 : vector<1x2048xf32>, vector<8x2048xf32>, vector<1x2048xf32> -> vector<10x2048xf32>
    %28 = tpu.concatenate %23, %25, %13 in 0 : vector<1x2048xf32>, vector<1x2048xf32>, vector<8x2048xf32> -> vector<10x2048xf32>
    %29 = arith.maximumf %27, %28 : vector<10x2048xf32>
    %30 = arith.truncf %29 : vector<10x2048xf32> to vector<10x2048xbf16>
    %c0_13 = arith.constant 0 : index
    %c0_14 = arith.constant 0 : index
    %31 = vector.load %arg6[%c0_13, %c0_14] : memref<2048x384xbf16, #tpu.memory_space<vmem>>, vector<2048x384xbf16>
    %cst_15 = arith.constant dense<0.000000e+00> : vector<10x384xf32>
    %32 = tpu.matmul %30, %31, %cst_15 {dimension_numbers = #tpu.dot_dimension_numbers<[1], [0], [0], [1], [0, 0, 1, 1], [], []>} : vector<10x2048xbf16>, vector<2048x384xbf16>, vector<10x384xf32> -> vector<10x384xf32>
    %cst_16 = arith.constant 0.000000e+00 : f32
    %33 = vector.broadcast %cst_16 : f32 to vector<1x384xf32>
    %34 = vector.extract_strided_slice %32 {offsets = [0, 0], sizes = [1, 384], strides = [1, 1]} : vector<10x384xf32> to vector<1x384xf32>
    %35 = arith.select %3, %33, %34 : vector<1x384xf32>
    %36 = vector.extract_strided_slice %32 {offsets = [9, 0], sizes = [1, 384], strides = [1, 1]} : vector<10x384xf32> to vector<1x384xf32>
    %37 = arith.select %4, %33, %36 : vector<1x384xf32>
    %38 = vector.extract_strided_slice %32 {offsets = [1, 0], sizes = [8, 384], strides = [1, 1]} : vector<10x384xf32> to vector<8x384xf32>
    %39 = tpu.concatenate %35, %38, %37 in 0 : vector<1x384xf32>, vector<8x384xf32>, vector<1x384xf32> -> vector<10x384xf32>
    %40 = vector.extract_strided_slice %39 {offsets = [0, 0], sizes = [8, 128], strides = [1, 1]} : vector<10x384xf32> to vector<8x128xf32>
    %41 = vector.extract_strided_slice %39 {offsets = [1, 128], sizes = [8, 128], strides = [1, 1]} : vector<10x384xf32> to vector<8x128xf32>
    %42 = arith.addf %40, %41 : vector<8x128xf32>
    %43 = vector.extract_strided_slice %39 {offsets = [2, 256], sizes = [8, 128], strides = [1, 1]} : vector<10x384xf32> to vector<8x128xf32>
    %44 = arith.addf %42, %43 : vector<8x128xf32>
    %c0_17 = arith.constant 0 : index
    %c0_18 = arith.constant 0 : index
    %45 = vector.load %arg7[%c0_17, %c0_18] : memref<1x128xf32, #tpu.memory_space<vmem>>, vector<1x128xf32>
    %46 = vector.broadcast %45 : vector<1x128xf32> to vector<8x128xf32>
    %47 = arith.addf %44, %46 : vector<8x128xf32>
    %cst_19 = arith.constant 0.000000e+00 : f32
    %48 = vector.broadcast %cst_19 : f32 to vector<8x128xf32>
    %49 = arith.maximumf %47, %48 : vector<8x128xf32>
    %50 = arith.truncf %49 : vector<8x128xf32> to vector<8x128xbf16>
    %c0_20 = arith.constant 0 : index
    %c0_21 = arith.constant 0 : index
    %c0_22 = arith.constant 0 : index
    %51 = vector.load %arg8[%c0_20, %c0_21, %c0_22] : memref<1x8x128xbf16, #tpu.memory_space<vmem>>, vector<1x8x128xbf16>
    %52 = vector.shape_cast %51 : vector<1x8x128xbf16> to vector<8x128xbf16>
    %53 = vector.shape_cast %50 : vector<8x128xbf16> to vector<1x8x128xbf16>
    tpu.vector_store %arg8[%c0_20, %c0_21, %c0_22], %53 {strides = array<i32>} : memref<1x8x128xbf16, #tpu.memory_space<vmem>>, vector<1x8x128xbf16>,
    %c0_23 = arith.constant 0 : index
    %c0_24 = arith.constant 0 : index
    %c0_25 = arith.constant 0 : index
    %54 = vector.load %arg9[%c0_23, %c0_24, %c0_25] : memref<1x1x128xf32, #tpu.memory_space<vmem>>, vector<1x1x128xf32>
    %55 = vector.shape_cast %54 : vector<1x1x128xf32> to vector<1x128xf32>
    %cst_26 = arith.constant dense<0.000000e+00> : vector<128xf32>
    %56 = vector.multi_reduction <add>, %49, %cst_26 [0] : vector<8x128xf32> to vector<128xf32>
    %57 = vector.shape_cast %56 : vector<128xf32> to vector<1x128xf32>
    %58 = arith.addf %55, %57 : vector<1x128xf32>
    %c0_27 = arith.constant 0 : index
    %c0_28 = arith.constant 0 : index
    %c0_29 = arith.constant 0 : index
    %59 = vector.load %arg9[%c0_27, %c0_28, %c0_29] : memref<1x1x128xf32, #tpu.memory_space<vmem>>, vector<1x1x128xf32>
    %60 = vector.shape_cast %59 : vector<1x1x128xf32> to vector<1x128xf32>
    %61 = vector.shape_cast %58 : vector<1x128xf32> to vector<1x1x128xf32>
    tpu.vector_store %arg9[%c0_27, %c0_28, %c0_29], %61 {strides = array<i32>} : memref<1x1x128xf32, #tpu.memory_space<vmem>>, vector<1x1x128xf32>,
    %c0_30 = arith.constant 0 : index
    %c0_31 = arith.constant 0 : index
    %c0_32 = arith.constant 0 : index
    %62 = vector.load %arg10[%c0_30, %c0_31, %c0_32] : memref<1x1x128xf32, #tpu.memory_space<vmem>>, vector<1x1x128xf32>
    %63 = vector.shape_cast %62 : vector<1x1x128xf32> to vector<1x128xf32>
    %64 = arith.mulf %49, %49 : vector<8x128xf32>
    %cst_33 = arith.constant dense<0.000000e+00> : vector<128xf32>
    %65 = vector.multi_reduction <add>, %64, %cst_33 [0] : vector<8x128xf32> to vector<128xf32>
    %66 = vector.shape_cast %65 : vector<128xf32> to vector<1x128xf32>
    %67 = arith.addf %63, %66 : vector<1x128xf32>
    %c0_34 = arith.constant 0 : index
    %c0_35 = arith.constant 0 : index
    %c0_36 = arith.constant 0 : index
    %68 = vector.load %arg10[%c0_34, %c0_35, %c0_36] : memref<1x1x128xf32, #tpu.memory_space<vmem>>, vector<1x1x128xf32>
    %69 = vector.shape_cast %68 : vector<1x1x128xf32> to vector<1x128xf32>
    %70 = vector.shape_cast %67 : vector<1x128xf32> to vector<1x1x128xf32>
    tpu.vector_store %arg10[%c0_34, %c0_35, %c0_36], %70 {strides = array<i32>} : memref<1x1x128xf32, #tpu.memory_space<vmem>>, vector<1x1x128xf32>,
    return
  }
  func.func @transform_0(%arg0: i32, %arg1: i32) -> (i32, i32, i32) {
    %c0_i32 = arith.constant 0 : i32
    %c0_i32_0 = arith.constant 0 : i32
    return %arg0, %arg1, %c0_i32 : i32, i32, i32
  }
  func.func @transform_1(%arg0: i32, %arg1: i32) -> (i32, i32, i32, i32) {
    %c0_i32 = arith.constant 0 : i32
    %c0_i32_0 = arith.constant 0 : i32
    %c0_i32_1 = arith.constant 0 : i32
    return %arg0, %arg1, %c0_i32, %c0_i32_0 : i32, i32, i32, i32
  }
  func.func @transform_2(%arg0: i32, %arg1: i32) -> (i32, i32) {
    %c0_i32 = arith.constant 0 : i32
    %c0_i32_0 = arith.constant 0 : i32
    %c0_i32_1 = arith.constant 0 : i32
    return %c0_i32, %c0_i32_0 : i32, i32
  }
  func.func @transform_3(%arg0: i32, %arg1: i32) -> (i32, i32) {
    %c0_i32 = arith.constant 0 : i32
    %c0_i32_0 = arith.constant 0 : i32
    %c0_i32_1 = arith.constant 0 : i32
    return %c0_i32, %c0_i32_0 : i32, i32
  }
  func.func @transform_4(%arg0: i32, %arg1: i32) -> (i32, i32) {
    %c0_i32 = arith.constant 0 : i32
    %c0_i32_0 = arith.constant 0 : i32
    %c0_i32_1 = arith.constant 0 : i32
    return %c0_i32, %c0_i32_0 : i32, i32
  }
  func.func @transform_5(%arg0: i32, %arg1: i32) -> (i32, i32) {
    %c0_i32 = arith.constant 0 : i32
    %c0_i32_0 = arith.constant 0 : i32
    %c0_i32_1 = arith.constant 0 : i32
    return %c0_i32, %c0_i32_0 : i32, i32
  }
  func.func @transform_6(%arg0: i32, %arg1: i32) -> (i32, i32, i32) {
    %c0_i32 = arith.constant 0 : i32
    %c0_i32_0 = arith.constant 0 : i32
    return %arg0, %arg1, %c0_i32 : i32, i32, i32
  }
  func.func @transform_7(%arg0: i32, %arg1: i32) -> (i32, i32, i32) {
    %c0_i32 = arith.constant 0 : i32
    %c0_i32_0 = arith.constant 0 : i32
    %c0_i32_1 = arith.constant 0 : i32
    return %arg0, %c0_i32, %c0_i32_0 : i32, i32, i32
  }
  func.func @transform_8(%arg0: i32, %arg1: i32) -> (i32, i32, i32) {
    %c0_i32 = arith.constant 0 : i32
    %c0_i32_0 = arith.constant 0 : i32
    %c0_i32_1 = arith.constant 0 : i32
    return %arg0, %c0_i32, %c0_i32_0 : i32, i32, i32
  }
}

module attributes {stable_mosaic.version = 11 : i64} {
  func.func @_conv3_kernel(%arg0: i32, %arg1: i32, %arg2: memref<1x8x128xbf16, #tpu.memory_space<vmem>>, %arg3: memref<1x1x3x128xbf16, #tpu.memory_space<vmem>>, %arg4: memref<1x128xf32, #tpu.memory_space<vmem>>, %arg5: memref<1x128xf32, #tpu.memory_space<vmem>>, %arg6: memref<128x12xbf16, #tpu.memory_space<vmem>>, %arg7: memref<1x4xf32, #tpu.memory_space<vmem>>, %arg8: memref<1x8x4xf32, #tpu.memory_space<vmem>>, %arg9: memref<1x1x4xf32, #tpu.memory_space<vmem>>, %arg10: memref<1x1x4xf32, #tpu.memory_space<vmem>>) attributes {dimension_semantics = [#tpu.dimension_semantics<parallel>, #tpu.dimension_semantics<arbitrary>], iteration_bounds = array<i64: 2, 1>, scalar_prefetch = 0 : i64, scratch_operands = 0 : i64, tpu.core_type = #tpu.core_type<tc>, window_params = [{transform_indices = @transform_0, window_bounds = array<i64: 1, 8, 128>}, {transform_indices = @transform_1, window_bounds = array<i64: 1, 1, 3, 128>}, {pipeline_mode = #tpu.pipeline_mode<synchronous>, transform_indices = @transform_2, window_bounds = array<i64: 1, 128>}, {pipeline_mode = #tpu.pipeline_mode<synchronous>, transform_indices = @transform_3, window_bounds = array<i64: 1, 128>}, {pipeline_mode = #tpu.pipeline_mode<synchronous>, transform_indices = @transform_4, window_bounds = array<i64: 128, 12>}, {pipeline_mode = #tpu.pipeline_mode<synchronous>, transform_indices = @transform_5, window_bounds = array<i64: 1, 4>}, {transform_indices = @transform_6, window_bounds = array<i64: 1, 8, 4>}, {transform_indices = @transform_7, window_bounds = array<i64: 1, 1, 4>}, {transform_indices = @transform_8, window_bounds = array<i64: 1, 1, 4>}]} {
    %c0_i32 = arith.constant 0 : i32
    %0 = arith.cmpi eq, %arg1, %c0_i32 : i32
    %1 = arith.extui %0 : i1 to i32
    %c0_i32_0 = arith.constant 0 : i32
    %2 = arith.cmpi ne, %1, %c0_i32_0 : i32
    scf.if %2 {
      %cst_37 = arith.constant 0.000000e+00 : f32
      %66 = vector.broadcast %cst_37 : f32 to vector<1x1x4xf32>
      %c0_38 = arith.constant 0 : index
      %c0_39 = arith.constant 0 : index
      %c0_40 = arith.constant 0 : index
      %67 = vector.load %arg9[%c0_38, %c0_39, %c0_40] : memref<1x1x4xf32, #tpu.memory_space<vmem>>, vector<1x1x4xf32>
      tpu.vector_store %arg9[%c0_38, %c0_39, %c0_40], %66 {strides = array<i32>} : memref<1x1x4xf32, #tpu.memory_space<vmem>>, vector<1x1x4xf32>,
      %cst_41 = arith.constant 0.000000e+00 : f32
      %68 = vector.broadcast %cst_41 : f32 to vector<1x1x4xf32>
      %c0_42 = arith.constant 0 : index
      %c0_43 = arith.constant 0 : index
      %c0_44 = arith.constant 0 : index
      %69 = vector.load %arg10[%c0_42, %c0_43, %c0_44] : memref<1x1x4xf32, #tpu.memory_space<vmem>>, vector<1x1x4xf32>
      tpu.vector_store %arg10[%c0_42, %c0_43, %c0_44], %68 {strides = array<i32>} : memref<1x1x4xf32, #tpu.memory_space<vmem>>, vector<1x1x4xf32>,
    } else {
    }
    %c0_i32_1 = arith.constant 0 : i32
    %3 = arith.cmpi eq, %arg1, %c0_i32_1 : i32
    %c0_i32_2 = arith.constant 0 : i32
    %4 = arith.cmpi eq, %arg1, %c0_i32_2 : i32
    %c0 = arith.constant 0 : index
    %c0_3 = arith.constant 0 : index
    %5 = vector.load %arg4[%c0, %c0_3] : memref<1x128xf32, #tpu.memory_space<vmem>>, vector<1x128xf32>
    %c0_4 = arith.constant 0 : index
    %c0_5 = arith.constant 0 : index
    %6 = vector.load %arg5[%c0_4, %c0_5] : memref<1x128xf32, #tpu.memory_space<vmem>>, vector<1x128xf32>
    %c0_6 = arith.constant 0 : index
    %c0_7 = arith.constant 0 : index
    %c0_8 = arith.constant 0 : index
    %7 = vector.load %arg2[%c0_6, %c0_7, %c0_8] : memref<1x8x128xbf16, #tpu.memory_space<vmem>>, vector<1x8x128xbf16>
    %8 = vector.shape_cast %7 : vector<1x8x128xbf16> to vector<8x128xbf16>
    %9 = arith.extf %8 : vector<8x128xbf16> to vector<8x128xf32>
    %10 = vector.broadcast %5 : vector<1x128xf32> to vector<8x128xf32>
    %11 = arith.mulf %9, %10 : vector<8x128xf32>
    %12 = vector.broadcast %6 : vector<1x128xf32> to vector<8x128xf32>
    %13 = arith.addf %11, %12 : vector<8x128xf32>
    %c0_9 = arith.constant 0 : index
    %c0_10 = arith.constant 0 : index
    %c0_11 = arith.constant 0 : index
    %c0_12 = arith.constant 0 : index
    %14 = vector.load %arg3[%c0_9, %c0_10, %c0_11, %c0_12] : memref<1x1x3x128xbf16, #tpu.memory_space<vmem>>, vector<1x1x3x128xbf16>
    %15 = vector.shape_cast %14 : vector<1x1x3x128xbf16> to vector<3x128xbf16>
    %16 = arith.extf %15 : vector<3x128xbf16> to vector<3x128xf32>
    %17 = vector.broadcast %5 : vector<1x128xf32> to vector<3x128xf32>
    %18 = arith.mulf %16, %17 : vector<3x128xf32>
    %19 = vector.broadcast %6 : vector<1x128xf32> to vector<3x128xf32>
    %20 = arith.addf %18, %19 : vector<3x128xf32>
    %21 = vector.extract_strided_slice %20 {offsets = [1, 0], sizes = [1, 128], strides = [1, 1]} : vector<3x128xf32> to vector<1x128xf32>
    %22 = vector.extract_strided_slice %20 {offsets = [2, 0], sizes = [1, 128], strides = [1, 1]} : vector<3x128xf32> to vector<1x128xf32>
    %23 = tpu.concatenate %21, %13, %22 in 0 : vector<1x128xf32>, vector<8x128xf32>, vector<1x128xf32> -> vector<10x128xf32>
    %cst = arith.constant 0.000000e+00 : f32
    %24 = vector.broadcast %cst : f32 to vector<10x128xf32>
    %25 = arith.maximumf %23, %24 : vector<10x128xf32>
    %26 = arith.truncf %25 : vector<10x128xf32> to vector<10x128xbf16>
    %c0_13 = arith.constant 0 : index
    %c0_14 = arith.constant 0 : index
    %27 = vector.load %arg6[%c0_13, %c0_14] : memref<128x12xbf16, #tpu.memory_space<vmem>>, vector<128x12xbf16>
    %cst_15 = arith.constant dense<0.000000e+00> : vector<10x12xf32>
    %28 = tpu.matmul %26, %27, %cst_15 {dimension_numbers = #tpu.dot_dimension_numbers<[1], [0], [0], [1], [0, 0, 1, 1], [], []>} : vector<10x128xbf16>, vector<128x12xbf16>, vector<10x12xf32> -> vector<10x12xf32>
    %cst_16 = arith.constant 0.000000e+00 : f32
    %29 = vector.broadcast %cst_16 : f32 to vector<1x12xf32>
    %30 = vector.extract_strided_slice %28 {offsets = [0, 0], sizes = [1, 12], strides = [1, 1]} : vector<10x12xf32> to vector<1x12xf32>
    %31 = arith.select %3, %29, %30 : vector<1x12xf32>
    %32 = vector.extract_strided_slice %28 {offsets = [9, 0], sizes = [1, 12], strides = [1, 1]} : vector<10x12xf32> to vector<1x12xf32>
    %33 = arith.select %4, %29, %32 : vector<1x12xf32>
    %34 = vector.extract_strided_slice %28 {offsets = [1, 0], sizes = [8, 12], strides = [1, 1]} : vector<10x12xf32> to vector<8x12xf32>
    %35 = tpu.concatenate %31, %34, %33 in 0 : vector<1x12xf32>, vector<8x12xf32>, vector<1x12xf32> -> vector<10x12xf32>
    %36 = vector.extract_strided_slice %35 {offsets = [0, 0], sizes = [8, 4], strides = [1, 1]} : vector<10x12xf32> to vector<8x4xf32>
    %37 = vector.extract_strided_slice %35 {offsets = [1, 4], sizes = [8, 4], strides = [1, 1]} : vector<10x12xf32> to vector<8x4xf32>
    %38 = arith.addf %36, %37 : vector<8x4xf32>
    %39 = vector.extract_strided_slice %35 {offsets = [2, 8], sizes = [8, 4], strides = [1, 1]} : vector<10x12xf32> to vector<8x4xf32>
    %40 = arith.addf %38, %39 : vector<8x4xf32>
    %c0_17 = arith.constant 0 : index
    %c0_18 = arith.constant 0 : index
    %41 = vector.load %arg7[%c0_17, %c0_18] : memref<1x4xf32, #tpu.memory_space<vmem>>, vector<1x4xf32>
    %42 = vector.broadcast %41 : vector<1x4xf32> to vector<8x4xf32>
    %43 = arith.addf %40, %42 : vector<8x4xf32>
    %cst_19 = arith.constant 0.000000e+00 : f32
    %44 = vector.broadcast %cst_19 : f32 to vector<8x4xf32>
    %45 = arith.maximumf %43, %44 : vector<8x4xf32>
    %c0_20 = arith.constant 0 : index
    %c0_21 = arith.constant 0 : index
    %c0_22 = arith.constant 0 : index
    %46 = vector.load %arg8[%c0_20, %c0_21, %c0_22] : memref<1x8x4xf32, #tpu.memory_space<vmem>>, vector<1x8x4xf32>
    %47 = vector.shape_cast %46 : vector<1x8x4xf32> to vector<8x4xf32>
    %48 = vector.shape_cast %45 : vector<8x4xf32> to vector<1x8x4xf32>
    tpu.vector_store %arg8[%c0_20, %c0_21, %c0_22], %48 {strides = array<i32>} : memref<1x8x4xf32, #tpu.memory_space<vmem>>, vector<1x8x4xf32>,
    %c0_23 = arith.constant 0 : index
    %c0_24 = arith.constant 0 : index
    %c0_25 = arith.constant 0 : index
    %49 = vector.load %arg9[%c0_23, %c0_24, %c0_25] : memref<1x1x4xf32, #tpu.memory_space<vmem>>, vector<1x1x4xf32>
    %50 = vector.shape_cast %49 : vector<1x1x4xf32> to vector<1x4xf32>
    %cst_26 = arith.constant dense<0.000000e+00> : vector<4xf32>
    %51 = vector.multi_reduction <add>, %45, %cst_26 [0] : vector<8x4xf32> to vector<4xf32>
    %52 = vector.shape_cast %51 : vector<4xf32> to vector<1x4xf32>
    %53 = arith.addf %50, %52 : vector<1x4xf32>
    %c0_27 = arith.constant 0 : index
    %c0_28 = arith.constant 0 : index
    %c0_29 = arith.constant 0 : index
    %54 = vector.load %arg9[%c0_27, %c0_28, %c0_29] : memref<1x1x4xf32, #tpu.memory_space<vmem>>, vector<1x1x4xf32>
    %55 = vector.shape_cast %54 : vector<1x1x4xf32> to vector<1x4xf32>
    %56 = vector.shape_cast %53 : vector<1x4xf32> to vector<1x1x4xf32>
    tpu.vector_store %arg9[%c0_27, %c0_28, %c0_29], %56 {strides = array<i32>} : memref<1x1x4xf32, #tpu.memory_space<vmem>>, vector<1x1x4xf32>,
    %c0_30 = arith.constant 0 : index
    %c0_31 = arith.constant 0 : index
    %c0_32 = arith.constant 0 : index
    %57 = vector.load %arg10[%c0_30, %c0_31, %c0_32] : memref<1x1x4xf32, #tpu.memory_space<vmem>>, vector<1x1x4xf32>
    %58 = vector.shape_cast %57 : vector<1x1x4xf32> to vector<1x4xf32>
    %59 = arith.mulf %45, %45 : vector<8x4xf32>
    %cst_33 = arith.constant dense<0.000000e+00> : vector<4xf32>
    %60 = vector.multi_reduction <add>, %59, %cst_33 [0] : vector<8x4xf32> to vector<4xf32>
    %61 = vector.shape_cast %60 : vector<4xf32> to vector<1x4xf32>
    %62 = arith.addf %58, %61 : vector<1x4xf32>
    %c0_34 = arith.constant 0 : index
    %c0_35 = arith.constant 0 : index
    %c0_36 = arith.constant 0 : index
    %63 = vector.load %arg10[%c0_34, %c0_35, %c0_36] : memref<1x1x4xf32, #tpu.memory_space<vmem>>, vector<1x1x4xf32>
    %64 = vector.shape_cast %63 : vector<1x1x4xf32> to vector<1x4xf32>
    %65 = vector.shape_cast %62 : vector<1x4xf32> to vector<1x1x4xf32>
    tpu.vector_store %arg10[%c0_34, %c0_35, %c0_36], %65 {strides = array<i32>} : memref<1x1x4xf32, #tpu.memory_space<vmem>>, vector<1x1x4xf32>,
    return
  }
  func.func @transform_0(%arg0: i32, %arg1: i32) -> (i32, i32, i32) {
    %c0_i32 = arith.constant 0 : i32
    %c0_i32_0 = arith.constant 0 : i32
    return %arg0, %arg1, %c0_i32 : i32, i32, i32
  }
  func.func @transform_1(%arg0: i32, %arg1: i32) -> (i32, i32, i32, i32) {
    %c0_i32 = arith.constant 0 : i32
    %c0_i32_0 = arith.constant 0 : i32
    %c0_i32_1 = arith.constant 0 : i32
    return %arg0, %arg1, %c0_i32, %c0_i32_0 : i32, i32, i32, i32
  }
  func.func @transform_2(%arg0: i32, %arg1: i32) -> (i32, i32) {
    %c0_i32 = arith.constant 0 : i32
    %c0_i32_0 = arith.constant 0 : i32
    %c0_i32_1 = arith.constant 0 : i32
    return %c0_i32, %c0_i32_0 : i32, i32
  }
  func.func @transform_3(%arg0: i32, %arg1: i32) -> (i32, i32) {
    %c0_i32 = arith.constant 0 : i32
    %c0_i32_0 = arith.constant 0 : i32
    %c0_i32_1 = arith.constant 0 : i32
    return %c0_i32, %c0_i32_0 : i32, i32
  }
  func.func @transform_4(%arg0: i32, %arg1: i32) -> (i32, i32) {
    %c0_i32 = arith.constant 0 : i32
    %c0_i32_0 = arith.constant 0 : i32
    %c0_i32_1 = arith.constant 0 : i32
    return %c0_i32, %c0_i32_0 : i32, i32
  }
  func.func @transform_5(%arg0: i32, %arg1: i32) -> (i32, i32) {
    %c0_i32 = arith.constant 0 : i32
    %c0_i32_0 = arith.constant 0 : i32
    %c0_i32_1 = arith.constant 0 : i32
    return %c0_i32, %c0_i32_0 : i32, i32
  }
  func.func @transform_6(%arg0: i32, %arg1: i32) -> (i32, i32, i32) {
    %c0_i32 = arith.constant 0 : i32
    %c0_i32_0 = arith.constant 0 : i32
    return %arg0, %arg1, %c0_i32 : i32, i32, i32
  }
  func.func @transform_7(%arg0: i32, %arg1: i32) -> (i32, i32, i32) {
    %c0_i32 = arith.constant 0 : i32
    %c0_i32_0 = arith.constant 0 : i32
    %c0_i32_1 = arith.constant 0 : i32
    return %arg0, %c0_i32, %c0_i32_0 : i32, i32, i32
  }
  func.func @transform_8(%arg0: i32, %arg1: i32) -> (i32, i32, i32) {
    %c0_i32 = arith.constant 0 : i32
    %c0_i32_0 = arith.constant 0 : i32
    %c0_i32_1 = arith.constant 0 : i32
    return %arg0, %c0_i32, %c0_i32_0 : i32, i32, i32
  }
}

module attributes {stable_mosaic.version = 11 : i64} {
  func.func @_highway_gi_kernel(%arg0: i32, %arg1: memref<16x4xf32, #tpu.memory_space<vmem>>, %arg2: memref<16x4xf32, #tpu.memory_space<vmem>>, %arg3: memref<1x4xf32, #tpu.memory_space<vmem>>, %arg4: memref<1x4xf32, #tpu.memory_space<vmem>>, %arg5: memref<4x128xbf16, #tpu.memory_space<vmem>>, %arg6: memref<1x128xf32, #tpu.memory_space<vmem>>, %arg7: memref<4x128x256xbf16, #tpu.memory_space<vmem>>, %arg8: memref<4x1x256xf32, #tpu.memory_space<vmem>>, %arg9: memref<128x768xbf16, #tpu.memory_space<vmem>>, %arg10: memref<1x768xf32, #tpu.memory_space<vmem>>, %arg11: memref<16x768xbf16, #tpu.memory_space<vmem>>) attributes {dimension_semantics = [#tpu.dimension_semantics<parallel>], iteration_bounds = array<i64: 1>, scalar_prefetch = 0 : i64, scratch_operands = 0 : i64, tpu.core_type = #tpu.core_type<tc>, window_params = [{transform_indices = @transform_0, window_bounds = array<i64: 16, 4>}, {transform_indices = @transform_1, window_bounds = array<i64: 16, 4>}, {pipeline_mode = #tpu.pipeline_mode<synchronous>, transform_indices = @transform_2, window_bounds = array<i64: 1, 4>}, {pipeline_mode = #tpu.pipeline_mode<synchronous>, transform_indices = @transform_3, window_bounds = array<i64: 1, 4>}, {pipeline_mode = #tpu.pipeline_mode<synchronous>, transform_indices = @transform_4, window_bounds = array<i64: 4, 128>}, {pipeline_mode = #tpu.pipeline_mode<synchronous>, transform_indices = @transform_5, window_bounds = array<i64: 1, 128>}, {pipeline_mode = #tpu.pipeline_mode<synchronous>, transform_indices = @transform_6, window_bounds = array<i64: 4, 128, 256>}, {pipeline_mode = #tpu.pipeline_mode<synchronous>, transform_indices = @transform_7, window_bounds = array<i64: 4, 1, 256>}, {pipeline_mode = #tpu.pipeline_mode<synchronous>, transform_indices = @transform_8, window_bounds = array<i64: 128, 768>}, {pipeline_mode = #tpu.pipeline_mode<synchronous>, transform_indices = @transform_9, window_bounds = array<i64: 1, 768>}, {transform_indices = @transform_10, window_bounds = array<i64: 16, 768>}]} {
    %c0 = arith.constant 0 : index
    %c0_0 = arith.constant 0 : index
    %0 = vector.load %arg1[%c0, %c0_0] : memref<16x4xf32, #tpu.memory_space<vmem>>, vector<16x4xf32>
    %c0_1 = arith.constant 0 : index
    %c0_2 = arith.constant 0 : index
    %1 = vector.load %arg3[%c0_1, %c0_2] : memref<1x4xf32, #tpu.memory_space<vmem>>, vector<1x4xf32>
    %2 = vector.broadcast %1 : vector<1x4xf32> to vector<16x4xf32>
    %3 = arith.mulf %0, %2 : vector<16x4xf32>
    %c0_3 = arith.constant 0 : index
    %c0_4 = arith.constant 0 : index
    %4 = vector.load %arg4[%c0_3, %c0_4] : memref<1x4xf32, #tpu.memory_space<vmem>>, vector<1x4xf32>
    %5 = vector.broadcast %4 : vector<1x4xf32> to vector<16x4xf32>
    %6 = arith.addf %3, %5 : vector<16x4xf32>
    %c0_5 = arith.constant 0 : index
    %c0_6 = arith.constant 0 : index
    %7 = vector.load %arg2[%c0_5, %c0_6] : memref<16x4xf32, #tpu.memory_space<vmem>>, vector<16x4xf32>
    %8 = arith.addf %6, %7 : vector<16x4xf32>
    %9 = arith.truncf %8 : vector<16x4xf32> to vector<16x4xbf16>
    %c0_7 = arith.constant 0 : index
    %c0_8 = arith.constant 0 : index
    %10 = vector.load %arg5[%c0_7, %c0_8] : memref<4x128xbf16, #tpu.memory_space<vmem>>, vector<4x128xbf16>
    %cst = arith.constant dense<0.000000e+00> : vector<16x128xf32>
    %11 = tpu.matmul %9, %10, %cst {dimension_numbers = #tpu.dot_dimension_numbers<[1], [0], [0], [1], [0, 0, 1, 1], [], []>} : vector<16x4xbf16>, vector<4x128xbf16>, vector<16x128xf32> -> vector<16x128xf32>
    %c0_9 = arith.constant 0 : index
    %c0_10 = arith.constant 0 : index
    %12 = vector.load %arg6[%c0_9, %c0_10] : memref<1x128xf32, #tpu.memory_space<vmem>>, vector<1x128xf32>
    %13 = vector.broadcast %12 : vector<1x128xf32> to vector<16x128xf32>
    %14 = arith.addf %11, %13 : vector<16x128xf32>
    %15 = arith.truncf %14 : vector<16x128xf32> to vector<16x128xbf16>
    %c0_11 = arith.constant 0 : index
    %c0_12 = arith.constant 0 : index
    %c0_13 = arith.constant 0 : index
    %16 = vector.load %arg7[%c0_11, %c0_12, %c0_13] : memref<4x128x256xbf16, #tpu.memory_space<vmem>>, vector<1x128x256xbf16>
    %17 = vector.shape_cast %16 : vector<1x128x256xbf16> to vector<128x256xbf16>
    %cst_14 = arith.constant dense<0.000000e+00> : vector<16x256xf32>
    %18 = tpu.matmul %15, %17, %cst_14 {dimension_numbers = #tpu.dot_dimension_numbers<[1], [0], [0], [1], [0, 0, 1, 1], [], []>} : vector<16x128xbf16>, vector<128x256xbf16>, vector<16x256xf32> -> vector<16x256xf32>
    %c0_15 = arith.constant 0 : index
    %c0_16 = arith.constant 0 : index
    %c0_17 = arith.constant 0 : index
    %19 = vector.load %arg8[%c0_15, %c0_16, %c0_17] : memref<4x1x256xf32, #tpu.memory_space<vmem>>, vector<1x1x256xf32>
    %20 = vector.shape_cast %19 : vector<1x1x256xf32> to vector<1x256xf32>
    %21 = vector.broadcast %20 : vector<1x256xf32> to vector<16x256xf32>
    %22 = arith.addf %18, %21 : vector<16x256xf32>
    %23 = vector.extract_strided_slice %22 {offsets = [0, 0], sizes = [16, 128], strides = [1, 1]} : vector<16x256xf32> to vector<16x128xf32>
    %cst_18 = arith.constant 0.000000e+00 : f32
    %24 = vector.broadcast %cst_18 : f32 to vector<16x128xf32>
    %25 = arith.maximumf %23, %24 : vector<16x128xf32>
    %26 = vector.extract_strided_slice %22 {offsets = [0, 128], sizes = [16, 128], strides = [1, 1]} : vector<16x256xf32> to vector<16x128xf32>
    %27 = arith.negf %26 : vector<16x128xf32>
    %28 = math.exp %27 : vector<16x128xf32>
    %cst_19 = arith.constant 1.000000e+00 : f32
    %29 = vector.broadcast %cst_19 : f32 to vector<16x128xf32>
    %30 = arith.addf %29, %28 : vector<16x128xf32>
    %31 = arith.divf %29, %30 : vector<16x128xf32>
    %32 = arith.mulf %25, %31 : vector<16x128xf32>
    %cst_20 = arith.constant 1.000000e+00 : f32
    %33 = vector.broadcast %cst_20 : f32 to vector<16x128xf32>
    %34 = arith.subf %33, %31 : vector<16x128xf32>
    %35 = arith.mulf %14, %34 : vector<16x128xf32>
    %36 = arith.addf %32, %35 : vector<16x128xf32>
    %37 = arith.truncf %36 : vector<16x128xf32> to vector<16x128xbf16>
    %c1 = arith.constant 1 : index
    %c0_21 = arith.constant 0 : index
    %c0_22 = arith.constant 0 : index
    %38 = vector.load %arg7[%c1, %c0_21, %c0_22] : memref<4x128x256xbf16, #tpu.memory_space<vmem>>, vector<1x128x256xbf16>
    %39 = vector.shape_cast %38 : vector<1x128x256xbf16> to vector<128x256xbf16>
    %cst_23 = arith.constant dense<0.000000e+00> : vector<16x256xf32>
    %40 = tpu.matmul %37, %39, %cst_23 {dimension_numbers = #tpu.dot_dimension_numbers<[1], [0], [0], [1], [0, 0, 1, 1], [], []>} : vector<16x128xbf16>, vector<128x256xbf16>, vector<16x256xf32> -> vector<16x256xf32>
    %c1_24 = arith.constant 1 : index
    %c0_25 = arith.constant 0 : index
    %c0_26 = arith.constant 0 : index
    %41 = vector.load %arg8[%c1_24, %c0_25, %c0_26] : memref<4x1x256xf32, #tpu.memory_space<vmem>>, vector<1x1x256xf32>
    %42 = vector.shape_cast %41 : vector<1x1x256xf32> to vector<1x256xf32>
    %43 = vector.broadcast %42 : vector<1x256xf32> to vector<16x256xf32>
    %44 = arith.addf %40, %43 : vector<16x256xf32>
    %45 = vector.extract_strided_slice %44 {offsets = [0, 0], sizes = [16, 128], strides = [1, 1]} : vector<16x256xf32> to vector<16x128xf32>
    %cst_27 = arith.constant 0.000000e+00 : f32
    %46 = vector.broadcast %cst_27 : f32 to vector<16x128xf32>
    %47 = arith.maximumf %45, %46 : vector<16x128xf32>
    %48 = vector.extract_strided_slice %44 {offsets = [0, 128], sizes = [16, 128], strides = [1, 1]} : vector<16x256xf32> to vector<16x128xf32>
    %49 = arith.negf %48 : vector<16x128xf32>
    %50 = math.exp %49 : vector<16x128xf32>
    %cst_28 = arith.constant 1.000000e+00 : f32
    %51 = vector.broadcast %cst_28 : f32 to vector<16x128xf32>
    %52 = arith.addf %51, %50 : vector<16x128xf32>
    %53 = arith.divf %51, %52 : vector<16x128xf32>
    %54 = arith.mulf %47, %53 : vector<16x128xf32>
    %cst_29 = arith.constant 1.000000e+00 : f32
    %55 = vector.broadcast %cst_29 : f32 to vector<16x128xf32>
    %56 = arith.subf %55, %53 : vector<16x128xf32>
    %57 = arith.mulf %36, %56 : vector<16x128xf32>
    %58 = arith.addf %54, %57 : vector<16x128xf32>
    %59 = arith.truncf %58 : vector<16x128xf32> to vector<16x128xbf16>
    %c2 = arith.constant 2 : index
    %c0_30 = arith.constant 0 : index
    %c0_31 = arith.constant 0 : index
    %60 = vector.load %arg7[%c2, %c0_30, %c0_31] : memref<4x128x256xbf16, #tpu.memory_space<vmem>>, vector<1x128x256xbf16>
    %61 = vector.shape_cast %60 : vector<1x128x256xbf16> to vector<128x256xbf16>
    %cst_32 = arith.constant dense<0.000000e+00> : vector<16x256xf32>
    %62 = tpu.matmul %59, %61, %cst_32 {dimension_numbers = #tpu.dot_dimension_numbers<[1], [0], [0], [1], [0, 0, 1, 1], [], []>} : vector<16x128xbf16>, vector<128x256xbf16>, vector<16x256xf32> -> vector<16x256xf32>
    %c2_33 = arith.constant 2 : index
    %c0_34 = arith.constant 0 : index
    %c0_35 = arith.constant 0 : index
    %63 = vector.load %arg8[%c2_33, %c0_34, %c0_35] : memref<4x1x256xf32, #tpu.memory_space<vmem>>, vector<1x1x256xf32>
    %64 = vector.shape_cast %63 : vector<1x1x256xf32> to vector<1x256xf32>
    %65 = vector.broadcast %64 : vector<1x256xf32> to vector<16x256xf32>
    %66 = arith.addf %62, %65 : vector<16x256xf32>
    %67 = vector.extract_strided_slice %66 {offsets = [0, 0], sizes = [16, 128], strides = [1, 1]} : vector<16x256xf32> to vector<16x128xf32>
    %cst_36 = arith.constant 0.000000e+00 : f32
    %68 = vector.broadcast %cst_36 : f32 to vector<16x128xf32>
    %69 = arith.maximumf %67, %68 : vector<16x128xf32>
    %70 = vector.extract_strided_slice %66 {offsets = [0, 128], sizes = [16, 128], strides = [1, 1]} : vector<16x256xf32> to vector<16x128xf32>
    %71 = arith.negf %70 : vector<16x128xf32>
    %72 = math.exp %71 : vector<16x128xf32>
    %cst_37 = arith.constant 1.000000e+00 : f32
    %73 = vector.broadcast %cst_37 : f32 to vector<16x128xf32>
    %74 = arith.addf %73, %72 : vector<16x128xf32>
    %75 = arith.divf %73, %74 : vector<16x128xf32>
    %76 = arith.mulf %69, %75 : vector<16x128xf32>
    %cst_38 = arith.constant 1.000000e+00 : f32
    %77 = vector.broadcast %cst_38 : f32 to vector<16x128xf32>
    %78 = arith.subf %77, %75 : vector<16x128xf32>
    %79 = arith.mulf %58, %78 : vector<16x128xf32>
    %80 = arith.addf %76, %79 : vector<16x128xf32>
    %81 = arith.truncf %80 : vector<16x128xf32> to vector<16x128xbf16>
    %c3 = arith.constant 3 : index
    %c0_39 = arith.constant 0 : index
    %c0_40 = arith.constant 0 : index
    %82 = vector.load %arg7[%c3, %c0_39, %c0_40] : memref<4x128x256xbf16, #tpu.memory_space<vmem>>, vector<1x128x256xbf16>
    %83 = vector.shape_cast %82 : vector<1x128x256xbf16> to vector<128x256xbf16>
    %cst_41 = arith.constant dense<0.000000e+00> : vector<16x256xf32>
    %84 = tpu.matmul %81, %83, %cst_41 {dimension_numbers = #tpu.dot_dimension_numbers<[1], [0], [0], [1], [0, 0, 1, 1], [], []>} : vector<16x128xbf16>, vector<128x256xbf16>, vector<16x256xf32> -> vector<16x256xf32>
    %c3_42 = arith.constant 3 : index
    %c0_43 = arith.constant 0 : index
    %c0_44 = arith.constant 0 : index
    %85 = vector.load %arg8[%c3_42, %c0_43, %c0_44] : memref<4x1x256xf32, #tpu.memory_space<vmem>>, vector<1x1x256xf32>
    %86 = vector.shape_cast %85 : vector<1x1x256xf32> to vector<1x256xf32>
    %87 = vector.broadcast %86 : vector<1x256xf32> to vector<16x256xf32>
    %88 = arith.addf %84, %87 : vector<16x256xf32>
    %89 = vector.extract_strided_slice %88 {offsets = [0, 0], sizes = [16, 128], strides = [1, 1]} : vector<16x256xf32> to vector<16x128xf32>
    %cst_45 = arith.constant 0.000000e+00 : f32
    %90 = vector.broadcast %cst_45 : f32 to vector<16x128xf32>
    %91 = arith.maximumf %89, %90 : vector<16x128xf32>
    %92 = vector.extract_strided_slice %88 {offsets = [0, 128], sizes = [16, 128], strides = [1, 1]} : vector<16x256xf32> to vector<16x128xf32>
    %93 = arith.negf %92 : vector<16x128xf32>
    %94 = math.exp %93 : vector<16x128xf32>
    %cst_46 = arith.constant 1.000000e+00 : f32
    %95 = vector.broadcast %cst_46 : f32 to vector<16x128xf32>
    %96 = arith.addf %95, %94 : vector<16x128xf32>
    %97 = arith.divf %95, %96 : vector<16x128xf32>
    %98 = arith.mulf %91, %97 : vector<16x128xf32>
    %cst_47 = arith.constant 1.000000e+00 : f32
    %99 = vector.broadcast %cst_47 : f32 to vector<16x128xf32>
    %100 = arith.subf %99, %97 : vector<16x128xf32>
    %101 = arith.mulf %80, %100 : vector<16x128xf32>
    %102 = arith.addf %98, %101 : vector<16x128xf32>
    %103 = arith.truncf %102 : vector<16x128xf32> to vector<16x128xbf16>
    %c0_48 = arith.constant 0 : index
    %c0_49 = arith.constant 0 : index
    %104 = vector.load %arg9[%c0_48, %c0_49] : memref<128x768xbf16, #tpu.memory_space<vmem>>, vector<128x768xbf16>
    %cst_50 = arith.constant dense<0.000000e+00> : vector<16x768xf32>
    %105 = tpu.matmul %103, %104, %cst_50 {dimension_numbers = #tpu.dot_dimension_numbers<[1], [0], [0], [1], [0, 0, 1, 1], [], []>} : vector<16x128xbf16>, vector<128x768xbf16>, vector<16x768xf32> -> vector<16x768xf32>
    %c0_51 = arith.constant 0 : index
    %c0_52 = arith.constant 0 : index
    %106 = vector.load %arg10[%c0_51, %c0_52] : memref<1x768xf32, #tpu.memory_space<vmem>>, vector<1x768xf32>
    %107 = vector.broadcast %106 : vector<1x768xf32> to vector<16x768xf32>
    %108 = arith.addf %105, %107 : vector<16x768xf32>
    %109 = arith.truncf %108 : vector<16x768xf32> to vector<16x768xbf16>
    %c0_53 = arith.constant 0 : index
    %c0_54 = arith.constant 0 : index
    %110 = vector.load %arg11[%c0_53, %c0_54] : memref<16x768xbf16, #tpu.memory_space<vmem>>, vector<16x768xbf16>
    tpu.vector_store %arg11[%c0_53, %c0_54], %109 {strides = array<i32>} : memref<16x768xbf16, #tpu.memory_space<vmem>>, vector<16x768xbf16>,
    return
  }
  func.func @transform_0(%arg0: i32) -> (i32, i32) {
    %c0_i32 = arith.constant 0 : i32
    %c0_i32_0 = arith.constant 0 : i32
    return %arg0, %c0_i32 : i32, i32
  }
  func.func @transform_1(%arg0: i32) -> (i32, i32) {
    %c0_i32 = arith.constant 0 : i32
    %c0_i32_0 = arith.constant 0 : i32
    return %arg0, %c0_i32 : i32, i32
  }
  func.func @transform_2(%arg0: i32) -> (i32, i32) {
    %c0_i32 = arith.constant 0 : i32
    %c0_i32_0 = arith.constant 0 : i32
    %c0_i32_1 = arith.constant 0 : i32
    return %c0_i32, %c0_i32_0 : i32, i32
  }
  func.func @transform_3(%arg0: i32) -> (i32, i32) {
    %c0_i32 = arith.constant 0 : i32
    %c0_i32_0 = arith.constant 0 : i32
    %c0_i32_1 = arith.constant 0 : i32
    return %c0_i32, %c0_i32_0 : i32, i32
  }
  func.func @transform_4(%arg0: i32) -> (i32, i32) {
    %c0_i32 = arith.constant 0 : i32
    %c0_i32_0 = arith.constant 0 : i32
    %c0_i32_1 = arith.constant 0 : i32
    return %c0_i32, %c0_i32_0 : i32, i32
  }
  func.func @transform_5(%arg0: i32) -> (i32, i32) {
    %c0_i32 = arith.constant 0 : i32
    %c0_i32_0 = arith.constant 0 : i32
    %c0_i32_1 = arith.constant 0 : i32
    return %c0_i32, %c0_i32_0 : i32, i32
  }
  func.func @transform_6(%arg0: i32) -> (i32, i32, i32) {
    %c0_i32 = arith.constant 0 : i32
    %c0_i32_0 = arith.constant 0 : i32
    %c0_i32_1 = arith.constant 0 : i32
    %c0_i32_2 = arith.constant 0 : i32
    return %c0_i32, %c0_i32_0, %c0_i32_1 : i32, i32, i32
  }
  func.func @transform_7(%arg0: i32) -> (i32, i32, i32) {
    %c0_i32 = arith.constant 0 : i32
    %c0_i32_0 = arith.constant 0 : i32
    %c0_i32_1 = arith.constant 0 : i32
    %c0_i32_2 = arith.constant 0 : i32
    return %c0_i32, %c0_i32_0, %c0_i32_1 : i32, i32, i32
  }
  func.func @transform_8(%arg0: i32) -> (i32, i32) {
    %c0_i32 = arith.constant 0 : i32
    %c0_i32_0 = arith.constant 0 : i32
    %c0_i32_1 = arith.constant 0 : i32
    return %c0_i32, %c0_i32_0 : i32, i32
  }
  func.func @transform_9(%arg0: i32) -> (i32, i32) {
    %c0_i32 = arith.constant 0 : i32
    %c0_i32_0 = arith.constant 0 : i32
    %c0_i32_1 = arith.constant 0 : i32
    return %c0_i32, %c0_i32_0 : i32, i32
  }
  func.func @transform_10(%arg0: i32) -> (i32, i32) {
    %c0_i32 = arith.constant 0 : i32
    %c0_i32_0 = arith.constant 0 : i32
    return %arg0, %c0_i32 : i32, i32
  }
}

module attributes {stable_mosaic.version = 11 : i64} {
  func.func @_bigru_kernel(%arg0: i32, %arg1: memref<2x8x768xbf16, #tpu.memory_space<vmem>>, %arg2: memref<256x768xbf16, #tpu.memory_space<vmem>>, %arg3: memref<1x768xf32, #tpu.memory_space<vmem>>, %arg4: memref<2x8x256xf32, #tpu.memory_space<vmem>>) attributes {dimension_semantics = [#tpu.dimension_semantics<parallel>], iteration_bounds = array<i64: 1>, scalar_prefetch = 0 : i64, scratch_operands = 0 : i64, tpu.core_type = #tpu.core_type<tc>, window_params = [{transform_indices = @transform_0, window_bounds = array<i64: 2, 8, 768>}, {pipeline_mode = #tpu.pipeline_mode<synchronous>, transform_indices = @transform_1, window_bounds = array<i64: 256, 768>}, {pipeline_mode = #tpu.pipeline_mode<synchronous>, transform_indices = @transform_2, window_bounds = array<i64: 1, 768>}, {transform_indices = @transform_3, window_bounds = array<i64: 2, 8, 256>}]} {
    %cst = arith.constant 0.000000e+00 : f32
    %0 = vector.broadcast %cst : f32 to vector<8x256xf32>
    %c0_i32 = arith.constant 0 : i32
    %c2_i32 = arith.constant 2 : i32
    %1 = arith.addi %c0_i32, %c2_i32 : i32
    %c1_i32 = arith.constant 1 : i32
    %2 = scf.for %arg5 = %c0_i32 to %1 step %c1_i32 iter_args(%arg6 = %0) -> (vector<8x256xf32>)  : i32 {
      %3 = arith.truncf %arg6 : vector<8x256xf32> to vector<8x256xbf16>
      %c0 = arith.constant 0 : index
      %c0_1 = arith.constant 0 : index
      %4 = vector.load %arg2[%c0, %c0_1] : memref<256x768xbf16, #tpu.memory_space<vmem>>, vector<256x768xbf16>
      %cst_2 = arith.constant dense<0.000000e+00> : vector<8x768xf32>
      %5 = tpu.matmul %3, %4, %cst_2 {dimension_numbers = #tpu.dot_dimension_numbers<[1], [0], [0], [1], [0, 0, 1, 1], [], []>} : vector<8x256xbf16>, vector<256x768xbf16>, vector<8x768xf32> -> vector<8x768xf32>
      %c0_3 = arith.constant 0 : index
      %c0_4 = arith.constant 0 : index
      %6 = vector.load %arg3[%c0_3, %c0_4] : memref<1x768xf32, #tpu.memory_space<vmem>>, vector<1x768xf32>
      %7 = vector.broadcast %6 : vector<1x768xf32> to vector<8x768xf32>
      %8 = arith.addf %5, %7 : vector<8x768xf32>
      %9 = arith.index_cast %arg5 : i32 to index
      %c0_5 = arith.constant 0 : index
      %c0_6 = arith.constant 0 : index
      %10 = vector.load %arg1[%9, %c0_5, %c0_6] : memref<2x8x768xbf16, #tpu.memory_space<vmem>>, vector<1x8x768xbf16>
      %11 = vector.shape_cast %10 : vector<1x8x768xbf16> to vector<8x768xbf16>
      %12 = arith.extf %11 : vector<8x768xbf16> to vector<8x768xf32>
      %c1_i32_7 = arith.constant 1 : i32
      %13 = arith.subi %c1_i32_7, %arg5 : i32
      %14 = arith.index_cast %13 : i32 to index
      %c0_8 = arith.constant 0 : index
      %c0_9 = arith.constant 0 : index
      %15 = vector.load %arg1[%14, %c0_8, %c0_9] : memref<2x8x768xbf16, #tpu.memory_space<vmem>>, vector<1x8x768xbf16>
      %16 = vector.shape_cast %15 : vector<1x8x768xbf16> to vector<8x768xbf16>
      %17 = arith.extf %16 : vector<8x768xbf16> to vector<8x768xf32>
      %18 = vector.extract_strided_slice %12 {offsets = [0, 0], sizes = [8, 384], strides = [1, 1]} : vector<8x768xf32> to vector<8x384xf32>
      %19 = vector.extract_strided_slice %8 {offsets = [0, 0], sizes = [8, 384], strides = [1, 1]} : vector<8x768xf32> to vector<8x384xf32>
      %20 = vector.extract_strided_slice %arg6 {offsets = [0, 0], sizes = [8, 128], strides = [1, 1]} : vector<8x256xf32> to vector<8x128xf32>
      %21 = vector.extract_strided_slice %18 {offsets = [0, 0], sizes = [8, 128], strides = [1, 1]} : vector<8x384xf32> to vector<8x128xf32>
      %22 = vector.extract_strided_slice %19 {offsets = [0, 0], sizes = [8, 128], strides = [1, 1]} : vector<8x384xf32> to vector<8x128xf32>
      %23 = arith.addf %21, %22 : vector<8x128xf32>
      %24 = arith.negf %23 : vector<8x128xf32>
      %25 = math.exp %24 : vector<8x128xf32>
      %cst_10 = arith.constant 1.000000e+00 : f32
      %26 = vector.broadcast %cst_10 : f32 to vector<8x128xf32>
      %27 = arith.addf %26, %25 : vector<8x128xf32>
      %28 = arith.divf %26, %27 : vector<8x128xf32>
      %29 = vector.extract_strided_slice %18 {offsets = [0, 128], sizes = [8, 128], strides = [1, 1]} : vector<8x384xf32> to vector<8x128xf32>
      %30 = vector.extract_strided_slice %19 {offsets = [0, 128], sizes = [8, 128], strides = [1, 1]} : vector<8x384xf32> to vector<8x128xf32>
      %31 = arith.addf %29, %30 : vector<8x128xf32>
      %32 = arith.negf %31 : vector<8x128xf32>
      %33 = math.exp %32 : vector<8x128xf32>
      %cst_11 = arith.constant 1.000000e+00 : f32
      %34 = vector.broadcast %cst_11 : f32 to vector<8x128xf32>
      %35 = arith.addf %34, %33 : vector<8x128xf32>
      %36 = arith.divf %34, %35 : vector<8x128xf32>
      %37 = vector.extract_strided_slice %18 {offsets = [0, 256], sizes = [8, 128], strides = [1, 1]} : vector<8x384xf32> to vector<8x128xf32>
      %38 = vector.extract_strided_slice %19 {offsets = [0, 256], sizes = [8, 128], strides = [1, 1]} : vector<8x384xf32> to vector<8x128xf32>
      %39 = arith.mulf %28, %38 : vector<8x128xf32>
      %40 = arith.addf %37, %39 : vector<8x128xf32>
      %41 = math.tanh %40 : vector<8x128xf32>
      %cst_12 = arith.constant 1.000000e+00 : f32
      %42 = vector.broadcast %cst_12 : f32 to vector<8x128xf32>
      %43 = arith.subf %42, %36 : vector<8x128xf32>
      %44 = arith.mulf %43, %41 : vector<8x128xf32>
      %45 = arith.mulf %36, %20 : vector<8x128xf32>
      %46 = arith.addf %44, %45 : vector<8x128xf32>
      %47 = vector.extract_strided_slice %17 {offsets = [0, 384], sizes = [8, 384], strides = [1, 1]} : vector<8x768xf32> to vector<8x384xf32>
      %48 = vector.extract_strided_slice %8 {offsets = [0, 384], sizes = [8, 384], strides = [1, 1]} : vector<8x768xf32> to vector<8x384xf32>
      %49 = vector.extract_strided_slice %arg6 {offsets = [0, 128], sizes = [8, 128], strides = [1, 1]} : vector<8x256xf32> to vector<8x128xf32>
      %50 = vector.extract_strided_slice %47 {offsets = [0, 0], sizes = [8, 128], strides = [1, 1]} : vector<8x384xf32> to vector<8x128xf32>
      %51 = vector.extract_strided_slice %48 {offsets = [0, 0], sizes = [8, 128], strides = [1, 1]} : vector<8x384xf32> to vector<8x128xf32>
      %52 = arith.addf %50, %51 : vector<8x128xf32>
      %53 = arith.negf %52 : vector<8x128xf32>
      %54 = math.exp %53 : vector<8x128xf32>
      %cst_13 = arith.constant 1.000000e+00 : f32
      %55 = vector.broadcast %cst_13 : f32 to vector<8x128xf32>
      %56 = arith.addf %55, %54 : vector<8x128xf32>
      %57 = arith.divf %55, %56 : vector<8x128xf32>
      %58 = vector.extract_strided_slice %47 {offsets = [0, 128], sizes = [8, 128], strides = [1, 1]} : vector<8x384xf32> to vector<8x128xf32>
      %59 = vector.extract_strided_slice %48 {offsets = [0, 128], sizes = [8, 128], strides = [1, 1]} : vector<8x384xf32> to vector<8x128xf32>
      %60 = arith.addf %58, %59 : vector<8x128xf32>
      %61 = arith.negf %60 : vector<8x128xf32>
      %62 = math.exp %61 : vector<8x128xf32>
      %cst_14 = arith.constant 1.000000e+00 : f32
      %63 = vector.broadcast %cst_14 : f32 to vector<8x128xf32>
      %64 = arith.addf %63, %62 : vector<8x128xf32>
      %65 = arith.divf %63, %64 : vector<8x128xf32>
      %66 = vector.extract_strided_slice %47 {offsets = [0, 256], sizes = [8, 128], strides = [1, 1]} : vector<8x384xf32> to vector<8x128xf32>
      %67 = vector.extract_strided_slice %48 {offsets = [0, 256], sizes = [8, 128], strides = [1, 1]} : vector<8x384xf32> to vector<8x128xf32>
      %68 = arith.mulf %57, %67 : vector<8x128xf32>
      %69 = arith.addf %66, %68 : vector<8x128xf32>
      %70 = math.tanh %69 : vector<8x128xf32>
      %cst_15 = arith.constant 1.000000e+00 : f32
      %71 = vector.broadcast %cst_15 : f32 to vector<8x128xf32>
      %72 = arith.subf %71, %65 : vector<8x128xf32>
      %73 = arith.mulf %72, %70 : vector<8x128xf32>
      %74 = arith.mulf %65, %49 : vector<8x128xf32>
      %75 = arith.addf %73, %74 : vector<8x128xf32>
      %76 = arith.index_cast %arg5 : i32 to index
      %c0_16 = arith.constant 0 : index
      %c0_17 = arith.constant 0 : index
      %77 = vector.load %arg4[%76, %c0_16, %c0_17] : memref<2x8x256xf32, #tpu.memory_space<vmem>>, vector<1x8x128xf32>
      %78 = vector.shape_cast %77 : vector<1x8x128xf32> to vector<8x128xf32>
      %79 = vector.shape_cast %46 : vector<8x128xf32> to vector<1x8x128xf32>
      tpu.vector_store %arg4[%76, %c0_16, %c0_17], %79 {strides = array<i32>} : memref<2x8x256xf32, #tpu.memory_space<vmem>>, vector<1x8x128xf32>,
      %c1_i32_18 = arith.constant 1 : i32
      %80 = arith.subi %c1_i32_18, %arg5 : i32
      %81 = arith.index_cast %80 : i32 to index
      %c0_19 = arith.constant 0 : index
      %c128 = arith.constant 128 : index
      %82 = vector.load %arg4[%81, %c0_19, %c128] : memref<2x8x256xf32, #tpu.memory_space<vmem>>, vector<1x8x128xf32>
      %83 = vector.shape_cast %82 : vector<1x8x128xf32> to vector<8x128xf32>
      %84 = vector.shape_cast %75 : vector<8x128xf32> to vector<1x8x128xf32>
      tpu.vector_store %arg4[%81, %c0_19, %c128], %84 {strides = array<i32>} : memref<2x8x256xf32, #tpu.memory_space<vmem>>, vector<1x8x128xf32>,
      %85 = tpu.concatenate %46, %75 in 1 : vector<8x128xf32>, vector<8x128xf32> -> vector<8x256xf32>
      scf.yield %85 : vector<8x256xf32>
    }
    %c2_i32_0 = arith.constant 2 : i32
    return
  }
  func.func @transform_0(%arg0: i32) -> (i32, i32, i32) {
    %c0_i32 = arith.constant 0 : i32
    %c0_i32_0 = arith.constant 0 : i32
    %c0_i32_1 = arith.constant 0 : i32
    return %c0_i32, %arg0, %c0_i32_0 : i32, i32, i32
  }
  func.func @transform_1(%arg0: i32) -> (i32, i32) {
    %c0_i32 = arith.constant 0 : i32
    %c0_i32_0 = arith.constant 0 : i32
    %c0_i32_1 = arith.constant 0 : i32
    return %c0_i32, %c0_i32_0 : i32, i32
  }
  func.func @transform_2(%arg0: i32) -> (i32, i32) {
    %c0_i32 = arith.constant 0 : i32
    %c0_i32_0 = arith.constant 0 : i32
    %c0_i32_1 = arith.constant 0 : i32
    return %c0_i32, %c0_i32_0 : i32, i32
  }
  func.func @transform_3(%arg0: i32) -> (i32, i32, i32) {
    %c0_i32 = arith.constant 0 : i32
    %c0_i32_0 = arith.constant 0 : i32
    %c0_i32_1 = arith.constant 0 : i32
    return %c0_i32, %arg0, %c0_i32_0 : i32, i32, i32
  }
}

</mosaic_0001>

<llo_original>
// kernel: encoder_forward.5
$region0: #{encoder_forward.5}
  #allocation0 [shape = 'u32[]', space=smem, size = 0x4, offset = 0x4, fixed_abs, tag = 'smem constant byte address 0x4 - core index']
  #allocation1 [shape = 'u32[144,128]{1,0:T(1,128)}', space=vmem, size = 0x12000, scoped, tag = 'internal scratch']
  %s0 = inlined_call_operand.vmem [shape: f32[2,23,4], index: 0, kind: input, shape index: {}]
  %s1 = inlined_call_operand.hbm [shape: bf16[64,2048], index: 1, kind: input, shape index: {}]
  %s2 = inlined_call_operand.hbm [shape: f32[1,2048], index: 2, kind: input, shape index: {}]
  %s3 = inlined_call_operand.vmem [shape: bf16[2,8,2048], index: 3, kind: output, shape index: {0}]
  %s4 = inlined_call_operand.vmem [shape: f32[2,1,2048], index: 4, kind: output, shape index: {1}]
  %s5 = inlined_call_operand.vmem [shape: f32[2,1,2048], index: 5, kind: output, shape index: {2}]
  %6 = xla_tuple %s3, %s4, %s5
  %s7 = sld [smem:[#allocation0]]
  $region73: #{encoder_forward.5} parent=0
    _
  %s9 = ssub.s32 1, %s7
  %s10 = scalar_select 0, %s9, %s7
  $region1: #{encoder_forward.5} parent=0
    #allocation2 [shape = 'u8[262144]{0}', space=vmem, size = 0x40000, scoped, tag = 'input window, operand 1, single buffered']
    #allocation3 [shape = 's32[2]{0}', space=sflag, size = 0x8, scoped, tag = 'scoped memory for encoder_forward.5']
    #allocation4 [shape = 'u8[8192]{0}', space=vmem, size = 0x2000, scoped, tag = 'input window, operand 2, single buffered']
    #allocation5 [shape = 's32[1]{0}', space=sflag, size = 0x4, scoped, tag = 'scoped memory for encoder_forward.5']
    %11 = vsyncpa [#allocation3], 0
    %12 = vsyncpa [#allocation5], 0
    loop: start=0, step=1, limit=4
    $region2: #{encoder_forward.5} parent=1 // loop_pre_header
      _
    $region3: #{encoder_forward.5} parent=1 // loop_header
      %s14 = sphi 0, %s18
      %p15 = scmp.ge.s32.totalorder %s14, 4
      %s21 = sphi 0, %s33
      %s22 = sphi 0, %s29
      %s23 = sphi 0, %s21
      %s24 = sphi 0, %s22
      %s25 = sphi 0, %s23
      %s26 = sphi 0, %s24
      %s36 = sphi 0, %s38
      %s39 = sphi 0, %s36
      %s40 = sphi 0, %s39
      %s56 = sphi 0, %s40
      %s60 = sphi 0, %s60
      %s62 = sphi 0, %s60
      %s63 = sphi 0, %s62
      %s77 = sphi 0, %s63
      %s81 = sphi 0, %s81
      %s83 = sphi 0, %s81
      %s84 = sphi 0, %s83
      %s98 = sphi 0, %s84
      %s106 = sphi 0, %s108
      %s109 = sphi 0, %s106
      %s110 = sphi 0, %s109
      %s126 = sphi 0, %s110
      %s132 = sphi 0, %s134
      %s135 = sphi 0, %s132
      %s136 = sphi 0, %s135
      %s152 = sphi 0, %s136
      %s158 = sphi 0, %s160
      %s161 = sphi 0, %s158
      %s162 = sphi 0, %s161
      %s178 = sphi 0, %s162
    $region4: #{encoder_forward.5} parent=1 // loop_header_branch
      %17 = sbr.rel (%p15) target = $region8
    $region5: #{encoder_forward.5} parent=1 // loop_body
      %s19 = ssub.s32 %s14, 1
      %s20 = ssub.s32 %s14, 2
      %s27 = sadd.s32 1, %s22
      %p28 = scmp.ge.s32.totalorder %s27, 1
      %s29 = scalar_select %p28, 0, %s27
      %s30 = sadd.s32 1, %s21
      %s31 = scalar_select %p28, %s30, %s21
      %p32 = scmp.ge.s32.totalorder %s31, 2
      %s33 = scalar_select %p32, 0, %s31
      %s34 = ssub.s32 %s21, %s33
      %p35 = scmp.eq.s32.totalorder %s34, 0
      %s37 = sadd.s32 %s36, 1
      %s38 = scalar_select %p35, %s36, %s37
      %p41 = pneg %p35
      %p42 = scmp.eq.s32.totalorder %s14, 1
      %p43 = por %p41, %p42
      %p44 = scmp.ne.s32.totalorder %s36, %s39
      %p45 = scmp.eq.s32.totalorder %s14, 0
      %p46 = por %p44, %p45
      %p47 = scmp.ne.s32.totalorder %s36, %s39
      %p48 = scmp.eq.s32.totalorder %s19, 1
      %p49 = por %p47, %p48
      %p50 = scmp.ne.s32.totalorder %s39, %s40
      %p51 = scmp.eq.s32.totalorder %s19, 0
      %p52 = por %p50, %p51
      %p53 = scmp.ne.s32.totalorder %s39, %s40
      %p54 = scmp.eq.s32.totalorder %s20, 1
      %p55 = por %p53, %p54
      %p57 = scmp.ne.s32.totalorder %s40, %s56
      %p58 = scmp.eq.s32.totalorder %s20, 0
      %p59 = por %p57, %p58
      %s61 = sadd.s32 %s60, 1
      %p64 = scmp.eq.s32.totalorder %s14, 1
      %p65 = scmp.ne.s32.totalorder %s60, %s62
      %p66 = scmp.eq.s32.totalorder %s14, 0
      %p67 = por %p65, %p66
      %p68 = scmp.ne.s32.totalorder %s60, %s62
      %p69 = scmp.eq.s32.totalorder %s19, 1
      %p70 = por %p68, %p69
      %p71 = scmp.ne.s32.totalorder %s62, %s63
      %p72 = scmp.eq.s32.totalorder %s19, 0
      %p73 = por %p71, %p72
      %p74 = scmp.ne.s32.totalorder %s62, %s63
      %p75 = scmp.eq.s32.totalorder %s20, 1
      %p76 = por %p74, %p75
      %p78 = scmp.ne.s32.totalorder %s63, %s77
      %p79 = scmp.eq.s32.totalorder %s20, 0
      %p80 = por %p78, %p79
      %s82 = sadd.s32 %s81, 1
      %p85 = scmp.eq.s32.totalorder %s14, 1
      %p86 = scmp.ne.s32.totalorder %s81, %s83
      %p87 = scmp.eq.s32.totalorder %s14, 0
      %p88 = por %p86, %p87
      %p89 = scmp.ne.s32.totalorder %s81, %s83
      %p90 = scmp.eq.s32.totalorder %s19, 1
      %p91 = por %p89, %p90
      %p92 = scmp.ne.s32.totalorder %s83, %s84
      %p93 = scmp.eq.s32.totalorder %s19, 0
      %p94 = por %p92, %p93
      %p95 = scmp.ne.s32.totalorder %s83, %s84
      %p96 = scmp.eq.s32.totalorder %s20, 1
      %p97 = por %p95, %p96
      %p99 = scmp.ne.s32.totalorder %s84, %s98
      %p100 = scmp.eq.s32.totalorder %s20, 0
      %p101 = por %p99, %p100
      %s102 = ssub.s32 %s21, %s33
      %s103 = ssub.s32 %s22, %s29
      %s104 = sor.u32 %s102, %s103
      %p105 = scmp.eq.s32.totalorder %s104, 0
      %s107 = sadd.s32 %s106, 1
      %s108 = scalar_select %p105, %s106, %s107
      %p111 = pneg %p105
      %p112 = scmp.eq.s32.totalorder %s14, 1
      %p113 = por %p111, %p112
      %p114 = scmp.ne.s32.totalorder %s106, %s109
      %p115 = scmp.eq.s32.totalorder %s14, 0
      %p116 = por %p114, %p115
      %p117 = scmp.ne.s32.totalorder %s106, %s109
      %p118 = scmp.eq.s32.totalorder %s19, 1
      %p119 = por %p117, %p118
      %p120 = scmp.ne.s32.totalorder %s109, %s110
      %p121 = scmp.eq.s32.totalorder %s19, 0
      %p122 = por %p120, %p121
      %p123 = scmp.ne.s32.totalorder %s109, %s110
      %p124 = scmp.eq.s32.totalorder %s20, 1
      %p125 = por %p123, %p124
      %p127 = scmp.ne.s32.totalorder %s110, %s126
      %p128 = scmp.eq.s32.totalorder %s20, 0
      %p129 = por %p127, %p128
      %s130 = ssub.s32 %s21, %s33
      %p131 = scmp.eq.s32.totalorder %s130, 0
      %s133 = sadd.s32 %s132, 1
      %s134 = scalar_select %p131, %s132, %s133
      %p137 = pneg %p131
      %p138 = scmp.eq.s32.totalorder %s14, 1
      %p139 = por %p137, %p138
      %p140 = scmp.ne.s32.totalorder %s132, %s135
      %p141 = scmp.eq.s32.totalorder %s14, 0
      %p142 = por %p140, %p141
      %p143 = scmp.ne.s32.totalorder %s132, %s135
      %p144 = scmp.eq.s32.totalorder %s19, 1
      %p145 = por %p143, %p144
      %p146 = scmp.ne.s32.totalorder %s135, %s136
      %p147 = scmp.eq.s32.totalorder %s19, 0
      %p148 = por %p146, %p147
      %p149 = scmp.ne.s32.totalorder %s135, %s136
      %p150 = scmp.eq.s32.totalorder %s20, 1
      %p151 = por %p149, %p150
      %p153 = scmp.ne.s32.totalorder %s136, %s152
      %p154 = scmp.eq.s32.totalorder %s20, 0
      %p155 = por %p153, %p154
      %s156 = ssub.s32 %s21, %s33
      %p157 = scmp.eq.s32.totalorder %s156, 0
      %s159 = sadd.s32 %s158, 1
      %s160 = scalar_select %p157, %s158, %s159
      %p163 = pneg %p157
      %p164 = scmp.eq.s32.totalorder %s14, 1
      %p165 = por %p163, %p164
      %p166 = scmp.ne.s32.totalorder %s158, %s161
      %p167 = scmp.eq.s32.totalorder %s14, 0
      %p168 = por %p166, %p167
      %p169 = scmp.ne.s32.totalorder %s158, %s161
      %p170 = scmp.eq.s32.totalorder %s19, 1
      %p171 = por %p169, %p170
      %p172 = scmp.ne.s32.totalorder %s161, %s162
      %p173 = scmp.eq.s32.totalorder %s19, 0
      %p174 = por %p172, %p173
      %p175 = scmp.ne.s32.totalorder %s161, %s162
      %p176 = scmp.eq.s32.totalorder %s20, 1
      %p177 = por %p175, %p176
      %p179 = scmp.ne.s32.totalorder %s162, %s178
      %p180 = scmp.eq.s32.totalorder %s20, 0
      %p181 = por %p179, %p180
      %p182 = scmp.le.s32.totalorder 1, %s14
      %p183 = scmp.lt.s32.totalorder %s14, 3
      %p184 = pnand %p182, %p183
      %p185 = pneg %p184
      // Predicated region
      $region9: #{encoder_forward.5} parent=5 // pred_check
        _
      $region10: #{encoder_forward.5} parent=5 // pred_check_branch
        %187 = sbr.rel (%p184) target = $region12
      $region11: #{encoder_forward.5} parent=5 // pred_region
        %s188 = ssub.s32 %s14, 1
        // Predicated region
        $region13: #{encoder_forward.5} parent=11 // pred_check
          %p189 = pneg %p73
        $region14: #{encoder_forward.5} parent=11 // pred_check_branch
          %191 = sbr.rel (%p189) target = $region16
        $region15: #{encoder_forward.5} parent=11 // pred_region
          %s193 = ssub.s32 8192, 8192
          %194 = vsyncadd [#allocation3], %s193
          %s195 = sshll.u32 [#allocation2], 4
          %s196 = int_to_ptr.vmem [resolvable:$true] %s195
          %201 = dma.hbm_to_vmem [thread:$0]  %s1, 8192, %s196, [#allocation3], 1024, 1024, 64
        $region16: #{encoder_forward.5} parent=11 // pred_fallthru
          _
        // Predicated region
        $region17: #{encoder_forward.5} parent=11 // pred_check
          %p202 = pneg %p94
        $region18: #{encoder_forward.5} parent=11 // pred_check_branch
          %204 = sbr.rel (%p202) target = $region20
        $region19: #{encoder_forward.5} parent=11 // pred_region
          %s206 = ssub.s32 256, 256
          %207 = vsyncadd [#allocation5], %s206
          %s209 = sshll.u32 [#allocation4], 4
          %s210 = int_to_ptr.vmem [resolvable:$true] %s209
          %212 = dma.hbm_to_vmem [thread:$0]  %s2, 256, %s210, [#allocation5]
        $region20: #{encoder_forward.5} parent=11 // pred_fallthru
          _
      $region12: #{encoder_forward.5} parent=5 // pred_fallthru
        _
      %p213 = scmp.lt.s32.totalorder %s14, 2
      // Predicated region
      $region21: #{encoder_forward.5} parent=5 // pred_check
        %p214 = pneg %p213
      $region22: #{encoder_forward.5} parent=5 // pred_check_branch
        %216 = sbr.rel (%p214) target = $region24
      $region23: #{encoder_forward.5} parent=5 // pred_region
        // Predicated region
        $region25: #{encoder_forward.5} parent=23 // pred_check
          %p217 = pneg %p46
        $region26: #{encoder_forward.5} parent=23 // pred_check_branch
          %219 = sbr.rel (%p217) target = $region28
        $region27: #{encoder_forward.5} parent=23 // pred_region
          %p220 = scmp.lt.s32.totalorder %s21, 1
          %s221 = scalar_select %p220, %s21, 1
          %s222 = smul.addr %s221, 3
          %s223 = smul.addr %s222, 8
          %s224 = scalar_lea.vmem %s0, %s223
        $region28: #{encoder_forward.5} parent=23 // pred_fallthru
          _
      $region24: #{encoder_forward.5} parent=5 // pred_fallthru
        _
      %p225 = scmp.le.s32.totalorder 1, %s14
      %p226 = scmp.lt.s32.totalorder %s14, 3
      %p227 = pnand %p225, %p226
      %p228 = pneg %p227
      // Predicated region
      $region29: #{encoder_forward.5} parent=5 // pred_check
        _
      $region30: #{encoder_forward.5} parent=5 // pred_check_branch
        %230 = sbr.rel (%p227) target = $region32
      $region31: #{encoder_forward.5} parent=5 // pred_region
        %s231 = ssub.s32 %s14, 1
        // Predicated region
        $region33: #{encoder_forward.5} parent=31 // pred_check
          %p232 = pneg %p73
        $region34: #{encoder_forward.5} parent=31 // pred_check_branch
          %234 = sbr.rel (%p232) target = $region36
        $region35: #{encoder_forward.5} parent=31 // pred_region
          %235 = dma.done [#allocation3], 8192
        $region36: #{encoder_forward.5} parent=31 // pred_fallthru
          _
        // Predicated region
        $region37: #{encoder_forward.5} parent=31 // pred_check
          %p236 = pneg %p94
        $region38: #{encoder_forward.5} parent=31 // pred_check_branch
          %238 = sbr.rel (%p236) target = $region40
        $region39: #{encoder_forward.5} parent=31 // pred_region
          %239 = dma.done [#allocation5], 256
        $region40: #{encoder_forward.5} parent=31 // pred_fallthru
          _
        %p240 = scmp.lt.s32.totalorder %s23, 1
        %s241 = scalar_select %p240, %s23, 1
        %s242 = smul.addr %s241, 3
        %s243 = smul.addr %s242, 8
        %s244 = scalar_lea.vmem %s0, %s243
        %p245 = pneg %p52
        %p246 = pneg %p49
        %p247 = pneg %p73
        %p248 = pneg %p70
        %p249 = pneg %p94
        %p250 = pneg %p91
        %p251 = pneg %p122
        %p252 = pneg %p119
        %p253 = scmp.lt.s32.totalorder %s23, 1
        %s254 = scalar_select %p253, %s23, 1
        %p255 = scmp.lt.s32.totalorder %s24, 0
        %s256 = scalar_select %p255, %s24, 0
        %s257 = smul.addr %s256, 16
        %s258 = smul.addr %s254, 16
        %s259 = sadd.s32 %s257, %s258
        %s260 = smul.addr %s259, 4
        %s261 = scalar_lea.vmem %s3, %s260
        %p262 = pneg %p148
        %p263 = pneg %p145
        %p264 = scmp.lt.s32.totalorder %s23, 1
        %s265 = scalar_select %p264, %s23, 1
        %s266 = smul.addr %s265, 16
        %s267 = scalar_lea.vmem %s4, %s266
        %p268 = pneg %p174
        %p269 = pneg %p171
        %p270 = scmp.lt.s32.totalorder %s23, 1
        %s271 = scalar_select %p270, %s23, 1
        %s272 = smul.addr %s271, 16
        %s273 = scalar_lea.vmem %s5, %s272
        %p274 = scmp.lt.s32.totalorder %s23, 1
        %s275 = scalar_select %p274, %s23, 1
        %s276 = smul.addr %s275, 3
        %s277 = smul.addr %s276, 8
        %s278 = scalar_lea.vmem %s0, %s277
        %p279 = scmp.lt.s32.totalorder %s23, 1
        %s280 = scalar_select %p279, %s23, 1
        %p281 = scmp.lt.s32.totalorder %s24, 0
        %s282 = scalar_select %p281, %s24, 0
        %s283 = smul.addr %s282, 16
        %s284 = smul.addr %s280, 16
        %s285 = sadd.s32 %s283, %s284
        %s286 = smul.addr %s285, 4
        %s287 = scalar_lea.vmem %s3, %s286
        %p288 = scmp.lt.s32.totalorder %s23, 1
        %s289 = scalar_select %p288, %s23, 1
        %s290 = smul.addr %s289, 16
        %s291 = scalar_lea.vmem %s4, %s290
        %p292 = scmp.lt.s32.totalorder %s23, 1
        %s293 = scalar_select %p292, %s23, 1
        %s294 = smul.addr %s293, 16
        %s295 = scalar_lea.vmem %s5, %s294
        %p297 = scmp.eq.s32.totalorder %s24, 0
        // Predicated region
        $region41: #{encoder_forward.5} parent=31 // pred_check
          %p298 = pneg %p297
        $region42: #{encoder_forward.5} parent=31 // pred_check_branch
          %300 = sbr.rel (%p298) target = $region44
        $region43: #{encoder_forward.5} parent=31 // pred_region
          %301 = vst [vmem:[%s291] sm:$0xff] 0.0
          %302 = vst [vmem:[%s291 + $0x8] sm:$0xff] 0.0
          %303 = vst [vmem:[%s295] sm:$0xff] 0.0
          %304 = vst [vmem:[%s295 + $0x8] sm:$0xff] 0.0
        $region44: #{encoder_forward.5} parent=31 // pred_fallthru
          _
        %s305 = smul.u32 %s24, 8
        %s306 = scalar_lea.vmem %s278, %s305
        %v307 = vld [vmem:[%s306] sm:$0xff]
        %v308 = vld [vmem:[%s306 + $0x8] sm:$0xff]
        %v309 = vld [vmem:[%s306 + $0x10] sm:$0x7f]
        %vm312 = vcmask 1046528
        %v313 = vrot.slane %v307, 1
        %v314 = vrot.slane %v308, 1
        %v315 = vsel %vm312, %v313, %v314
        %316 = vrot.lane.b32.xlu0 %v315, 4
        %v317 = vpop.permute.xlu0 %316
        %vm319 = vcmask 1045504
        %v320 = vrot.slane %v307, 2
        %v321 = vrot.slane %v308, 2
        %v322 = vsel %vm319, %v320, %v321
        %323 = vrot.lane.b32.xlu0 %v322, 8
        %v324 = vpop.permute.xlu0 %323
        %vm326 = vcmask 1044480
        %v327 = vrot.slane %v307, 3
        %v328 = vrot.slane %v308, 3
        %v329 = vsel %vm326, %v327, %v328
        %330 = vrot.lane.b32.xlu0 %v329, 12
        %v331 = vpop.permute.xlu0 %330
        %vm333 = vcmask 1043456
        %v334 = vrot.slane %v307, 4
        %v335 = vrot.slane %v308, 4
        %v336 = vsel %vm333, %v334, %v335
        %337 = vrot.lane.b32.xlu0 %v336, 16
        %v338 = vpop.permute.xlu0 %337
        %vm340 = vcmask 1042432
        %v341 = vrot.slane %v307, 5
        %v342 = vrot.slane %v308, 5
        %v343 = vsel %vm340, %v341, %v342
        %344 = vrot.lane.b32.xlu0 %v343, 20
        %v345 = vpop.permute.xlu0 %344
        %vm347 = vcmask 1041408
        %v348 = vrot.slane %v307, 6
        %v349 = vrot.slane %v308, 6
        %v350 = vsel %vm347, %v348, %v349
        %351 = vrot.lane.b32.xlu0 %v350, 24
        %v352 = vpop.permute.xlu0 %351
        %vm354 = vcmask 1040384
        %v355 = vrot.slane %v307, 7
        %v356 = vrot.slane %v308, 7
        %v357 = vsel %vm354, %v355, %v356
        %358 = vrot.lane.b32.xlu0 %v357, 28
        %v359 = vpop.permute.xlu0 %358
        %361 = vrot.lane.b32.xlu0 %v308, 32
        %v362 = vpop.permute.xlu0 %361
        %v365 = vrot.slane %v309, 1
        %v366 = vsel %vm312, %v314, %v365
        %367 = vrot.lane.b32.xlu0 %v366, 36
        %v368 = vpop.permute.xlu0 %367
        %v370 = vrot.slane %v309, 2
        %v371 = vsel %vm319, %v321, %v370
        %372 = vrot.lane.b32.xlu0 %v371, 40
        %v373 = vpop.permute.xlu0 %372
        %v375 = vrot.slane %v309, 3
        %v376 = vsel %vm326, %v328, %v375
        %377 = vrot.lane.b32.xlu0 %v376, 44
        %v378 = vpop.permute.xlu0 %377
        %v380 = vrot.slane %v309, 4
        %v381 = vsel %vm333, %v335, %v380
        %382 = vrot.lane.b32.xlu0 %v381, 48
        %v383 = vpop.permute.xlu0 %382
        %v385 = vrot.slane %v309, 5
        %v386 = vsel %vm340, %v342, %v385
        %387 = vrot.lane.b32.xlu0 %v386, 52
        %v388 = vpop.permute.xlu0 %387
        %v390 = vrot.slane %v309, 6
        %v391 = vsel %vm347, %v349, %v390
        %392 = vrot.lane.b32.xlu0 %v391, 56
        %v393 = vpop.permute.xlu0 %392
        %v395 = vrot.slane %v309, 7
        %v396 = vsel %vm354, %v356, %v395
        %397 = vrot.lane.b32.xlu0 %v396, 60
        %v398 = vpop.permute.xlu0 %397
        %vm400 = vcmask 31744
        %v401 = vsel %vm400, %v307, %v317
        %vm402 = vcmask 64512
        %v403 = vsel %vm402, %v401, %v324
        %vm404 = vcmask 97280
        %v405 = vsel %vm404, %v403, %v331
        %vm406 = vcmask 130048
        %v407 = vsel %vm406, %v405, %v338
        %vm408 = vcmask 162816
        %v409 = vsel %vm408, %v407, %v345
        %vm410 = vcmask 195584
        %v411 = vsel %vm410, %v409, %v352
        %vm412 = vcmask 228352
        %v413 = vsel %vm412, %v411, %v359
        %vm414 = vcmask 261120
        %v415 = vsel %vm414, %v413, %v362
        %vm416 = vcmask 293888
        %v417 = vsel %vm416, %v415, %v368
        %vm418 = vcmask 326656
        %v419 = vsel %vm418, %v417, %v373
        %vm420 = vcmask 359424
        %v421 = vsel %vm420, %v419, %v378
        %vm422 = vcmask 392192
        %v423 = vsel %vm422, %v421, %v383
        %vm424 = vcmask 424960
        %v425 = vsel %vm424, %v423, %v388
        %vm426 = vcmask 457728
        %v427 = vsel %vm426, %v425, %v393
        %vm428 = vcmask 490496
        %v429 = vsel %vm428, %v427, %v398
        %v430 = vpack.c.bf16 %v429, %v429
        %v431 = vld [vmem:[#allocation2] sm:$0xff]
        %v432 = vld [vmem:[#allocation2 + $0x8] sm:$0xff]
        %v433 = vld [vmem:[#allocation2 + $0x10] sm:$0xff]
        %v434 = vld [vmem:[#allocation2 + $0x18] sm:$0xff]
        %v435 = vld [vmem:[#allocation2 + $0x20] sm:$0xff]
        %v436 = vld [vmem:[#allocation2 + $0x28] sm:$0xff]
        %v437 = vld [vmem:[#allocation2 + $0x30] sm:$0xff]
        %v438 = vld [vmem:[#allocation2 + $0x38] sm:$0xff]
        %v439 = vld [vmem:[#allocation2 + $0x40] sm:$0xff]
        %v440 = vld [vmem:[#allocation2 + $0x48] sm:$0xff]
        %v441 = vld [vmem:[#allocation2 + $0x50] sm:$0xff]
        %v442 = vld [vmem:[#allocation2 + $0x58] sm:$0xff]
        %v443 = vld [vmem:[#allocation2 + $0x60] sm:$0xff]
        %v444 = vld [vmem:[#allocation2 + $0x68] sm:$0xff]
        %v445 = vld [vmem:[#allocation2 + $0x70] sm:$0xff]
        %v446 = vld [vmem:[#allocation2 + $0x78] sm:$0xff]
        %v447 = vld [vmem:[#allocation2 + $0x80] sm:$0xff]
        %v448 = vld [vmem:[#allocation2 + $0x88] sm:$0xff]
        %v449 = vld [vmem:[#allocation2 + $0x90] sm:$0xff]
        %v450 = vld [vmem:[#allocation2 + $0x98] sm:$0xff]
        %v451 = vld [vmem:[#allocation2 + $0xa0] sm:$0xff]
        %v452 = vld [vmem:[#allocation2 + $0xa8] sm:$0xff]
        %v453 = vld [vmem:[#allocation2 + $0xb0] sm:$0xff]
        %v454 = vld [vmem:[#allocation2 + $0xb8] sm:$0xff]
        %v455 = vld [vmem:[#allocation2 + $0xc0] sm:$0xff]
        %v456 = vld [vmem:[#allocation2 + $0xc8] sm:$0xff]
        %v457 = vld [vmem:[#allocation2 + $0xd0] sm:$0xff]
        %v458 = vld [vmem:[#allocation2 + $0xd8] sm:$0xff]
        %v459 = vld [vmem:[#allocation2 + $0xe0] sm:$0xff]
        %v460 = vld [vmem:[#allocation2 + $0xe8] sm:$0xff]
        %v461 = vld [vmem:[#allocation2 + $0xf0] sm:$0xff]
        %v462 = vld [vmem:[#allocation2 + $0xf8] sm:$0xff]
        %v463 = vld [vmem:[#allocation2 + $0x100] sm:$0xff]
        %v464 = vld [vmem:[#allocation2 + $0x108] sm:$0xff]
        %v465 = vld [vmem:[#allocation2 + $0x110] sm:$0xff]
        %v466 = vld [vmem:[#allocation2 + $0x118] sm:$0xff]
        %v467 = vld [vmem:[#allocation2 + $0x120] sm:$0xff]
        %v468 = vld [vmem:[#allocation2 + $0x128] sm:$0xff]
        %v469 = vld [vmem:[#allocation2 + $0x130] sm:$0xff]
        %v470 = vld [vmem:[#allocation2 + $0x138] sm:$0xff]
        %v471 = vld [vmem:[#allocation2 + $0x140] sm:$0xff]
        %v472 = vld [vmem:[#allocation2 + $0x148] sm:$0xff]
        %v473 = vld [vmem:[#allocation2 + $0x150] sm:$0xff]
        %v474 = vld [vmem:[#allocation2 + $0x158] sm:$0xff]
        %v475 = vld [vmem:[#allocation2 + $0x160] sm:$0xff]
        %v476 = vld [vmem:[#allocation2 + $0x168] sm:$0xff]
        %v477 = vld [vmem:[#allocation2 + $0x170] sm:$0xff]
        %v478 = vld [vmem:[#allocation2 + $0x178] sm:$0xff]
        %v479 = vld [vmem:[#allocation2 + $0x180] sm:$0xff]
        %v480 = vld [vmem:[#allocation2 + $0x188] sm:$0xff]
        %v481 = vld [vmem:[#allocation2 + $0x190] sm:$0xff]
        %v482 = vld [vmem:[#allocation2 + $0x198] sm:$0xff]
        %v483 = vld [vmem:[#allocation2 + $0x1a0] sm:$0xff]
        %v484 = vld [vmem:[#allocation2 + $0x1a8] sm:$0xff]
        %v485 = vld [vmem:[#allocation2 + $0x1b0] sm:$0xff]
        %v486 = vld [vmem:[#allocation2 + $0x1b8] sm:$0xff]
        %v487 = vld [vmem:[#allocation2 + $0x1c0] sm:$0xff]
        %v488 = vld [vmem:[#allocation2 + $0x1c8] sm:$0xff]
        %v489 = vld [vmem:[#allocation2 + $0x1d0] sm:$0xff]
        %v490 = vld [vmem:[#allocation2 + $0x1d8] sm:$0xff]
        %v491 = vld [vmem:[#allocation2 + $0x1e0] sm:$0xff]
        %v492 = vld [vmem:[#allocation2 + $0x1e8] sm:$0xff]
        %v493 = vld [vmem:[#allocation2 + $0x1f0] sm:$0xff]
        %v494 = vld [vmem:[#allocation2 + $0x1f8] sm:$0xff]
        %v495 = vld [vmem:[#allocation4] sm:$0xff]
        %v496 = vld [vmem:[#allocation4 + $0x8] sm:$0xff]
        %v499 = vlaneseq
        %v500 = vshrl.u32 %v499, 7
        %v501 = vsub.s32 0, %v500
        %v502 = vrot.slane %v495, %v501
        %v503 = vlaneseq
        %v504 = vshrl.u32 %v503, 7
        %v505 = vsub.s32 1, %v504
        %v506 = vrot.slane %v495, %v505
        %v507 = vlaneseq
        %v508 = vshrl.u32 %v507, 7
        %v509 = vsub.s32 2, %v508
        %v510 = vrot.slane %v495, %v509
        %v511 = vlaneseq
        %v512 = vshrl.u32 %v511, 7
        %v513 = vsub.s32 3, %v512
        %v514 = vrot.slane %v495, %v513
        %v515 = vlaneseq
        %v516 = vshrl.u32 %v515, 7
        %v517 = vsub.s32 4, %v516
        %v518 = vrot.slane %v495, %v517
        %v519 = vlaneseq
        %v520 = vshrl.u32 %v519, 7
        %v521 = vsub.s32 5, %v520
        %v522 = vrot.slane %v495, %v521
        %v523 = vlaneseq
        %v524 = vshrl.u32 %v523, 7
        %v525 = vsub.s32 6, %v524
        %v526 = vrot.slane %v495, %v525
        %v527 = vlaneseq
        %v528 = vshrl.u32 %v527, 7
        %v529 = vsub.s32 7, %v528
        %v530 = vrot.slane %v495, %v529
        %v531 = vlaneseq
        %v532 = vshrl.u32 %v531, 7
        %v533 = vsub.s32 0, %v532
        %v534 = vrot.slane %v496, %v533
        %v535 = vlaneseq
        %v536 = vshrl.u32 %v535, 7
        %v537 = vsub.s32 1, %v536
        %v538 = vrot.slane %v496, %v537
        %v539 = vlaneseq
        %v540 = vshrl.u32 %v539, 7
        %v541 = vsub.s32 2, %v540
        %v542 = vrot.slane %v496, %v541
        %v543 = vlaneseq
        %v544 = vshrl.u32 %v543, 7
        %v545 = vsub.s32 3, %v544
        %v546 = vrot.slane %v496, %v545
        %v547 = vlaneseq
        %v548 = vshrl.u32 %v547, 7
        %v549 = vsub.s32 4, %v548
        %v550 = vrot.slane %v496, %v549
        %v551 = vlaneseq
        %v552 = vshrl.u32 %v551, 7
        %v553 = vsub.s32 5, %v552
        %v554 = vrot.slane %v496, %v553
        %v555 = vlaneseq
        %v556 = vshrl.u32 %v555, 7
        %v557 = vsub.s32 6, %v556
        %v558 = vrot.slane %v496, %v557
        %v559 = vlaneseq
        %v560 = vshrl.u32 %v559, 7
        %v561 = vsub.s32 7, %v560
        %v562 = vrot.slane %v496, %v561
        %v643 = vunpack.c.l.b16 %v431
        %v644 = vunpack.c.h.b16 %v431
        %v645 = vunpack.c.l.b16 %v432
        %v646 = vunpack.c.h.b16 %v432
        %v647 = vunpack.c.l.b16 %v433
        %v648 = vunpack.c.h.b16 %v433
        %v649 = vunpack.c.l.b16 %v434
        %v650 = vunpack.c.h.b16 %v434
        %v651 = vunpack.c.l.b16 %v435
        %v652 = vunpack.c.h.b16 %v435
        %v653 = vunpack.c.l.b16 %v436
        %v654 = vunpack.c.h.b16 %v436
        %v655 = vunpack.c.l.b16 %v437
        %v656 = vunpack.c.h.b16 %v437
        %v657 = vunpack.c.l.b16 %v438
        %v658 = vunpack.c.h.b16 %v438
        %v659 = vunpack.c.l.b16 %v439
        %v660 = vunpack.c.h.b16 %v439
        %v661 = vunpack.c.l.b16 %v440
        %v662 = vunpack.c.h.b16 %v440
        %v663 = vunpack.c.l.b16 %v441
        %v664 = vunpack.c.h.b16 %v441
        %v665 = vunpack.c.l.b16 %v442
        %v666 = vunpack.c.h.b16 %v442
        %v667 = vunpack.c.l.b16 %v443
        %v668 = vunpack.c.h.b16 %v443
        %v669 = vunpack.c.l.b16 %v444
        %v670 = vunpack.c.h.b16 %v444
        %v671 = vunpack.c.l.b16 %v445
        %v672 = vunpack.c.h.b16 %v445
        %v673 = vunpack.c.l.b16 %v446
        %v674 = vunpack.c.h.b16 %v446
        %v675 = vunpack.c.l.b16 %v447
        %v676 = vunpack.c.h.b16 %v447
        %v677 = vunpack.c.l.b16 %v448
        %v678 = vunpack.c.h.b16 %v448
        %v679 = vunpack.c.l.b16 %v449
        %v680 = vunpack.c.h.b16 %v449
        %v681 = vunpack.c.l.b16 %v450
        %v682 = vunpack.c.h.b16 %v450
        %v683 = vunpack.c.l.b16 %v451
        %v684 = vunpack.c.h.b16 %v451
        %v685 = vunpack.c.l.b16 %v452
        %v686 = vunpack.c.h.b16 %v452
        %v687 = vunpack.c.l.b16 %v453
        %v688 = vunpack.c.h.b16 %v453
        %v689 = vunpack.c.l.b16 %v454
        %v690 = vunpack.c.h.b16 %v454
        %v691 = vunpack.c.l.b16 %v455
        %v692 = vunpack.c.h.b16 %v455
        %v693 = vunpack.c.l.b16 %v456
        %v694 = vunpack.c.h.b16 %v456
        %v695 = vunpack.c.l.b16 %v457
        %v696 = vunpack.c.h.b16 %v457
        %v697 = vunpack.c.l.b16 %v458
        %v698 = vunpack.c.h.b16 %v458
        %v699 = vunpack.c.l.b16 %v459
        %v700 = vunpack.c.h.b16 %v459
        %v701 = vunpack.c.l.b16 %v460
        %v702 = vunpack.c.h.b16 %v460
        %v703 = vunpack.c.l.b16 %v461
        %v704 = vunpack.c.h.b16 %v461
        %v705 = vunpack.c.l.b16 %v462
        %v706 = vunpack.c.h.b16 %v462
        %v707 = vunpack.c.l.b16 %v463
        %v708 = vunpack.c.h.b16 %v463
        %v709 = vunpack.c.l.b16 %v464
        %v710 = vunpack.c.h.b16 %v464
        %v711 = vunpack.c.l.b16 %v465
        %v712 = vunpack.c.h.b16 %v465
        %v713 = vunpack.c.l.b16 %v466
        %v714 = vunpack.c.h.b16 %v466
        %v715 = vunpack.c.l.b16 %v467
        %v716 = vunpack.c.h.b16 %v467
        %v717 = vunpack.c.l.b16 %v468
        %v718 = vunpack.c.h.b16 %v468
        %v719 = vunpack.c.l.b16 %v469
        %v720 = vunpack.c.h.b16 %v469
        %v721 = vunpack.c.l.b16 %v470
        %v722 = vunpack.c.h.b16 %v470
        %v723 = vunpack.c.l.b16 %v471
        %v724 = vunpack.c.h.b16 %v471
        %v725 = vunpack.c.l.b16 %v472
        %v726 = vunpack.c.h.b16 %v472
        %v727 = vunpack.c.l.b16 %v473
        %v728 = vunpack.c.h.b16 %v473
        %v729 = vunpack.c.l.b16 %v474
        %v730 = vunpack.c.h.b16 %v474
        %v731 = vunpack.c.l.b16 %v475
        %v732 = vunpack.c.h.b16 %v475
        %v733 = vunpack.c.l.b16 %v476
        %v734 = vunpack.c.h.b16 %v476
        %v735 = vunpack.c.l.b16 %v477
        %v736 = vunpack.c.h.b16 %v477
        %v737 = vunpack.c.l.b16 %v478
        %v738 = vunpack.c.h.b16 %v478
        %v739 = vunpack.c.l.b16 %v479
        %v740 = vunpack.c.h.b16 %v479
        %v741 = vunpack.c.l.b16 %v480
        %v742 = vunpack.c.h.b16 %v480
        %v743 = vunpack.c.l.b16 %v481
        %v744 = vunpack.c.h.b16 %v481
        %v745 = vunpack.c.l.b16 %v482
        %v746 = vunpack.c.h.b16 %v482
        %v747 = vunpack.c.l.b16 %v483
        %v748 = vunpack.c.h.b16 %v483
        %v749 = vunpack.c.l.b16 %v484
        %v750 = vunpack.c.h.b16 %v484
        %v751 = vunpack.c.l.b16 %v485
        %v752 = vunpack.c.h.b16 %v485
        %v753 = vunpack.c.l.b16 %v486
        %v754 = vunpack.c.h.b16 %v486
        %v755 = vunpack.c.l.b16 %v487
        %v756 = vunpack.c.h.b16 %v487
        %v757 = vunpack.c.l.b16 %v488
        %v758 = vunpack.c.h.b16 %v488
        %v759 = vunpack.c.l.b16 %v489
        %v760 = vunpack.c.h.b16 %v489
        %v761 = vunpack.c.l.b16 %v490
        %v762 = vunpack.c.h.b16 %v490
        %v763 = vunpack.c.l.b16 %v491
        %v764 = vunpack.c.h.b16 %v491
        %v765 = vunpack.c.l.b16 %v492
        %v766 = vunpack.c.h.b16 %v492
        %v767 = vunpack.c.l.b16 %v493
        %v768 = vunpack.c.h.b16 %v493
        %v769 = vunpack.c.l.b16 %v494
        %v770 = vunpack.c.h.b16 %v494
        %v771 = vpack.c.b16 %v659, %v643
        %v772 = vpack.c.b16 %v660, %v644
        %v773 = vpack.c.b16 %v661, %v645
        %v774 = vpack.c.b16 %v662, %v646
        %v775 = vpack.c.b16 %v663, %v647
        %v776 = vpack.c.b16 %v664, %v648
        %v777 = vpack.c.b16 %v665, %v649
        %v778 = vpack.c.b16 %v666, %v650
        %v779 = vpack.c.b16 %v667, %v651
        %v780 = vpack.c.b16 %v668, %v652
        %v781 = vpack.c.b16 %v669, %v653
        %v782 = vpack.c.b16 %v670, %v654
        %v783 = vpack.c.b16 %v671, %v655
        %v784 = vpack.c.b16 %v672, %v656
        %v785 = vpack.c.b16 %v673, %v657
        %v786 = vpack.c.b16 %v674, %v658
        %v787 = vpack.c.b16 %v691, %v675
        %v788 = vpack.c.b16 %v692, %v676
        %v789 = vpack.c.b16 %v693, %v677
        %v790 = vpack.c.b16 %v694, %v678
        %v791 = vpack.c.b16 %v695, %v679
        %v792 = vpack.c.b16 %v696, %v680
        %v793 = vpack.c.b16 %v697, %v681
        %v794 = vpack.c.b16 %v698, %v682
        %v795 = vpack.c.b16 %v699, %v683
        %v796 = vpack.c.b16 %v700, %v684
        %v797 = vpack.c.b16 %v701, %v685
        %v798 = vpack.c.b16 %v702, %v686
        %v799 = vpack.c.b16 %v703, %v687
        %v800 = vpack.c.b16 %v704, %v688
        %v801 = vpack.c.b16 %v705, %v689
        %v802 = vpack.c.b16 %v706, %v690
        %v803 = vpack.c.b16 %v723, %v707
        %v804 = vpack.c.b16 %v724, %v708
        %v805 = vpack.c.b16 %v725, %v709
        %v806 = vpack.c.b16 %v726, %v710
        %v807 = vpack.c.b16 %v727, %v711
        %v808 = vpack.c.b16 %v728, %v712
        %v809 = vpack.c.b16 %v729, %v713
        %v810 = vpack.c.b16 %v730, %v714
        %v811 = vpack.c.b16 %v731, %v715
        %v812 = vpack.c.b16 %v732, %v716
        %v813 = vpack.c.b16 %v733, %v717
        %v814 = vpack.c.b16 %v734, %v718
        %v815 = vpack.c.b16 %v735, %v719
        %v816 = vpack.c.b16 %v736, %v720
        %v817 = vpack.c.b16 %v737, %v721
        %v818 = vpack.c.b16 %v738, %v722
        %v819 = vpack.c.b16 %v755, %v739
        %v820 = vpack.c.b16 %v756, %v740
        %v821 = vpack.c.b16 %v757, %v741
        %v822 = vpack.c.b16 %v758, %v742
        %v823 = vpack.c.b16 %v759, %v743
        %v824 = vpack.c.b16 %v760, %v744
        %v825 = vpack.c.b16 %v761, %v745
        %v826 = vpack.c.b16 %v762, %v746
        %v827 = vpack.c.b16 %v763, %v747
        %v828 = vpack.c.b16 %v764, %v748
        %v829 = vpack.c.b16 %v765, %v749
        %v830 = vpack.c.b16 %v766, %v750
        %v831 = vpack.c.b16 %v767, %v751
        %v832 = vpack.c.b16 %v768, %v752
        %v833 = vpack.c.b16 %v769, %v753
        %v834 = vpack.c.b16 %v770, %v754
        %vm899 = vcmask 523264
        %v901 = vsel %vm899, %v430, 0
        %903 = vmatprep.subr.bf16.mxu0 %v772
        %904 = vmatpush1.bf16.msra.mxu0 %v771
        %905 = vmatprep.subr.bf16.mxu0 %v788
        %906 = vmatpush1.bf16.msra.mxu0 %v787
        %907 = vmatprep.subr.bf16.mxu0 %v804
        %908 = vmatpush1.bf16.msra.mxu0 %v803
        %909 = vmatprep.subr.bf16.mxu0 %v820
        %910 = vmatpush1.bf16.msra.mxu0 %v819
        %911 = vmatprep.subr.bf16.mxu0 0
        %912 = vmatpush1.bf16.msra.mxu0 0
        %913 = vmatprep.subr.bf16.mxu0 0
        %914 = vmatpush1.bf16.msra.mxu0 0
        %915 = vmatprep.subr.bf16.mxu0 0
        %916 = vmatpush1.bf16.msra.mxu0 0
        %917 = vmatprep.subr.bf16.mxu0 0
        %918 = vmatpush1.bf16.msra.mxu0 0
        %919 = vmatprep.subr.bf16.mxu0 0
        %920 = vmatpush1.bf16.msra.mxu0 0
        %921 = vmatprep.subr.bf16.mxu0 0
        %922 = vmatpush1.bf16.msra.mxu0 0
        %923 = vmatprep.subr.bf16.mxu0 0
        %924 = vmatpush1.bf16.msra.mxu0 0
        %925 = vmatprep.subr.bf16.mxu0 0
        %926 = vmatpush1.bf16.msra.mxu0 0
        %927 = vmatprep.subr.bf16.mxu0 0
        %928 = vmatpush1.bf16.msra.mxu0 0
        %929 = vmatprep.subr.bf16.mxu0 0
        %930 = vmatpush1.bf16.msra.mxu0 0
        %931 = vmatprep.subr.bf16.mxu0 0
        %932 = vmatpush1.bf16.msra.mxu0 0
        %933 = vmatprep.subr.bf16.mxu0 0
        %934 = vmatpush1.bf16.msra.mxu0 0
        %935 = vmatprep.mubr.bf16.mxu0 0
        %936 = vmatmul.mubr.bf16.gmra.mrb[0].mxu0 %v901
        %v937 = vpop.f32.mrb[0].mxu0
        %v938 = vadd.f32 %v502, %v937
        %v939 = vpop.f32.mrb[0].mxu0
        %v940 = vadd.f32 %v506, %v939
        %v941 = vpop.f32.mrb[0].mxu0
        %v942 = vpop.f32.mrb[0].mxu0
        %943 = vdwg.mxu0
        %944 = vmatprep.subr.bf16.mxu0 %v774
        %945 = vmatpush1.bf16.msra.mxu0 %v773
        %946 = vmatprep.subr.bf16.mxu0 %v790
        %947 = vmatpush1.bf16.msra.mxu0 %v789
        %948 = vmatprep.subr.bf16.mxu0 %v806
        %949 = vmatpush1.bf16.msra.mxu0 %v805
        %950 = vmatprep.subr.bf16.mxu0 %v822
        %951 = vmatpush1.bf16.msra.mxu0 %v821
        %952 = vmatprep.subr.bf16.mxu0 0
        %953 = vmatpush1.bf16.msra.mxu0 0
        %954 = vmatprep.subr.bf16.mxu0 0
        %955 = vmatpush1.bf16.msra.mxu0 0
        %956 = vmatprep.subr.bf16.mxu0 0
        %957 = vmatpush1.bf16.msra.mxu0 0
        %958 = vmatprep.subr.bf16.mxu0 0
        %959 = vmatpush1.bf16.msra.mxu0 0
        %960 = vmatprep.subr.bf16.mxu0 0
        %961 = vmatpush1.bf16.msra.mxu0 0
        %962 = vmatprep.subr.bf16.mxu0 0
        %963 = vmatpush1.bf16.msra.mxu0 0
        %964 = vmatprep.subr.bf16.mxu0 0
        %965 = vmatpush1.bf16.msra.mxu0 0
        %966 = vmatprep.subr.bf16.mxu0 0
        %967 = vmatpush1.bf16.msra.mxu0 0
        %968 = vmatprep.subr.bf16.mxu0 0
        %969 = vmatpush1.bf16.msra.mxu0 0
        %970 = vmatprep.subr.bf16.mxu0 0
        %971 = vmatpush1.bf16.msra.mxu0 0
        %972 = vmatprep.subr.bf16.mxu0 0
        %973 = vmatpush1.bf16.msra.mxu0 0
        %974 = vmatprep.subr.bf16.mxu0 0
        %975 = vmatpush1.bf16.msra.mxu0 0
        %976 = vmatprep.mubr.bf16.mxu0 0
        %977 = vmatmul.mubr.bf16.gmra.mrb[0].mxu0 %v901
        %v978 = vpop.f32.mrb[0].mxu0
        %v979 = vadd.f32 %v510, %v978
        %v980 = vpop.f32.mrb[0].mxu0
        %v981 = vadd.f32 %v514, %v980
        %v982 = vpop.f32.mrb[0].mxu0
        %v983 = vpop.f32.mrb[0].mxu0
        %984 = vdwg.mxu0
        %985 = vmatprep.subr.bf16.mxu0 %v776
        %986 = vmatpush1.bf16.msra.mxu0 %v775
        %987 = vmatprep.subr.bf16.mxu0 %v792
        %988 = vmatpush1.bf16.msra.mxu0 %v791
        %989 = vmatprep.subr.bf16.mxu0 %v808
        %990 = vmatpush1.bf16.msra.mxu0 %v807
        %991 = vmatprep.subr.bf16.mxu0 %v824
        %992 = vmatpush1.bf16.msra.mxu0 %v823
        %993 = vmatprep.subr.bf16.mxu0 0
        %994 = vmatpush1.bf16.msra.mxu0 0
        %995 = vmatprep.subr.bf16.mxu0 0
        %996 = vmatpush1.bf16.msra.mxu0 0
        %997 = vmatprep.subr.bf16.mxu0 0
        %998 = vmatpush1.bf16.msra.mxu0 0
        %999 = vmatprep.subr.bf16.mxu0 0
        %1000 = vmatpush1.bf16.msra.mxu0 0
        %1001 = vmatprep.subr.bf16.mxu0 0
        %1002 = vmatpush1.bf16.msra.mxu0 0
        %1003 = vmatprep.subr.bf16.mxu0 0
        %1004 = vmatpush1.bf16.msra.mxu0 0
        %1005 = vmatprep.subr.bf16.mxu0 0
        %1006 = vmatpush1.bf16.msra.mxu0 0
        %1007 = vmatprep.subr.bf16.mxu0 0
        %1008 = vmatpush1.bf16.msra.mxu0 0
        %1009 = vmatprep.subr.bf16.mxu0 0
        %1010 = vmatpush1.bf16.msra.mxu0 0
        %1011 = vmatprep.subr.bf16.mxu0 0
        %1012 = vmatpush1.bf16.msra.mxu0 0
        %1013 = vmatprep.subr.bf16.mxu0 0
        %1014 = vmatpush1.bf16.msra.mxu0 0
        %1015 = vmatprep.subr.bf16.mxu0 0
        %1016 = vmatpush1.bf16.msra.mxu0 0
        %1017 = vmatprep.mubr.bf16.mxu0 0
        %1018 = vmatmul.mubr.bf16.gmra.mrb[0].mxu0 %v901
        %v1019 = vpop.f32.mrb[0].mxu0
        %v1020 = vadd.f32 %v518, %v1019
        %v1021 = vpop.f32.mrb[0].mxu0
        %v1022 = vadd.f32 %v522, %v1021
        %v1023 = vpop.f32.mrb[0].mxu0
        %v1024 = vpop.f32.mrb[0].mxu0
        %1025 = vdwg.mxu0
        %1026 = vmatprep.subr.bf16.mxu0 %v778
        %1027 = vmatpush1.bf16.msra.mxu0 %v777
        %1028 = vmatprep.subr.bf16.mxu0 %v794
        %1029 = vmatpush1.bf16.msra.mxu0 %v793
        %1030 = vmatprep.subr.bf16.mxu0 %v810
        %1031 = vmatpush1.bf16.msra.mxu0 %v809
        %1032 = vmatprep.subr.bf16.mxu0 %v826
        %1033 = vmatpush1.bf16.msra.mxu0 %v825
        %1034 = vmatprep.subr.bf16.mxu0 0
        %1035 = vmatpush1.bf16.msra.mxu0 0
        %1036 = vmatprep.subr.bf16.mxu0 0
        %1037 = vmatpush1.bf16.msra.mxu0 0
        %1038 = vmatprep.subr.bf16.mxu0 0
        %1039 = vmatpush1.bf16.msra.mxu0 0
        %1040 = vmatprep.subr.bf16.mxu0 0
        %1041 = vmatpush1.bf16.msra.mxu0 0
        %1042 = vmatprep.subr.bf16.mxu0 0
        %1043 = vmatpush1.bf16.msra.mxu0 0
        %1044 = vmatprep.subr.bf16.mxu0 0
        %1045 = vmatpush1.bf16.msra.mxu0 0
        %1046 = vmatprep.subr.bf16.mxu0 0
        %1047 = vmatpush1.bf16.msra.mxu0 0
        %1048 = vmatprep.subr.bf16.mxu0 0
        %1049 = vmatpush1.bf16.msra.mxu0 0
        %1050 = vmatprep.subr.bf16.mxu0 0
        %1051 = vmatpush1.bf16.msra.mxu0 0
        %1052 = vmatprep.subr.bf16.mxu0 0
        %1053 = vmatpush1.bf16.msra.mxu0 0
        %1054 = vmatprep.subr.bf16.mxu0 0
        %1055 = vmatpush1.bf16.msra.mxu0 0
        %1056 = vmatprep.subr.bf16.mxu0 0
        %1057 = vmatpush1.bf16.msra.mxu0 0
        %1058 = vmatprep.mubr.bf16.mxu0 0
        %1059 = vmatmul.mubr.bf16.gmra.mrb[0].mxu0 %v901
        %v1060 = vpop.f32.mrb[0].mxu0
        %v1061 = vadd.f32 %v526, %v1060
        %v1062 = vpop.f32.mrb[0].mxu0
        %v1063 = vadd.f32 %v530, %v1062
        %v1064 = vpop.f32.mrb[0].mxu0
        %v1065 = vpop.f32.mrb[0].mxu0
        %1066 = vdwg.mxu0
        %1067 = vmatprep.subr.bf16.mxu0 %v780
        %1068 = vmatpush1.bf16.msra.mxu0 %v779
        %1069 = vmatprep.subr.bf16.mxu0 %v796
        %1070 = vmatpush1.bf16.msra.mxu0 %v795
        %1071 = vmatprep.subr.bf16.mxu0 %v812
        %1072 = vmatpush1.bf16.msra.mxu0 %v811
        %1073 = vmatprep.subr.bf16.mxu0 %v828
        %1074 = vmatpush1.bf16.msra.mxu0 %v827
        %1075 = vmatprep.subr.bf16.mxu0 0
        %1076 = vmatpush1.bf16.msra.mxu0 0
        %1077 = vmatprep.subr.bf16.mxu0 0
        %1078 = vmatpush1.bf16.msra.mxu0 0
        %1079 = vmatprep.subr.bf16.mxu0 0
        %1080 = vmatpush1.bf16.msra.mxu0 0
        %1081 = vmatprep.subr.bf16.mxu0 0
        %1082 = vmatpush1.bf16.msra.mxu0 0
        %1083 = vmatprep.subr.bf16.mxu0 0
        %1084 = vmatpush1.bf16.msra.mxu0 0
        %1085 = vmatprep.subr.bf16.mxu0 0
        %1086 = vmatpush1.bf16.msra.mxu0 0
        %1087 = vmatprep.subr.bf16.mxu0 0
        %1088 = vmatpush1.bf16.msra.mxu0 0
        %1089 = vmatprep.subr.bf16.mxu0 0
        %1090 = vmatpush1.bf16.msra.mxu0 0
        %1091 = vmatprep.subr.bf16.mxu0 0
        %1092 = vmatpush1.bf16.msra.mxu0 0
        %1093 = vmatprep.subr.bf16.mxu0 0
        %1094 = vmatpush1.bf16.msra.mxu0 0
        %1095 = vmatprep.subr.bf16.mxu0 0
        %1096 = vmatpush1.bf16.msra.mxu0 0
        %1097 = vmatprep.subr.bf16.mxu0 0
        %1098 = vmatpush1.bf16.msra.mxu0 0
        %1099 = vmatprep.mubr.bf16.mxu0 0
        %1100 = vmatmul.mubr.bf16.gmra.mrb[0].mxu0 %v901
        %v1101 = vpop.f32.mrb[0].mxu0
        %v1102 = vadd.f32 %v534, %v1101
        %v1103 = vpop.f32.mrb[0].mxu0
        %v1104 = vadd.f32 %v538, %v1103
        %v1105 = vpop.f32.mrb[0].mxu0
        %v1106 = vpop.f32.mrb[0].mxu0
        %1107 = vdwg.mxu0
        %1108 = vmatprep.subr.bf16.mxu0 %v782
        %1109 = vmatpush1.bf16.msra.mxu0 %v781
        %1110 = vmatprep.subr.bf16.mxu0 %v798
        %1111 = vmatpush1.bf16.msra.mxu0 %v797
        %1112 = vmatprep.subr.bf16.mxu0 %v814
        %1113 = vmatpush1.bf16.msra.mxu0 %v813
        %1114 = vmatprep.subr.bf16.mxu0 %v830
        %1115 = vmatpush1.bf16.msra.mxu0 %v829
        %1116 = vmatprep.subr.bf16.mxu0 0
        %1117 = vmatpush1.bf16.msra.mxu0 0
        %1118 = vmatprep.subr.bf16.mxu0 0
        %1119 = vmatpush1.bf16.msra.mxu0 0
        %1120 = vmatprep.subr.bf16.mxu0 0
        %1121 = vmatpush1.bf16.msra.mxu0 0
        %1122 = vmatprep.subr.bf16.mxu0 0
        %1123 = vmatpush1.bf16.msra.mxu0 0
        %1124 = vmatprep.subr.bf16.mxu0 0
        %1125 = vmatpush1.bf16.msra.mxu0 0
        %1126 = vmatprep.subr.bf16.mxu0 0
        %1127 = vmatpush1.bf16.msra.mxu0 0
        %1128 = vmatprep.subr.bf16.mxu0 0
        %1129 = vmatpush1.bf16.msra.mxu0 0
        %1130 = vmatprep.subr.bf16.mxu0 0
        %1131 = vmatpush1.bf16.msra.mxu0 0
        %1132 = vmatprep.subr.bf16.mxu0 0
        %1133 = vmatpush1.bf16.msra.mxu0 0
        %1134 = vmatprep.subr.bf16.mxu0 0
        %1135 = vmatpush1.bf16.msra.mxu0 0
        %1136 = vmatprep.subr.bf16.mxu0 0
        %1137 = vmatpush1.bf16.msra.mxu0 0
        %1138 = vmatprep.subr.bf16.mxu0 0
        %1139 = vmatpush1.bf16.msra.mxu0 0
        %1140 = vmatprep.mubr.bf16.mxu0 0
        %1141 = vmatmul.mubr.bf16.gmra.mrb[0].mxu0 %v901
        %v1142 = vpop.f32.mrb[0].mxu0
        %v1143 = vadd.f32 %v542, %v1142
        %v1144 = vpop.f32.mrb[0].mxu0
        %v1145 = vadd.f32 %v546, %v1144
        %v1146 = vpop.f32.mrb[0].mxu0
        %v1147 = vpop.f32.mrb[0].mxu0
        %1148 = vdwg.mxu0
        %1149 = vmatprep.subr.bf16.mxu0 %v784
        %1150 = vmatpush1.bf16.msra.mxu0 %v783
        %1151 = vmatprep.subr.bf16.mxu0 %v800
        %1152 = vmatpush1.bf16.msra.mxu0 %v799
        %1153 = vmatprep.subr.bf16.mxu0 %v816
        %1154 = vmatpush1.bf16.msra.mxu0 %v815
        %1155 = vmatprep.subr.bf16.mxu0 %v832
        %1156 = vmatpush1.bf16.msra.mxu0 %v831
        %1157 = vmatprep.subr.bf16.mxu0 0
        %1158 = vmatpush1.bf16.msra.mxu0 0
        %1159 = vmatprep.subr.bf16.mxu0 0
        %1160 = vmatpush1.bf16.msra.mxu0 0
        %1161 = vmatprep.subr.bf16.mxu0 0
        %1162 = vmatpush1.bf16.msra.mxu0 0
        %1163 = vmatprep.subr.bf16.mxu0 0
        %1164 = vmatpush1.bf16.msra.mxu0 0
        %1165 = vmatprep.subr.bf16.mxu0 0
        %1166 = vmatpush1.bf16.msra.mxu0 0
        %1167 = vmatprep.subr.bf16.mxu0 0
        %1168 = vmatpush1.bf16.msra.mxu0 0
        %1169 = vmatprep.subr.bf16.mxu0 0
        %1170 = vmatpush1.bf16.msra.mxu0 0
        %1171 = vmatprep.subr.bf16.mxu0 0
        %1172 = vmatpush1.bf16.msra.mxu0 0
        %1173 = vmatprep.subr.bf16.mxu0 0
        %1174 = vmatpush1.bf16.msra.mxu0 0
        %1175 = vmatprep.subr.bf16.mxu0 0
        %1176 = vmatpush1.bf16.msra.mxu0 0
        %1177 = vmatprep.subr.bf16.mxu0 0
        %1178 = vmatpush1.bf16.msra.mxu0 0
        %1179 = vmatprep.subr.bf16.mxu0 0
        %1180 = vmatpush1.bf16.msra.mxu0 0
        %1181 = vmatprep.mubr.bf16.mxu0 0
        %1182 = vmatmul.mubr.bf16.gmra.mrb[0].mxu0 %v901
        %v1183 = vpop.f32.mrb[0].mxu0
        %v1184 = vadd.f32 %v550, %v1183
        %v1185 = vpop.f32.mrb[0].mxu0
        %v1186 = vadd.f32 %v554, %v1185
        %v1187 = vpop.f32.mrb[0].mxu0
        %v1188 = vpop.f32.mrb[0].mxu0
        %1189 = vdwg.mxu0
        %1190 = vmatprep.subr.bf16.mxu0 %v786
        %1191 = vmatpush1.bf16.msra.mxu0 %v785
        %1192 = vmatprep.subr.bf16.mxu0 %v802
        %1193 = vmatpush1.bf16.msra.mxu0 %v801
        %1194 = vmatprep.subr.bf16.mxu0 %v818
        %1195 = vmatpush1.bf16.msra.mxu0 %v817
        %1196 = vmatprep.subr.bf16.mxu0 %v834
        %1197 = vmatpush1.bf16.msra.mxu0 %v833
        %1198 = vmatprep.subr.bf16.mxu0 0
        %1199 = vmatpush1.bf16.msra.mxu0 0
        %1200 = vmatprep.subr.bf16.mxu0 0
        %1201 = vmatpush1.bf16.msra.mxu0 0
        %1202 = vmatprep.subr.bf16.mxu0 0
        %1203 = vmatpush1.bf16.msra.mxu0 0
        %1204 = vmatprep.subr.bf16.mxu0 0
        %1205 = vmatpush1.bf16.msra.mxu0 0
        %1206 = vmatprep.subr.bf16.mxu0 0
        %1207 = vmatpush1.bf16.msra.mxu0 0
        %1208 = vmatprep.subr.bf16.mxu0 0
        %1209 = vmatpush1.bf16.msra.mxu0 0
        %1210 = vmatprep.subr.bf16.mxu0 0
        %1211 = vmatpush1.bf16.msra.mxu0 0
        %1212 = vmatprep.subr.bf16.mxu0 0
        %1213 = vmatpush1.bf16.msra.mxu0 0
        %1214 = vmatprep.subr.bf16.mxu0 0
        %1215 = vmatpush1.bf16.msra.mxu0 0
        %1216 = vmatprep.subr.bf16.mxu0 0
        %1217 = vmatpush1.bf16.msra.mxu0 0
        %1218 = vmatprep.subr.bf16.mxu0 0
        %1219 = vmatpush1.bf16.msra.mxu0 0
        %1220 = vmatprep.subr.bf16.mxu0 0
        %1221 = vmatpush1.bf16.msra.mxu0 0
        %1222 = vmatprep.mubr.bf16.mxu0 0
        %1223 = vmatmul.mubr.bf16.gmra.mrb[0].mxu0 %v901
        %v1224 = vpop.f32.mrb[0].mxu0
        %v1225 = vadd.f32 %v558, %v1224
        %v1226 = vpop.f32.mrb[0].mxu0
        %v1227 = vadd.f32 %v562, %v1226
        %v1228 = vpop.f32.mrb[0].mxu0
        %v1229 = vpop.f32.mrb[0].mxu0
        %1230 = vdwg.mxu0
        %v1231 = vmax.f32 %v938, 0.0
        %v1232 = vmax.f32 %v940, 0.0
        %v1233 = vmax.f32 %v979, 0.0
        %v1234 = vmax.f32 %v981, 0.0
        %v1235 = vmax.f32 %v1020, 0.0
        %v1236 = vmax.f32 %v1022, 0.0
        %v1237 = vmax.f32 %v1061, 0.0
        %v1238 = vmax.f32 %v1063, 0.0
        %v1239 = vmax.f32 %v1102, 0.0
        %v1240 = vmax.f32 %v1104, 0.0
        %v1241 = vmax.f32 %v1143, 0.0
        %v1242 = vmax.f32 %v1145, 0.0
        %v1243 = vmax.f32 %v1184, 0.0
        %v1244 = vmax.f32 %v1186, 0.0
        %v1245 = vmax.f32 %v1225, 0.0
        %v1246 = vmax.f32 %v1227, 0.0
        %v1247 = vpack.c.bf16 %v1231, %v1231
        %v1248 = vpack.c.bf16 %v1232, %v1232
        %v1249 = vpack.c.bf16 %v1233, %v1233
        %v1250 = vpack.c.bf16 %v1234, %v1234
        %v1251 = vpack.c.bf16 %v1235, %v1235
        %v1252 = vpack.c.bf16 %v1236, %v1236
        %v1253 = vpack.c.bf16 %v1237, %v1237
        %v1254 = vpack.c.bf16 %v1238, %v1238
        %v1255 = vpack.c.bf16 %v1239, %v1239
        %v1256 = vpack.c.bf16 %v1240, %v1240
        %v1257 = vpack.c.bf16 %v1241, %v1241
        %v1258 = vpack.c.bf16 %v1242, %v1242
        %v1259 = vpack.c.bf16 %v1243, %v1243
        %v1260 = vpack.c.bf16 %v1244, %v1244
        %v1261 = vpack.c.bf16 %v1245, %v1245
        %v1262 = vpack.c.bf16 %v1246, %v1246
        %v1279 = vunpack.c.l.b16 %v1247
        %v1280 = vunpack.c.l.b16 %v1248
        %v1281 = vunpack.c.l.b16 %v1249
        %v1282 = vunpack.c.l.b16 %v1250
        %v1283 = vunpack.c.l.b16 %v1251
        %v1284 = vunpack.c.l.b16 %v1252
        %v1285 = vunpack.c.l.b16 %v1253
        %v1286 = vunpack.c.l.b16 %v1254
        %v1287 = vunpack.c.l.b16 %v1255
        %v1288 = vunpack.c.l.b16 %v1256
        %v1289 = vunpack.c.l.b16 %v1257
        %v1290 = vunpack.c.l.b16 %v1258
        %v1291 = vunpack.c.l.b16 %v1259
        %v1292 = vunpack.c.l.b16 %v1260
        %v1293 = vunpack.c.l.b16 %v1261
        %v1294 = vunpack.c.l.b16 %v1262
        %v1295 = vpack.c.b16 %v1280, %v1279
        %v1296 = vpack.c.b16 %v1282, %v1281
        %v1297 = vpack.c.b16 %v1284, %v1283
        %v1298 = vpack.c.b16 %v1286, %v1285
        %v1299 = vpack.c.b16 %v1288, %v1287
        %v1300 = vpack.c.b16 %v1290, %v1289
        %v1301 = vpack.c.b16 %v1292, %v1291
        %v1302 = vpack.c.b16 %v1294, %v1293
        %1311 = vst [vmem:[%s287] sm:$0xff] %v1295
        %1312 = vst [vmem:[%s287 + $0x8] sm:$0xff] %v1296
        %1313 = vst [vmem:[%s287 + $0x10] sm:$0xff] %v1297
        %1314 = vst [vmem:[%s287 + $0x18] sm:$0xff] %v1298
        %1315 = vst [vmem:[%s287 + $0x20] sm:$0xff] %v1299
        %1316 = vst [vmem:[%s287 + $0x28] sm:$0xff] %v1300
        %1317 = vst [vmem:[%s287 + $0x30] sm:$0xff] %v1301
        %1318 = vst [vmem:[%s287 + $0x38] sm:$0xff] %v1302
        %v1319 = vld [vmem:[%s291] sm:$0xff]
        %v1320 = vld [vmem:[%s291 + $0x8] sm:$0xff]
        %v1321 = vrot.slane %v1231, 4
        %v1322 = vadd.f32 %v1231, %v1321
        %v1323 = vrot.slane %v1322, 2
        %v1324 = vadd.f32 %v1322, %v1323
        %v1325 = vrot.slane %v1324, 1
        %v1326 = vadd.f32 %v1324, %v1325
        %v1327 = vrot.slane %v1232, 4
        %v1328 = vadd.f32 %v1232, %v1327
        %v1329 = vrot.slane %v1328, 2
        %v1330 = vadd.f32 %v1328, %v1329
        %v1331 = vrot.slane %v1330, 1
        %v1332 = vadd.f32 %v1330, %v1331
        %v1333 = vrot.slane %v1233, 4
        %v1334 = vadd.f32 %v1233, %v1333
        %v1335 = vrot.slane %v1334, 2
        %v1336 = vadd.f32 %v1334, %v1335
        %v1337 = vrot.slane %v1336, 1
        %v1338 = vadd.f32 %v1336, %v1337
        %v1339 = vrot.slane %v1234, 4
        %v1340 = vadd.f32 %v1234, %v1339
        %v1341 = vrot.slane %v1340, 2
        %v1342 = vadd.f32 %v1340, %v1341
        %v1343 = vrot.slane %v1342, 1
        %v1344 = vadd.f32 %v1342, %v1343
        %v1345 = vrot.slane %v1235, 4
        %v1346 = vadd.f32 %v1235, %v1345
        %v1347 = vrot.slane %v1346, 2
        %v1348 = vadd.f32 %v1346, %v1347
        %v1349 = vrot.slane %v1348, 1
        %v1350 = vadd.f32 %v1348, %v1349
        %v1351 = vrot.slane %v1236, 4
        %v1352 = vadd.f32 %v1236, %v1351
        %v1353 = vrot.slane %v1352, 2
        %v1354 = vadd.f32 %v1352, %v1353
        %v1355 = vrot.slane %v1354, 1
        %v1356 = vadd.f32 %v1354, %v1355
        %v1357 = vrot.slane %v1237, 4
        %v1358 = vadd.f32 %v1237, %v1357
        %v1359 = vrot.slane %v1358, 2
        %v1360 = vadd.f32 %v1358, %v1359
        %v1361 = vrot.slane %v1360, 1
        %v1362 = vadd.f32 %v1360, %v1361
        %v1363 = vrot.slane %v1238, 4
        %v1364 = vadd.f32 %v1238, %v1363
        %v1365 = vrot.slane %v1364, 2
        %v1366 = vadd.f32 %v1364, %v1365
        %v1367 = vrot.slane %v1366, 1
        %v1368 = vadd.f32 %v1366, %v1367
        %v1369 = vrot.slane %v1239, 4
        %v1370 = vadd.f32 %v1239, %v1369
        %v1371 = vrot.slane %v1370, 2
        %v1372 = vadd.f32 %v1370, %v1371
        %v1373 = vrot.slane %v1372, 1
        %v1374 = vadd.f32 %v1372, %v1373
        %v1375 = vrot.slane %v1240, 4
        %v1376 = vadd.f32 %v1240, %v1375
        %v1377 = vrot.slane %v1376, 2
        %v1378 = vadd.f32 %v1376, %v1377
        %v1379 = vrot.slane %v1378, 1
        %v1380 = vadd.f32 %v1378, %v1379
        %v1381 = vrot.slane %v1241, 4
        %v1382 = vadd.f32 %v1241, %v1381
        %v1383 = vrot.slane %v1382, 2
        %v1384 = vadd.f32 %v1382, %v1383
        %v1385 = vrot.slane %v1384, 1
        %v1386 = vadd.f32 %v1384, %v1385
        %v1387 = vrot.slane %v1242, 4
        %v1388 = vadd.f32 %v1242, %v1387
        %v1389 = vrot.slane %v1388, 2
        %v1390 = vadd.f32 %v1388, %v1389
        %v1391 = vrot.slane %v1390, 1
        %v1392 = vadd.f32 %v1390, %v1391
        %v1393 = vrot.slane %v1243, 4
        %v1394 = vadd.f32 %v1243, %v1393
        %v1395 = vrot.slane %v1394, 2
        %v1396 = vadd.f32 %v1394, %v1395
        %v1397 = vrot.slane %v1396, 1
        %v1398 = vadd.f32 %v1396, %v1397
        %v1399 = vrot.slane %v1244, 4
        %v1400 = vadd.f32 %v1244, %v1399
        %v1401 = vrot.slane %v1400, 2
        %v1402 = vadd.f32 %v1400, %v1401
        %v1403 = vrot.slane %v1402, 1
        %v1404 = vadd.f32 %v1402, %v1403
        %v1405 = vrot.slane %v1245, 4
        %v1406 = vadd.f32 %v1245, %v1405
        %v1407 = vrot.slane %v1406, 2
        %v1408 = vadd.f32 %v1406, %v1407
        %v1409 = vrot.slane %v1408, 1
        %v1410 = vadd.f32 %v1408, %v1409
        %v1411 = vrot.slane %v1246, 4
        %v1412 = vadd.f32 %v1246, %v1411
        %v1413 = vrot.slane %v1412, 2
        %v1414 = vadd.f32 %v1412, %v1413
        %v1415 = vrot.slane %v1414, 1
        %v1416 = vadd.f32 %v1414, %v1415
        %v1433 = vcombine.low %v1326, %v1332
        %v1434 = vcombine.low %v1338, %v1344
        %v1435 = vcombine.low %v1350, %v1356
        %v1436 = vcombine.low %v1362, %v1368
        %v1438 = vunpack.c.l.s4 1966171168
        %v1439 = vunpack.c.0.s8 %v1438
        %v1440 = vlaneseq
        %v1441 = vshrl.u32 %v1440, 7
        %v1442 = vsub.s32 %v1439, %v1441
        %v1443 = vrot.slane %v1433, %v1442
        %v1445 = vunpack.c.l.s4 1966171168
        %v1446 = vunpack.c.0.s8 %v1445
        %v1447 = vlaneseq
        %v1448 = vshrl.u32 %v1447, 7
        %v1449 = vsub.s32 %v1446, %v1448
        %v1450 = vrot.slane %v1434, %v1449
        %v1452 = vunpack.c.l.s4 1966171168
        %v1453 = vunpack.c.0.s8 %v1452
        %v1454 = vlaneseq
        %v1455 = vshrl.u32 %v1454, 7
        %v1456 = vsub.s32 %v1453, %v1455
        %v1457 = vrot.slane %v1435, %v1456
        %v1459 = vunpack.c.l.s4 1966171168
        %v1460 = vunpack.c.0.s8 %v1459
        %v1461 = vlaneseq
        %v1462 = vshrl.u32 %v1461, 7
        %v1463 = vsub.s32 %v1460, %v1462
        %v1464 = vrot.slane %v1436, %v1463
        %v1465 = vcombine.low %v1443, %v1450
        %v1466 = vcombine.low %v1457, %v1464
        %v1468 = vunpack.c.l.s4 1966171168
        %v1469 = vunpack.c.0.s8 %v1468
        %v1470 = vlaneseq
        %v1471 = vshrl.u32 %v1470, 7
        %v1472 = vsub.s32 %v1469, %v1471
        %v1473 = vrot.slane %v1465, %v1472
        %v1475 = vunpack.c.l.s4 1966171168
        %v1476 = vunpack.c.0.s8 %v1475
        %v1477 = vlaneseq
        %v1478 = vshrl.u32 %v1477, 7
        %v1479 = vsub.s32 %v1476, %v1478
        %v1480 = vrot.slane %v1466, %v1479
        %v1481 = vcombine.low %v1473, %v1480
        %v1482 = vcombine.low %v1374, %v1380
        %v1483 = vcombine.low %v1386, %v1392
        %v1484 = vcombine.low %v1398, %v1404
        %v1485 = vcombine.low %v1410, %v1416
        %v1487 = vunpack.c.l.s4 1966171168
        %v1488 = vunpack.c.0.s8 %v1487
        %v1489 = vlaneseq
        %v1490 = vshrl.u32 %v1489, 7
        %v1491 = vsub.s32 %v1488, %v1490
        %v1492 = vrot.slane %v1482, %v1491
        %v1494 = vunpack.c.l.s4 1966171168
        %v1495 = vunpack.c.0.s8 %v1494
        %v1496 = vlaneseq
        %v1497 = vshrl.u32 %v1496, 7
        %v1498 = vsub.s32 %v1495, %v1497
        %v1499 = vrot.slane %v1483, %v1498
        %v1501 = vunpack.c.l.s4 1966171168
        %v1502 = vunpack.c.0.s8 %v1501
        %v1503 = vlaneseq
        %v1504 = vshrl.u32 %v1503, 7
        %v1505 = vsub.s32 %v1502, %v1504
        %v1506 = vrot.slane %v1484, %v1505
        %v1508 = vunpack.c.l.s4 1966171168
        %v1509 = vunpack.c.0.s8 %v1508
        %v1510 = vlaneseq
        %v1511 = vshrl.u32 %v1510, 7
        %v1512 = vsub.s32 %v1509, %v1511
        %v1513 = vrot.slane %v1485, %v1512
        %v1514 = vcombine.low %v1492, %v1499
        %v1515 = vcombine.low %v1506, %v1513
        %v1517 = vunpack.c.l.s4 1966171168
        %v1518 = vunpack.c.0.s8 %v1517
        %v1519 = vlaneseq
        %v1520 = vshrl.u32 %v1519, 7
        %v1521 = vsub.s32 %v1518, %v1520
        %v1522 = vrot.slane %v1514, %v1521
        %v1524 = vunpack.c.l.s4 1966171168
        %v1525 = vunpack.c.0.s8 %v1524
        %v1526 = vlaneseq
        %v1527 = vshrl.u32 %v1526, 7
        %v1528 = vsub.s32 %v1525, %v1527
        %v1529 = vrot.slane %v1515, %v1528
        %v1530 = vcombine.low %v1522, %v1529
        %v1533 = vadd.f32 %v1319, %v1481
        %v1534 = vadd.f32 %v1320, %v1530
        %1535 = vst [vmem:[%s291] sm:$0xff] %v1533
        %1536 = vst [vmem:[%s291 + $0x8] sm:$0xff] %v1534
        %v1537 = vld [vmem:[%s295] sm:$0xff]
        %v1538 = vld [vmem:[%s295 + $0x8] sm:$0xff]
        %v1539 = vmul.f32 %v1231, %v1231
        %v1540 = vmul.f32 %v1232, %v1232
        %v1541 = vmul.f32 %v1233, %v1233
        %v1542 = vmul.f32 %v1234, %v1234
        %v1543 = vmul.f32 %v1235, %v1235
        %v1544 = vmul.f32 %v1236, %v1236
        %v1545 = vmul.f32 %v1237, %v1237
        %v1546 = vmul.f32 %v1238, %v1238
        %v1547 = vmul.f32 %v1239, %v1239
        %v1548 = vmul.f32 %v1240, %v1240
        %v1549 = vmul.f32 %v1241, %v1241
        %v1550 = vmul.f32 %v1242, %v1242
        %v1551 = vmul.f32 %v1243, %v1243
        %v1552 = vmul.f32 %v1244, %v1244
        %v1553 = vmul.f32 %v1245, %v1245
        %v1554 = vmul.f32 %v1246, %v1246
        %v1555 = vrot.slane %v1539, 4
        %v1556 = vadd.f32 %v1539, %v1555
        %v1557 = vrot.slane %v1556, 2
        %v1558 = vadd.f32 %v1556, %v1557
        %v1559 = vrot.slane %v1558, 1
        %v1560 = vadd.f32 %v1558, %v1559
        %v1561 = vrot.slane %v1540, 4
        %v1562 = vadd.f32 %v1540, %v1561
        %v1563 = vrot.slane %v1562, 2
        %v1564 = vadd.f32 %v1562, %v1563
        %v1565 = vrot.slane %v1564, 1
        %v1566 = vadd.f32 %v1564, %v1565
        %v1567 = vrot.slane %v1541, 4
        %v1568 = vadd.f32 %v1541, %v1567
        %v1569 = vrot.slane %v1568, 2
        %v1570 = vadd.f32 %v1568, %v1569
        %v1571 = vrot.slane %v1570, 1
        %v1572 = vadd.f32 %v1570, %v1571
        %v1573 = vrot.slane %v1542, 4
        %v1574 = vadd.f32 %v1542, %v1573
        %v1575 = vrot.slane %v1574, 2
        %v1576 = vadd.f32 %v1574, %v1575
        %v1577 = vrot.slane %v1576, 1
        %v1578 = vadd.f32 %v1576, %v1577
        %v1579 = vrot.slane %v1543, 4
        %v1580 = vadd.f32 %v1543, %v1579
        %v1581 = vrot.slane %v1580, 2
        %v1582 = vadd.f32 %v1580, %v1581
        %v1583 = vrot.slane %v1582, 1
        %v1584 = vadd.f32 %v1582, %v1583
        %v1585 = vrot.slane %v1544, 4
        %v1586 = vadd.f32 %v1544, %v1585
        %v1587 = vrot.slane %v1586, 2
        %v1588 = vadd.f32 %v1586, %v1587
        %v1589 = vrot.slane %v1588, 1
        %v1590 = vadd.f32 %v1588, %v1589
        %v1591 = vrot.slane %v1545, 4
        %v1592 = vadd.f32 %v1545, %v1591
        %v1593 = vrot.slane %v1592, 2
        %v1594 = vadd.f32 %v1592, %v1593
        %v1595 = vrot.slane %v1594, 1
        %v1596 = vadd.f32 %v1594, %v1595
        %v1597 = vrot.slane %v1546, 4
        %v1598 = vadd.f32 %v1546, %v1597
        %v1599 = vrot.slane %v1598, 2
        %v1600 = vadd.f32 %v1598, %v1599
        %v1601 = vrot.slane %v1600, 1
        %v1602 = vadd.f32 %v1600, %v1601
        %v1603 = vrot.slane %v1547, 4
        %v1604 = vadd.f32 %v1547, %v1603
        %v1605 = vrot.slane %v1604, 2
        %v1606 = vadd.f32 %v1604, %v1605
        %v1607 = vrot.slane %v1606, 1
        %v1608 = vadd.f32 %v1606, %v1607
        %v1609 = vrot.slane %v1548, 4
        %v1610 = vadd.f32 %v1548, %v1609
        %v1611 = vrot.slane %v1610, 2
        %v1612 = vadd.f32 %v1610, %v1611
        %v1613 = vrot.slane %v1612, 1
        %v1614 = vadd.f32 %v1612, %v1613
        %v1615 = vrot.slane %v1549, 4
        %v1616 = vadd.f32 %v1549, %v1615
        %v1617 = vrot.slane %v1616, 2
        %v1618 = vadd.f32 %v1616, %v1617
        %v1619 = vrot.slane %v1618, 1
        %v1620 = vadd.f32 %v1618, %v1619
        %v1621 = vrot.slane %v1550, 4
        %v1622 = vadd.f32 %v1550, %v1621
        %v1623 = vrot.slane %v1622, 2
        %v1624 = vadd.f32 %v1622, %v1623
        %v1625 = vrot.slane %v1624, 1
        %v1626 = vadd.f32 %v1624, %v1625
        %v1627 = vrot.slane %v1551, 4
        %v1628 = vadd.f32 %v1551, %v1627
        %v1629 = vrot.slane %v1628, 2
        %v1630 = vadd.f32 %v1628, %v1629
        %v1631 = vrot.slane %v1630, 1
        %v1632 = vadd.f32 %v1630, %v1631
        %v1633 = vrot.slane %v1552, 4
        %v1634 = vadd.f32 %v1552, %v1633
        %v1635 = vrot.slane %v1634, 2
        %v1636 = vadd.f32 %v1634, %v1635
        %v1637 = vrot.slane %v1636, 1
        %v1638 = vadd.f32 %v1636, %v1637
        %v1639 = vrot.slane %v1553, 4
        %v1640 = vadd.f32 %v1553, %v1639
        %v1641 = vrot.slane %v1640, 2
        %v1642 = vadd.f32 %v1640, %v1641
        %v1643 = vrot.slane %v1642, 1
        %v1644 = vadd.f32 %v1642, %v1643
        %v1645 = vrot.slane %v1554, 4
        %v1646 = vadd.f32 %v1554, %v1645
        %v1647 = vrot.slane %v1646, 2
        %v1648 = vadd.f32 %v1646, %v1647
        %v1649 = vrot.slane %v1648, 1
        %v1650 = vadd.f32 %v1648, %v1649
        %v1667 = vcombine.low %v1560, %v1566
        %v1668 = vcombine.low %v1572, %v1578
        %v1669 = vcombine.low %v1584, %v1590
        %v1670 = vcombine.low %v1596, %v1602
        %v1672 = vunpack.c.l.s4 1966171168
        %v1673 = vunpack.c.0.s8 %v1672
        %v1674 = vlaneseq
        %v1675 = vshrl.u32 %v1674, 7
        %v1676 = vsub.s32 %v1673, %v1675
        %v1677 = vrot.slane %v1667, %v1676
        %v1679 = vunpack.c.l.s4 1966171168
        %v1680 = vunpack.c.0.s8 %v1679
        %v1681 = vlaneseq
        %v1682 = vshrl.u32 %v1681, 7
        %v1683 = vsub.s32 %v1680, %v1682
        %v1684 = vrot.slane %v1668, %v1683
        %v1686 = vunpack.c.l.s4 1966171168
        %v1687 = vunpack.c.0.s8 %v1686
        %v1688 = vlaneseq
        %v1689 = vshrl.u32 %v1688, 7
        %v1690 = vsub.s32 %v1687, %v1689
        %v1691 = vrot.slane %v1669, %v1690
        %v1693 = vunpack.c.l.s4 1966171168
        %v1694 = vunpack.c.0.s8 %v1693
        %v1695 = vlaneseq
        %v1696 = vshrl.u32 %v1695, 7
        %v1697 = vsub.s32 %v1694, %v1696
        %v1698 = vrot.slane %v1670, %v1697
        %v1699 = vcombine.low %v1677, %v1684
        %v1700 = vcombine.low %v1691, %v1698
        %v1702 = vunpack.c.l.s4 1966171168
        %v1703 = vunpack.c.0.s8 %v1702
        %v1704 = vlaneseq
        %v1705 = vshrl.u32 %v1704, 7
        %v1706 = vsub.s32 %v1703, %v1705
        %v1707 = vrot.slane %v1699, %v1706
        %v1709 = vunpack.c.l.s4 1966171168
        %v1710 = vunpack.c.0.s8 %v1709
        %v1711 = vlaneseq
        %v1712 = vshrl.u32 %v1711, 7
        %v1713 = vsub.s32 %v1710, %v1712
        %v1714 = vrot.slane %v1700, %v1713
        %v1715 = vcombine.low %v1707, %v1714
        %v1716 = vcombine.low %v1608, %v1614
        %v1717 = vcombine.low %v1620, %v1626
        %v1718 = vcombine.low %v1632, %v1638
        %v1719 = vcombine.low %v1644, %v1650
        %v1721 = vunpack.c.l.s4 1966171168
        %v1722 = vunpack.c.0.s8 %v1721
        %v1723 = vlaneseq
        %v1724 = vshrl.u32 %v1723, 7
        %v1725 = vsub.s32 %v1722, %v1724
        %v1726 = vrot.slane %v1716, %v1725
        %v1728 = vunpack.c.l.s4 1966171168
        %v1729 = vunpack.c.0.s8 %v1728
        %v1730 = vlaneseq
        %v1731 = vshrl.u32 %v1730, 7
        %v1732 = vsub.s32 %v1729, %v1731
        %v1733 = vrot.slane %v1717, %v1732
        %v1735 = vunpack.c.l.s4 1966171168
        %v1736 = vunpack.c.0.s8 %v1735
        %v1737 = vlaneseq
        %v1738 = vshrl.u32 %v1737, 7
        %v1739 = vsub.s32 %v1736, %v1738
        %v1740 = vrot.slane %v1718, %v1739
        %v1742 = vunpack.c.l.s4 1966171168
        %v1743 = vunpack.c.0.s8 %v1742
        %v1744 = vlaneseq
        %v1745 = vshrl.u32 %v1744, 7
        %v1746 = vsub.s32 %v1743, %v1745
        %v1747 = vrot.slane %v1719, %v1746
        %v1748 = vcombine.low %v1726, %v1733
        %v1749 = vcombine.low %v1740, %v1747
        %v1751 = vunpack.c.l.s4 1966171168
        %v1752 = vunpack.c.0.s8 %v1751
        %v1753 = vlaneseq
        %v1754 = vshrl.u32 %v1753, 7
        %v1755 = vsub.s32 %v1752, %v1754
        %v1756 = vrot.slane %v1748, %v1755
        %v1758 = vunpack.c.l.s4 1966171168
        %v1759 = vunpack.c.0.s8 %v1758
        %v1760 = vlaneseq
        %v1761 = vshrl.u32 %v1760, 7
        %v1762 = vsub.s32 %v1759, %v1761
        %v1763 = vrot.slane %v1749, %v1762
        %v1764 = vcombine.low %v1756, %v1763
        %v1767 = vadd.f32 %v1537, %v1715
        %v1768 = vadd.f32 %v1538, %v1764
        %1769 = vst [vmem:[%s295] sm:$0xff] %v1767
        %1770 = vst [vmem:[%s295 + $0x8] sm:$0xff] %v1768
        %p1771 = scmp.lt.s32.totalorder %s23, 1
        %s1772 = scalar_select %p1771, %s23, 1
        %p1773 = scmp.lt.s32.totalorder %s24, 0
        %s1774 = scalar_select %p1773, %s24, 0
        %s1775 = smul.addr %s1774, 16
        %s1776 = smul.addr %s1772, 16
        %s1777 = sadd.s32 %s1775, %s1776
        %s1778 = smul.addr %s1777, 4
        %s1779 = scalar_lea.vmem %s3, %s1778
        %p1780 = scmp.lt.s32.totalorder %s23, 1
        %s1781 = scalar_select %p1780, %s23, 1
        %s1782 = smul.addr %s1781, 16
        %s1783 = scalar_lea.vmem %s4, %s1782
        %p1784 = scmp.lt.s32.totalorder %s23, 1
        %s1785 = scalar_select %p1784, %s23, 1
        %s1786 = smul.addr %s1785, 16
        %s1787 = scalar_lea.vmem %s5, %s1786
        // Predicated region
        $region45: #{encoder_forward.5} parent=31 // pred_check
          %p1788 = pneg %p119
        $region46: #{encoder_forward.5} parent=31 // pred_check_branch
          %1790 = sbr.rel (%p1788) target = $region48
        $region47: #{encoder_forward.5} parent=31 // pred_region
          _
        $region48: #{encoder_forward.5} parent=31 // pred_fallthru
          _
        // Predicated region
        $region49: #{encoder_forward.5} parent=31 // pred_check
          %p1791 = pneg %p145
        $region50: #{encoder_forward.5} parent=31 // pred_check_branch
          %1793 = sbr.rel (%p1791) target = $region52
        $region51: #{encoder_forward.5} parent=31 // pred_region
          _
        $region52: #{encoder_forward.5} parent=31 // pred_fallthru
          _
        // Predicated region
        $region53: #{encoder_forward.5} parent=31 // pred_check
          %p1794 = pneg %p171
        $region54: #{encoder_forward.5} parent=31 // pred_check_branch
          %1796 = sbr.rel (%p1794) target = $region56
        $region55: #{encoder_forward.5} parent=31 // pred_region
          _
        $region56: #{encoder_forward.5} parent=31 // pred_fallthru
          _
      $region32: #{encoder_forward.5} parent=5 // pred_fallthru
        _
      %p1797 = scmp.le.s32.totalorder 2, %s14
      // Predicated region
      $region57: #{encoder_forward.5} parent=5 // pred_check
        %p1798 = pneg %p1797
      $region58: #{encoder_forward.5} parent=5 // pred_check_branch
        %1800 = sbr.rel (%p1798) target = $region60
      $region59: #{encoder_forward.5} parent=5 // pred_region
        %s1801 = ssub.s32 %s14, 2
        // Predicated region
        $region61: #{encoder_forward.5} parent=59 // pred_check
          %p1802 = pneg %p125
        $region62: #{encoder_forward.5} parent=59 // pred_check_branch
          %1804 = sbr.rel (%p1802) target = $region64
        $region63: #{encoder_forward.5} parent=59 // pred_region
          %p1805 = scmp.lt.s32.totalorder %s25, 1
          %s1806 = scalar_select %p1805, %s25, 1
          %p1807 = scmp.lt.s32.totalorder %s26, 0
          %s1808 = scalar_select %p1807, %s26, 0
          %s1809 = smul.addr %s1808, 16
          %s1810 = smul.addr %s1806, 16
          %s1811 = sadd.s32 %s1809, %s1810
          %s1812 = smul.addr %s1811, 4
          %s1813 = scalar_lea.vmem %s3, %s1812
        $region64: #{encoder_forward.5} parent=59 // pred_fallthru
          _
        // Predicated region
        $region65: #{encoder_forward.5} parent=59 // pred_check
          %p1814 = pneg %p151
        $region66: #{encoder_forward.5} parent=59 // pred_check_branch
          %1816 = sbr.rel (%p1814) target = $region68
        $region67: #{encoder_forward.5} parent=59 // pred_region
          %p1817 = scmp.lt.s32.totalorder %s25, 1
          %s1818 = scalar_select %p1817, %s25, 1
          %s1819 = smul.addr %s1818, 16
          %s1820 = scalar_lea.vmem %s4, %s1819
        $region68: #{encoder_forward.5} parent=59 // pred_fallthru
          _
        // Predicated region
        $region69: #{encoder_forward.5} parent=59 // pred_check
          %p1821 = pneg %p177
        $region70: #{encoder_forward.5} parent=59 // pred_check_branch
          %1823 = sbr.rel (%p1821) target = $region72
        $region71: #{encoder_forward.5} parent=59 // pred_region
          %p1824 = scmp.lt.s32.totalorder %s25, 1
          %s1825 = scalar_select %p1824, %s25, 1
          %s1826 = smul.addr %s1825, 16
          %s1827 = scalar_lea.vmem %s5, %s1826
        $region72: #{encoder_forward.5} parent=59 // pred_fallthru
          _
      $region60: #{encoder_forward.5} parent=5 // pred_fallthru
        _
    $region6: #{encoder_forward.5} parent=1 // loop_footer
      %s18 = sadd.s32 1, %s14
    $region7: #{encoder_forward.5} parent=1 // loop_footer_branch
      %13 = sbr.rel target = $region3
    $region8: #{encoder_forward.5} parent=1 // loop_exit
      _
    %1828 = vsyncpa [#allocation3], 1
    %s1829 = scalar_lea.sflag [#allocation3], 1
    %1830 = vsyncpa %s1829, 1
    %1831 = vsyncpa [#allocation5], 1

// kernel: encoder_forward.7
$region0: #{encoder_forward.7}
  #allocation0 [shape = 'u32[]', space=smem, size = 0x4, offset = 0x4, fixed_abs, tag = 'smem constant byte address 0x4 - core index']
  #allocation1 [shape = 'u32[144,128]{1,0:T(1,128)}', space=vmem, size = 0x12000, scoped, tag = 'internal scratch']
  %s0 = inlined_call_operand.vmem [shape: bf16[2,8,128], index: 0, kind: input, shape index: {}]
  %s1 = inlined_call_operand.vmem [shape: bf16[2,1,3,128], index: 1, kind: input, shape index: {}]
  %s2 = inlined_call_operand.vmem [shape: f32[1,128], index: 2, kind: input, shape index: {}]
  %s3 = inlined_call_operand.vmem [shape: f32[1,128], index: 3, kind: input, shape index: {}]
  %s4 = inlined_call_operand.vmem [shape: bf16[128,12], index: 4, kind: input, shape index: {}]
  %s5 = inlined_call_operand.vmem [shape: f32[1,4], index: 5, kind: input, shape index: {}]
  %s6 = inlined_call_operand.vmem [shape: f32[2,8,4], index: 6, kind: output, shape index: {0}]
  %s7 = inlined_call_operand.vmem [shape: f32[2,1,4], index: 7, kind: output, shape index: {1}]
  %s8 = inlined_call_operand.vmem [shape: f32[2,1,4], index: 8, kind: output, shape index: {2}]
  %9 = xla_tuple %s6, %s7, %s8
  %s10 = sld [smem:[#allocation0]]
  $region77: #{encoder_forward.7} parent=0
    _
  %s12 = ssub.s32 1, %s10
  %s13 = scalar_select 0, %s12, %s10
  loop: start=0, step=1, limit=4
  $region2: #{encoder_forward.7} parent=0 // loop_pre_header
    _
  $region3: #{encoder_forward.7} parent=0 // loop_header
    %s15 = sphi 0, %s19
    %p16 = scmp.ge.s32.totalorder %s15, 4
    %s22 = sphi 0, %s34
    %s23 = sphi 0, %s30
    %s24 = sphi 0, %s22
    %s25 = sphi 0, %s23
    %s26 = sphi 0, %s24
    %s27 = sphi 0, %s25
    %s39 = sphi 0, %s41
    %s42 = sphi 0, %s39
    %s43 = sphi 0, %s42
    %s59 = sphi 0, %s43
    %s67 = sphi 0, %s69
    %s70 = sphi 0, %s67
    %s71 = sphi 0, %s70
    %s87 = sphi 0, %s71
    %s91 = sphi 0, %s91
    %s93 = sphi 0, %s91
    %s94 = sphi 0, %s93
    %s108 = sphi 0, %s94
    %s112 = sphi 0, %s112
    %s114 = sphi 0, %s112
    %s115 = sphi 0, %s114
    %s129 = sphi 0, %s115
    %s133 = sphi 0, %s133
    %s135 = sphi 0, %s133
    %s136 = sphi 0, %s135
    %s150 = sphi 0, %s136
    %s154 = sphi 0, %s154
    %s156 = sphi 0, %s154
    %s157 = sphi 0, %s156
    %s171 = sphi 0, %s157
    %s179 = sphi 0, %s181
    %s182 = sphi 0, %s179
    %s183 = sphi 0, %s182
    %s199 = sphi 0, %s183
    %s205 = sphi 0, %s207
    %s208 = sphi 0, %s205
    %s209 = sphi 0, %s208
    %s225 = sphi 0, %s209
    %s231 = sphi 0, %s233
    %s234 = sphi 0, %s231
    %s235 = sphi 0, %s234
    %s251 = sphi 0, %s235
  $region4: #{encoder_forward.7} parent=0 // loop_header_branch
    %18 = sbr.rel (%p16) target = $region8
  $region5: #{encoder_forward.7} parent=0 // loop_body
    %s20 = ssub.s32 %s15, 1
    %s21 = ssub.s32 %s15, 2
    %s28 = sadd.s32 1, %s23
    %p29 = scmp.ge.s32.totalorder %s28, 1
    %s30 = scalar_select %p29, 0, %s28
    %s31 = sadd.s32 1, %s22
    %s32 = scalar_select %p29, %s31, %s22
    %p33 = scmp.ge.s32.totalorder %s32, 2
    %s34 = scalar_select %p33, 0, %s32
    %s35 = ssub.s32 %s22, %s34
    %s36 = ssub.s32 %s23, %s30
    %s37 = sor.u32 %s35, %s36
    %p38 = scmp.eq.s32.totalorder %s37, 0
    %s40 = sadd.s32 %s39, 1
    %s41 = scalar_select %p38, %s39, %s40
    %p44 = pneg %p38
    %p45 = scmp.eq.s32.totalorder %s15, 1
    %p46 = por %p44, %p45
    %p47 = scmp.ne.s32.totalorder %s39, %s42
    %p48 = scmp.eq.s32.totalorder %s15, 0
    %p49 = por %p47, %p48
    %p50 = scmp.ne.s32.totalorder %s39, %s42
    %p51 = scmp.eq.s32.totalorder %s20, 1
    %p52 = por %p50, %p51
    %p53 = scmp.ne.s32.totalorder %s42, %s43
    %p54 = scmp.eq.s32.totalorder %s20, 0
    %p55 = por %p53, %p54
    %p56 = scmp.ne.s32.totalorder %s42, %s43
    %p57 = scmp.eq.s32.totalorder %s21, 1
    %p58 = por %p56, %p57
    %p60 = scmp.ne.s32.totalorder %s43, %s59
    %p61 = scmp.eq.s32.totalorder %s21, 0
    %p62 = por %p60, %p61
    %s63 = ssub.s32 %s22, %s34
    %s64 = ssub.s32 %s23, %s30
    %s65 = sor.u32 %s63, %s64
    %p66 = scmp.eq.s32.totalorder %s65, 0
    %s68 = sadd.s32 %s67, 1
    %s69 = scalar_select %p66, %s67, %s68
    %p72 = pneg %p66
    %p73 = scmp.eq.s32.totalorder %s15, 1
    %p74 = por %p72, %p73
    %p75 = scmp.ne.s32.totalorder %s67, %s70
    %p76 = scmp.eq.s32.totalorder %s15, 0
    %p77 = por %p75, %p76
    %p78 = scmp.ne.s32.totalorder %s67, %s70
    %p79 = scmp.eq.s32.totalorder %s20, 1
    %p80 = por %p78, %p79
    %p81 = scmp.ne.s32.totalorder %s70, %s71
    %p82 = scmp.eq.s32.totalorder %s20, 0
    %p83 = por %p81, %p82
    %p84 = scmp.ne.s32.totalorder %s70, %s71
    %p85 = scmp.eq.s32.totalorder %s21, 1
    %p86 = por %p84, %p85
    %p88 = scmp.ne.s32.totalorder %s71, %s87
    %p89 = scmp.eq.s32.totalorder %s21, 0
    %p90 = por %p88, %p89
    %s92 = sadd.s32 %s91, 1
    %p95 = scmp.eq.s32.totalorder %s15, 1
    %p96 = scmp.ne.s32.totalorder %s91, %s93
    %p97 = scmp.eq.s32.totalorder %s15, 0
    %p98 = por %p96, %p97
    %p99 = scmp.ne.s32.totalorder %s91, %s93
    %p100 = scmp.eq.s32.totalorder %s20, 1
    %p101 = por %p99, %p100
    %p102 = scmp.ne.s32.totalorder %s93, %s94
    %p103 = scmp.eq.s32.totalorder %s20, 0
    %p104 = por %p102, %p103
    %p105 = scmp.ne.s32.totalorder %s93, %s94
    %p106 = scmp.eq.s32.totalorder %s21, 1
    %p107 = por %p105, %p106
    %p109 = scmp.ne.s32.totalorder %s94, %s108
    %p110 = scmp.eq.s32.totalorder %s21, 0
    %p111 = por %p109, %p110
    %s113 = sadd.s32 %s112, 1
    %p116 = scmp.eq.s32.totalorder %s15, 1
    %p117 = scmp.ne.s32.totalorder %s112, %s114
    %p118 = scmp.eq.s32.totalorder %s15, 0
    %p119 = por %p117, %p118
    %p120 = scmp.ne.s32.totalorder %s112, %s114
    %p121 = scmp.eq.s32.totalorder %s20, 1
    %p122 = por %p120, %p121
    %p123 = scmp.ne.s32.totalorder %s114, %s115
    %p124 = scmp.eq.s32.totalorder %s20, 0
    %p125 = por %p123, %p124
    %p126 = scmp.ne.s32.totalorder %s114, %s115
    %p127 = scmp.eq.s32.totalorder %s21, 1
    %p128 = por %p126, %p127
    %p130 = scmp.ne.s32.totalorder %s115, %s129
    %p131 = scmp.eq.s32.totalorder %s21, 0
    %p132 = por %p130, %p131
    %s134 = sadd.s32 %s133, 1
    %p137 = scmp.eq.s32.totalorder %s15, 1
    %p138 = scmp.ne.s32.totalorder %s133, %s135
    %p139 = scmp.eq.s32.totalorder %s15, 0
    %p140 = por %p138, %p139
    %p141 = scmp.ne.s32.totalorder %s133, %s135
    %p142 = scmp.eq.s32.totalorder %s20, 1
    %p143 = por %p141, %p142
    %p144 = scmp.ne.s32.totalorder %s135, %s136
    %p145 = scmp.eq.s32.totalorder %s20, 0
    %p146 = por %p144, %p145
    %p147 = scmp.ne.s32.totalorder %s135, %s136
    %p148 = scmp.eq.s32.totalorder %s21, 1
    %p149 = por %p147, %p148
    %p151 = scmp.ne.s32.totalorder %s136, %s150
    %p152 = scmp.eq.s32.totalorder %s21, 0
    %p153 = por %p151, %p152
    %s155 = sadd.s32 %s154, 1
    %p158 = scmp.eq.s32.totalorder %s15, 1
    %p159 = scmp.ne.s32.totalorder %s154, %s156
    %p160 = scmp.eq.s32.totalorder %s15, 0
    %p161 = por %p159, %p160
    %p162 = scmp.ne.s32.totalorder %s154, %s156
    %p163 = scmp.eq.s32.totalorder %s20, 1
    %p164 = por %p162, %p163
    %p165 = scmp.ne.s32.totalorder %s156, %s157
    %p166 = scmp.eq.s32.totalorder %s20, 0
    %p167 = por %p165, %p166
    %p168 = scmp.ne.s32.totalorder %s156, %s157
    %p169 = scmp.eq.s32.totalorder %s21, 1
    %p170 = por %p168, %p169
    %p172 = scmp.ne.s32.totalorder %s157, %s171
    %p173 = scmp.eq.s32.totalorder %s21, 0
    %p174 = por %p172, %p173
    %s175 = ssub.s32 %s22, %s34
    %s176 = ssub.s32 %s23, %s30
    %s177 = sor.u32 %s175, %s176
    %p178 = scmp.eq.s32.totalorder %s177, 0
    %s180 = sadd.s32 %s179, 1
    %s181 = scalar_select %p178, %s179, %s180
    %p184 = pneg %p178
    %p185 = scmp.eq.s32.totalorder %s15, 1
    %p186 = por %p184, %p185
    %p187 = scmp.ne.s32.totalorder %s179, %s182
    %p188 = scmp.eq.s32.totalorder %s15, 0
    %p189 = por %p187, %p188
    %p190 = scmp.ne.s32.totalorder %s179, %s182
    %p191 = scmp.eq.s32.totalorder %s20, 1
    %p192 = por %p190, %p191
    %p193 = scmp.ne.s32.totalorder %s182, %s183
    %p194 = scmp.eq.s32.totalorder %s20, 0
    %p195 = por %p193, %p194
    %p196 = scmp.ne.s32.totalorder %s182, %s183
    %p197 = scmp.eq.s32.totalorder %s21, 1
    %p198 = por %p196, %p197
    %p200 = scmp.ne.s32.totalorder %s183, %s199
    %p201 = scmp.eq.s32.totalorder %s21, 0
    %p202 = por %p200, %p201
    %s203 = ssub.s32 %s22, %s34
    %p204 = scmp.eq.s32.totalorder %s203, 0
    %s206 = sadd.s32 %s205, 1
    %s207 = scalar_select %p204, %s205, %s206
    %p210 = pneg %p204
    %p211 = scmp.eq.s32.totalorder %s15, 1
    %p212 = por %p210, %p211
    %p213 = scmp.ne.s32.totalorder %s205, %s208
    %p214 = scmp.eq.s32.totalorder %s15, 0
    %p215 = por %p213, %p214
    %p216 = scmp.ne.s32.totalorder %s205, %s208
    %p217 = scmp.eq.s32.totalorder %s20, 1
    %p218 = por %p216, %p217
    %p219 = scmp.ne.s32.totalorder %s208, %s209
    %p220 = scmp.eq.s32.totalorder %s20, 0
    %p221 = por %p219, %p220
    %p222 = scmp.ne.s32.totalorder %s208, %s209
    %p223 = scmp.eq.s32.totalorder %s21, 1
    %p224 = por %p222, %p223
    %p226 = scmp.ne.s32.totalorder %s209, %s225
    %p227 = scmp.eq.s32.totalorder %s21, 0
    %p228 = por %p226, %p227
    %s229 = ssub.s32 %s22, %s34
    %p230 = scmp.eq.s32.totalorder %s229, 0
    %s232 = sadd.s32 %s231, 1
    %s233 = scalar_select %p230, %s231, %s232
    %p236 = pneg %p230
    %p237 = scmp.eq.s32.totalorder %s15, 1
    %p238 = por %p236, %p237
    %p239 = scmp.ne.s32.totalorder %s231, %s234
    %p240 = scmp.eq.s32.totalorder %s15, 0
    %p241 = por %p239, %p240
    %p242 = scmp.ne.s32.totalorder %s231, %s234
    %p243 = scmp.eq.s32.totalorder %s20, 1
    %p244 = por %p242, %p243
    %p245 = scmp.ne.s32.totalorder %s234, %s235
    %p246 = scmp.eq.s32.totalorder %s20, 0
    %p247 = por %p245, %p246
    %p248 = scmp.ne.s32.totalorder %s234, %s235
    %p249 = scmp.eq.s32.totalorder %s21, 1
    %p250 = por %p248, %p249
    %p252 = scmp.ne.s32.totalorder %s235, %s251
    %p253 = scmp.eq.s32.totalorder %s21, 0
    %p254 = por %p252, %p253
    %p255 = scmp.le.s32.totalorder 1, %s15
    %p256 = scmp.lt.s32.totalorder %s15, 3
    %p257 = pnand %p255, %p256
    %p258 = pneg %p257
    // Predicated region
    $region9: #{encoder_forward.7} parent=5 // pred_check
      _
    $region10: #{encoder_forward.7} parent=5 // pred_check_branch
      %260 = sbr.rel (%p257) target = $region12
    $region11: #{encoder_forward.7} parent=5 // pred_region
      %s261 = ssub.s32 %s15, 1
      // Predicated region
      $region13: #{encoder_forward.7} parent=11 // pred_check
        %p262 = pneg %p104
      $region14: #{encoder_forward.7} parent=11 // pred_check_branch
        %264 = sbr.rel (%p262) target = $region16
      $region15: #{encoder_forward.7} parent=11 // pred_region
        _
      $region16: #{encoder_forward.7} parent=11 // pred_fallthru
        _
      // Predicated region
      $region17: #{encoder_forward.7} parent=11 // pred_check
        %p265 = pneg %p125
      $region18: #{encoder_forward.7} parent=11 // pred_check_branch
        %267 = sbr.rel (%p265) target = $region20
      $region19: #{encoder_forward.7} parent=11 // pred_region
        _
      $region20: #{encoder_forward.7} parent=11 // pred_fallthru
        _
      // Predicated region
      $region21: #{encoder_forward.7} parent=11 // pred_check
        %p268 = pneg %p146
      $region22: #{encoder_forward.7} parent=11 // pred_check_branch
        %270 = sbr.rel (%p268) target = $region24
      $region23: #{encoder_forward.7} parent=11 // pred_region
        _
      $region24: #{encoder_forward.7} parent=11 // pred_fallthru
        _
      // Predicated region
      $region25: #{encoder_forward.7} parent=11 // pred_check
        %p271 = pneg %p167
      $region26: #{encoder_forward.7} parent=11 // pred_check_branch
        %273 = sbr.rel (%p271) target = $region28
      $region27: #{encoder_forward.7} parent=11 // pred_region
        _
      $region28: #{encoder_forward.7} parent=11 // pred_fallthru
        _
    $region12: #{encoder_forward.7} parent=5 // pred_fallthru
      _
    %p274 = scmp.lt.s32.totalorder %s15, 2
    // Predicated region
    $region29: #{encoder_forward.7} parent=5 // pred_check
      %p275 = pneg %p274
    $region30: #{encoder_forward.7} parent=5 // pred_check_branch
      %277 = sbr.rel (%p275) target = $region32
    $region31: #{encoder_forward.7} parent=5 // pred_region
      // Predicated region
      $region33: #{encoder_forward.7} parent=31 // pred_check
        %p278 = pneg %p49
      $region34: #{encoder_forward.7} parent=31 // pred_check_branch
        %280 = sbr.rel (%p278) target = $region36
      $region35: #{encoder_forward.7} parent=31 // pred_region
        %p281 = scmp.lt.s32.totalorder %s22, 1
        %s282 = scalar_select %p281, %s22, 1
        %p283 = scmp.lt.s32.totalorder %s23, 0
        %s284 = scalar_select %p283, %s23, 0
        %s285 = sadd.s32 %s284, %s282
        %s286 = smul.addr %s285, 4
        %s287 = scalar_lea.vmem %s0, %s286
      $region36: #{encoder_forward.7} parent=31 // pred_fallthru
        _
      // Predicated region
      $region37: #{encoder_forward.7} parent=31 // pred_check
        %p288 = pneg %p77
      $region38: #{encoder_forward.7} parent=31 // pred_check_branch
        %290 = sbr.rel (%p288) target = $region40
      $region39: #{encoder_forward.7} parent=31 // pred_region
        %p291 = scmp.lt.s32.totalorder %s22, 1
        %s292 = scalar_select %p291, %s22, 1
        %p293 = scmp.lt.s32.totalorder %s23, 0
        %s294 = scalar_select %p293, %s23, 0
        %s295 = sadd.s32 %s294, %s292
        %s296 = smul.addr %s295, 2
        %s297 = scalar_lea.vmem %s1, %s296
      $region40: #{encoder_forward.7} parent=31 // pred_fallthru
        _
    $region32: #{encoder_forward.7} parent=5 // pred_fallthru
      _
    %p298 = scmp.le.s32.totalorder 1, %s15
    %p299 = scmp.lt.s32.totalorder %s15, 3
    %p300 = pnand %p298, %p299
    %p301 = pneg %p300
    // Predicated region
    $region41: #{encoder_forward.7} parent=5 // pred_check
      _
    $region42: #{encoder_forward.7} parent=5 // pred_check_branch
      %303 = sbr.rel (%p300) target = $region44
    $region43: #{encoder_forward.7} parent=5 // pred_region
      %s304 = ssub.s32 %s15, 1
      %p305 = scmp.lt.s32.totalorder %s24, 1
      %s306 = scalar_select %p305, %s24, 1
      %p307 = scmp.lt.s32.totalorder %s25, 0
      %s308 = scalar_select %p307, %s25, 0
      %s309 = sadd.s32 %s308, %s306
      %s310 = smul.addr %s309, 4
      %s311 = scalar_lea.vmem %s0, %s310
      %p312 = pneg %p55
      %p313 = pneg %p52
      %p314 = scmp.lt.s32.totalorder %s24, 1
      %s315 = scalar_select %p314, %s24, 1
      %p316 = scmp.lt.s32.totalorder %s25, 0
      %s317 = scalar_select %p316, %s25, 0
      %s318 = sadd.s32 %s317, %s315
      %s319 = smul.addr %s318, 2
      %s320 = scalar_lea.vmem %s1, %s319
      %p321 = pneg %p83
      %p322 = pneg %p80
      %p323 = pneg %p104
      %p324 = pneg %p101
      %p325 = pneg %p125
      %p326 = pneg %p122
      %p327 = pneg %p146
      %p328 = pneg %p143
      %p329 = pneg %p167
      %p330 = pneg %p164
      %p331 = pneg %p195
      %p332 = pneg %p192
      %p333 = scmp.lt.s32.totalorder %s24, 1
      %s334 = scalar_select %p333, %s24, 1
      %p335 = scmp.lt.s32.totalorder %s25, 0
      %s336 = scalar_select %p335, %s25, 0
      %s337 = sadd.s32 %s336, %s334
      %s338 = smul.addr %s337, 8
      %s339 = scalar_lea.vmem %s6, %s338
      %p340 = pneg %p221
      %p341 = pneg %p218
      %p342 = scmp.lt.s32.totalorder %s24, 1
      %s343 = scalar_select %p342, %s24, 1
      %s344 = scalar_lea.vmem %s7, %s343
      %p345 = pneg %p247
      %p346 = pneg %p244
      %p347 = scmp.lt.s32.totalorder %s24, 1
      %s348 = scalar_select %p347, %s24, 1
      %s349 = scalar_lea.vmem %s8, %s348
      %p350 = scmp.lt.s32.totalorder %s24, 1
      %s351 = scalar_select %p350, %s24, 1
      %p352 = scmp.lt.s32.totalorder %s25, 0
      %s353 = scalar_select %p352, %s25, 0
      %s354 = sadd.s32 %s353, %s351
      %s355 = smul.addr %s354, 4
      %s356 = scalar_lea.vmem %s0, %s355
      %p357 = scmp.lt.s32.totalorder %s24, 1
      %s358 = scalar_select %p357, %s24, 1
      %p359 = scmp.lt.s32.totalorder %s25, 0
      %s360 = scalar_select %p359, %s25, 0
      %s361 = sadd.s32 %s360, %s358
      %s362 = smul.addr %s361, 2
      %s363 = scalar_lea.vmem %s1, %s362
      %p364 = scmp.lt.s32.totalorder %s24, 1
      %s365 = scalar_select %p364, %s24, 1
      %p366 = scmp.lt.s32.totalorder %s25, 0
      %s367 = scalar_select %p366, %s25, 0
      %s368 = sadd.s32 %s367, %s365
      %s369 = smul.addr %s368, 8
      %s370 = scalar_lea.vmem %s6, %s369
      %p371 = scmp.lt.s32.totalorder %s24, 1
      %s372 = scalar_select %p371, %s24, 1
      %s373 = scalar_lea.vmem %s7, %s372
      %p374 = scmp.lt.s32.totalorder %s24, 1
      %s375 = scalar_select %p374, %s24, 1
      %s376 = scalar_lea.vmem %s8, %s375
      %p378 = scmp.eq.s32.totalorder %s25, 0
      // Predicated region
      $region45: #{encoder_forward.7} parent=43 // pred_check
        %p379 = pneg %p378
      $region46: #{encoder_forward.7} parent=43 // pred_check_branch
        %381 = sbr.rel (%p379) target = $region48
      $region47: #{encoder_forward.7} parent=43 // pred_region
        %vm382 = vcmask 24576
        %383 = vst.msk [vmem:[%s373] sm:$0x1] %vm382, 0.0
        %384 = vst.msk [vmem:[%s376] sm:$0x1] %vm382, 0.0
      $region48: #{encoder_forward.7} parent=43 // pred_fallthru
        _
      %v385 = vld [vmem:[%s2] sm:$0x1]
      %v386 = vld [vmem:[%s3] sm:$0x1]
      %v387 = vld [vmem:[%s356] sm:$0xf]
      %v388 = vunpack.c.l.bf16 %v387
      %v390 = vlaneseq
      %v391 = vshrl.u32 %v390, 7
      %v392 = vsub.s32 0, %v391
      %v393 = vrot.slane %v385, %v392
      %v395 = vmul.f32 %v388, %v393
      %v397 = vlaneseq
      %v398 = vshrl.u32 %v397, 7
      %v399 = vsub.s32 0, %v398
      %v400 = vrot.slane %v386, %v399
      %v402 = vadd.f32 %v395, %v400
      %v403 = vld [vmem:[%s363] sm:$0x3]
      %v404 = vunpack.c.l.bf16 %v403
      %v405 = vmul.f32 %v404, %v393
      %v406 = vadd.f32 %v405, %v400
      %v408 = vlaneseq
      %v409 = vshrl.u32 %v408, 7
      %v410 = vsub.s32 1, %v409
      %v411 = vrot.slane %v406, %v410
      %v414 = vrot.slane %v402, 7
      %v416 = vlaneseq
      %v417 = vshrl.u32 %v416, 7
      %v418 = vsub.s32 2, %v417
      %v419 = vrot.slane %v406, %v418
      %vm421 = vcmask 1040384
      %v422 = vsel %vm421, %v411, %v414
      %v423 = vsel %vm421, %v414, %v419
      %v424 = vmax.f32 %v422, 0.0
      %v425 = vmax.f32 %v423, 0.0
      %v426 = vpack.c.bf16 %v425, %v424
      %v427 = vld [vmem:[%s4] sm:$0xf]
      %v428 = vld [vmem:[%s4 + $0x4] sm:$0xf]
      %v429 = vld [vmem:[%s4 + $0x8] sm:$0xf]
      %v430 = vld [vmem:[%s4 + $0xc] sm:$0xf]
      %v431 = vld [vmem:[%s4 + $0x10] sm:$0xf]
      %v432 = vld [vmem:[%s4 + $0x14] sm:$0xf]
      %v433 = vld [vmem:[%s4 + $0x18] sm:$0xf]
      %v434 = vld [vmem:[%s4 + $0x1c] sm:$0xf]
      %v435 = vld [vmem:[%s4 + $0x20] sm:$0xf]
      %v436 = vld [vmem:[%s4 + $0x24] sm:$0xf]
      %v437 = vld [vmem:[%s4 + $0x28] sm:$0xf]
      %v438 = vld [vmem:[%s4 + $0x2c] sm:$0xf]
      %v439 = vld [vmem:[%s4 + $0x30] sm:$0xf]
      %v440 = vld [vmem:[%s4 + $0x34] sm:$0xf]
      %v441 = vld [vmem:[%s4 + $0x38] sm:$0xf]
      %v442 = vld [vmem:[%s4 + $0x3c] sm:$0xf]
      %v459 = vunpack.c.l.b16 %v427
      %v460 = vunpack.c.l.b16 %v428
      %v461 = vunpack.c.l.b16 %v429
      %v462 = vunpack.c.l.b16 %v430
      %v463 = vunpack.c.l.b16 %v431
      %v464 = vunpack.c.l.b16 %v432
      %v465 = vunpack.c.l.b16 %v433
      %v466 = vunpack.c.l.b16 %v434
      %v467 = vunpack.c.l.b16 %v435
      %v468 = vunpack.c.l.b16 %v436
      %v469 = vunpack.c.l.b16 %v437
      %v470 = vunpack.c.l.b16 %v438
      %v471 = vunpack.c.l.b16 %v439
      %v472 = vunpack.c.l.b16 %v440
      %v473 = vunpack.c.l.b16 %v441
      %v474 = vunpack.c.l.b16 %v442
      %v475 = vpack.c.b16 %v460, %v459
      %v476 = vpack.c.b16 %v462, %v461
      %v477 = vpack.c.b16 %v464, %v463
      %v478 = vpack.c.b16 %v466, %v465
      %v479 = vpack.c.b16 %v468, %v467
      %v480 = vpack.c.b16 %v470, %v469
      %v481 = vpack.c.b16 %v472, %v471
      %v482 = vpack.c.b16 %v474, %v473
      %491 = vmatprep.subr.bf16.mxu0 0
      %492 = vmatpush1.bf16.msra.mxu0 %v475
      %493 = vmatprep.subr.bf16.mxu0 0
      %494 = vmatpush1.bf16.msra.mxu0 %v476
      %495 = vmatprep.subr.bf16.mxu0 0
      %496 = vmatpush1.bf16.msra.mxu0 %v477
      %497 = vmatprep.subr.bf16.mxu0 0
      %498 = vmatpush1.bf16.msra.mxu0 %v478
      %499 = vmatprep.subr.bf16.mxu0 0
      %500 = vmatpush1.bf16.msra.mxu0 %v479
      %501 = vmatprep.subr.bf16.mxu0 0
      %502 = vmatpush1.bf16.msra.mxu0 %v480
      %503 = vmatprep.subr.bf16.mxu0 0
      %504 = vmatpush1.bf16.msra.mxu0 %v481
      %505 = vmatprep.subr.bf16.mxu0 0
      %506 = vmatpush1.bf16.msra.mxu0 %v482
      %507 = vmatprep.subr.bf16.mxu0 0
      %508 = vmatpush1.bf16.msra.mxu0 0
      %509 = vmatprep.subr.bf16.mxu0 0
      %510 = vmatpush1.bf16.msra.mxu0 0
      %511 = vmatprep.subr.bf16.mxu0 0
      %512 = vmatpush1.bf16.msra.mxu0 0
      %513 = vmatprep.subr.bf16.mxu0 0
      %514 = vmatpush1.bf16.msra.mxu0 0
      %515 = vmatprep.subr.bf16.mxu0 0
      %516 = vmatpush1.bf16.msra.mxu0 0
      %517 = vmatprep.subr.bf16.mxu0 0
      %518 = vmatpush1.bf16.msra.mxu0 0
      %519 = vmatprep.subr.bf16.mxu0 0
      %520 = vmatpush1.bf16.msra.mxu0 0
      %521 = vmatprep.subr.bf16.mxu0 0
      %522 = vmatpush1.bf16.msra.mxu0 0
      %523 = vmatprep.mubr.bf16.mxu0 0
      %524 = vmatmul.mubr.bf16.gmra.mrb[0].mxu0 %v426
      %v525 = vpop.f32.mrb[0].mxu0
      %v526 = vadd.f32 0.0, %v525
      %v527 = vpop.f32.mrb[0].mxu0
      %v528 = vpop.f32.mrb[0].mxu0
      %v529 = vadd.f32 0.0, %v528
      %v530 = vpop.f32.mrb[0].mxu0
      %531 = vdwg.mxu0
      %s532 = scalar_select %p378, 1, 0
      %v533 = vstv %s532
      %vm534 = vcmp.eq.s32.totalorder %v533, 1
      %v535 = vsel %vm534, 0.0, %v526
      %v536 = vsel %vm534, 0.0, %v529
      %v537 = vsel %vm421, %v535, %v526
      %v538 = vsel %vm421, %v529, %v536
      %vm541 = vcmask 1046528
      %v542 = vrot.slane %v537, 1
      %v543 = vrot.slane %v538, 1
      %v544 = vsel %vm541, %v542, %v543
      %545 = vrot.lane.b32.xlu0 %v544, 124
      %v546 = vpop.permute.xlu0 %545
      %v548 = vadd.f32 %v537, %v546
      %vm549 = vcmask 1045504
      %v550 = vrot.slane %v537, 2
      %v551 = vrot.slane %v538, 2
      %v552 = vsel %vm549, %v550, %v551
      %553 = vrot.lane.b32.xlu0 %v552, 120
      %v554 = vpop.permute.xlu0 %553
      %v556 = vadd.f32 %v548, %v554
      %v557 = vld [vmem:[%s5] sm:$0x1]
      %v559 = vlaneseq
      %v560 = vshrl.u32 %v559, 7
      %v561 = vsub.s32 0, %v560
      %v562 = vrot.slane %v557, %v561
      %v564 = vadd.f32 %v556, %v562
      %v565 = vmax.f32 %v564, 0.0
      %vm566 = vcmask 31744
      %567 = vst.msk [vmem:[%s370] sm:$0xff] %vm566, %v565
      %v568 = vld [vmem:[%s373] sm:$0x1]
      %v569 = vsel %vm566, %v565, 0.0
      %v570 = vrot.slane %v569, 4
      %v571 = vadd.f32 %v569, %v570
      %v572 = vrot.slane %v571, 2
      %v573 = vadd.f32 %v571, %v572
      %v574 = vrot.slane %v573, 1
      %v575 = vadd.f32 %v573, %v574
      %v576 = vadd.f32 %v568, %v575
      %vm577 = vcmask 24576
      %578 = vst.msk [vmem:[%s373] sm:$0x1] %vm577, %v576
      %v579 = vld [vmem:[%s376] sm:$0x1]
      %v580 = vmul.f32 %v565, %v565
      %v581 = vsel %vm566, %v580, 0.0
      %v582 = vrot.slane %v581, 4
      %v583 = vadd.f32 %v581, %v582
      %v584 = vrot.slane %v583, 2
      %v585 = vadd.f32 %v583, %v584
      %v586 = vrot.slane %v585, 1
      %v587 = vadd.f32 %v585, %v586
      %v588 = vadd.f32 %v579, %v587
      %589 = vst.msk [vmem:[%s376] sm:$0x1] %vm577, %v588
      %p590 = scmp.lt.s32.totalorder %s24, 1
      %s591 = scalar_select %p590, %s24, 1
      %p592 = scmp.lt.s32.totalorder %s25, 0
      %s593 = scalar_select %p592, %s25, 0
      %s594 = sadd.s32 %s593, %s591
      %s595 = smul.addr %s594, 8
      %s596 = scalar_lea.vmem %s6, %s595
      %p597 = scmp.lt.s32.totalorder %s24, 1
      %s598 = scalar_select %p597, %s24, 1
      %s599 = scalar_lea.vmem %s7, %s598
      %p600 = scmp.lt.s32.totalorder %s24, 1
      %s601 = scalar_select %p600, %s24, 1
      %s602 = scalar_lea.vmem %s8, %s601
      // Predicated region
      $region49: #{encoder_forward.7} parent=43 // pred_check
        %p603 = pneg %p192
      $region50: #{encoder_forward.7} parent=43 // pred_check_branch
        %605 = sbr.rel (%p603) target = $region52
      $region51: #{encoder_forward.7} parent=43 // pred_region
        _
      $region52: #{encoder_forward.7} parent=43 // pred_fallthru
        _
      // Predicated region
      $region53: #{encoder_forward.7} parent=43 // pred_check
        %p606 = pneg %p218
      $region54: #{encoder_forward.7} parent=43 // pred_check_branch
        %608 = sbr.rel (%p606) target = $region56
      $region55: #{encoder_forward.7} parent=43 // pred_region
        _
      $region56: #{encoder_forward.7} parent=43 // pred_fallthru
        _
      // Predicated region
      $region57: #{encoder_forward.7} parent=43 // pred_check
        %p609 = pneg %p244
      $region58: #{encoder_forward.7} parent=43 // pred_check_branch
        %611 = sbr.rel (%p609) target = $region60
      $region59: #{encoder_forward.7} parent=43 // pred_region
        _
      $region60: #{encoder_forward.7} parent=43 // pred_fallthru
        _
    $region44: #{encoder_forward.7} parent=5 // pred_fallthru
      _
    %p612 = scmp.le.s32.totalorder 2, %s15
    // Predicated region
    $region61: #{encoder_forward.7} parent=5 // pred_check
      %p613 = pneg %p612
    $region62: #{encoder_forward.7} parent=5 // pred_check_branch
      %615 = sbr.rel (%p613) target = $region64
    $region63: #{encoder_forward.7} parent=5 // pred_region
      %s616 = ssub.s32 %s15, 2
      // Predicated region
      $region65: #{encoder_forward.7} parent=63 // pred_check
        %p617 = pneg %p198
      $region66: #{encoder_forward.7} parent=63 // pred_check_branch
        %619 = sbr.rel (%p617) target = $region68
      $region67: #{encoder_forward.7} parent=63 // pred_region
        %p620 = scmp.lt.s32.totalorder %s26, 1
        %s621 = scalar_select %p620, %s26, 1
        %p622 = scmp.lt.s32.totalorder %s27, 0
        %s623 = scalar_select %p622, %s27, 0
        %s624 = sadd.s32 %s623, %s621
        %s625 = smul.addr %s624, 8
        %s626 = scalar_lea.vmem %s6, %s625
      $region68: #{encoder_forward.7} parent=63 // pred_fallthru
        _
      // Predicated region
      $region69: #{encoder_forward.7} parent=63 // pred_check
        %p627 = pneg %p224
      $region70: #{encoder_forward.7} parent=63 // pred_check_branch
        %629 = sbr.rel (%p627) target = $region72
      $region71: #{encoder_forward.7} parent=63 // pred_region
        %p630 = scmp.lt.s32.totalorder %s26, 1
        %s631 = scalar_select %p630, %s26, 1
        %s632 = scalar_lea.vmem %s7, %s631
      $region72: #{encoder_forward.7} parent=63 // pred_fallthru
        _
      // Predicated region
      $region73: #{encoder_forward.7} parent=63 // pred_check
        %p633 = pneg %p250
      $region74: #{encoder_forward.7} parent=63 // pred_check_branch
        %635 = sbr.rel (%p633) target = $region76
      $region75: #{encoder_forward.7} parent=63 // pred_region
        %p636 = scmp.lt.s32.totalorder %s26, 1
        %s637 = scalar_select %p636, %s26, 1
        %s638 = scalar_lea.vmem %s8, %s637
      $region76: #{encoder_forward.7} parent=63 // pred_fallthru
        _
    $region64: #{encoder_forward.7} parent=5 // pred_fallthru
      _
  $region6: #{encoder_forward.7} parent=0 // loop_footer
    %s19 = sadd.s32 1, %s15
  $region7: #{encoder_forward.7} parent=0 // loop_footer_branch
    %14 = sbr.rel target = $region3
  $region8: #{encoder_forward.7} parent=0 // loop_exit
    _

// kernel: encoder_forward.6
$region0: #{encoder_forward.6}
  #allocation0 [shape = 'u32[]', space=smem, size = 0x4, offset = 0x4, fixed_abs, tag = 'smem constant byte address 0x4 - core index']
  #allocation1 [shape = 'u32[144,128]{1,0:T(1,128)}', space=vmem, size = 0x12000, scoped, tag = 'internal scratch']
  %s0 = inlined_call_operand.vmem [shape: bf16[2,8,2048], index: 0, kind: input, shape index: {}]
  %s1 = inlined_call_operand.vmem [shape: bf16[2,1,3,2048], index: 1, kind: input, shape index: {}]
  %s2 = inlined_call_operand.vmem [shape: f32[1,2048], index: 2, kind: input, shape index: {}]
  %s3 = inlined_call_operand.vmem [shape: f32[1,2048], index: 3, kind: input, shape index: {}]
  %s4 = inlined_call_operand.hbm [shape: bf16[2048,384], index: 4, kind: input, shape index: {}]
  %s5 = inlined_call_operand.hbm [shape: f32[1,128], index: 5, kind: input, shape index: {}]
  %s6 = inlined_call_operand.vmem [shape: bf16[2,8,128], index: 6, kind: output, shape index: {0}]
  %s7 = inlined_call_operand.vmem [shape: f32[2,1,128], index: 7, kind: output, shape index: {1}]
  %s8 = inlined_call_operand.vmem [shape: f32[2,1,128], index: 8, kind: output, shape index: {2}]
  %9 = xla_tuple %s6, %s7, %s8
  %s10 = sld [smem:[#allocation0]]
  $region85: #{encoder_forward.6} parent=0
    _
  %s12 = ssub.s32 1, %s10
  %s13 = scalar_select 0, %s12, %s10
  $region1: #{encoder_forward.6} parent=0
    #allocation2 [shape = 'u8[1572864]{0}', space=vmem, size = 0x180000, scoped, tag = 'input window, operand 4, single buffered']
    #allocation3 [shape = 's32[2]{0}', space=sflag, size = 0x8, scoped, tag = 'scoped memory for encoder_forward.6']
    #allocation4 [shape = 'u8[512]{0}', space=vmem, size = 0x400, scoped, tag = 'input window, operand 5, single buffered']
    #allocation5 [shape = 's32[1]{0}', space=sflag, size = 0x4, scoped, tag = 'scoped memory for encoder_forward.6']
    %14 = vsyncpa [#allocation3], 0
    %15 = vsyncpa [#allocation5], 0
    loop: start=0, step=1, limit=4
    $region2: #{encoder_forward.6} parent=1 // loop_pre_header
      _
    $region3: #{encoder_forward.6} parent=1 // loop_header
      %s17 = sphi 0, %s21
      %p18 = scmp.ge.s32.totalorder %s17, 4
      %s24 = sphi 0, %s36
      %s25 = sphi 0, %s32
      %s26 = sphi 0, %s24
      %s27 = sphi 0, %s25
      %s28 = sphi 0, %s26
      %s29 = sphi 0, %s27
      %s41 = sphi 0, %s43
      %s44 = sphi 0, %s41
      %s45 = sphi 0, %s44
      %s61 = sphi 0, %s45
      %s69 = sphi 0, %s71
      %s72 = sphi 0, %s69
      %s73 = sphi 0, %s72
      %s89 = sphi 0, %s73
      %s93 = sphi 0, %s93
      %s95 = sphi 0, %s93
      %s96 = sphi 0, %s95
      %s110 = sphi 0, %s96
      %s114 = sphi 0, %s114
      %s116 = sphi 0, %s114
      %s117 = sphi 0, %s116
      %s131 = sphi 0, %s117
      %s135 = sphi 0, %s135
      %s137 = sphi 0, %s135
      %s138 = sphi 0, %s137
      %s152 = sphi 0, %s138
      %s156 = sphi 0, %s156
      %s158 = sphi 0, %s156
      %s159 = sphi 0, %s158
      %s173 = sphi 0, %s159
      %s181 = sphi 0, %s183
      %s184 = sphi 0, %s181
      %s185 = sphi 0, %s184
      %s201 = sphi 0, %s185
      %s207 = sphi 0, %s209
      %s210 = sphi 0, %s207
      %s211 = sphi 0, %s210
      %s227 = sphi 0, %s211
      %s233 = sphi 0, %s235
      %s236 = sphi 0, %s233
      %s237 = sphi 0, %s236
      %s253 = sphi 0, %s237
    $region4: #{encoder_forward.6} parent=1 // loop_header_branch
      %20 = sbr.rel (%p18) target = $region8
    $region5: #{encoder_forward.6} parent=1 // loop_body
      %s22 = ssub.s32 %s17, 1
      %s23 = ssub.s32 %s17, 2
      %s30 = sadd.s32 1, %s25
      %p31 = scmp.ge.s32.totalorder %s30, 1
      %s32 = scalar_select %p31, 0, %s30
      %s33 = sadd.s32 1, %s24
      %s34 = scalar_select %p31, %s33, %s24
      %p35 = scmp.ge.s32.totalorder %s34, 2
      %s36 = scalar_select %p35, 0, %s34
      %s37 = ssub.s32 %s24, %s36
      %s38 = ssub.s32 %s25, %s32
      %s39 = sor.u32 %s37, %s38
      %p40 = scmp.eq.s32.totalorder %s39, 0
      %s42 = sadd.s32 %s41, 1
      %s43 = scalar_select %p40, %s41, %s42
      %p46 = pneg %p40
      %p47 = scmp.eq.s32.totalorder %s17, 1
      %p48 = por %p46, %p47
      %p49 = scmp.ne.s32.totalorder %s41, %s44
      %p50 = scmp.eq.s32.totalorder %s17, 0
      %p51 = por %p49, %p50
      %p52 = scmp.ne.s32.totalorder %s41, %s44
      %p53 = scmp.eq.s32.totalorder %s22, 1
      %p54 = por %p52, %p53
      %p55 = scmp.ne.s32.totalorder %s44, %s45
      %p56 = scmp.eq.s32.totalorder %s22, 0
      %p57 = por %p55, %p56
      %p58 = scmp.ne.s32.totalorder %s44, %s45
      %p59 = scmp.eq.s32.totalorder %s23, 1
      %p60 = por %p58, %p59
      %p62 = scmp.ne.s32.totalorder %s45, %s61
      %p63 = scmp.eq.s32.totalorder %s23, 0
      %p64 = por %p62, %p63
      %s65 = ssub.s32 %s24, %s36
      %s66 = ssub.s32 %s25, %s32
      %s67 = sor.u32 %s65, %s66
      %p68 = scmp.eq.s32.totalorder %s67, 0
      %s70 = sadd.s32 %s69, 1
      %s71 = scalar_select %p68, %s69, %s70
      %p74 = pneg %p68
      %p75 = scmp.eq.s32.totalorder %s17, 1
      %p76 = por %p74, %p75
      %p77 = scmp.ne.s32.totalorder %s69, %s72
      %p78 = scmp.eq.s32.totalorder %s17, 0
      %p79 = por %p77, %p78
      %p80 = scmp.ne.s32.totalorder %s69, %s72
      %p81 = scmp.eq.s32.totalorder %s22, 1
      %p82 = por %p80, %p81
      %p83 = scmp.ne.s32.totalorder %s72, %s73
      %p84 = scmp.eq.s32.totalorder %s22, 0
      %p85 = por %p83, %p84
      %p86 = scmp.ne.s32.totalorder %s72, %s73
      %p87 = scmp.eq.s32.totalorder %s23, 1
      %p88 = por %p86, %p87
      %p90 = scmp.ne.s32.totalorder %s73, %s89
      %p91 = scmp.eq.s32.totalorder %s23, 0
      %p92 = por %p90, %p91
      %s94 = sadd.s32 %s93, 1
      %p97 = scmp.eq.s32.totalorder %s17, 1
      %p98 = scmp.ne.s32.totalorder %s93, %s95
      %p99 = scmp.eq.s32.totalorder %s17, 0
      %p100 = por %p98, %p99
      %p101 = scmp.ne.s32.totalorder %s93, %s95
      %p102 = scmp.eq.s32.totalorder %s22, 1
      %p103 = por %p101, %p102
      %p104 = scmp.ne.s32.totalorder %s95, %s96
      %p105 = scmp.eq.s32.totalorder %s22, 0
      %p106 = por %p104, %p105
      %p107 = scmp.ne.s32.totalorder %s95, %s96
      %p108 = scmp.eq.s32.totalorder %s23, 1
      %p109 = por %p107, %p108
      %p111 = scmp.ne.s32.totalorder %s96, %s110
      %p112 = scmp.eq.s32.totalorder %s23, 0
      %p113 = por %p111, %p112
      %s115 = sadd.s32 %s114, 1
      %p118 = scmp.eq.s32.totalorder %s17, 1
      %p119 = scmp.ne.s32.totalorder %s114, %s116
      %p120 = scmp.eq.s32.totalorder %s17, 0
      %p121 = por %p119, %p120
      %p122 = scmp.ne.s32.totalorder %s114, %s116
      %p123 = scmp.eq.s32.totalorder %s22, 1
      %p124 = por %p122, %p123
      %p125 = scmp.ne.s32.totalorder %s116, %s117
      %p126 = scmp.eq.s32.totalorder %s22, 0
      %p127 = por %p125, %p126
      %p128 = scmp.ne.s32.totalorder %s116, %s117
      %p129 = scmp.eq.s32.totalorder %s23, 1
      %p130 = por %p128, %p129
      %p132 = scmp.ne.s32.totalorder %s117, %s131
      %p133 = scmp.eq.s32.totalorder %s23, 0
      %p134 = por %p132, %p133
      %s136 = sadd.s32 %s135, 1
      %p139 = scmp.eq.s32.totalorder %s17, 1
      %p140 = scmp.ne.s32.totalorder %s135, %s137
      %p141 = scmp.eq.s32.totalorder %s17, 0
      %p142 = por %p140, %p141
      %p143 = scmp.ne.s32.totalorder %s135, %s137
      %p144 = scmp.eq.s32.totalorder %s22, 1
      %p145 = por %p143, %p144
      %p146 = scmp.ne.s32.totalorder %s137, %s138
      %p147 = scmp.eq.s32.totalorder %s22, 0
      %p148 = por %p146, %p147
      %p149 = scmp.ne.s32.totalorder %s137, %s138
      %p150 = scmp.eq.s32.totalorder %s23, 1
      %p151 = por %p149, %p150
      %p153 = scmp.ne.s32.totalorder %s138, %s152
      %p154 = scmp.eq.s32.totalorder %s23, 0
      %p155 = por %p153, %p154
      %s157 = sadd.s32 %s156, 1
      %p160 = scmp.eq.s32.totalorder %s17, 1
      %p161 = scmp.ne.s32.totalorder %s156, %s158
      %p162 = scmp.eq.s32.totalorder %s17, 0
      %p163 = por %p161, %p162
      %p164 = scmp.ne.s32.totalorder %s156, %s158
      %p165 = scmp.eq.s32.totalorder %s22, 1
      %p166 = por %p164, %p165
      %p167 = scmp.ne.s32.totalorder %s158, %s159
      %p168 = scmp.eq.s32.totalorder %s22, 0
      %p169 = por %p167, %p168
      %p170 = scmp.ne.s32.totalorder %s158, %s159
      %p171 = scmp.eq.s32.totalorder %s23, 1
      %p172 = por %p170, %p171
      %p174 = scmp.ne.s32.totalorder %s159, %s173
      %p175 = scmp.eq.s32.totalorder %s23, 0
      %p176 = por %p174, %p175
      %s177 = ssub.s32 %s24, %s36
      %s178 = ssub.s32 %s25, %s32
      %s179 = sor.u32 %s177, %s178
      %p180 = scmp.eq.s32.totalorder %s179, 0
      %s182 = sadd.s32 %s181, 1
      %s183 = scalar_select %p180, %s181, %s182
      %p186 = pneg %p180
      %p187 = scmp.eq.s32.totalorder %s17, 1
      %p188 = por %p186, %p187
      %p189 = scmp.ne.s32.totalorder %s181, %s184
      %p190 = scmp.eq.s32.totalorder %s17, 0
      %p191 = por %p189, %p190
      %p192 = scmp.ne.s32.totalorder %s181, %s184
      %p193 = scmp.eq.s32.totalorder %s22, 1
      %p194 = por %p192, %p193
      %p195 = scmp.ne.s32.totalorder %s184, %s185
      %p196 = scmp.eq.s32.totalorder %s22, 0
      %p197 = por %p195, %p196
      %p198 = scmp.ne.s32.totalorder %s184, %s185
      %p199 = scmp.eq.s32.totalorder %s23, 1
      %p200 = por %p198, %p199
      %p202 = scmp.ne.s32.totalorder %s185, %s201
      %p203 = scmp.eq.s32.totalorder %s23, 0
      %p204 = por %p202, %p203
      %s205 = ssub.s32 %s24, %s36
      %p206 = scmp.eq.s32.totalorder %s205, 0
      %s208 = sadd.s32 %s207, 1
      %s209 = scalar_select %p206, %s207, %s208
      %p212 = pneg %p206
      %p213 = scmp.eq.s32.totalorder %s17, 1
      %p214 = por %p212, %p213
      %p215 = scmp.ne.s32.totalorder %s207, %s210
      %p216 = scmp.eq.s32.totalorder %s17, 0
      %p217 = por %p215, %p216
      %p218 = scmp.ne.s32.totalorder %s207, %s210
      %p219 = scmp.eq.s32.totalorder %s22, 1
      %p220 = por %p218, %p219
      %p221 = scmp.ne.s32.totalorder %s210, %s211
      %p222 = scmp.eq.s32.totalorder %s22, 0
      %p223 = por %p221, %p222
      %p224 = scmp.ne.s32.totalorder %s210, %s211
      %p225 = scmp.eq.s32.totalorder %s23, 1
      %p226 = por %p224, %p225
      %p228 = scmp.ne.s32.totalorder %s211, %s227
      %p229 = scmp.eq.s32.totalorder %s23, 0
      %p230 = por %p228, %p229
      %s231 = ssub.s32 %s24, %s36
      %p232 = scmp.eq.s32.totalorder %s231, 0
      %s234 = sadd.s32 %s233, 1
      %s235 = scalar_select %p232, %s233, %s234
      %p238 = pneg %p232
      %p239 = scmp.eq.s32.totalorder %s17, 1
      %p240 = por %p238, %p239
      %p241 = scmp.ne.s32.totalorder %s233, %s236
      %p242 = scmp.eq.s32.totalorder %s17, 0
      %p243 = por %p241, %p242
      %p244 = scmp.ne.s32.totalorder %s233, %s236
      %p245 = scmp.eq.s32.totalorder %s22, 1
      %p246 = por %p244, %p245
      %p247 = scmp.ne.s32.totalorder %s236, %s237
      %p248 = scmp.eq.s32.totalorder %s22, 0
      %p249 = por %p247, %p248
      %p250 = scmp.ne.s32.totalorder %s236, %s237
      %p251 = scmp.eq.s32.totalorder %s23, 1
      %p252 = por %p250, %p251
      %p254 = scmp.ne.s32.totalorder %s237, %s253
      %p255 = scmp.eq.s32.totalorder %s23, 0
      %p256 = por %p254, %p255
      %p257 = scmp.le.s32.totalorder 1, %s17
      %p258 = scmp.lt.s32.totalorder %s17, 3
      %p259 = pnand %p257, %p258
      %p260 = pneg %p259
      // Predicated region
      $region9: #{encoder_forward.6} parent=5 // pred_check
        _
      $region10: #{encoder_forward.6} parent=5 // pred_check_branch
        %262 = sbr.rel (%p259) target = $region12
      $region11: #{encoder_forward.6} parent=5 // pred_region
        %s263 = ssub.s32 %s17, 1
        // Predicated region
        $region13: #{encoder_forward.6} parent=11 // pred_check
          %p264 = pneg %p106
        $region14: #{encoder_forward.6} parent=11 // pred_check_branch
          %266 = sbr.rel (%p264) target = $region16
        $region15: #{encoder_forward.6} parent=11 // pred_region
          _
        $region16: #{encoder_forward.6} parent=11 // pred_fallthru
          _
        // Predicated region
        $region17: #{encoder_forward.6} parent=11 // pred_check
          %p267 = pneg %p127
        $region18: #{encoder_forward.6} parent=11 // pred_check_branch
          %269 = sbr.rel (%p267) target = $region20
        $region19: #{encoder_forward.6} parent=11 // pred_region
          _
        $region20: #{encoder_forward.6} parent=11 // pred_fallthru
          _
        // Predicated region
        $region21: #{encoder_forward.6} parent=11 // pred_check
          %p270 = pneg %p148
        $region22: #{encoder_forward.6} parent=11 // pred_check_branch
          %272 = sbr.rel (%p270) target = $region24
        $region23: #{encoder_forward.6} parent=11 // pred_region
          %s274 = ssub.s32 49152, 49152
          %275 = vsyncadd [#allocation3], %s274
          %s276 = sshll.u32 [#allocation2], 4
          %s277 = int_to_ptr.vmem [resolvable:$true] %s276
          %282 = dma.hbm_to_vmem [thread:$0]  %s4, 49152, %s277, [#allocation3], 192, 192, 12
        $region24: #{encoder_forward.6} parent=11 // pred_fallthru
          _
        // Predicated region
        $region25: #{encoder_forward.6} parent=11 // pred_check
          %p283 = pneg %p169
        $region26: #{encoder_forward.6} parent=11 // pred_check_branch
          %285 = sbr.rel (%p283) target = $region28
        $region27: #{encoder_forward.6} parent=11 // pred_region
          %s287 = ssub.s32 16, 16
          %288 = vsyncadd [#allocation5], %s287
          %s290 = sshll.u32 [#allocation4], 4
          %s291 = int_to_ptr.vmem [resolvable:$true] %s290
          %293 = dma.hbm_to_vmem [thread:$0]  %s5, 16, %s291, [#allocation5]
        $region28: #{encoder_forward.6} parent=11 // pred_fallthru
          _
      $region12: #{encoder_forward.6} parent=5 // pred_fallthru
        _
      %p294 = scmp.lt.s32.totalorder %s17, 2
      // Predicated region
      $region29: #{encoder_forward.6} parent=5 // pred_check
        %p295 = pneg %p294
      $region30: #{encoder_forward.6} parent=5 // pred_check_branch
        %297 = sbr.rel (%p295) target = $region32
      $region31: #{encoder_forward.6} parent=5 // pred_region
        // Predicated region
        $region33: #{encoder_forward.6} parent=31 // pred_check
          %p298 = pneg %p51
        $region34: #{encoder_forward.6} parent=31 // pred_check_branch
          %300 = sbr.rel (%p298) target = $region36
        $region35: #{encoder_forward.6} parent=31 // pred_region
          %p301 = scmp.lt.s32.totalorder %s24, 1
          %s302 = scalar_select %p301, %s24, 1
          %p303 = scmp.lt.s32.totalorder %s25, 0
          %s304 = scalar_select %p303, %s25, 0
          %s305 = smul.addr %s304, 16
          %s306 = smul.addr %s302, 16
          %s307 = sadd.s32 %s305, %s306
          %s308 = smul.addr %s307, 4
          %s309 = scalar_lea.vmem %s0, %s308
        $region36: #{encoder_forward.6} parent=31 // pred_fallthru
          _
        // Predicated region
        $region37: #{encoder_forward.6} parent=31 // pred_check
          %p310 = pneg %p79
        $region38: #{encoder_forward.6} parent=31 // pred_check_branch
          %312 = sbr.rel (%p310) target = $region40
        $region39: #{encoder_forward.6} parent=31 // pred_region
          %p313 = scmp.lt.s32.totalorder %s24, 1
          %s314 = scalar_select %p313, %s24, 1
          %p315 = scmp.lt.s32.totalorder %s25, 0
          %s316 = scalar_select %p315, %s25, 0
          %s317 = smul.addr %s316, 16
          %s318 = smul.addr %s314, 16
          %s319 = sadd.s32 %s317, %s318
          %s320 = smul.addr %s319, 2
          %s321 = scalar_lea.vmem %s1, %s320
        $region40: #{encoder_forward.6} parent=31 // pred_fallthru
          _
      $region32: #{encoder_forward.6} parent=5 // pred_fallthru
        _
      %p322 = scmp.le.s32.totalorder 1, %s17
      %p323 = scmp.lt.s32.totalorder %s17, 3
      %p324 = pnand %p322, %p323
      %p325 = pneg %p324
      // Predicated region
      $region41: #{encoder_forward.6} parent=5 // pred_check
        _
      $region42: #{encoder_forward.6} parent=5 // pred_check_branch
        %327 = sbr.rel (%p324) target = $region44
      $region43: #{encoder_forward.6} parent=5 // pred_region
        %s328 = ssub.s32 %s17, 1
        // Predicated region
        $region45: #{encoder_forward.6} parent=43 // pred_check
          %p329 = pneg %p148
        $region46: #{encoder_forward.6} parent=43 // pred_check_branch
          %331 = sbr.rel (%p329) target = $region48
        $region47: #{encoder_forward.6} parent=43 // pred_region
          %332 = dma.done [#allocation3], 49152
        $region48: #{encoder_forward.6} parent=43 // pred_fallthru
          _
        // Predicated region
        $region49: #{encoder_forward.6} parent=43 // pred_check
          %p333 = pneg %p169
        $region50: #{encoder_forward.6} parent=43 // pred_check_branch
          %335 = sbr.rel (%p333) target = $region52
        $region51: #{encoder_forward.6} parent=43 // pred_region
          %336 = dma.done [#allocation5], 16
        $region52: #{encoder_forward.6} parent=43 // pred_fallthru
          _
        %p337 = scmp.lt.s32.totalorder %s26, 1
        %s338 = scalar_select %p337, %s26, 1
        %p339 = scmp.lt.s32.totalorder %s27, 0
        %s340 = scalar_select %p339, %s27, 0
        %s341 = smul.addr %s340, 16
        %s342 = smul.addr %s338, 16
        %s343 = sadd.s32 %s341, %s342
        %s344 = smul.addr %s343, 4
        %s345 = scalar_lea.vmem %s0, %s344
        %p346 = pneg %p57
        %p347 = pneg %p54
        %p348 = scmp.lt.s32.totalorder %s26, 1
        %s349 = scalar_select %p348, %s26, 1
        %p350 = scmp.lt.s32.totalorder %s27, 0
        %s351 = scalar_select %p350, %s27, 0
        %s352 = smul.addr %s351, 16
        %s353 = smul.addr %s349, 16
        %s354 = sadd.s32 %s352, %s353
        %s355 = smul.addr %s354, 2
        %s356 = scalar_lea.vmem %s1, %s355
        %p357 = pneg %p85
        %p358 = pneg %p82
        %p359 = pneg %p106
        %p360 = pneg %p103
        %p361 = pneg %p127
        %p362 = pneg %p124
        %p363 = pneg %p148
        %p364 = pneg %p145
        %p365 = pneg %p169
        %p366 = pneg %p166
        %p367 = pneg %p197
        %p368 = pneg %p194
        %p369 = scmp.lt.s32.totalorder %s26, 1
        %s370 = scalar_select %p369, %s26, 1
        %p371 = scmp.lt.s32.totalorder %s27, 0
        %s372 = scalar_select %p371, %s27, 0
        %s373 = sadd.s32 %s372, %s370
        %s374 = smul.addr %s373, 4
        %s375 = scalar_lea.vmem %s6, %s374
        %p376 = pneg %p223
        %p377 = pneg %p220
        %p378 = scmp.lt.s32.totalorder %s26, 1
        %s379 = scalar_select %p378, %s26, 1
        %s380 = scalar_lea.vmem %s7, %s379
        %p381 = pneg %p249
        %p382 = pneg %p246
        %p383 = scmp.lt.s32.totalorder %s26, 1
        %s384 = scalar_select %p383, %s26, 1
        %s385 = scalar_lea.vmem %s8, %s384
        %p386 = scmp.lt.s32.totalorder %s26, 1
        %s387 = scalar_select %p386, %s26, 1
        %p388 = scmp.lt.s32.totalorder %s27, 0
        %s389 = scalar_select %p388, %s27, 0
        %s390 = smul.addr %s389, 16
        %s391 = smul.addr %s387, 16
        %s392 = sadd.s32 %s390, %s391
        %s393 = smul.addr %s392, 4
        %s394 = scalar_lea.vmem %s0, %s393
        %p395 = scmp.lt.s32.totalorder %s26, 1
        %s396 = scalar_select %p395, %s26, 1
        %p397 = scmp.lt.s32.totalorder %s27, 0
        %s398 = scalar_select %p397, %s27, 0
        %s399 = smul.addr %s398, 16
        %s400 = smul.addr %s396, 16
        %s401 = sadd.s32 %s399, %s400
        %s402 = smul.addr %s401, 2
        %s403 = scalar_lea.vmem %s1, %s402
        %p404 = scmp.lt.s32.totalorder %s26, 1
        %s405 = scalar_select %p404, %s26, 1
        %p406 = scmp.lt.s32.totalorder %s27, 0
        %s407 = scalar_select %p406, %s27, 0
        %s408 = sadd.s32 %s407, %s405
        %s409 = smul.addr %s408, 4
        %s410 = scalar_lea.vmem %s6, %s409
        %p411 = scmp.lt.s32.totalorder %s26, 1
        %s412 = scalar_select %p411, %s26, 1
        %s413 = scalar_lea.vmem %s7, %s412
        %p414 = scmp.lt.s32.totalorder %s26, 1
        %s415 = scalar_select %p414, %s26, 1
        %s416 = scalar_lea.vmem %s8, %s415
        %p418 = scmp.eq.s32.totalorder %s27, 0
        // Predicated region
        $region53: #{encoder_forward.6} parent=43 // pred_check
          %p419 = pneg %p418
        $region54: #{encoder_forward.6} parent=43 // pred_check_branch
          %421 = sbr.rel (%p419) target = $region56
        $region55: #{encoder_forward.6} parent=43 // pred_region
          %422 = vst [vmem:[%s413] sm:$0x1] 0.0
          %423 = vst [vmem:[%s416] sm:$0x1] 0.0
        $region56: #{encoder_forward.6} parent=43 // pred_fallthru
          _
        %v424 = vld [vmem:[%s2] sm:$0xff]
        %v425 = vld [vmem:[%s2 + $0x8] sm:$0xff]
        %v426 = vld [vmem:[%s3] sm:$0xff]
        %v427 = vld [vmem:[%s3 + $0x8] sm:$0xff]
        %v428 = vld [vmem:[%s394] sm:$0xff]
        %v429 = vld [vmem:[%s394 + $0x8] sm:$0xff]
        %v430 = vld [vmem:[%s394 + $0x10] sm:$0xff]
        %v431 = vld [vmem:[%s394 + $0x18] sm:$0xff]
        %v432 = vld [vmem:[%s394 + $0x20] sm:$0xff]
        %v433 = vld [vmem:[%s394 + $0x28] sm:$0xff]
        %v434 = vld [vmem:[%s394 + $0x30] sm:$0xff]
        %v435 = vld [vmem:[%s394 + $0x38] sm:$0xff]
        %v436 = vunpack.c.l.bf16 %v428
        %v437 = vunpack.c.h.bf16 %v428
        %v438 = vunpack.c.l.bf16 %v429
        %v439 = vunpack.c.h.bf16 %v429
        %v440 = vunpack.c.l.bf16 %v430
        %v441 = vunpack.c.h.bf16 %v430
        %v442 = vunpack.c.l.bf16 %v431
        %v443 = vunpack.c.h.bf16 %v431
        %v444 = vunpack.c.l.bf16 %v432
        %v445 = vunpack.c.h.bf16 %v432
        %v446 = vunpack.c.l.bf16 %v433
        %v447 = vunpack.c.h.bf16 %v433
        %v448 = vunpack.c.l.bf16 %v434
        %v449 = vunpack.c.h.bf16 %v434
        %v450 = vunpack.c.l.bf16 %v435
        %v451 = vunpack.c.h.bf16 %v435
        %v454 = vlaneseq
        %v455 = vshrl.u32 %v454, 7
        %v456 = vsub.s32 0, %v455
        %v457 = vrot.slane %v424, %v456
        %v458 = vlaneseq
        %v459 = vshrl.u32 %v458, 7
        %v460 = vsub.s32 1, %v459
        %v461 = vrot.slane %v424, %v460
        %v462 = vlaneseq
        %v463 = vshrl.u32 %v462, 7
        %v464 = vsub.s32 2, %v463
        %v465 = vrot.slane %v424, %v464
        %v466 = vlaneseq
        %v467 = vshrl.u32 %v466, 7
        %v468 = vsub.s32 3, %v467
        %v469 = vrot.slane %v424, %v468
        %v470 = vlaneseq
        %v471 = vshrl.u32 %v470, 7
        %v472 = vsub.s32 4, %v471
        %v473 = vrot.slane %v424, %v472
        %v474 = vlaneseq
        %v475 = vshrl.u32 %v474, 7
        %v476 = vsub.s32 5, %v475
        %v477 = vrot.slane %v424, %v476
        %v478 = vlaneseq
        %v479 = vshrl.u32 %v478, 7
        %v480 = vsub.s32 6, %v479
        %v481 = vrot.slane %v424, %v480
        %v482 = vlaneseq
        %v483 = vshrl.u32 %v482, 7
        %v484 = vsub.s32 7, %v483
        %v485 = vrot.slane %v424, %v484
        %v486 = vlaneseq
        %v487 = vshrl.u32 %v486, 7
        %v488 = vsub.s32 0, %v487
        %v489 = vrot.slane %v425, %v488
        %v490 = vlaneseq
        %v491 = vshrl.u32 %v490, 7
        %v492 = vsub.s32 1, %v491
        %v493 = vrot.slane %v425, %v492
        %v494 = vlaneseq
        %v495 = vshrl.u32 %v494, 7
        %v496 = vsub.s32 2, %v495
        %v497 = vrot.slane %v425, %v496
        %v498 = vlaneseq
        %v499 = vshrl.u32 %v498, 7
        %v500 = vsub.s32 3, %v499
        %v501 = vrot.slane %v425, %v500
        %v502 = vlaneseq
        %v503 = vshrl.u32 %v502, 7
        %v504 = vsub.s32 4, %v503
        %v505 = vrot.slane %v425, %v504
        %v506 = vlaneseq
        %v507 = vshrl.u32 %v506, 7
        %v508 = vsub.s32 5, %v507
        %v509 = vrot.slane %v425, %v508
        %v510 = vlaneseq
        %v511 = vshrl.u32 %v510, 7
        %v512 = vsub.s32 6, %v511
        %v513 = vrot.slane %v425, %v512
        %v514 = vlaneseq
        %v515 = vshrl.u32 %v514, 7
        %v516 = vsub.s32 7, %v515
        %v517 = vrot.slane %v425, %v516
        %v534 = vmul.f32 %v436, %v457
        %v535 = vmul.f32 %v437, %v461
        %v536 = vmul.f32 %v438, %v465
        %v537 = vmul.f32 %v439, %v469
        %v538 = vmul.f32 %v440, %v473
        %v539 = vmul.f32 %v441, %v477
        %v540 = vmul.f32 %v442, %v481
        %v541 = vmul.f32 %v443, %v485
        %v542 = vmul.f32 %v444, %v489
        %v543 = vmul.f32 %v445, %v493
        %v544 = vmul.f32 %v446, %v497
        %v545 = vmul.f32 %v447, %v501
        %v546 = vmul.f32 %v448, %v505
        %v547 = vmul.f32 %v449, %v509
        %v548 = vmul.f32 %v450, %v513
        %v549 = vmul.f32 %v451, %v517
        %v552 = vlaneseq
        %v553 = vshrl.u32 %v552, 7
        %v554 = vsub.s32 0, %v553
        %v555 = vrot.slane %v426, %v554
        %v556 = vlaneseq
        %v557 = vshrl.u32 %v556, 7
        %v558 = vsub.s32 1, %v557
        %v559 = vrot.slane %v426, %v558
        %v560 = vlaneseq
        %v561 = vshrl.u32 %v560, 7
        %v562 = vsub.s32 2, %v561
        %v563 = vrot.slane %v426, %v562
        %v564 = vlaneseq
        %v565 = vshrl.u32 %v564, 7
        %v566 = vsub.s32 3, %v565
        %v567 = vrot.slane %v426, %v566
        %v568 = vlaneseq
        %v569 = vshrl.u32 %v568, 7
        %v570 = vsub.s32 4, %v569
        %v571 = vrot.slane %v426, %v570
        %v572 = vlaneseq
        %v573 = vshrl.u32 %v572, 7
        %v574 = vsub.s32 5, %v573
        %v575 = vrot.slane %v426, %v574
        %v576 = vlaneseq
        %v577 = vshrl.u32 %v576, 7
        %v578 = vsub.s32 6, %v577
        %v579 = vrot.slane %v426, %v578
        %v580 = vlaneseq
        %v581 = vshrl.u32 %v580, 7
        %v582 = vsub.s32 7, %v581
        %v583 = vrot.slane %v426, %v582
        %v584 = vlaneseq
        %v585 = vshrl.u32 %v584, 7
        %v586 = vsub.s32 0, %v585
        %v587 = vrot.slane %v427, %v586
        %v588 = vlaneseq
        %v589 = vshrl.u32 %v588, 7
        %v590 = vsub.s32 1, %v589
        %v591 = vrot.slane %v427, %v590
        %v592 = vlaneseq
        %v593 = vshrl.u32 %v592, 7
        %v594 = vsub.s32 2, %v593
        %v595 = vrot.slane %v427, %v594
        %v596 = vlaneseq
        %v597 = vshrl.u32 %v596, 7
        %v598 = vsub.s32 3, %v597
        %v599 = vrot.slane %v427, %v598
        %v600 = vlaneseq
        %v601 = vshrl.u32 %v600, 7
        %v602 = vsub.s32 4, %v601
        %v603 = vrot.slane %v427, %v602
        %v604 = vlaneseq
        %v605 = vshrl.u32 %v604, 7
        %v606 = vsub.s32 5, %v605
        %v607 = vrot.slane %v427, %v606
        %v608 = vlaneseq
        %v609 = vshrl.u32 %v608, 7
        %v610 = vsub.s32 6, %v609
        %v611 = vrot.slane %v427, %v610
        %v612 = vlaneseq
        %v613 = vshrl.u32 %v612, 7
        %v614 = vsub.s32 7, %v613
        %v615 = vrot.slane %v427, %v614
        %v632 = vadd.f32 %v534, %v555
        %v633 = vadd.f32 %v535, %v559
        %v634 = vadd.f32 %v536, %v563
        %v635 = vadd.f32 %v537, %v567
        %v636 = vadd.f32 %v538, %v571
        %v637 = vadd.f32 %v539, %v575
        %v638 = vadd.f32 %v540, %v579
        %v639 = vadd.f32 %v541, %v583
        %v640 = vadd.f32 %v542, %v587
        %v641 = vadd.f32 %v543, %v591
        %v642 = vadd.f32 %v544, %v595
        %v643 = vadd.f32 %v545, %v599
        %v644 = vadd.f32 %v546, %v603
        %v645 = vadd.f32 %v547, %v607
        %v646 = vadd.f32 %v548, %v611
        %v647 = vadd.f32 %v549, %v615
        %v648 = vld [vmem:[%s403] sm:$0xff]
        %v649 = vld [vmem:[%s403 + $0x8] sm:$0xff]
        %v650 = vld [vmem:[%s403 + $0x10] sm:$0xff]
        %v651 = vld [vmem:[%s403 + $0x18] sm:$0xff]
        %v652 = vunpack.c.l.bf16 %v648
        %v653 = vunpack.c.h.bf16 %v648
        %v654 = vunpack.c.l.bf16 %v649
        %v655 = vunpack.c.h.bf16 %v649
        %v656 = vunpack.c.l.bf16 %v650
        %v657 = vunpack.c.h.bf16 %v650
        %v658 = vunpack.c.l.bf16 %v651
        %v659 = vunpack.c.h.bf16 %v651
        %v660 = vcombine.low %v457, %v461
        %v661 = vcombine.low %v465, %v469
        %v662 = vcombine.low %v473, %v477
        %v663 = vcombine.low %v481, %v485
        %v664 = vcombine.low %v489, %v493
        %v665 = vcombine.low %v497, %v501
        %v666 = vcombine.low %v505, %v509
        %v667 = vcombine.low %v513, %v517
        %v676 = vmul.f32 %v652, %v660
        %v677 = vmul.f32 %v653, %v661
        %v678 = vmul.f32 %v654, %v662
        %v679 = vmul.f32 %v655, %v663
        %v680 = vmul.f32 %v656, %v664
        %v681 = vmul.f32 %v657, %v665
        %v682 = vmul.f32 %v658, %v666
        %v683 = vmul.f32 %v659, %v667
        %v684 = vcombine.low %v555, %v559
        %v685 = vcombine.low %v563, %v567
        %v686 = vcombine.low %v571, %v575
        %v687 = vcombine.low %v579, %v583
        %v688 = vcombine.low %v587, %v591
        %v689 = vcombine.low %v595, %v599
        %v690 = vcombine.low %v603, %v607
        %v691 = vcombine.low %v611, %v615
        %v700 = vadd.f32 %v676, %v684
        %v701 = vadd.f32 %v677, %v685
        %v702 = vadd.f32 %v678, %v686
        %v703 = vadd.f32 %v679, %v687
        %v704 = vadd.f32 %v680, %v688
        %v705 = vadd.f32 %v681, %v689
        %v706 = vadd.f32 %v682, %v690
        %v707 = vadd.f32 %v683, %v691
        %s708 = scalar_select %p418, 1, 0
        %v709 = vstv %s708
        %vm710 = vcmp.eq.s32.totalorder %v709, 1
        %v711 = vsel %vm710, -1e+30, %v700
        %v712 = vsel %vm710, -1e+30, %v701
        %v713 = vsel %vm710, -1e+30, %v702
        %v714 = vsel %vm710, -1e+30, %v703
        %v715 = vsel %vm710, -1e+30, %v704
        %v716 = vsel %vm710, -1e+30, %v705
        %v717 = vsel %vm710, -1e+30, %v706
        %v718 = vsel %vm710, -1e+30, %v707
        %v727 = vlaneseq
        %v728 = vshrl.u32 %v727, 7
        %v729 = vsub.s32 1, %v728
        %v730 = vrot.slane %v711, %v729
        %v731 = vlaneseq
        %v732 = vshrl.u32 %v731, 7
        %v733 = vsub.s32 5, %v732
        %v734 = vrot.slane %v711, %v733
        %v735 = vlaneseq
        %v736 = vshrl.u32 %v735, 7
        %v737 = vsub.s32 1, %v736
        %v738 = vrot.slane %v712, %v737
        %v739 = vlaneseq
        %v740 = vshrl.u32 %v739, 7
        %v741 = vsub.s32 5, %v740
        %v742 = vrot.slane %v712, %v741
        %v743 = vlaneseq
        %v744 = vshrl.u32 %v743, 7
        %v745 = vsub.s32 1, %v744
        %v746 = vrot.slane %v713, %v745
        %v747 = vlaneseq
        %v748 = vshrl.u32 %v747, 7
        %v749 = vsub.s32 5, %v748
        %v750 = vrot.slane %v713, %v749
        %v751 = vlaneseq
        %v752 = vshrl.u32 %v751, 7
        %v753 = vsub.s32 1, %v752
        %v754 = vrot.slane %v714, %v753
        %v755 = vlaneseq
        %v756 = vshrl.u32 %v755, 7
        %v757 = vsub.s32 5, %v756
        %v758 = vrot.slane %v714, %v757
        %v759 = vlaneseq
        %v760 = vshrl.u32 %v759, 7
        %v761 = vsub.s32 1, %v760
        %v762 = vrot.slane %v715, %v761
        %v763 = vlaneseq
        %v764 = vshrl.u32 %v763, 7
        %v765 = vsub.s32 5, %v764
        %v766 = vrot.slane %v715, %v765
        %v767 = vlaneseq
        %v768 = vshrl.u32 %v767, 7
        %v769 = vsub.s32 1, %v768
        %v770 = vrot.slane %v716, %v769
        %v771 = vlaneseq
        %v772 = vshrl.u32 %v771, 7
        %v773 = vsub.s32 5, %v772
        %v774 = vrot.slane %v716, %v773
        %v775 = vlaneseq
        %v776 = vshrl.u32 %v775, 7
        %v777 = vsub.s32 1, %v776
        %v778 = vrot.slane %v717, %v777
        %v779 = vlaneseq
        %v780 = vshrl.u32 %v779, 7
        %v781 = vsub.s32 5, %v780
        %v782 = vrot.slane %v717, %v781
        %v783 = vlaneseq
        %v784 = vshrl.u32 %v783, 7
        %v785 = vsub.s32 1, %v784
        %v786 = vrot.slane %v718, %v785
        %v787 = vlaneseq
        %v788 = vshrl.u32 %v787, 7
        %v789 = vsub.s32 5, %v788
        %v790 = vrot.slane %v718, %v789
        %v823 = vrot.slane %v632, 7
        %v824 = vrot.slane %v633, 7
        %v825 = vrot.slane %v634, 7
        %v826 = vrot.slane %v635, 7
        %v827 = vrot.slane %v636, 7
        %v828 = vrot.slane %v637, 7
        %v829 = vrot.slane %v638, 7
        %v830 = vrot.slane %v639, 7
        %v831 = vrot.slane %v640, 7
        %v832 = vrot.slane %v641, 7
        %v833 = vrot.slane %v642, 7
        %v834 = vrot.slane %v643, 7
        %v835 = vrot.slane %v644, 7
        %v836 = vrot.slane %v645, 7
        %v837 = vrot.slane %v646, 7
        %v838 = vrot.slane %v647, 7
        %v863 = vlaneseq
        %v864 = vshrl.u32 %v863, 7
        %v865 = vsub.s32 2, %v864
        %v866 = vrot.slane %v700, %v865
        %v867 = vlaneseq
        %v868 = vshrl.u32 %v867, 7
        %v869 = vsub.s32 6, %v868
        %v870 = vrot.slane %v700, %v869
        %v871 = vlaneseq
        %v872 = vshrl.u32 %v871, 7
        %v873 = vsub.s32 2, %v872
        %v874 = vrot.slane %v701, %v873
        %v875 = vlaneseq
        %v876 = vshrl.u32 %v875, 7
        %v877 = vsub.s32 6, %v876
        %v878 = vrot.slane %v701, %v877
        %v879 = vlaneseq
        %v880 = vshrl.u32 %v879, 7
        %v881 = vsub.s32 2, %v880
        %v882 = vrot.slane %v702, %v881
        %v883 = vlaneseq
        %v884 = vshrl.u32 %v883, 7
        %v885 = vsub.s32 6, %v884
        %v886 = vrot.slane %v702, %v885
        %v887 = vlaneseq
        %v888 = vshrl.u32 %v887, 7
        %v889 = vsub.s32 2, %v888
        %v890 = vrot.slane %v703, %v889
        %v891 = vlaneseq
        %v892 = vshrl.u32 %v891, 7
        %v893 = vsub.s32 6, %v892
        %v894 = vrot.slane %v703, %v893
        %v895 = vlaneseq
        %v896 = vshrl.u32 %v895, 7
        %v897 = vsub.s32 2, %v896
        %v898 = vrot.slane %v704, %v897
        %v899 = vlaneseq
        %v900 = vshrl.u32 %v899, 7
        %v901 = vsub.s32 6, %v900
        %v902 = vrot.slane %v704, %v901
        %v903 = vlaneseq
        %v904 = vshrl.u32 %v903, 7
        %v905 = vsub.s32 2, %v904
        %v906 = vrot.slane %v705, %v905
        %v907 = vlaneseq
        %v908 = vshrl.u32 %v907, 7
        %v909 = vsub.s32 6, %v908
        %v910 = vrot.slane %v705, %v909
        %v911 = vlaneseq
        %v912 = vshrl.u32 %v911, 7
        %v913 = vsub.s32 2, %v912
        %v914 = vrot.slane %v706, %v913
        %v915 = vlaneseq
        %v916 = vshrl.u32 %v915, 7
        %v917 = vsub.s32 6, %v916
        %v918 = vrot.slane %v706, %v917
        %v919 = vlaneseq
        %v920 = vshrl.u32 %v919, 7
        %v921 = vsub.s32 2, %v920
        %v922 = vrot.slane %v707, %v921
        %v923 = vlaneseq
        %v924 = vshrl.u32 %v923, 7
        %v925 = vsub.s32 6, %v924
        %v926 = vrot.slane %v707, %v925
        %vm943 = vcmask 1040384
        %v944 = vsel %vm943, %v730, %v823
        %v945 = vsel %vm943, %v734, %v824
        %v946 = vsel %vm943, %v738, %v825
        %v947 = vsel %vm943, %v742, %v826
        %v948 = vsel %vm943, %v746, %v827
        %v949 = vsel %vm943, %v750, %v828
        %v950 = vsel %vm943, %v754, %v829
        %v951 = vsel %vm943, %v758, %v830
        %v952 = vsel %vm943, %v762, %v831
        %v953 = vsel %vm943, %v766, %v832
        %v954 = vsel %vm943, %v770, %v833
        %v955 = vsel %vm943, %v774, %v834
        %v956 = vsel %vm943, %v778, %v835
        %v957 = vsel %vm943, %v782, %v836
        %v958 = vsel %vm943, %v786, %v837
        %v959 = vsel %vm943, %v790, %v838
        %v960 = vsel %vm943, %v823, %v866
        %v961 = vsel %vm943, %v824, %v870
        %v962 = vsel %vm943, %v825, %v874
        %v963 = vsel %vm943, %v826, %v878
        %v964 = vsel %vm943, %v827, %v882
        %v965 = vsel %vm943, %v828, %v886
        %v966 = vsel %vm943, %v829, %v890
        %v967 = vsel %vm943, %v830, %v894
        %v968 = vsel %vm943, %v831, %v898
        %v969 = vsel %vm943, %v832, %v902
        %v970 = vsel %vm943, %v833, %v906
        %v971 = vsel %vm943, %v834, %v910
        %v972 = vsel %vm943, %v835, %v914
        %v973 = vsel %vm943, %v836, %v918
        %v974 = vsel %vm943, %v837, %v922
        %v975 = vsel %vm943, %v838, %v926
        %v976 = vlaneseq
        %v977 = vshrl.u32 %v976, 7
        %v978 = vsub.s32 0, %v977
        %v979 = vrot.slane %v711, %v978
        %v980 = vlaneseq
        %v981 = vshrl.u32 %v980, 7
        %v982 = vsub.s32 4, %v981
        %v983 = vrot.slane %v711, %v982
        %v984 = vlaneseq
        %v985 = vshrl.u32 %v984, 7
        %v986 = vsub.s32 0, %v985
        %v987 = vrot.slane %v712, %v986
        %v988 = vlaneseq
        %v989 = vshrl.u32 %v988, 7
        %v990 = vsub.s32 4, %v989
        %v991 = vrot.slane %v712, %v990
        %v992 = vlaneseq
        %v993 = vshrl.u32 %v992, 7
        %v994 = vsub.s32 0, %v993
        %v995 = vrot.slane %v713, %v994
        %v996 = vlaneseq
        %v997 = vshrl.u32 %v996, 7
        %v998 = vsub.s32 4, %v997
        %v999 = vrot.slane %v713, %v998
        %v1000 = vlaneseq
        %v1001 = vshrl.u32 %v1000, 7
        %v1002 = vsub.s32 0, %v1001
        %v1003 = vrot.slane %v714, %v1002
        %v1004 = vlaneseq
        %v1005 = vshrl.u32 %v1004, 7
        %v1006 = vsub.s32 4, %v1005
        %v1007 = vrot.slane %v714, %v1006
        %v1008 = vlaneseq
        %v1009 = vshrl.u32 %v1008, 7
        %v1010 = vsub.s32 0, %v1009
        %v1011 = vrot.slane %v715, %v1010
        %v1012 = vlaneseq
        %v1013 = vshrl.u32 %v1012, 7
        %v1014 = vsub.s32 4, %v1013
        %v1015 = vrot.slane %v715, %v1014
        %v1016 = vlaneseq
        %v1017 = vshrl.u32 %v1016, 7
        %v1018 = vsub.s32 0, %v1017
        %v1019 = vrot.slane %v716, %v1018
        %v1020 = vlaneseq
        %v1021 = vshrl.u32 %v1020, 7
        %v1022 = vsub.s32 4, %v1021
        %v1023 = vrot.slane %v716, %v1022
        %v1024 = vlaneseq
        %v1025 = vshrl.u32 %v1024, 7
        %v1026 = vsub.s32 0, %v1025
        %v1027 = vrot.slane %v717, %v1026
        %v1028 = vlaneseq
        %v1029 = vshrl.u32 %v1028, 7
        %v1030 = vsub.s32 4, %v1029
        %v1031 = vrot.slane %v717, %v1030
        %v1032 = vlaneseq
        %v1033 = vshrl.u32 %v1032, 7
        %v1034 = vsub.s32 0, %v1033
        %v1035 = vrot.slane %v718, %v1034
        %v1036 = vlaneseq
        %v1037 = vshrl.u32 %v1036, 7
        %v1038 = vsub.s32 4, %v1037
        %v1039 = vrot.slane %v718, %v1038
        %v1056 = vrot.slane %v632, 6
        %v1057 = vrot.slane %v633, 6
        %v1058 = vrot.slane %v634, 6
        %v1059 = vrot.slane %v635, 6
        %v1060 = vrot.slane %v636, 6
        %v1061 = vrot.slane %v637, 6
        %v1062 = vrot.slane %v638, 6
        %v1063 = vrot.slane %v639, 6
        %v1064 = vrot.slane %v640, 6
        %v1065 = vrot.slane %v641, 6
        %v1066 = vrot.slane %v642, 6
        %v1067 = vrot.slane %v643, 6
        %v1068 = vrot.slane %v644, 6
        %v1069 = vrot.slane %v645, 6
        %v1070 = vrot.slane %v646, 6
        %v1071 = vrot.slane %v647, 6
        %v1088 = vsel %vm943, %v979, %v730
        %v1089 = vsel %vm943, %v983, %v734
        %v1090 = vsel %vm943, %v987, %v738
        %v1091 = vsel %vm943, %v991, %v742
        %v1092 = vsel %vm943, %v995, %v746
        %v1093 = vsel %vm943, %v999, %v750
        %v1094 = vsel %vm943, %v1003, %v754
        %v1095 = vsel %vm943, %v1007, %v758
        %v1096 = vsel %vm943, %v1011, %v762
        %v1097 = vsel %vm943, %v1015, %v766
        %v1098 = vsel %vm943, %v1019, %v770
        %v1099 = vsel %vm943, %v1023, %v774
        %v1100 = vsel %vm943, %v1027, %v778
        %v1101 = vsel %vm943, %v1031, %v782
        %v1102 = vsel %vm943, %v1035, %v786
        %v1103 = vsel %vm943, %v1039, %v790
        %vm1104 = vcmask 1041408
        %v1105 = vsel %vm1104, %v1088, %v1056
        %v1106 = vsel %vm1104, %v1089, %v1057
        %v1107 = vsel %vm1104, %v1090, %v1058
        %v1108 = vsel %vm1104, %v1091, %v1059
        %v1109 = vsel %vm1104, %v1092, %v1060
        %v1110 = vsel %vm1104, %v1093, %v1061
        %v1111 = vsel %vm1104, %v1094, %v1062
        %v1112 = vsel %vm1104, %v1095, %v1063
        %v1113 = vsel %vm1104, %v1096, %v1064
        %v1114 = vsel %vm1104, %v1097, %v1065
        %v1115 = vsel %vm1104, %v1098, %v1066
        %v1116 = vsel %vm1104, %v1099, %v1067
        %v1117 = vsel %vm1104, %v1100, %v1068
        %v1118 = vsel %vm1104, %v1101, %v1069
        %v1119 = vsel %vm1104, %v1102, %v1070
        %v1120 = vsel %vm1104, %v1103, %v1071
        %v1121 = vmax.f32 %v944, %v1105
        %v1122 = vmax.f32 %v945, %v1106
        %v1123 = vmax.f32 %v946, %v1107
        %v1124 = vmax.f32 %v947, %v1108
        %v1125 = vmax.f32 %v948, %v1109
        %v1126 = vmax.f32 %v949, %v1110
        %v1127 = vmax.f32 %v950, %v1111
        %v1128 = vmax.f32 %v951, %v1112
        %v1129 = vmax.f32 %v952, %v1113
        %v1130 = vmax.f32 %v953, %v1114
        %v1131 = vmax.f32 %v954, %v1115
        %v1132 = vmax.f32 %v955, %v1116
        %v1133 = vmax.f32 %v956, %v1117
        %v1134 = vmax.f32 %v957, %v1118
        %v1135 = vmax.f32 %v958, %v1119
        %v1136 = vmax.f32 %v959, %v1120
        %v1137 = vmax.f32 %v960, %v1056
        %v1138 = vmax.f32 %v961, %v1057
        %v1139 = vmax.f32 %v962, %v1058
        %v1140 = vmax.f32 %v963, %v1059
        %v1141 = vmax.f32 %v964, %v1060
        %v1142 = vmax.f32 %v965, %v1061
        %v1143 = vmax.f32 %v966, %v1062
        %v1144 = vmax.f32 %v967, %v1063
        %v1145 = vmax.f32 %v968, %v1064
        %v1146 = vmax.f32 %v969, %v1065
        %v1147 = vmax.f32 %v970, %v1066
        %v1148 = vmax.f32 %v971, %v1067
        %v1149 = vmax.f32 %v972, %v1068
        %v1150 = vmax.f32 %v973, %v1069
        %v1151 = vmax.f32 %v974, %v1070
        %v1152 = vmax.f32 %v975, %v1071
        %v1153 = vpack.c.bf16 %v1137, %v1121
        %v1154 = vpack.c.bf16 %v1138, %v1122
        %v1155 = vpack.c.bf16 %v1139, %v1123
        %v1156 = vpack.c.bf16 %v1140, %v1124
        %v1157 = vpack.c.bf16 %v1141, %v1125
        %v1158 = vpack.c.bf16 %v1142, %v1126
        %v1159 = vpack.c.bf16 %v1143, %v1127
        %v1160 = vpack.c.bf16 %v1144, %v1128
        %v1161 = vpack.c.bf16 %v1145, %v1129
        %v1162 = vpack.c.bf16 %v1146, %v1130
        %v1163 = vpack.c.bf16 %v1147, %v1131
        %v1164 = vpack.c.bf16 %v1148, %v1132
        %v1165 = vpack.c.bf16 %v1149, %v1133
        %v1166 = vpack.c.bf16 %v1150, %v1134
        %v1167 = vpack.c.bf16 %v1151, %v1135
        %v1168 = vpack.c.bf16 %v1152, %v1136
        %v1169 = vld [vmem:[#allocation2] sm:$0xff]
        %v1170 = vld [vmem:[#allocation2 + $0x8] sm:$0xf]
        %v1171 = vld [vmem:[#allocation2 + $0xc] sm:$0xff]
        %v1172 = vld [vmem:[#allocation2 + $0x14] sm:$0xf]
        %v1173 = vld [vmem:[#allocation2 + $0x18] sm:$0xff]
        %v1174 = vld [vmem:[#allocation2 + $0x20] sm:$0xf]
        %v1175 = vld [vmem:[#allocation2 + $0x24] sm:$0xff]
        %v1176 = vld [vmem:[#allocation2 + $0x2c] sm:$0xf]
        %v1177 = vld [vmem:[#allocation2 + $0x30] sm:$0xff]
        %v1178 = vld [vmem:[#allocation2 + $0x38] sm:$0xf]
        %v1179 = vld [vmem:[#allocation2 + $0x3c] sm:$0xff]
        %v1180 = vld [vmem:[#allocation2 + $0x44] sm:$0xf]
        %v1181 = vld [vmem:[#allocation2 + $0x48] sm:$0xff]
        %v1182 = vld [vmem:[#allocation2 + $0x50] sm:$0xf]
        %v1183 = vld [vmem:[#allocation2 + $0x54] sm:$0xff]
        %v1184 = vld [vmem:[#allocation2 + $0x5c] sm:$0xf]
        %v1185 = vld [vmem:[#allocation2 + $0x60] sm:$0xff]
        %v1186 = vld [vmem:[#allocation2 + $0x68] sm:$0xf]
        %v1187 = vld [vmem:[#allocation2 + $0x6c] sm:$0xff]
        %v1188 = vld [vmem:[#allocation2 + $0x74] sm:$0xf]
        %v1189 = vld [vmem:[#allocation2 + $0x78] sm:$0xff]
        %v1190 = vld [vmem:[#allocation2 + $0x80] sm:$0xf]
        %v1191 = vld [vmem:[#allocation2 + $0x84] sm:$0xff]
        %v1192 = vld [vmem:[#allocation2 + $0x8c] sm:$0xf]
        %v1193 = vld [vmem:[#allocation2 + $0x90] sm:$0xff]
        %v1194 = vld [vmem:[#allocation2 + $0x98] sm:$0xf]
        %v1195 = vld [vmem:[#allocation2 + $0x9c] sm:$0xff]
        %v1196 = vld [vmem:[#allocation2 + $0xa4] sm:$0xf]
        %v1197 = vld [vmem:[#allocation2 + $0xa8] sm:$0xff]
        %v1198 = vld [vmem:[#allocation2 + $0xb0] sm:$0xf]
        %v1199 = vld [vmem:[#allocation2 + $0xb4] sm:$0xff]
        %v1200 = vld [vmem:[#allocation2 + $0xbc] sm:$0xf]
        %v1201 = vld [vmem:[#allocation2 + $0xc0] sm:$0xff]
        %v1202 = vld [vmem:[#allocation2 + $0xc8] sm:$0xf]
        %v1203 = vld [vmem:[#allocation2 + $0xcc] sm:$0xff]
        %v1204 = vld [vmem:[#allocation2 + $0xd4] sm:$0xf]
        %v1205 = vld [vmem:[#allocation2 + $0xd8] sm:$0xff]
        %v1206 = vld [vmem:[#allocation2 + $0xe0] sm:$0xf]
        %v1207 = vld [vmem:[#allocation2 + $0xe4] sm:$0xff]
        %v1208 = vld [vmem:[#allocation2 + $0xec] sm:$0xf]
        %v1209 = vld [vmem:[#allocation2 + $0xf0] sm:$0xff]
        %v1210 = vld [vmem:[#allocation2 + $0xf8] sm:$0xf]
        %v1211 = vld [vmem:[#allocation2 + $0xfc] sm:$0xff]
        %v1212 = vld [vmem:[#allocation2 + $0x104] sm:$0xf]
        %v1213 = vld [vmem:[#allocation2 + $0x108] sm:$0xff]
        %v1214 = vld [vmem:[#allocation2 + $0x110] sm:$0xf]
        %v1215 = vld [vmem:[#allocation2 + $0x114] sm:$0xff]
        %v1216 = vld [vmem:[#allocation2 + $0x11c] sm:$0xf]
        %v1217 = vld [vmem:[#allocation2 + $0x120] sm:$0xff]
        %v1218 = vld [vmem:[#allocation2 + $0x128] sm:$0xf]
        %v1219 = vld [vmem:[#allocation2 + $0x12c] sm:$0xff]
        %v1220 = vld [vmem:[#allocation2 + $0x134] sm:$0xf]
        %v1221 = vld [vmem:[#allocation2 + $0x138] sm:$0xff]
        %v1222 = vld [vmem:[#allocation2 + $0x140] sm:$0xf]
        %v1223 = vld [vmem:[#allocation2 + $0x144] sm:$0xff]
        %v1224 = vld [vmem:[#allocation2 + $0x14c] sm:$0xf]
        %v1225 = vld [vmem:[#allocation2 + $0x150] sm:$0xff]
        %v1226 = vld [vmem:[#allocation2 + $0x158] sm:$0xf]
        %v1227 = vld [vmem:[#allocation2 + $0x15c] sm:$0xff]
        %v1228 = vld [vmem:[#allocation2 + $0x164] sm:$0xf]
        %v1229 = vld [vmem:[#allocation2 + $0x168] sm:$0xff]
        %v1230 = vld [vmem:[#allocation2 + $0x170] sm:$0xf]
        %v1231 = vld [vmem:[#allocation2 + $0x174] sm:$0xff]
        %v1232 = vld [vmem:[#allocation2 + $0x17c] sm:$0xf]
        %v1233 = vld [vmem:[#allocation2 + $0x180] sm:$0xff]
        %v1234 = vld [vmem:[#allocation2 + $0x188] sm:$0xf]
        %v1235 = vld [vmem:[#allocation2 + $0x18c] sm:$0xff]
        %v1236 = vld [vmem:[#allocation2 + $0x194] sm:$0xf]
        %v1237 = vld [vmem:[#allocation2 + $0x198] sm:$0xff]
        %v1238 = vld [vmem:[#allocation2 + $0x1a0] sm:$0xf]
        %v1239 = vld [vmem:[#allocation2 + $0x1a4] sm:$0xff]
        %v1240 = vld [vmem:[#allocation2 + $0x1ac] sm:$0xf]
        %v1241 = vld [vmem:[#allocation2 + $0x1b0] sm:$0xff]
        %v1242 = vld [vmem:[#allocation2 + $0x1b8] sm:$0xf]
        %v1243 = vld [vmem:[#allocation2 + $0x1bc] sm:$0xff]
        %v1244 = vld [vmem:[#allocation2 + $0x1c4] sm:$0xf]
        %v1245 = vld [vmem:[#allocation2 + $0x1c8] sm:$0xff]
        %v1246 = vld [vmem:[#allocation2 + $0x1d0] sm:$0xf]
        %v1247 = vld [vmem:[#allocation2 + $0x1d4] sm:$0xff]
        %v1248 = vld [vmem:[#allocation2 + $0x1dc] sm:$0xf]
        %v1249 = vld [vmem:[#allocation2 + $0x1e0] sm:$0xff]
        %v1250 = vld [vmem:[#allocation2 + $0x1e8] sm:$0xf]
        %v1251 = vld [vmem:[#allocation2 + $0x1ec] sm:$0xff]
        %v1252 = vld [vmem:[#allocation2 + $0x1f4] sm:$0xf]
        %v1253 = vld [vmem:[#allocation2 + $0x1f8] sm:$0xff]
        %v1254 = vld [vmem:[#allocation2 + $0x200] sm:$0xf]
        %v1255 = vld [vmem:[#allocation2 + $0x204] sm:$0xff]
        %v1256 = vld [vmem:[#allocation2 + $0x20c] sm:$0xf]
        %v1257 = vld [vmem:[#allocation2 + $0x210] sm:$0xff]
        %v1258 = vld [vmem:[#allocation2 + $0x218] sm:$0xf]
        %v1259 = vld [vmem:[#allocation2 + $0x21c] sm:$0xff]
        %v1260 = vld [vmem:[#allocation2 + $0x224] sm:$0xf]
        %v1261 = vld [vmem:[#allocation2 + $0x228] sm:$0xff]
        %v1262 = vld [vmem:[#allocation2 + $0x230] sm:$0xf]
        %v1263 = vld [vmem:[#allocation2 + $0x234] sm:$0xff]
        %v1264 = vld [vmem:[#allocation2 + $0x23c] sm:$0xf]
        %v1265 = vld [vmem:[#allocation2 + $0x240] sm:$0xff]
        %v1266 = vld [vmem:[#allocation2 + $0x248] sm:$0xf]
        %v1267 = vld [vmem:[#allocation2 + $0x24c] sm:$0xff]
        %v1268 = vld [vmem:[#allocation2 + $0x254] sm:$0xf]
        %v1269 = vld [vmem:[#allocation2 + $0x258] sm:$0xff]
        %v1270 = vld [vmem:[#allocation2 + $0x260] sm:$0xf]
        %v1271 = vld [vmem:[#allocation2 + $0x264] sm:$0xff]
        %v1272 = vld [vmem:[#allocation2 + $0x26c] sm:$0xf]
        %v1273 = vld [vmem:[#allocation2 + $0x270] sm:$0xff]
        %v1274 = vld [vmem:[#allocation2 + $0x278] sm:$0xf]
        %v1275 = vld [vmem:[#allocation2 + $0x27c] sm:$0xff]
        %v1276 = vld [vmem:[#allocation2 + $0x284] sm:$0xf]
        %v1277 = vld [vmem:[#allocation2 + $0x288] sm:$0xff]
        %v1278 = vld [vmem:[#allocation2 + $0x290] sm:$0xf]
        %v1279 = vld [vmem:[#allocation2 + $0x294] sm:$0xff]
        %v1280 = vld [vmem:[#allocation2 + $0x29c] sm:$0xf]
        %v1281 = vld [vmem:[#allocation2 + $0x2a0] sm:$0xff]
        %v1282 = vld [vmem:[#allocation2 + $0x2a8] sm:$0xf]
        %v1283 = vld [vmem:[#allocation2 + $0x2ac] sm:$0xff]
        %v1284 = vld [vmem:[#allocation2 + $0x2b4] sm:$0xf]
        %v1285 = vld [vmem:[#allocation2 + $0x2b8] sm:$0xff]
        %v1286 = vld [vmem:[#allocation2 + $0x2c0] sm:$0xf]
        %v1287 = vld [vmem:[#allocation2 + $0x2c4] sm:$0xff]
        %v1288 = vld [vmem:[#allocation2 + $0x2cc] sm:$0xf]
        %v1289 = vld [vmem:[#allocation2 + $0x2d0] sm:$0xff]
        %v1290 = vld [vmem:[#allocation2 + $0x2d8] sm:$0xf]
        %v1291 = vld [vmem:[#allocation2 + $0x2dc] sm:$0xff]
        %v1292 = vld [vmem:[#allocation2 + $0x2e4] sm:$0xf]
        %v1293 = vld [vmem:[#allocation2 + $0x2e8] sm:$0xff]
        %v1294 = vld [vmem:[#allocation2 + $0x2f0] sm:$0xf]
        %v1295 = vld [vmem:[#allocation2 + $0x2f4] sm:$0xff]
        %v1296 = vld [vmem:[#allocation2 + $0x2fc] sm:$0xf]
        %v1297 = vld [vmem:[#allocation2 + $0x300] sm:$0xff]
        %v1298 = vld [vmem:[#allocation2 + $0x308] sm:$0xf]
        %v1299 = vld [vmem:[#allocation2 + $0x30c] sm:$0xff]
        %v1300 = vld [vmem:[#allocation2 + $0x314] sm:$0xf]
        %v1301 = vld [vmem:[#allocation2 + $0x318] sm:$0xff]
        %v1302 = vld [vmem:[#allocation2 + $0x320] sm:$0xf]
        %v1303 = vld [vmem:[#allocation2 + $0x324] sm:$0xff]
        %v1304 = vld [vmem:[#allocation2 + $0x32c] sm:$0xf]
        %v1305 = vld [vmem:[#allocation2 + $0x330] sm:$0xff]
        %v1306 = vld [vmem:[#allocation2 + $0x338] sm:$0xf]
        %v1307 = vld [vmem:[#allocation2 + $0x33c] sm:$0xff]
        %v1308 = vld [vmem:[#allocation2 + $0x344] sm:$0xf]
        %v1309 = vld [vmem:[#allocation2 + $0x348] sm:$0xff]
        %v1310 = vld [vmem:[#allocation2 + $0x350] sm:$0xf]
        %v1311 = vld [vmem:[#allocation2 + $0x354] sm:$0xff]
        %v1312 = vld [vmem:[#allocation2 + $0x35c] sm:$0xf]
        %v1313 = vld [vmem:[#allocation2 + $0x360] sm:$0xff]
        %v1314 = vld [vmem:[#allocation2 + $0x368] sm:$0xf]
        %v1315 = vld [vmem:[#allocation2 + $0x36c] sm:$0xff]
        %v1316 = vld [vmem:[#allocation2 + $0x374] sm:$0xf]
        %v1317 = vld [vmem:[#allocation2 + $0x378] sm:$0xff]
        %v1318 = vld [vmem:[#allocation2 + $0x380] sm:$0xf]
        %v1319 = vld [vmem:[#allocation2 + $0x384] sm:$0xff]
        %v1320 = vld [vmem:[#allocation2 + $0x38c] sm:$0xf]
        %v1321 = vld [vmem:[#allocation2 + $0x390] sm:$0xff]
        %v1322 = vld [vmem:[#allocation2 + $0x398] sm:$0xf]
        %v1323 = vld [vmem:[#allocation2 + $0x39c] sm:$0xff]
        %v1324 = vld [vmem:[#allocation2 + $0x3a4] sm:$0xf]
        %v1325 = vld [vmem:[#allocation2 + $0x3a8] sm:$0xff]
        %v1326 = vld [vmem:[#allocation2 + $0x3b0] sm:$0xf]
        %v1327 = vld [vmem:[#allocation2 + $0x3b4] sm:$0xff]
        %v1328 = vld [vmem:[#allocation2 + $0x3bc] sm:$0xf]
        %v1329 = vld [vmem:[#allocation2 + $0x3c0] sm:$0xff]
        %v1330 = vld [vmem:[#allocation2 + $0x3c8] sm:$0xf]
        %v1331 = vld [vmem:[#allocation2 + $0x3cc] sm:$0xff]
        %v1332 = vld [vmem:[#allocation2 + $0x3d4] sm:$0xf]
        %v1333 = vld [vmem:[#allocation2 + $0x3d8] sm:$0xff]
        %v1334 = vld [vmem:[#allocation2 + $0x3e0] sm:$0xf]
        %v1335 = vld [vmem:[#allocation2 + $0x3e4] sm:$0xff]
        %v1336 = vld [vmem:[#allocation2 + $0x3ec] sm:$0xf]
        %v1337 = vld [vmem:[#allocation2 + $0x3f0] sm:$0xff]
        %v1338 = vld [vmem:[#allocation2 + $0x3f8] sm:$0xf]
        %v1339 = vld [vmem:[#allocation2 + $0x3fc] sm:$0xff]
        %v1340 = vld [vmem:[#allocation2 + $0x404] sm:$0xf]
        %v1341 = vld [vmem:[#allocation2 + $0x408] sm:$0xff]
        %v1342 = vld [vmem:[#allocation2 + $0x410] sm:$0xf]
        %v1343 = vld [vmem:[#allocation2 + $0x414] sm:$0xff]
        %v1344 = vld [vmem:[#allocation2 + $0x41c] sm:$0xf]
        %v1345 = vld [vmem:[#allocation2 + $0x420] sm:$0xff]
        %v1346 = vld [vmem:[#allocation2 + $0x428] sm:$0xf]
        %v1347 = vld [vmem:[#allocation2 + $0x42c] sm:$0xff]
        %v1348 = vld [vmem:[#allocation2 + $0x434] sm:$0xf]
        %v1349 = vld [vmem:[#allocation2 + $0x438] sm:$0xff]
        %v1350 = vld [vmem:[#allocation2 + $0x440] sm:$0xf]
        %v1351 = vld [vmem:[#allocation2 + $0x444] sm:$0xff]
        %v1352 = vld [vmem:[#allocation2 + $0x44c] sm:$0xf]
        %v1353 = vld [vmem:[#allocation2 + $0x450] sm:$0xff]
        %v1354 = vld [vmem:[#allocation2 + $0x458] sm:$0xf]
        %v1355 = vld [vmem:[#allocation2 + $0x45c] sm:$0xff]
        %v1356 = vld [vmem:[#allocation2 + $0x464] sm:$0xf]
        %v1357 = vld [vmem:[#allocation2 + $0x468] sm:$0xff]
        %v1358 = vld [vmem:[#allocation2 + $0x470] sm:$0xf]
        %v1359 = vld [vmem:[#allocation2 + $0x474] sm:$0xff]
        %v1360 = vld [vmem:[#allocation2 + $0x47c] sm:$0xf]
        %v1361 = vld [vmem:[#allocation2 + $0x480] sm:$0xff]
        %v1362 = vld [vmem:[#allocation2 + $0x488] sm:$0xf]
        %v1363 = vld [vmem:[#allocation2 + $0x48c] sm:$0xff]
        %v1364 = vld [vmem:[#allocation2 + $0x494] sm:$0xf]
        %v1365 = vld [vmem:[#allocation2 + $0x498] sm:$0xff]
        %v1366 = vld [vmem:[#allocation2 + $0x4a0] sm:$0xf]
        %v1367 = vld [vmem:[#allocation2 + $0x4a4] sm:$0xff]
        %v1368 = vld [vmem:[#allocation2 + $0x4ac] sm:$0xf]
        %v1369 = vld [vmem:[#allocation2 + $0x4b0] sm:$0xff]
        %v1370 = vld [vmem:[#allocation2 + $0x4b8] sm:$0xf]
        %v1371 = vld [vmem:[#allocation2 + $0x4bc] sm:$0xff]
        %v1372 = vld [vmem:[#allocation2 + $0x4c4] sm:$0xf]
        %v1373 = vld [vmem:[#allocation2 + $0x4c8] sm:$0xff]
        %v1374 = vld [vmem:[#allocation2 + $0x4d0] sm:$0xf]
        %v1375 = vld [vmem:[#allocation2 + $0x4d4] sm:$0xff]
        %v1376 = vld [vmem:[#allocation2 + $0x4dc] sm:$0xf]
        %v1377 = vld [vmem:[#allocation2 + $0x4e0] sm:$0xff]
        %v1378 = vld [vmem:[#allocation2 + $0x4e8] sm:$0xf]
        %v1379 = vld [vmem:[#allocation2 + $0x4ec] sm:$0xff]
        %v1380 = vld [vmem:[#allocation2 + $0x4f4] sm:$0xf]
        %v1381 = vld [vmem:[#allocation2 + $0x4f8] sm:$0xff]
        %v1382 = vld [vmem:[#allocation2 + $0x500] sm:$0xf]
        %v1383 = vld [vmem:[#allocation2 + $0x504] sm:$0xff]
        %v1384 = vld [vmem:[#allocation2 + $0x50c] sm:$0xf]
        %v1385 = vld [vmem:[#allocation2 + $0x510] sm:$0xff]
        %v1386 = vld [vmem:[#allocation2 + $0x518] sm:$0xf]
        %v1387 = vld [vmem:[#allocation2 + $0x51c] sm:$0xff]
        %v1388 = vld [vmem:[#allocation2 + $0x524] sm:$0xf]
        %v1389 = vld [vmem:[#allocation2 + $0x528] sm:$0xff]
        %v1390 = vld [vmem:[#allocation2 + $0x530] sm:$0xf]
        %v1391 = vld [vmem:[#allocation2 + $0x534] sm:$0xff]
        %v1392 = vld [vmem:[#allocation2 + $0x53c] sm:$0xf]
        %v1393 = vld [vmem:[#allocation2 + $0x540] sm:$0xff]
        %v1394 = vld [vmem:[#allocation2 + $0x548] sm:$0xf]
        %v1395 = vld [vmem:[#allocation2 + $0x54c] sm:$0xff]
        %v1396 = vld [vmem:[#allocation2 + $0x554] sm:$0xf]
        %v1397 = vld [vmem:[#allocation2 + $0x558] sm:$0xff]
        %v1398 = vld [vmem:[#allocation2 + $0x560] sm:$0xf]
        %v1399 = vld [vmem:[#allocation2 + $0x564] sm:$0xff]
        %v1400 = vld [vmem:[#allocation2 + $0x56c] sm:$0xf]
        %v1401 = vld [vmem:[#allocation2 + $0x570] sm:$0xff]
        %v1402 = vld [vmem:[#allocation2 + $0x578] sm:$0xf]
        %v1403 = vld [vmem:[#allocation2 + $0x57c] sm:$0xff]
        %v1404 = vld [vmem:[#allocation2 + $0x584] sm:$0xf]
        %v1405 = vld [vmem:[#allocation2 + $0x588] sm:$0xff]
        %v1406 = vld [vmem:[#allocation2 + $0x590] sm:$0xf]
        %v1407 = vld [vmem:[#allocation2 + $0x594] sm:$0xff]
        %v1408 = vld [vmem:[#allocation2 + $0x59c] sm:$0xf]
        %v1409 = vld [vmem:[#allocation2 + $0x5a0] sm:$0xff]
        %v1410 = vld [vmem:[#allocation2 + $0x5a8] sm:$0xf]
        %v1411 = vld [vmem:[#allocation2 + $0x5ac] sm:$0xff]
        %v1412 = vld [vmem:[#allocation2 + $0x5b4] sm:$0xf]
        %v1413 = vld [vmem:[#allocation2 + $0x5b8] sm:$0xff]
        %v1414 = vld [vmem:[#allocation2 + $0x5c0] sm:$0xf]
        %v1415 = vld [vmem:[#allocation2 + $0x5c4] sm:$0xff]
        %v1416 = vld [vmem:[#allocation2 + $0x5cc] sm:$0xf]
        %v1417 = vld [vmem:[#allocation2 + $0x5d0] sm:$0xff]
        %v1418 = vld [vmem:[#allocation2 + $0x5d8] sm:$0xf]
        %v1419 = vld [vmem:[#allocation2 + $0x5dc] sm:$0xff]
        %v1420 = vld [vmem:[#allocation2 + $0x5e4] sm:$0xf]
        %v1421 = vld [vmem:[#allocation2 + $0x5e8] sm:$0xff]
        %v1422 = vld [vmem:[#allocation2 + $0x5f0] sm:$0xf]
        %v1423 = vld [vmem:[#allocation2 + $0x5f4] sm:$0xff]
        %v1424 = vld [vmem:[#allocation2 + $0x5fc] sm:$0xf]
        %v1425 = vld [vmem:[#allocation2 + $0x600] sm:$0xff]
        %v1426 = vld [vmem:[#allocation2 + $0x608] sm:$0xf]
        %v1427 = vld [vmem:[#allocation2 + $0x60c] sm:$0xff]
        %v1428 = vld [vmem:[#allocation2 + $0x614] sm:$0xf]
        %v1429 = vld [vmem:[#allocation2 + $0x618] sm:$0xff]
        %v1430 = vld [vmem:[#allocation2 + $0x620] sm:$0xf]
        %v1431 = vld [vmem:[#allocation2 + $0x624] sm:$0xff]
        %v1432 = vld [vmem:[#allocation2 + $0x62c] sm:$0xf]
        %v1433 = vld [vmem:[#allocation2 + $0x630] sm:$0xff]
        %v1434 = vld [vmem:[#allocation2 + $0x638] sm:$0xf]
        %v1435 = vld [vmem:[#allocation2 + $0x63c] sm:$0xff]
        %v1436 = vld [vmem:[#allocation2 + $0x644] sm:$0xf]
        %v1437 = vld [vmem:[#allocation2 + $0x648] sm:$0xff]
        %v1438 = vld [vmem:[#allocation2 + $0x650] sm:$0xf]
        %v1439 = vld [vmem:[#allocation2 + $0x654] sm:$0xff]
        %v1440 = vld [vmem:[#allocation2 + $0x65c] sm:$0xf]
        %v1441 = vld [vmem:[#allocation2 + $0x660] sm:$0xff]
        %v1442 = vld [vmem:[#allocation2 + $0x668] sm:$0xf]
        %v1443 = vld [vmem:[#allocation2 + $0x66c] sm:$0xff]
        %v1444 = vld [vmem:[#allocation2 + $0x674] sm:$0xf]
        %v1445 = vld [vmem:[#allocation2 + $0x678] sm:$0xff]
        %v1446 = vld [vmem:[#allocation2 + $0x680] sm:$0xf]
        %v1447 = vld [vmem:[#allocation2 + $0x684] sm:$0xff]
        %v1448 = vld [vmem:[#allocation2 + $0x68c] sm:$0xf]
        %v1449 = vld [vmem:[#allocation2 + $0x690] sm:$0xff]
        %v1450 = vld [vmem:[#allocation2 + $0x698] sm:$0xf]
        %v1451 = vld [vmem:[#allocation2 + $0x69c] sm:$0xff]
        %v1452 = vld [vmem:[#allocation2 + $0x6a4] sm:$0xf]
        %v1453 = vld [vmem:[#allocation2 + $0x6a8] sm:$0xff]
        %v1454 = vld [vmem:[#allocation2 + $0x6b0] sm:$0xf]
        %v1455 = vld [vmem:[#allocation2 + $0x6b4] sm:$0xff]
        %v1456 = vld [vmem:[#allocation2 + $0x6bc] sm:$0xf]
        %v1457 = vld [vmem:[#allocation2 + $0x6c0] sm:$0xff]
        %v1458 = vld [vmem:[#allocation2 + $0x6c8] sm:$0xf]
        %v1459 = vld [vmem:[#allocation2 + $0x6cc] sm:$0xff]
        %v1460 = vld [vmem:[#allocation2 + $0x6d4] sm:$0xf]
        %v1461 = vld [vmem:[#allocation2 + $0x6d8] sm:$0xff]
        %v1462 = vld [vmem:[#allocation2 + $0x6e0] sm:$0xf]
        %v1463 = vld [vmem:[#allocation2 + $0x6e4] sm:$0xff]
        %v1464 = vld [vmem:[#allocation2 + $0x6ec] sm:$0xf]
        %v1465 = vld [vmem:[#allocation2 + $0x6f0] sm:$0xff]
        %v1466 = vld [vmem:[#allocation2 + $0x6f8] sm:$0xf]
        %v1467 = vld [vmem:[#allocation2 + $0x6fc] sm:$0xff]
        %v1468 = vld [vmem:[#allocation2 + $0x704] sm:$0xf]
        %v1469 = vld [vmem:[#allocation2 + $0x708] sm:$0xff]
        %v1470 = vld [vmem:[#allocation2 + $0x710] sm:$0xf]
        %v1471 = vld [vmem:[#allocation2 + $0x714] sm:$0xff]
        %v1472 = vld [vmem:[#allocation2 + $0x71c] sm:$0xf]
        %v1473 = vld [vmem:[#allocation2 + $0x720] sm:$0xff]
        %v1474 = vld [vmem:[#allocation2 + $0x728] sm:$0xf]
        %v1475 = vld [vmem:[#allocation2 + $0x72c] sm:$0xff]
        %v1476 = vld [vmem:[#allocation2 + $0x734] sm:$0xf]
        %v1477 = vld [vmem:[#allocation2 + $0x738] sm:$0xff]
        %v1478 = vld [vmem:[#allocation2 + $0x740] sm:$0xf]
        %v1479 = vld [vmem:[#allocation2 + $0x744] sm:$0xff]
        %v1480 = vld [vmem:[#allocation2 + $0x74c] sm:$0xf]
        %v1481 = vld [vmem:[#allocation2 + $0x750] sm:$0xff]
        %v1482 = vld [vmem:[#allocation2 + $0x758] sm:$0xf]
        %v1483 = vld [vmem:[#allocation2 + $0x75c] sm:$0xff]
        %v1484 = vld [vmem:[#allocation2 + $0x764] sm:$0xf]
        %v1485 = vld [vmem:[#allocation2 + $0x768] sm:$0xff]
        %v1486 = vld [vmem:[#allocation2 + $0x770] sm:$0xf]
        %v1487 = vld [vmem:[#allocation2 + $0x774] sm:$0xff]
        %v1488 = vld [vmem:[#allocation2 + $0x77c] sm:$0xf]
        %v1489 = vld [vmem:[#allocation2 + $0x780] sm:$0xff]
        %v1490 = vld [vmem:[#allocation2 + $0x788] sm:$0xf]
        %v1491 = vld [vmem:[#allocation2 + $0x78c] sm:$0xff]
        %v1492 = vld [vmem:[#allocation2 + $0x794] sm:$0xf]
        %v1493 = vld [vmem:[#allocation2 + $0x798] sm:$0xff]
        %v1494 = vld [vmem:[#allocation2 + $0x7a0] sm:$0xf]
        %v1495 = vld [vmem:[#allocation2 + $0x7a4] sm:$0xff]
        %v1496 = vld [vmem:[#allocation2 + $0x7ac] sm:$0xf]
        %v1497 = vld [vmem:[#allocation2 + $0x7b0] sm:$0xff]
        %v1498 = vld [vmem:[#allocation2 + $0x7b8] sm:$0xf]
        %v1499 = vld [vmem:[#allocation2 + $0x7bc] sm:$0xff]
        %v1500 = vld [vmem:[#allocation2 + $0x7c4] sm:$0xf]
        %v1501 = vld [vmem:[#allocation2 + $0x7c8] sm:$0xff]
        %v1502 = vld [vmem:[#allocation2 + $0x7d0] sm:$0xf]
        %v1503 = vld [vmem:[#allocation2 + $0x7d4] sm:$0xff]
        %v1504 = vld [vmem:[#allocation2 + $0x7dc] sm:$0xf]
        %v1505 = vld [vmem:[#allocation2 + $0x7e0] sm:$0xff]
        %v1506 = vld [vmem:[#allocation2 + $0x7e8] sm:$0xf]
        %v1507 = vld [vmem:[#allocation2 + $0x7ec] sm:$0xff]
        %v1508 = vld [vmem:[#allocation2 + $0x7f4] sm:$0xf]
        %v1509 = vld [vmem:[#allocation2 + $0x7f8] sm:$0xff]
        %v1510 = vld [vmem:[#allocation2 + $0x800] sm:$0xf]
        %v1511 = vld [vmem:[#allocation2 + $0x804] sm:$0xff]
        %v1512 = vld [vmem:[#allocation2 + $0x80c] sm:$0xf]
        %v1513 = vld [vmem:[#allocation2 + $0x810] sm:$0xff]
        %v1514 = vld [vmem:[#allocation2 + $0x818] sm:$0xf]
        %v1515 = vld [vmem:[#allocation2 + $0x81c] sm:$0xff]
        %v1516 = vld [vmem:[#allocation2 + $0x824] sm:$0xf]
        %v1517 = vld [vmem:[#allocation2 + $0x828] sm:$0xff]
        %v1518 = vld [vmem:[#allocation2 + $0x830] sm:$0xf]
        %v1519 = vld [vmem:[#allocation2 + $0x834] sm:$0xff]
        %v1520 = vld [vmem:[#allocation2 + $0x83c] sm:$0xf]
        %v1521 = vld [vmem:[#allocation2 + $0x840] sm:$0xff]
        %v1522 = vld [vmem:[#allocation2 + $0x848] sm:$0xf]
        %v1523 = vld [vmem:[#allocation2 + $0x84c] sm:$0xff]
        %v1524 = vld [vmem:[#allocation2 + $0x854] sm:$0xf]
        %v1525 = vld [vmem:[#allocation2 + $0x858] sm:$0xff]
        %v1526 = vld [vmem:[#allocation2 + $0x860] sm:$0xf]
        %v1527 = vld [vmem:[#allocation2 + $0x864] sm:$0xff]
        %v1528 = vld [vmem:[#allocation2 + $0x86c] sm:$0xf]
        %v1529 = vld [vmem:[#allocation2 + $0x870] sm:$0xff]
        %v1530 = vld [vmem:[#allocation2 + $0x878] sm:$0xf]
        %v1531 = vld [vmem:[#allocation2 + $0x87c] sm:$0xff]
        %v1532 = vld [vmem:[#allocation2 + $0x884] sm:$0xf]
        %v1533 = vld [vmem:[#allocation2 + $0x888] sm:$0xff]
        %v1534 = vld [vmem:[#allocation2 + $0x890] sm:$0xf]
        %v1535 = vld [vmem:[#allocation2 + $0x894] sm:$0xff]
        %v1536 = vld [vmem:[#allocation2 + $0x89c] sm:$0xf]
        %v1537 = vld [vmem:[#allocation2 + $0x8a0] sm:$0xff]
        %v1538 = vld [vmem:[#allocation2 + $0x8a8] sm:$0xf]
        %v1539 = vld [vmem:[#allocation2 + $0x8ac] sm:$0xff]
        %v1540 = vld [vmem:[#allocation2 + $0x8b4] sm:$0xf]
        %v1541 = vld [vmem:[#allocation2 + $0x8b8] sm:$0xff]
        %v1542 = vld [vmem:[#allocation2 + $0x8c0] sm:$0xf]
        %v1543 = vld [vmem:[#allocation2 + $0x8c4] sm:$0xff]
        %v1544 = vld [vmem:[#allocation2 + $0x8cc] sm:$0xf]
        %v1545 = vld [vmem:[#allocation2 + $0x8d0] sm:$0xff]
        %v1546 = vld [vmem:[#allocation2 + $0x8d8] sm:$0xf]
        %v1547 = vld [vmem:[#allocation2 + $0x8dc] sm:$0xff]
        %v1548 = vld [vmem:[#allocation2 + $0x8e4] sm:$0xf]
        %v1549 = vld [vmem:[#allocation2 + $0x8e8] sm:$0xff]
        %v1550 = vld [vmem:[#allocation2 + $0x8f0] sm:$0xf]
        %v1551 = vld [vmem:[#allocation2 + $0x8f4] sm:$0xff]
        %v1552 = vld [vmem:[#allocation2 + $0x8fc] sm:$0xf]
        %v1553 = vld [vmem:[#allocation2 + $0x900] sm:$0xff]
        %v1554 = vld [vmem:[#allocation2 + $0x908] sm:$0xf]
        %v1555 = vld [vmem:[#allocation2 + $0x90c] sm:$0xff]
        %v1556 = vld [vmem:[#allocation2 + $0x914] sm:$0xf]
        %v1557 = vld [vmem:[#allocation2 + $0x918] sm:$0xff]
        %v1558 = vld [vmem:[#allocation2 + $0x920] sm:$0xf]
        %v1559 = vld [vmem:[#allocation2 + $0x924] sm:$0xff]
        %v1560 = vld [vmem:[#allocation2 + $0x92c] sm:$0xf]
        %v1561 = vld [vmem:[#allocation2 + $0x930] sm:$0xff]
        %v1562 = vld [vmem:[#allocation2 + $0x938] sm:$0xf]
        %v1563 = vld [vmem:[#allocation2 + $0x93c] sm:$0xff]
        %v1564 = vld [vmem:[#allocation2 + $0x944] sm:$0xf]
        %v1565 = vld [vmem:[#allocation2 + $0x948] sm:$0xff]
        %v1566 = vld [vmem:[#allocation2 + $0x950] sm:$0xf]
        %v1567 = vld [vmem:[#allocation2 + $0x954] sm:$0xff]
        %v1568 = vld [vmem:[#allocation2 + $0x95c] sm:$0xf]
        %v1569 = vld [vmem:[#allocation2 + $0x960] sm:$0xff]
        %v1570 = vld [vmem:[#allocation2 + $0x968] sm:$0xf]
        %v1571 = vld [vmem:[#allocation2 + $0x96c] sm:$0xff]
        %v1572 = vld [vmem:[#allocation2 + $0x974] sm:$0xf]
        %v1573 = vld [vmem:[#allocation2 + $0x978] sm:$0xff]
        %v1574 = vld [vmem:[#allocation2 + $0x980] sm:$0xf]
        %v1575 = vld [vmem:[#allocation2 + $0x984] sm:$0xff]
        %v1576 = vld [vmem:[#allocation2 + $0x98c] sm:$0xf]
        %v1577 = vld [vmem:[#allocation2 + $0x990] sm:$0xff]
        %v1578 = vld [vmem:[#allocation2 + $0x998] sm:$0xf]
        %v1579 = vld [vmem:[#allocation2 + $0x99c] sm:$0xff]
        %v1580 = vld [vmem:[#allocation2 + $0x9a4] sm:$0xf]
        %v1581 = vld [vmem:[#allocation2 + $0x9a8] sm:$0xff]
        %v1582 = vld [vmem:[#allocation2 + $0x9b0] sm:$0xf]
        %v1583 = vld [vmem:[#allocation2 + $0x9b4] sm:$0xff]
        %v1584 = vld [vmem:[#allocation2 + $0x9bc] sm:$0xf]
        %v1585 = vld [vmem:[#allocation2 + $0x9c0] sm:$0xff]
        %v1586 = vld [vmem:[#allocation2 + $0x9c8] sm:$0xf]
        %v1587 = vld [vmem:[#allocation2 + $0x9cc] sm:$0xff]
        %v1588 = vld [vmem:[#allocation2 + $0x9d4] sm:$0xf]
        %v1589 = vld [vmem:[#allocation2 + $0x9d8] sm:$0xff]
        %v1590 = vld [vmem:[#allocation2 + $0x9e0] sm:$0xf]
        %v1591 = vld [vmem:[#allocation2 + $0x9e4] sm:$0xff]
        %v1592 = vld [vmem:[#allocation2 + $0x9ec] sm:$0xf]
        %v1593 = vld [vmem:[#allocation2 + $0x9f0] sm:$0xff]
        %v1594 = vld [vmem:[#allocation2 + $0x9f8] sm:$0xf]
        %v1595 = vld [vmem:[#allocation2 + $0x9fc] sm:$0xff]
        %v1596 = vld [vmem:[#allocation2 + $0xa04] sm:$0xf]
        %v1597 = vld [vmem:[#allocation2 + $0xa08] sm:$0xff]
        %v1598 = vld [vmem:[#allocation2 + $0xa10] sm:$0xf]
        %v1599 = vld [vmem:[#allocation2 + $0xa14] sm:$0xff]
        %v1600 = vld [vmem:[#allocation2 + $0xa1c] sm:$0xf]
        %v1601 = vld [vmem:[#allocation2 + $0xa20] sm:$0xff]
        %v1602 = vld [vmem:[#allocation2 + $0xa28] sm:$0xf]
        %v1603 = vld [vmem:[#allocation2 + $0xa2c] sm:$0xff]
        %v1604 = vld [vmem:[#allocation2 + $0xa34] sm:$0xf]
        %v1605 = vld [vmem:[#allocation2 + $0xa38] sm:$0xff]
        %v1606 = vld [vmem:[#allocation2 + $0xa40] sm:$0xf]
        %v1607 = vld [vmem:[#allocation2 + $0xa44] sm:$0xff]
        %v1608 = vld [vmem:[#allocation2 + $0xa4c] sm:$0xf]
        %v1609 = vld [vmem:[#allocation2 + $0xa50] sm:$0xff]
        %v1610 = vld [vmem:[#allocation2 + $0xa58] sm:$0xf]
        %v1611 = vld [vmem:[#allocation2 + $0xa5c] sm:$0xff]
        %v1612 = vld [vmem:[#allocation2 + $0xa64] sm:$0xf]
        %v1613 = vld [vmem:[#allocation2 + $0xa68] sm:$0xff]
        %v1614 = vld [vmem:[#allocation2 + $0xa70] sm:$0xf]
        %v1615 = vld [vmem:[#allocation2 + $0xa74] sm:$0xff]
        %v1616 = vld [vmem:[#allocation2 + $0xa7c] sm:$0xf]
        %v1617 = vld [vmem:[#allocation2 + $0xa80] sm:$0xff]
        %v1618 = vld [vmem:[#allocation2 + $0xa88] sm:$0xf]
        %v1619 = vld [vmem:[#allocation2 + $0xa8c] sm:$0xff]
        %v1620 = vld [vmem:[#allocation2 + $0xa94] sm:$0xf]
        %v1621 = vld [vmem:[#allocation2 + $0xa98] sm:$0xff]
        %v1622 = vld [vmem:[#allocation2 + $0xaa0] sm:$0xf]
        %v1623 = vld [vmem:[#allocation2 + $0xaa4] sm:$0xff]
        %v1624 = vld [vmem:[#allocation2 + $0xaac] sm:$0xf]
        %v1625 = vld [vmem:[#allocation2 + $0xab0] sm:$0xff]
        %v1626 = vld [vmem:[#allocation2 + $0xab8] sm:$0xf]
        %v1627 = vld [vmem:[#allocation2 + $0xabc] sm:$0xff]
        %v1628 = vld [vmem:[#allocation2 + $0xac4] sm:$0xf]
        %v1629 = vld [vmem:[#allocation2 + $0xac8] sm:$0xff]
        %v1630 = vld [vmem:[#allocation2 + $0xad0] sm:$0xf]
        %v1631 = vld [vmem:[#allocation2 + $0xad4] sm:$0xff]
        %v1632 = vld [vmem:[#allocation2 + $0xadc] sm:$0xf]
        %v1633 = vld [vmem:[#allocation2 + $0xae0] sm:$0xff]
        %v1634 = vld [vmem:[#allocation2 + $0xae8] sm:$0xf]
        %v1635 = vld [vmem:[#allocation2 + $0xaec] sm:$0xff]
        %v1636 = vld [vmem:[#allocation2 + $0xaf4] sm:$0xf]
        %v1637 = vld [vmem:[#allocation2 + $0xaf8] sm:$0xff]
        %v1638 = vld [vmem:[#allocation2 + $0xb00] sm:$0xf]
        %v1639 = vld [vmem:[#allocation2 + $0xb04] sm:$0xff]
        %v1640 = vld [vmem:[#allocation2 + $0xb0c] sm:$0xf]
        %v1641 = vld [vmem:[#allocation2 + $0xb10] sm:$0xff]
        %v1642 = vld [vmem:[#allocation2 + $0xb18] sm:$0xf]
        %v1643 = vld [vmem:[#allocation2 + $0xb1c] sm:$0xff]
        %v1644 = vld [vmem:[#allocation2 + $0xb24] sm:$0xf]
        %v1645 = vld [vmem:[#allocation2 + $0xb28] sm:$0xff]
        %v1646 = vld [vmem:[#allocation2 + $0xb30] sm:$0xf]
        %v1647 = vld [vmem:[#allocation2 + $0xb34] sm:$0xff]
        %v1648 = vld [vmem:[#allocation2 + $0xb3c] sm:$0xf]
        %v1649 = vld [vmem:[#allocation2 + $0xb40] sm:$0xff]
        %v1650 = vld [vmem:[#allocation2 + $0xb48] sm:$0xf]
        %v1651 = vld [vmem:[#allocation2 + $0xb4c] sm:$0xff]
        %v1652 = vld [vmem:[#allocation2 + $0xb54] sm:$0xf]
        %v1653 = vld [vmem:[#allocation2 + $0xb58] sm:$0xff]
        %v1654 = vld [vmem:[#allocation2 + $0xb60] sm:$0xf]
        %v1655 = vld [vmem:[#allocation2 + $0xb64] sm:$0xff]
        %v1656 = vld [vmem:[#allocation2 + $0xb6c] sm:$0xf]
        %v1657 = vld [vmem:[#allocation2 + $0xb70] sm:$0xff]
        %v1658 = vld [vmem:[#allocation2 + $0xb78] sm:$0xf]
        %v1659 = vld [vmem:[#allocation2 + $0xb7c] sm:$0xff]
        %v1660 = vld [vmem:[#allocation2 + $0xb84] sm:$0xf]
        %v1661 = vld [vmem:[#allocation2 + $0xb88] sm:$0xff]
        %v1662 = vld [vmem:[#allocation2 + $0xb90] sm:$0xf]
        %v1663 = vld [vmem:[#allocation2 + $0xb94] sm:$0xff]
        %v1664 = vld [vmem:[#allocation2 + $0xb9c] sm:$0xf]
        %v1665 = vld [vmem:[#allocation2 + $0xba0] sm:$0xff]
        %v1666 = vld [vmem:[#allocation2 + $0xba8] sm:$0xf]
        %v1667 = vld [vmem:[#allocation2 + $0xbac] sm:$0xff]
        %v1668 = vld [vmem:[#allocation2 + $0xbb4] sm:$0xf]
        %v1669 = vld [vmem:[#allocation2 + $0xbb8] sm:$0xff]
        %v1670 = vld [vmem:[#allocation2 + $0xbc0] sm:$0xf]
        %v1671 = vld [vmem:[#allocation2 + $0xbc4] sm:$0xff]
        %v1672 = vld [vmem:[#allocation2 + $0xbcc] sm:$0xf]
        %v1673 = vld [vmem:[#allocation2 + $0xbd0] sm:$0xff]
        %v1674 = vld [vmem:[#allocation2 + $0xbd8] sm:$0xf]
        %v1675 = vld [vmem:[#allocation2 + $0xbdc] sm:$0xff]
        %v1676 = vld [vmem:[#allocation2 + $0xbe4] sm:$0xf]
        %v1677 = vld [vmem:[#allocation2 + $0xbe8] sm:$0xff]
        %v1678 = vld [vmem:[#allocation2 + $0xbf0] sm:$0xf]
        %v1679 = vld [vmem:[#allocation2 + $0xbf4] sm:$0xff]
        %v1680 = vld [vmem:[#allocation2 + $0xbfc] sm:$0xf]
        %v2193 = vunpack.c.l.b16 %v1169
        %v2194 = vunpack.c.h.b16 %v1169
        %v2195 = vunpack.c.l.b16 %v1170
        %v2196 = vunpack.c.l.b16 %v1171
        %v2197 = vunpack.c.h.b16 %v1171
        %v2198 = vunpack.c.l.b16 %v1172
        %v2199 = vunpack.c.l.b16 %v1173
        %v2200 = vunpack.c.h.b16 %v1173
        %v2201 = vunpack.c.l.b16 %v1174
        %v2202 = vunpack.c.l.b16 %v1175
        %v2203 = vunpack.c.h.b16 %v1175
        %v2204 = vunpack.c.l.b16 %v1176
        %v2205 = vunpack.c.l.b16 %v1177
        %v2206 = vunpack.c.h.b16 %v1177
        %v2207 = vunpack.c.l.b16 %v1178
        %v2208 = vunpack.c.l.b16 %v1179
        %v2209 = vunpack.c.h.b16 %v1179
        %v2210 = vunpack.c.l.b16 %v1180
        %v2211 = vunpack.c.l.b16 %v1181
        %v2212 = vunpack.c.h.b16 %v1181
        %v2213 = vunpack.c.l.b16 %v1182
        %v2214 = vunpack.c.l.b16 %v1183
        %v2215 = vunpack.c.h.b16 %v1183
        %v2216 = vunpack.c.l.b16 %v1184
        %v2217 = vunpack.c.l.b16 %v1185
        %v2218 = vunpack.c.h.b16 %v1185
        %v2219 = vunpack.c.l.b16 %v1186
        %v2220 = vunpack.c.l.b16 %v1187
        %v2221 = vunpack.c.h.b16 %v1187
        %v2222 = vunpack.c.l.b16 %v1188
        %v2223 = vunpack.c.l.b16 %v1189
        %v2224 = vunpack.c.h.b16 %v1189
        %v2225 = vunpack.c.l.b16 %v1190
        %v2226 = vunpack.c.l.b16 %v1191
        %v2227 = vunpack.c.h.b16 %v1191
        %v2228 = vunpack.c.l.b16 %v1192
        %v2229 = vunpack.c.l.b16 %v1193
        %v2230 = vunpack.c.h.b16 %v1193
        %v2231 = vunpack.c.l.b16 %v1194
        %v2232 = vunpack.c.l.b16 %v1195
        %v2233 = vunpack.c.h.b16 %v1195
        %v2234 = vunpack.c.l.b16 %v1196
        %v2235 = vunpack.c.l.b16 %v1197
        %v2236 = vunpack.c.h.b16 %v1197
        %v2237 = vunpack.c.l.b16 %v1198
        %v2238 = vunpack.c.l.b16 %v1199
        %v2239 = vunpack.c.h.b16 %v1199
        %v2240 = vunpack.c.l.b16 %v1200
        %v2241 = vunpack.c.l.b16 %v1201
        %v2242 = vunpack.c.h.b16 %v1201
        %v2243 = vunpack.c.l.b16 %v1202
        %v2244 = vunpack.c.l.b16 %v1203
        %v2245 = vunpack.c.h.b16 %v1203
        %v2246 = vunpack.c.l.b16 %v1204
        %v2247 = vunpack.c.l.b16 %v1205
        %v2248 = vunpack.c.h.b16 %v1205
        %v2249 = vunpack.c.l.b16 %v1206
        %v2250 = vunpack.c.l.b16 %v1207
        %v2251 = vunpack.c.h.b16 %v1207
        %v2252 = vunpack.c.l.b16 %v1208
        %v2253 = vunpack.c.l.b16 %v1209
        %v2254 = vunpack.c.h.b16 %v1209
        %v2255 = vunpack.c.l.b16 %v1210
        %v2256 = vunpack.c.l.b16 %v1211
        %v2257 = vunpack.c.h.b16 %v1211
        %v2258 = vunpack.c.l.b16 %v1212
        %v2259 = vunpack.c.l.b16 %v1213
        %v2260 = vunpack.c.h.b16 %v1213
        %v2261 = vunpack.c.l.b16 %v1214
        %v2262 = vunpack.c.l.b16 %v1215
        %v2263 = vunpack.c.h.b16 %v1215
        %v2264 = vunpack.c.l.b16 %v1216
        %v2265 = vunpack.c.l.b16 %v1217
        %v2266 = vunpack.c.h.b16 %v1217
        %v2267 = vunpack.c.l.b16 %v1218
        %v2268 = vunpack.c.l.b16 %v1219
        %v2269 = vunpack.c.h.b16 %v1219
        %v2270 = vunpack.c.l.b16 %v1220
        %v2271 = vunpack.c.l.b16 %v1221
        %v2272 = vunpack.c.h.b16 %v1221
        %v2273 = vunpack.c.l.b16 %v1222
        %v2274 = vunpack.c.l.b16 %v1223
        %v2275 = vunpack.c.h.b16 %v1223
        %v2276 = vunpack.c.l.b16 %v1224
        %v2277 = vunpack.c.l.b16 %v1225
        %v2278 = vunpack.c.h.b16 %v1225
        %v2279 = vunpack.c.l.b16 %v1226
        %v2280 = vunpack.c.l.b16 %v1227
        %v2281 = vunpack.c.h.b16 %v1227
        %v2282 = vunpack.c.l.b16 %v1228
        %v2283 = vunpack.c.l.b16 %v1229
        %v2284 = vunpack.c.h.b16 %v1229
        %v2285 = vunpack.c.l.b16 %v1230
        %v2286 = vunpack.c.l.b16 %v1231
        %v2287 = vunpack.c.h.b16 %v1231
        %v2288 = vunpack.c.l.b16 %v1232
        %v2289 = vunpack.c.l.b16 %v1233
        %v2290 = vunpack.c.h.b16 %v1233
        %v2291 = vunpack.c.l.b16 %v1234
        %v2292 = vunpack.c.l.b16 %v1235
        %v2293 = vunpack.c.h.b16 %v1235
        %v2294 = vunpack.c.l.b16 %v1236
        %v2295 = vunpack.c.l.b16 %v1237
        %v2296 = vunpack.c.h.b16 %v1237
        %v2297 = vunpack.c.l.b16 %v1238
        %v2298 = vunpack.c.l.b16 %v1239
        %v2299 = vunpack.c.h.b16 %v1239
        %v2300 = vunpack.c.l.b16 %v1240
        %v2301 = vunpack.c.l.b16 %v1241
        %v2302 = vunpack.c.h.b16 %v1241
        %v2303 = vunpack.c.l.b16 %v1242
        %v2304 = vunpack.c.l.b16 %v1243
        %v2305 = vunpack.c.h.b16 %v1243
        %v2306 = vunpack.c.l.b16 %v1244
        %v2307 = vunpack.c.l.b16 %v1245
        %v2308 = vunpack.c.h.b16 %v1245
        %v2309 = vunpack.c.l.b16 %v1246
        %v2310 = vunpack.c.l.b16 %v1247
        %v2311 = vunpack.c.h.b16 %v1247
        %v2312 = vunpack.c.l.b16 %v1248
        %v2313 = vunpack.c.l.b16 %v1249
        %v2314 = vunpack.c.h.b16 %v1249
        %v2315 = vunpack.c.l.b16 %v1250
        %v2316 = vunpack.c.l.b16 %v1251
        %v2317 = vunpack.c.h.b16 %v1251
        %v2318 = vunpack.c.l.b16 %v1252
        %v2319 = vunpack.c.l.b16 %v1253
        %v2320 = vunpack.c.h.b16 %v1253
        %v2321 = vunpack.c.l.b16 %v1254
        %v2322 = vunpack.c.l.b16 %v1255
        %v2323 = vunpack.c.h.b16 %v1255
        %v2324 = vunpack.c.l.b16 %v1256
        %v2325 = vunpack.c.l.b16 %v1257
        %v2326 = vunpack.c.h.b16 %v1257
        %v2327 = vunpack.c.l.b16 %v1258
        %v2328 = vunpack.c.l.b16 %v1259
        %v2329 = vunpack.c.h.b16 %v1259
        %v2330 = vunpack.c.l.b16 %v1260
        %v2331 = vunpack.c.l.b16 %v1261
        %v2332 = vunpack.c.h.b16 %v1261
        %v2333 = vunpack.c.l.b16 %v1262
        %v2334 = vunpack.c.l.b16 %v1263
        %v2335 = vunpack.c.h.b16 %v1263
        %v2336 = vunpack.c.l.b16 %v1264
        %v2337 = vunpack.c.l.b16 %v1265
        %v2338 = vunpack.c.h.b16 %v1265
        %v2339 = vunpack.c.l.b16 %v1266
        %v2340 = vunpack.c.l.b16 %v1267
        %v2341 = vunpack.c.h.b16 %v1267
        %v2342 = vunpack.c.l.b16 %v1268
        %v2343 = vunpack.c.l.b16 %v1269
        %v2344 = vunpack.c.h.b16 %v1269
        %v2345 = vunpack.c.l.b16 %v1270
        %v2346 = vunpack.c.l.b16 %v1271
        %v2347 = vunpack.c.h.b16 %v1271
        %v2348 = vunpack.c.l.b16 %v1272
        %v2349 = vunpack.c.l.b16 %v1273
        %v2350 = vunpack.c.h.b16 %v1273
        %v2351 = vunpack.c.l.b16 %v1274
        %v2352 = vunpack.c.l.b16 %v1275
        %v2353 = vunpack.c.h.b16 %v1275
        %v2354 = vunpack.c.l.b16 %v1276
        %v2355 = vunpack.c.l.b16 %v1277
        %v2356 = vunpack.c.h.b16 %v1277
        %v2357 = vunpack.c.l.b16 %v1278
        %v2358 = vunpack.c.l.b16 %v1279
        %v2359 = vunpack.c.h.b16 %v1279
        %v2360 = vunpack.c.l.b16 %v1280
        %v2361 = vunpack.c.l.b16 %v1281
        %v2362 = vunpack.c.h.b16 %v1281
        %v2363 = vunpack.c.l.b16 %v1282
        %v2364 = vunpack.c.l.b16 %v1283
        %v2365 = vunpack.c.h.b16 %v1283
        %v2366 = vunpack.c.l.b16 %v1284
        %v2367 = vunpack.c.l.b16 %v1285
        %v2368 = vunpack.c.h.b16 %v1285
        %v2369 = vunpack.c.l.b16 %v1286
        %v2370 = vunpack.c.l.b16 %v1287
        %v2371 = vunpack.c.h.b16 %v1287
        %v2372 = vunpack.c.l.b16 %v1288
        %v2373 = vunpack.c.l.b16 %v1289
        %v2374 = vunpack.c.h.b16 %v1289
        %v2375 = vunpack.c.l.b16 %v1290
        %v2376 = vunpack.c.l.b16 %v1291
        %v2377 = vunpack.c.h.b16 %v1291
        %v2378 = vunpack.c.l.b16 %v1292
        %v2379 = vunpack.c.l.b16 %v1293
        %v2380 = vunpack.c.h.b16 %v1293
        %v2381 = vunpack.c.l.b16 %v1294
        %v2382 = vunpack.c.l.b16 %v1295
        %v2383 = vunpack.c.h.b16 %v1295
        %v2384 = vunpack.c.l.b16 %v1296
        %v2385 = vunpack.c.l.b16 %v1297
        %v2386 = vunpack.c.h.b16 %v1297
        %v2387 = vunpack.c.l.b16 %v1298
        %v2388 = vunpack.c.l.b16 %v1299
        %v2389 = vunpack.c.h.b16 %v1299
        %v2390 = vunpack.c.l.b16 %v1300
        %v2391 = vunpack.c.l.b16 %v1301
        %v2392 = vunpack.c.h.b16 %v1301
        %v2393 = vunpack.c.l.b16 %v1302
        %v2394 = vunpack.c.l.b16 %v1303
        %v2395 = vunpack.c.h.b16 %v1303
        %v2396 = vunpack.c.l.b16 %v1304
        %v2397 = vunpack.c.l.b16 %v1305
        %v2398 = vunpack.c.h.b16 %v1305
        %v2399 = vunpack.c.l.b16 %v1306
        %v2400 = vunpack.c.l.b16 %v1307
        %v2401 = vunpack.c.h.b16 %v1307
        %v2402 = vunpack.c.l.b16 %v1308
        %v2403 = vunpack.c.l.b16 %v1309
        %v2404 = vunpack.c.h.b16 %v1309
        %v2405 = vunpack.c.l.b16 %v1310
        %v2406 = vunpack.c.l.b16 %v1311
        %v2407 = vunpack.c.h.b16 %v1311
        %v2408 = vunpack.c.l.b16 %v1312
        %v2409 = vunpack.c.l.b16 %v1313
        %v2410 = vunpack.c.h.b16 %v1313
        %v2411 = vunpack.c.l.b16 %v1314
        %v2412 = vunpack.c.l.b16 %v1315
        %v2413 = vunpack.c.h.b16 %v1315
        %v2414 = vunpack.c.l.b16 %v1316
        %v2415 = vunpack.c.l.b16 %v1317
        %v2416 = vunpack.c.h.b16 %v1317
        %v2417 = vunpack.c.l.b16 %v1318
        %v2418 = vunpack.c.l.b16 %v1319
        %v2419 = vunpack.c.h.b16 %v1319
        %v2420 = vunpack.c.l.b16 %v1320
        %v2421 = vunpack.c.l.b16 %v1321
        %v2422 = vunpack.c.h.b16 %v1321
        %v2423 = vunpack.c.l.b16 %v1322
        %v2424 = vunpack.c.l.b16 %v1323
        %v2425 = vunpack.c.h.b16 %v1323
        %v2426 = vunpack.c.l.b16 %v1324
        %v2427 = vunpack.c.l.b16 %v1325
        %v2428 = vunpack.c.h.b16 %v1325
        %v2429 = vunpack.c.l.b16 %v1326
        %v2430 = vunpack.c.l.b16 %v1327
        %v2431 = vunpack.c.h.b16 %v1327
        %v2432 = vunpack.c.l.b16 %v1328
        %v2433 = vunpack.c.l.b16 %v1329
        %v2434 = vunpack.c.h.b16 %v1329
        %v2435 = vunpack.c.l.b16 %v1330
        %v2436 = vunpack.c.l.b16 %v1331
        %v2437 = vunpack.c.h.b16 %v1331
        %v2438 = vunpack.c.l.b16 %v1332
        %v2439 = vunpack.c.l.b16 %v1333
        %v2440 = vunpack.c.h.b16 %v1333
        %v2441 = vunpack.c.l.b16 %v1334
        %v2442 = vunpack.c.l.b16 %v1335
        %v2443 = vunpack.c.h.b16 %v1335
        %v2444 = vunpack.c.l.b16 %v1336
        %v2445 = vunpack.c.l.b16 %v1337
        %v2446 = vunpack.c.h.b16 %v1337
        %v2447 = vunpack.c.l.b16 %v1338
        %v2448 = vunpack.c.l.b16 %v1339
        %v2449 = vunpack.c.h.b16 %v1339
        %v2450 = vunpack.c.l.b16 %v1340
        %v2451 = vunpack.c.l.b16 %v1341
        %v2452 = vunpack.c.h.b16 %v1341
        %v2453 = vunpack.c.l.b16 %v1342
        %v2454 = vunpack.c.l.b16 %v1343
        %v2455 = vunpack.c.h.b16 %v1343
        %v2456 = vunpack.c.l.b16 %v1344
        %v2457 = vunpack.c.l.b16 %v1345
        %v2458 = vunpack.c.h.b16 %v1345
        %v2459 = vunpack.c.l.b16 %v1346
        %v2460 = vunpack.c.l.b16 %v1347
        %v2461 = vunpack.c.h.b16 %v1347
        %v2462 = vunpack.c.l.b16 %v1348
        %v2463 = vunpack.c.l.b16 %v1349
        %v2464 = vunpack.c.h.b16 %v1349
        %v2465 = vunpack.c.l.b16 %v1350
        %v2466 = vunpack.c.l.b16 %v1351
        %v2467 = vunpack.c.h.b16 %v1351
        %v2468 = vunpack.c.l.b16 %v1352
        %v2469 = vunpack.c.l.b16 %v1353
        %v2470 = vunpack.c.h.b16 %v1353
        %v2471 = vunpack.c.l.b16 %v1354
        %v2472 = vunpack.c.l.b16 %v1355
        %v2473 = vunpack.c.h.b16 %v1355
        %v2474 = vunpack.c.l.b16 %v1356
        %v2475 = vunpack.c.l.b16 %v1357
        %v2476 = vunpack.c.h.b16 %v1357
        %v2477 = vunpack.c.l.b16 %v1358
        %v2478 = vunpack.c.l.b16 %v1359
        %v2479 = vunpack.c.h.b16 %v1359
        %v2480 = vunpack.c.l.b16 %v1360
        %v2481 = vunpack.c.l.b16 %v1361
        %v2482 = vunpack.c.h.b16 %v1361
        %v2483 = vunpack.c.l.b16 %v1362
        %v2484 = vunpack.c.l.b16 %v1363
        %v2485 = vunpack.c.h.b16 %v1363
        %v2486 = vunpack.c.l.b16 %v1364
        %v2487 = vunpack.c.l.b16 %v1365
        %v2488 = vunpack.c.h.b16 %v1365
        %v2489 = vunpack.c.l.b16 %v1366
        %v2490 = vunpack.c.l.b16 %v1367
        %v2491 = vunpack.c.h.b16 %v1367
        %v2492 = vunpack.c.l.b16 %v1368
        %v2493 = vunpack.c.l.b16 %v1369
        %v2494 = vunpack.c.h.b16 %v1369
        %v2495 = vunpack.c.l.b16 %v1370
        %v2496 = vunpack.c.l.b16 %v1371
        %v2497 = vunpack.c.h.b16 %v1371
        %v2498 = vunpack.c.l.b16 %v1372
        %v2499 = vunpack.c.l.b16 %v1373
        %v2500 = vunpack.c.h.b16 %v1373
        %v2501 = vunpack.c.l.b16 %v1374
        %v2502 = vunpack.c.l.b16 %v1375
        %v2503 = vunpack.c.h.b16 %v1375
        %v2504 = vunpack.c.l.b16 %v1376
        %v2505 = vunpack.c.l.b16 %v1377
        %v2506 = vunpack.c.h.b16 %v1377
        %v2507 = vunpack.c.l.b16 %v1378
        %v2508 = vunpack.c.l.b16 %v1379
        %v2509 = vunpack.c.h.b16 %v1379
        %v2510 = vunpack.c.l.b16 %v1380
        %v2511 = vunpack.c.l.b16 %v1381
        %v2512 = vunpack.c.h.b16 %v1381
        %v2513 = vunpack.c.l.b16 %v1382
        %v2514 = vunpack.c.l.b16 %v1383
        %v2515 = vunpack.c.h.b16 %v1383
        %v2516 = vunpack.c.l.b16 %v1384
        %v2517 = vunpack.c.l.b16 %v1385
        %v2518 = vunpack.c.h.b16 %v1385
        %v2519 = vunpack.c.l.b16 %v1386
        %v2520 = vunpack.c.l.b16 %v1387
        %v2521 = vunpack.c.h.b16 %v1387
        %v2522 = vunpack.c.l.b16 %v1388
        %v2523 = vunpack.c.l.b16 %v1389
        %v2524 = vunpack.c.h.b16 %v1389
        %v2525 = vunpack.c.l.b16 %v1390
        %v2526 = vunpack.c.l.b16 %v1391
        %v2527 = vunpack.c.h.b16 %v1391
        %v2528 = vunpack.c.l.b16 %v1392
        %v2529 = vunpack.c.l.b16 %v1393
        %v2530 = vunpack.c.h.b16 %v1393
        %v2531 = vunpack.c.l.b16 %v1394
        %v2532 = vunpack.c.l.b16 %v1395
        %v2533 = vunpack.c.h.b16 %v1395
        %v2534 = vunpack.c.l.b16 %v1396
        %v2535 = vunpack.c.l.b16 %v1397
        %v2536 = vunpack.c.h.b16 %v1397
        %v2537 = vunpack.c.l.b16 %v1398
        %v2538 = vunpack.c.l.b16 %v1399
        %v2539 = vunpack.c.h.b16 %v1399
        %v2540 = vunpack.c.l.b16 %v1400
        %v2541 = vunpack.c.l.b16 %v1401
        %v2542 = vunpack.c.h.b16 %v1401
        %v2543 = vunpack.c.l.b16 %v1402
        %v2544 = vunpack.c.l.b16 %v1403
        %v2545 = vunpack.c.h.b16 %v1403
        %v2546 = vunpack.c.l.b16 %v1404
        %v2547 = vunpack.c.l.b16 %v1405
        %v2548 = vunpack.c.h.b16 %v1405
        %v2549 = vunpack.c.l.b16 %v1406
        %v2550 = vunpack.c.l.b16 %v1407
        %v2551 = vunpack.c.h.b16 %v1407
        %v2552 = vunpack.c.l.b16 %v1408
        %v2553 = vunpack.c.l.b16 %v1409
        %v2554 = vunpack.c.h.b16 %v1409
        %v2555 = vunpack.c.l.b16 %v1410
        %v2556 = vunpack.c.l.b16 %v1411
        %v2557 = vunpack.c.h.b16 %v1411
        %v2558 = vunpack.c.l.b16 %v1412
        %v2559 = vunpack.c.l.b16 %v1413
        %v2560 = vunpack.c.h.b16 %v1413
        %v2561 = vunpack.c.l.b16 %v1414
        %v2562 = vunpack.c.l.b16 %v1415
        %v2563 = vunpack.c.h.b16 %v1415
        %v2564 = vunpack.c.l.b16 %v1416
        %v2565 = vunpack.c.l.b16 %v1417
        %v2566 = vunpack.c.h.b16 %v1417
        %v2567 = vunpack.c.l.b16 %v1418
        %v2568 = vunpack.c.l.b16 %v1419
        %v2569 = vunpack.c.h.b16 %v1419
        %v2570 = vunpack.c.l.b16 %v1420
        %v2571 = vunpack.c.l.b16 %v1421
        %v2572 = vunpack.c.h.b16 %v1421
        %v2573 = vunpack.c.l.b16 %v1422
        %v2574 = vunpack.c.l.b16 %v1423
        %v2575 = vunpack.c.h.b16 %v1423
        %v2576 = vunpack.c.l.b16 %v1424
        %v2577 = vunpack.c.l.b16 %v1425
        %v2578 = vunpack.c.h.b16 %v1425
        %v2579 = vunpack.c.l.b16 %v1426
        %v2580 = vunpack.c.l.b16 %v1427
        %v2581 = vunpack.c.h.b16 %v1427
        %v2582 = vunpack.c.l.b16 %v1428
        %v2583 = vunpack.c.l.b16 %v1429
        %v2584 = vunpack.c.h.b16 %v1429
        %v2585 = vunpack.c.l.b16 %v1430
        %v2586 = vunpack.c.l.b16 %v1431
        %v2587 = vunpack.c.h.b16 %v1431
        %v2588 = vunpack.c.l.b16 %v1432
        %v2589 = vunpack.c.l.b16 %v1433
        %v2590 = vunpack.c.h.b16 %v1433
        %v2591 = vunpack.c.l.b16 %v1434
        %v2592 = vunpack.c.l.b16 %v1435
        %v2593 = vunpack.c.h.b16 %v1435
        %v2594 = vunpack.c.l.b16 %v1436
        %v2595 = vunpack.c.l.b16 %v1437
        %v2596 = vunpack.c.h.b16 %v1437
        %v2597 = vunpack.c.l.b16 %v1438
        %v2598 = vunpack.c.l.b16 %v1439
        %v2599 = vunpack.c.h.b16 %v1439
        %v2600 = vunpack.c.l.b16 %v1440
        %v2601 = vunpack.c.l.b16 %v1441
        %v2602 = vunpack.c.h.b16 %v1441
        %v2603 = vunpack.c.l.b16 %v1442
        %v2604 = vunpack.c.l.b16 %v1443
        %v2605 = vunpack.c.h.b16 %v1443
        %v2606 = vunpack.c.l.b16 %v1444
        %v2607 = vunpack.c.l.b16 %v1445
        %v2608 = vunpack.c.h.b16 %v1445
        %v2609 = vunpack.c.l.b16 %v1446
        %v2610 = vunpack.c.l.b16 %v1447
        %v2611 = vunpack.c.h.b16 %v1447
        %v2612 = vunpack.c.l.b16 %v1448
        %v2613 = vunpack.c.l.b16 %v1449
        %v2614 = vunpack.c.h.b16 %v1449
        %v2615 = vunpack.c.l.b16 %v1450
        %v2616 = vunpack.c.l.b16 %v1451
        %v2617 = vunpack.c.h.b16 %v1451
        %v2618 = vunpack.c.l.b16 %v1452
        %v2619 = vunpack.c.l.b16 %v1453
        %v2620 = vunpack.c.h.b16 %v1453
        %v2621 = vunpack.c.l.b16 %v1454
        %v2622 = vunpack.c.l.b16 %v1455
        %v2623 = vunpack.c.h.b16 %v1455
        %v2624 = vunpack.c.l.b16 %v1456
        %v2625 = vunpack.c.l.b16 %v1457
        %v2626 = vunpack.c.h.b16 %v1457
        %v2627 = vunpack.c.l.b16 %v1458
        %v2628 = vunpack.c.l.b16 %v1459
        %v2629 = vunpack.c.h.b16 %v1459
        %v2630 = vunpack.c.l.b16 %v1460
        %v2631 = vunpack.c.l.b16 %v1461
        %v2632 = vunpack.c.h.b16 %v1461
        %v2633 = vunpack.c.l.b16 %v1462
        %v2634 = vunpack.c.l.b16 %v1463
        %v2635 = vunpack.c.h.b16 %v1463
        %v2636 = vunpack.c.l.b16 %v1464
        %v2637 = vunpack.c.l.b16 %v1465
        %v2638 = vunpack.c.h.b16 %v1465
        %v2639 = vunpack.c.l.b16 %v1466
        %v2640 = vunpack.c.l.b16 %v1467
        %v2641 = vunpack.c.h.b16 %v1467
        %v2642 = vunpack.c.l.b16 %v1468
        %v2643 = vunpack.c.l.b16 %v1469
        %v2644 = vunpack.c.h.b16 %v1469
        %v2645 = vunpack.c.l.b16 %v1470
        %v2646 = vunpack.c.l.b16 %v1471
        %v2647 = vunpack.c.h.b16 %v1471
        %v2648 = vunpack.c.l.b16 %v1472
        %v2649 = vunpack.c.l.b16 %v1473
        %v2650 = vunpack.c.h.b16 %v1473
        %v2651 = vunpack.c.l.b16 %v1474
        %v2652 = vunpack.c.l.b16 %v1475
        %v2653 = vunpack.c.h.b16 %v1475
        %v2654 = vunpack.c.l.b16 %v1476
        %v2655 = vunpack.c.l.b16 %v1477
        %v2656 = vunpack.c.h.b16 %v1477
        %v2657 = vunpack.c.l.b16 %v1478
        %v2658 = vunpack.c.l.b16 %v1479
        %v2659 = vunpack.c.h.b16 %v1479
        %v2660 = vunpack.c.l.b16 %v1480
        %v2661 = vunpack.c.l.b16 %v1481
        %v2662 = vunpack.c.h.b16 %v1481
        %v2663 = vunpack.c.l.b16 %v1482
        %v2664 = vunpack.c.l.b16 %v1483
        %v2665 = vunpack.c.h.b16 %v1483
        %v2666 = vunpack.c.l.b16 %v1484
        %v2667 = vunpack.c.l.b16 %v1485
        %v2668 = vunpack.c.h.b16 %v1485
        %v2669 = vunpack.c.l.b16 %v1486
        %v2670 = vunpack.c.l.b16 %v1487
        %v2671 = vunpack.c.h.b16 %v1487
        %v2672 = vunpack.c.l.b16 %v1488
        %v2673 = vunpack.c.l.b16 %v1489
        %v2674 = vunpack.c.h.b16 %v1489
        %v2675 = vunpack.c.l.b16 %v1490
        %v2676 = vunpack.c.l.b16 %v1491
        %v2677 = vunpack.c.h.b16 %v1491
        %v2678 = vunpack.c.l.b16 %v1492
        %v2679 = vunpack.c.l.b16 %v1493
        %v2680 = vunpack.c.h.b16 %v1493
        %v2681 = vunpack.c.l.b16 %v1494
        %v2682 = vunpack.c.l.b16 %v1495
        %v2683 = vunpack.c.h.b16 %v1495
        %v2684 = vunpack.c.l.b16 %v1496
        %v2685 = vunpack.c.l.b16 %v1497
        %v2686 = vunpack.c.h.b16 %v1497
        %v2687 = vunpack.c.l.b16 %v1498
        %v2688 = vunpack.c.l.b16 %v1499
        %v2689 = vunpack.c.h.b16 %v1499
        %v2690 = vunpack.c.l.b16 %v1500
        %v2691 = vunpack.c.l.b16 %v1501
        %v2692 = vunpack.c.h.b16 %v1501
        %v2693 = vunpack.c.l.b16 %v1502
        %v2694 = vunpack.c.l.b16 %v1503
        %v2695 = vunpack.c.h.b16 %v1503
        %v2696 = vunpack.c.l.b16 %v1504
        %v2697 = vunpack.c.l.b16 %v1505
        %v2698 = vunpack.c.h.b16 %v1505
        %v2699 = vunpack.c.l.b16 %v1506
        %v2700 = vunpack.c.l.b16 %v1507
        %v2701 = vunpack.c.h.b16 %v1507
        %v2702 = vunpack.c.l.b16 %v1508
        %v2703 = vunpack.c.l.b16 %v1509
        %v2704 = vunpack.c.h.b16 %v1509
        %v2705 = vunpack.c.l.b16 %v1510
        %v2706 = vunpack.c.l.b16 %v1511
        %v2707 = vunpack.c.h.b16 %v1511
        %v2708 = vunpack.c.l.b16 %v1512
        %v2709 = vunpack.c.l.b16 %v1513
        %v2710 = vunpack.c.h.b16 %v1513
        %v2711 = vunpack.c.l.b16 %v1514
        %v2712 = vunpack.c.l.b16 %v1515
        %v2713 = vunpack.c.h.b16 %v1515
        %v2714 = vunpack.c.l.b16 %v1516
        %v2715 = vunpack.c.l.b16 %v1517
        %v2716 = vunpack.c.h.b16 %v1517
        %v2717 = vunpack.c.l.b16 %v1518
        %v2718 = vunpack.c.l.b16 %v1519
        %v2719 = vunpack.c.h.b16 %v1519
        %v2720 = vunpack.c.l.b16 %v1520
        %v2721 = vunpack.c.l.b16 %v1521
        %v2722 = vunpack.c.h.b16 %v1521
        %v2723 = vunpack.c.l.b16 %v1522
        %v2724 = vunpack.c.l.b16 %v1523
        %v2725 = vunpack.c.h.b16 %v1523
        %v2726 = vunpack.c.l.b16 %v1524
        %v2727 = vunpack.c.l.b16 %v1525
        %v2728 = vunpack.c.h.b16 %v1525
        %v2729 = vunpack.c.l.b16 %v1526
        %v2730 = vunpack.c.l.b16 %v1527
        %v2731 = vunpack.c.h.b16 %v1527
        %v2732 = vunpack.c.l.b16 %v1528
        %v2733 = vunpack.c.l.b16 %v1529
        %v2734 = vunpack.c.h.b16 %v1529
        %v2735 = vunpack.c.l.b16 %v1530
        %v2736 = vunpack.c.l.b16 %v1531
        %v2737 = vunpack.c.h.b16 %v1531
        %v2738 = vunpack.c.l.b16 %v1532
        %v2739 = vunpack.c.l.b16 %v1533
        %v2740 = vunpack.c.h.b16 %v1533
        %v2741 = vunpack.c.l.b16 %v1534
        %v2742 = vunpack.c.l.b16 %v1535
        %v2743 = vunpack.c.h.b16 %v1535
        %v2744 = vunpack.c.l.b16 %v1536
        %v2745 = vunpack.c.l.b16 %v1537
        %v2746 = vunpack.c.h.b16 %v1537
        %v2747 = vunpack.c.l.b16 %v1538
        %v2748 = vunpack.c.l.b16 %v1539
        %v2749 = vunpack.c.h.b16 %v1539
        %v2750 = vunpack.c.l.b16 %v1540
        %v2751 = vunpack.c.l.b16 %v1541
        %v2752 = vunpack.c.h.b16 %v1541
        %v2753 = vunpack.c.l.b16 %v1542
        %v2754 = vunpack.c.l.b16 %v1543
        %v2755 = vunpack.c.h.b16 %v1543
        %v2756 = vunpack.c.l.b16 %v1544
        %v2757 = vunpack.c.l.b16 %v1545
        %v2758 = vunpack.c.h.b16 %v1545
        %v2759 = vunpack.c.l.b16 %v1546
        %v2760 = vunpack.c.l.b16 %v1547
        %v2761 = vunpack.c.h.b16 %v1547
        %v2762 = vunpack.c.l.b16 %v1548
        %v2763 = vunpack.c.l.b16 %v1549
        %v2764 = vunpack.c.h.b16 %v1549
        %v2765 = vunpack.c.l.b16 %v1550
        %v2766 = vunpack.c.l.b16 %v1551
        %v2767 = vunpack.c.h.b16 %v1551
        %v2768 = vunpack.c.l.b16 %v1552
        %v2769 = vunpack.c.l.b16 %v1553
        %v2770 = vunpack.c.h.b16 %v1553
        %v2771 = vunpack.c.l.b16 %v1554
        %v2772 = vunpack.c.l.b16 %v1555
        %v2773 = vunpack.c.h.b16 %v1555
        %v2774 = vunpack.c.l.b16 %v1556
        %v2775 = vunpack.c.l.b16 %v1557
        %v2776 = vunpack.c.h.b16 %v1557
        %v2777 = vunpack.c.l.b16 %v1558
        %v2778 = vunpack.c.l.b16 %v1559
        %v2779 = vunpack.c.h.b16 %v1559
        %v2780 = vunpack.c.l.b16 %v1560
        %v2781 = vunpack.c.l.b16 %v1561
        %v2782 = vunpack.c.h.b16 %v1561
        %v2783 = vunpack.c.l.b16 %v1562
        %v2784 = vunpack.c.l.b16 %v1563
        %v2785 = vunpack.c.h.b16 %v1563
        %v2786 = vunpack.c.l.b16 %v1564
        %v2787 = vunpack.c.l.b16 %v1565
        %v2788 = vunpack.c.h.b16 %v1565
        %v2789 = vunpack.c.l.b16 %v1566
        %v2790 = vunpack.c.l.b16 %v1567
        %v2791 = vunpack.c.h.b16 %v1567
        %v2792 = vunpack.c.l.b16 %v1568
        %v2793 = vunpack.c.l.b16 %v1569
        %v2794 = vunpack.c.h.b16 %v1569
        %v2795 = vunpack.c.l.b16 %v1570
        %v2796 = vunpack.c.l.b16 %v1571
        %v2797 = vunpack.c.h.b16 %v1571
        %v2798 = vunpack.c.l.b16 %v1572
        %v2799 = vunpack.c.l.b16 %v1573
        %v2800 = vunpack.c.h.b16 %v1573
        %v2801 = vunpack.c.l.b16 %v1574
        %v2802 = vunpack.c.l.b16 %v1575
        %v2803 = vunpack.c.h.b16 %v1575
        %v2804 = vunpack.c.l.b16 %v1576
        %v2805 = vunpack.c.l.b16 %v1577
        %v2806 = vunpack.c.h.b16 %v1577
        %v2807 = vunpack.c.l.b16 %v1578
        %v2808 = vunpack.c.l.b16 %v1579
        %v2809 = vunpack.c.h.b16 %v1579
        %v2810 = vunpack.c.l.b16 %v1580
        %v2811 = vunpack.c.l.b16 %v1581
        %v2812 = vunpack.c.h.b16 %v1581
        %v2813 = vunpack.c.l.b16 %v1582
        %v2814 = vunpack.c.l.b16 %v1583
        %v2815 = vunpack.c.h.b16 %v1583
        %v2816 = vunpack.c.l.b16 %v1584
        %v2817 = vunpack.c.l.b16 %v1585
        %v2818 = vunpack.c.h.b16 %v1585
        %v2819 = vunpack.c.l.b16 %v1586
        %v2820 = vunpack.c.l.b16 %v1587
        %v2821 = vunpack.c.h.b16 %v1587
        %v2822 = vunpack.c.l.b16 %v1588
        %v2823 = vunpack.c.l.b16 %v1589
        %v2824 = vunpack.c.h.b16 %v1589
        %v2825 = vunpack.c.l.b16 %v1590
        %v2826 = vunpack.c.l.b16 %v1591
        %v2827 = vunpack.c.h.b16 %v1591
        %v2828 = vunpack.c.l.b16 %v1592
        %v2829 = vunpack.c.l.b16 %v1593
        %v2830 = vunpack.c.h.b16 %v1593
        %v2831 = vunpack.c.l.b16 %v1594
        %v2832 = vunpack.c.l.b16 %v1595
        %v2833 = vunpack.c.h.b16 %v1595
        %v2834 = vunpack.c.l.b16 %v1596
        %v2835 = vunpack.c.l.b16 %v1597
        %v2836 = vunpack.c.h.b16 %v1597
        %v2837 = vunpack.c.l.b16 %v1598
        %v2838 = vunpack.c.l.b16 %v1599
        %v2839 = vunpack.c.h.b16 %v1599
        %v2840 = vunpack.c.l.b16 %v1600
        %v2841 = vunpack.c.l.b16 %v1601
        %v2842 = vunpack.c.h.b16 %v1601
        %v2843 = vunpack.c.l.b16 %v1602
        %v2844 = vunpack.c.l.b16 %v1603
        %v2845 = vunpack.c.h.b16 %v1603
        %v2846 = vunpack.c.l.b16 %v1604
        %v2847 = vunpack.c.l.b16 %v1605
        %v2848 = vunpack.c.h.b16 %v1605
        %v2849 = vunpack.c.l.b16 %v1606
        %v2850 = vunpack.c.l.b16 %v1607
        %v2851 = vunpack.c.h.b16 %v1607
        %v2852 = vunpack.c.l.b16 %v1608
        %v2853 = vunpack.c.l.b16 %v1609
        %v2854 = vunpack.c.h.b16 %v1609
        %v2855 = vunpack.c.l.b16 %v1610
        %v2856 = vunpack.c.l.b16 %v1611
        %v2857 = vunpack.c.h.b16 %v1611
        %v2858 = vunpack.c.l.b16 %v1612
        %v2859 = vunpack.c.l.b16 %v1613
        %v2860 = vunpack.c.h.b16 %v1613
        %v2861 = vunpack.c.l.b16 %v1614
        %v2862 = vunpack.c.l.b16 %v1615
        %v2863 = vunpack.c.h.b16 %v1615
        %v2864 = vunpack.c.l.b16 %v1616
        %v2865 = vunpack.c.l.b16 %v1617
        %v2866 = vunpack.c.h.b16 %v1617
        %v2867 = vunpack.c.l.b16 %v1618
        %v2868 = vunpack.c.l.b16 %v1619
        %v2869 = vunpack.c.h.b16 %v1619
        %v2870 = vunpack.c.l.b16 %v1620
        %v2871 = vunpack.c.l.b16 %v1621
        %v2872 = vunpack.c.h.b16 %v1621
        %v2873 = vunpack.c.l.b16 %v1622
        %v2874 = vunpack.c.l.b16 %v1623
        %v2875 = vunpack.c.h.b16 %v1623
        %v2876 = vunpack.c.l.b16 %v1624
        %v2877 = vunpack.c.l.b16 %v1625
        %v2878 = vunpack.c.h.b16 %v1625
        %v2879 = vunpack.c.l.b16 %v1626
        %v2880 = vunpack.c.l.b16 %v1627
        %v2881 = vunpack.c.h.b16 %v1627
        %v2882 = vunpack.c.l.b16 %v1628
        %v2883 = vunpack.c.l.b16 %v1629
        %v2884 = vunpack.c.h.b16 %v1629
        %v2885 = vunpack.c.l.b16 %v1630
        %v2886 = vunpack.c.l.b16 %v1631
        %v2887 = vunpack.c.h.b16 %v1631
        %v2888 = vunpack.c.l.b16 %v1632
        %v2889 = vunpack.c.l.b16 %v1633
        %v2890 = vunpack.c.h.b16 %v1633
        %v2891 = vunpack.c.l.b16 %v1634
        %v2892 = vunpack.c.l.b16 %v1635
        %v2893 = vunpack.c.h.b16 %v1635
        %v2894 = vunpack.c.l.b16 %v1636
        %v2895 = vunpack.c.l.b16 %v1637
        %v2896 = vunpack.c.h.b16 %v1637
        %v2897 = vunpack.c.l.b16 %v1638
        %v2898 = vunpack.c.l.b16 %v1639
        %v2899 = vunpack.c.h.b16 %v1639
        %v2900 = vunpack.c.l.b16 %v1640
        %v2901 = vunpack.c.l.b16 %v1641
        %v2902 = vunpack.c.h.b16 %v1641
        %v2903 = vunpack.c.l.b16 %v1642
        %v2904 = vunpack.c.l.b16 %v1643
        %v2905 = vunpack.c.h.b16 %v1643
        %v2906 = vunpack.c.l.b16 %v1644
        %v2907 = vunpack.c.l.b16 %v1645
        %v2908 = vunpack.c.h.b16 %v1645
        %v2909 = vunpack.c.l.b16 %v1646
        %v2910 = vunpack.c.l.b16 %v1647
        %v2911 = vunpack.c.h.b16 %v1647
        %v2912 = vunpack.c.l.b16 %v1648
        %v2913 = vunpack.c.l.b16 %v1649
        %v2914 = vunpack.c.h.b16 %v1649
        %v2915 = vunpack.c.l.b16 %v1650
        %v2916 = vunpack.c.l.b16 %v1651
        %v2917 = vunpack.c.h.b16 %v1651
        %v2918 = vunpack.c.l.b16 %v1652
        %v2919 = vunpack.c.l.b16 %v1653
        %v2920 = vunpack.c.h.b16 %v1653
        %v2921 = vunpack.c.l.b16 %v1654
        %v2922 = vunpack.c.l.b16 %v1655
        %v2923 = vunpack.c.h.b16 %v1655
        %v2924 = vunpack.c.l.b16 %v1656
        %v2925 = vunpack.c.l.b16 %v1657
        %v2926 = vunpack.c.h.b16 %v1657
        %v2927 = vunpack.c.l.b16 %v1658
        %v2928 = vunpack.c.l.b16 %v1659
        %v2929 = vunpack.c.h.b16 %v1659
        %v2930 = vunpack.c.l.b16 %v1660
        %v2931 = vunpack.c.l.b16 %v1661
        %v2932 = vunpack.c.h.b16 %v1661
        %v2933 = vunpack.c.l.b16 %v1662
        %v2934 = vunpack.c.l.b16 %v1663
        %v2935 = vunpack.c.h.b16 %v1663
        %v2936 = vunpack.c.l.b16 %v1664
        %v2937 = vunpack.c.l.b16 %v1665
        %v2938 = vunpack.c.h.b16 %v1665
        %v2939 = vunpack.c.l.b16 %v1666
        %v2940 = vunpack.c.l.b16 %v1667
        %v2941 = vunpack.c.h.b16 %v1667
        %v2942 = vunpack.c.l.b16 %v1668
        %v2943 = vunpack.c.l.b16 %v1669
        %v2944 = vunpack.c.h.b16 %v1669
        %v2945 = vunpack.c.l.b16 %v1670
        %v2946 = vunpack.c.l.b16 %v1671
        %v2947 = vunpack.c.h.b16 %v1671
        %v2948 = vunpack.c.l.b16 %v1672
        %v2949 = vunpack.c.l.b16 %v1673
        %v2950 = vunpack.c.h.b16 %v1673
        %v2951 = vunpack.c.l.b16 %v1674
        %v2952 = vunpack.c.l.b16 %v1675
        %v2953 = vunpack.c.h.b16 %v1675
        %v2954 = vunpack.c.l.b16 %v1676
        %v2955 = vunpack.c.l.b16 %v1677
        %v2956 = vunpack.c.h.b16 %v1677
        %v2957 = vunpack.c.l.b16 %v1678
        %v2958 = vunpack.c.l.b16 %v1679
        %v2959 = vunpack.c.h.b16 %v1679
        %v2960 = vunpack.c.l.b16 %v1680
        %v2961 = vpack.c.b16 %v2196, %v2193
        %v2962 = vpack.c.b16 %v2197, %v2194
        %v2963 = vpack.c.b16 %v2198, %v2195
        %v2964 = vpack.c.b16 %v2202, %v2199
        %v2965 = vpack.c.b16 %v2203, %v2200
        %v2966 = vpack.c.b16 %v2204, %v2201
        %v2967 = vpack.c.b16 %v2208, %v2205
        %v2968 = vpack.c.b16 %v2209, %v2206
        %v2969 = vpack.c.b16 %v2210, %v2207
        %v2970 = vpack.c.b16 %v2214, %v2211
        %v2971 = vpack.c.b16 %v2215, %v2212
        %v2972 = vpack.c.b16 %v2216, %v2213
        %v2973 = vpack.c.b16 %v2220, %v2217
        %v2974 = vpack.c.b16 %v2221, %v2218
        %v2975 = vpack.c.b16 %v2222, %v2219
        %v2976 = vpack.c.b16 %v2226, %v2223
        %v2977 = vpack.c.b16 %v2227, %v2224
        %v2978 = vpack.c.b16 %v2228, %v2225
        %v2979 = vpack.c.b16 %v2232, %v2229
        %v2980 = vpack.c.b16 %v2233, %v2230
        %v2981 = vpack.c.b16 %v2234, %v2231
        %v2982 = vpack.c.b16 %v2238, %v2235
        %v2983 = vpack.c.b16 %v2239, %v2236
        %v2984 = vpack.c.b16 %v2240, %v2237
        %v2985 = vpack.c.b16 %v2244, %v2241
        %v2986 = vpack.c.b16 %v2245, %v2242
        %v2987 = vpack.c.b16 %v2246, %v2243
        %v2988 = vpack.c.b16 %v2250, %v2247
        %v2989 = vpack.c.b16 %v2251, %v2248
        %v2990 = vpack.c.b16 %v2252, %v2249
        %v2991 = vpack.c.b16 %v2256, %v2253
        %v2992 = vpack.c.b16 %v2257, %v2254
        %v2993 = vpack.c.b16 %v2258, %v2255
        %v2994 = vpack.c.b16 %v2262, %v2259
        %v2995 = vpack.c.b16 %v2263, %v2260
        %v2996 = vpack.c.b16 %v2264, %v2261
        %v2997 = vpack.c.b16 %v2268, %v2265
        %v2998 = vpack.c.b16 %v2269, %v2266
        %v2999 = vpack.c.b16 %v2270, %v2267
        %v3000 = vpack.c.b16 %v2274, %v2271
        %v3001 = vpack.c.b16 %v2275, %v2272
        %v3002 = vpack.c.b16 %v2276, %v2273
        %v3003 = vpack.c.b16 %v2280, %v2277
        %v3004 = vpack.c.b16 %v2281, %v2278
        %v3005 = vpack.c.b16 %v2282, %v2279
        %v3006 = vpack.c.b16 %v2286, %v2283
        %v3007 = vpack.c.b16 %v2287, %v2284
        %v3008 = vpack.c.b16 %v2288, %v2285
        %v3009 = vpack.c.b16 %v2292, %v2289
        %v3010 = vpack.c.b16 %v2293, %v2290
        %v3011 = vpack.c.b16 %v2294, %v2291
        %v3012 = vpack.c.b16 %v2298, %v2295
        %v3013 = vpack.c.b16 %v2299, %v2296
        %v3014 = vpack.c.b16 %v2300, %v2297
        %v3015 = vpack.c.b16 %v2304, %v2301
        %v3016 = vpack.c.b16 %v2305, %v2302
        %v3017 = vpack.c.b16 %v2306, %v2303
        %v3018 = vpack.c.b16 %v2310, %v2307
        %v3019 = vpack.c.b16 %v2311, %v2308
        %v3020 = vpack.c.b16 %v2312, %v2309
        %v3021 = vpack.c.b16 %v2316, %v2313
        %v3022 = vpack.c.b16 %v2317, %v2314
        %v3023 = vpack.c.b16 %v2318, %v2315
        %v3024 = vpack.c.b16 %v2322, %v2319
        %v3025 = vpack.c.b16 %v2323, %v2320
        %v3026 = vpack.c.b16 %v2324, %v2321
        %v3027 = vpack.c.b16 %v2328, %v2325
        %v3028 = vpack.c.b16 %v2329, %v2326
        %v3029 = vpack.c.b16 %v2330, %v2327
        %v3030 = vpack.c.b16 %v2334, %v2331
        %v3031 = vpack.c.b16 %v2335, %v2332
        %v3032 = vpack.c.b16 %v2336, %v2333
        %v3033 = vpack.c.b16 %v2340, %v2337
        %v3034 = vpack.c.b16 %v2341, %v2338
        %v3035 = vpack.c.b16 %v2342, %v2339
        %v3036 = vpack.c.b16 %v2346, %v2343
        %v3037 = vpack.c.b16 %v2347, %v2344
        %v3038 = vpack.c.b16 %v2348, %v2345
        %v3039 = vpack.c.b16 %v2352, %v2349
        %v3040 = vpack.c.b16 %v2353, %v2350
        %v3041 = vpack.c.b16 %v2354, %v2351
        %v3042 = vpack.c.b16 %v2358, %v2355
        %v3043 = vpack.c.b16 %v2359, %v2356
        %v3044 = vpack.c.b16 %v2360, %v2357
        %v3045 = vpack.c.b16 %v2364, %v2361
        %v3046 = vpack.c.b16 %v2365, %v2362
        %v3047 = vpack.c.b16 %v2366, %v2363
        %v3048 = vpack.c.b16 %v2370, %v2367
        %v3049 = vpack.c.b16 %v2371, %v2368
        %v3050 = vpack.c.b16 %v2372, %v2369
        %v3051 = vpack.c.b16 %v2376, %v2373
        %v3052 = vpack.c.b16 %v2377, %v2374
        %v3053 = vpack.c.b16 %v2378, %v2375
        %v3054 = vpack.c.b16 %v2382, %v2379
        %v3055 = vpack.c.b16 %v2383, %v2380
        %v3056 = vpack.c.b16 %v2384, %v2381
        %v3057 = vpack.c.b16 %v2388, %v2385
        %v3058 = vpack.c.b16 %v2389, %v2386
        %v3059 = vpack.c.b16 %v2390, %v2387
        %v3060 = vpack.c.b16 %v2394, %v2391
        %v3061 = vpack.c.b16 %v2395, %v2392
        %v3062 = vpack.c.b16 %v2396, %v2393
        %v3063 = vpack.c.b16 %v2400, %v2397
        %v3064 = vpack.c.b16 %v2401, %v2398
        %v3065 = vpack.c.b16 %v2402, %v2399
        %v3066 = vpack.c.b16 %v2406, %v2403
        %v3067 = vpack.c.b16 %v2407, %v2404
        %v3068 = vpack.c.b16 %v2408, %v2405
        %v3069 = vpack.c.b16 %v2412, %v2409
        %v3070 = vpack.c.b16 %v2413, %v2410
        %v3071 = vpack.c.b16 %v2414, %v2411
        %v3072 = vpack.c.b16 %v2418, %v2415
        %v3073 = vpack.c.b16 %v2419, %v2416
        %v3074 = vpack.c.b16 %v2420, %v2417
        %v3075 = vpack.c.b16 %v2424, %v2421
        %v3076 = vpack.c.b16 %v2425, %v2422
        %v3077 = vpack.c.b16 %v2426, %v2423
        %v3078 = vpack.c.b16 %v2430, %v2427
        %v3079 = vpack.c.b16 %v2431, %v2428
        %v3080 = vpack.c.b16 %v2432, %v2429
        %v3081 = vpack.c.b16 %v2436, %v2433
        %v3082 = vpack.c.b16 %v2437, %v2434
        %v3083 = vpack.c.b16 %v2438, %v2435
        %v3084 = vpack.c.b16 %v2442, %v2439
        %v3085 = vpack.c.b16 %v2443, %v2440
        %v3086 = vpack.c.b16 %v2444, %v2441
        %v3087 = vpack.c.b16 %v2448, %v2445
        %v3088 = vpack.c.b16 %v2449, %v2446
        %v3089 = vpack.c.b16 %v2450, %v2447
        %v3090 = vpack.c.b16 %v2454, %v2451
        %v3091 = vpack.c.b16 %v2455, %v2452
        %v3092 = vpack.c.b16 %v2456, %v2453
        %v3093 = vpack.c.b16 %v2460, %v2457
        %v3094 = vpack.c.b16 %v2461, %v2458
        %v3095 = vpack.c.b16 %v2462, %v2459
        %v3096 = vpack.c.b16 %v2466, %v2463
        %v3097 = vpack.c.b16 %v2467, %v2464
        %v3098 = vpack.c.b16 %v2468, %v2465
        %v3099 = vpack.c.b16 %v2472, %v2469
        %v3100 = vpack.c.b16 %v2473, %v2470
        %v3101 = vpack.c.b16 %v2474, %v2471
        %v3102 = vpack.c.b16 %v2478, %v2475
        %v3103 = vpack.c.b16 %v2479, %v2476
        %v3104 = vpack.c.b16 %v2480, %v2477
        %v3105 = vpack.c.b16 %v2484, %v2481
        %v3106 = vpack.c.b16 %v2485, %v2482
        %v3107 = vpack.c.b16 %v2486, %v2483
        %v3108 = vpack.c.b16 %v2490, %v2487
        %v3109 = vpack.c.b16 %v2491, %v2488
        %v3110 = vpack.c.b16 %v2492, %v2489
        %v3111 = vpack.c.b16 %v2496, %v2493
        %v3112 = vpack.c.b16 %v2497, %v2494
        %v3113 = vpack.c.b16 %v2498, %v2495
        %v3114 = vpack.c.b16 %v2502, %v2499
        %v3115 = vpack.c.b16 %v2503, %v2500
        %v3116 = vpack.c.b16 %v2504, %v2501
        %v3117 = vpack.c.b16 %v2508, %v2505
        %v3118 = vpack.c.b16 %v2509, %v2506
        %v3119 = vpack.c.b16 %v2510, %v2507
        %v3120 = vpack.c.b16 %v2514, %v2511
        %v3121 = vpack.c.b16 %v2515, %v2512
        %v3122 = vpack.c.b16 %v2516, %v2513
        %v3123 = vpack.c.b16 %v2520, %v2517
        %v3124 = vpack.c.b16 %v2521, %v2518
        %v3125 = vpack.c.b16 %v2522, %v2519
        %v3126 = vpack.c.b16 %v2526, %v2523
        %v3127 = vpack.c.b16 %v2527, %v2524
        %v3128 = vpack.c.b16 %v2528, %v2525
        %v3129 = vpack.c.b16 %v2532, %v2529
        %v3130 = vpack.c.b16 %v2533, %v2530
        %v3131 = vpack.c.b16 %v2534, %v2531
        %v3132 = vpack.c.b16 %v2538, %v2535
        %v3133 = vpack.c.b16 %v2539, %v2536
        %v3134 = vpack.c.b16 %v2540, %v2537
        %v3135 = vpack.c.b16 %v2544, %v2541
        %v3136 = vpack.c.b16 %v2545, %v2542
        %v3137 = vpack.c.b16 %v2546, %v2543
        %v3138 = vpack.c.b16 %v2550, %v2547
        %v3139 = vpack.c.b16 %v2551, %v2548
        %v3140 = vpack.c.b16 %v2552, %v2549
        %v3141 = vpack.c.b16 %v2556, %v2553
        %v3142 = vpack.c.b16 %v2557, %v2554
        %v3143 = vpack.c.b16 %v2558, %v2555
        %v3144 = vpack.c.b16 %v2562, %v2559
        %v3145 = vpack.c.b16 %v2563, %v2560
        %v3146 = vpack.c.b16 %v2564, %v2561
        %v3147 = vpack.c.b16 %v2568, %v2565
        %v3148 = vpack.c.b16 %v2569, %v2566
        %v3149 = vpack.c.b16 %v2570, %v2567
        %v3150 = vpack.c.b16 %v2574, %v2571
        %v3151 = vpack.c.b16 %v2575, %v2572
        %v3152 = vpack.c.b16 %v2576, %v2573
        %v3153 = vpack.c.b16 %v2580, %v2577
        %v3154 = vpack.c.b16 %v2581, %v2578
        %v3155 = vpack.c.b16 %v2582, %v2579
        %v3156 = vpack.c.b16 %v2586, %v2583
        %v3157 = vpack.c.b16 %v2587, %v2584
        %v3158 = vpack.c.b16 %v2588, %v2585
        %v3159 = vpack.c.b16 %v2592, %v2589
        %v3160 = vpack.c.b16 %v2593, %v2590
        %v3161 = vpack.c.b16 %v2594, %v2591
        %v3162 = vpack.c.b16 %v2598, %v2595
        %v3163 = vpack.c.b16 %v2599, %v2596
        %v3164 = vpack.c.b16 %v2600, %v2597
        %v3165 = vpack.c.b16 %v2604, %v2601
        %v3166 = vpack.c.b16 %v2605, %v2602
        %v3167 = vpack.c.b16 %v2606, %v2603
        %v3168 = vpack.c.b16 %v2610, %v2607
        %v3169 = vpack.c.b16 %v2611, %v2608
        %v3170 = vpack.c.b16 %v2612, %v2609
        %v3171 = vpack.c.b16 %v2616, %v2613
        %v3172 = vpack.c.b16 %v2617, %v2614
        %v3173 = vpack.c.b16 %v2618, %v2615
        %v3174 = vpack.c.b16 %v2622, %v2619
        %v3175 = vpack.c.b16 %v2623, %v2620
        %v3176 = vpack.c.b16 %v2624, %v2621
        %v3177 = vpack.c.b16 %v2628, %v2625
        %v3178 = vpack.c.b16 %v2629, %v2626
        %v3179 = vpack.c.b16 %v2630, %v2627
        %v3180 = vpack.c.b16 %v2634, %v2631
        %v3181 = vpack.c.b16 %v2635, %v2632
        %v3182 = vpack.c.b16 %v2636, %v2633
        %v3183 = vpack.c.b16 %v2640, %v2637
        %v3184 = vpack.c.b16 %v2641, %v2638
        %v3185 = vpack.c.b16 %v2642, %v2639
        %v3186 = vpack.c.b16 %v2646, %v2643
        %v3187 = vpack.c.b16 %v2647, %v2644
        %v3188 = vpack.c.b16 %v2648, %v2645
        %v3189 = vpack.c.b16 %v2652, %v2649
        %v3190 = vpack.c.b16 %v2653, %v2650
        %v3191 = vpack.c.b16 %v2654, %v2651
        %v3192 = vpack.c.b16 %v2658, %v2655
        %v3193 = vpack.c.b16 %v2659, %v2656
        %v3194 = vpack.c.b16 %v2660, %v2657
        %v3195 = vpack.c.b16 %v2664, %v2661
        %v3196 = vpack.c.b16 %v2665, %v2662
        %v3197 = vpack.c.b16 %v2666, %v2663
        %v3198 = vpack.c.b16 %v2670, %v2667
        %v3199 = vpack.c.b16 %v2671, %v2668
        %v3200 = vpack.c.b16 %v2672, %v2669
        %v3201 = vpack.c.b16 %v2676, %v2673
        %v3202 = vpack.c.b16 %v2677, %v2674
        %v3203 = vpack.c.b16 %v2678, %v2675
        %v3204 = vpack.c.b16 %v2682, %v2679
        %v3205 = vpack.c.b16 %v2683, %v2680
        %v3206 = vpack.c.b16 %v2684, %v2681
        %v3207 = vpack.c.b16 %v2688, %v2685
        %v3208 = vpack.c.b16 %v2689, %v2686
        %v3209 = vpack.c.b16 %v2690, %v2687
        %v3210 = vpack.c.b16 %v2694, %v2691
        %v3211 = vpack.c.b16 %v2695, %v2692
        %v3212 = vpack.c.b16 %v2696, %v2693
        %v3213 = vpack.c.b16 %v2700, %v2697
        %v3214 = vpack.c.b16 %v2701, %v2698
        %v3215 = vpack.c.b16 %v2702, %v2699
        %v3216 = vpack.c.b16 %v2706, %v2703
        %v3217 = vpack.c.b16 %v2707, %v2704
        %v3218 = vpack.c.b16 %v2708, %v2705
        %v3219 = vpack.c.b16 %v2712, %v2709
        %v3220 = vpack.c.b16 %v2713, %v2710
        %v3221 = vpack.c.b16 %v2714, %v2711
        %v3222 = vpack.c.b16 %v2718, %v2715
        %v3223 = vpack.c.b16 %v2719, %v2716
        %v3224 = vpack.c.b16 %v2720, %v2717
        %v3225 = vpack.c.b16 %v2724, %v2721
        %v3226 = vpack.c.b16 %v2725, %v2722
        %v3227 = vpack.c.b16 %v2726, %v2723
        %v3228 = vpack.c.b16 %v2730, %v2727
        %v3229 = vpack.c.b16 %v2731, %v2728
        %v3230 = vpack.c.b16 %v2732, %v2729
        %v3231 = vpack.c.b16 %v2736, %v2733
        %v3232 = vpack.c.b16 %v2737, %v2734
        %v3233 = vpack.c.b16 %v2738, %v2735
        %v3234 = vpack.c.b16 %v2742, %v2739
        %v3235 = vpack.c.b16 %v2743, %v2740
        %v3236 = vpack.c.b16 %v2744, %v2741
        %v3237 = vpack.c.b16 %v2748, %v2745
        %v3238 = vpack.c.b16 %v2749, %v2746
        %v3239 = vpack.c.b16 %v2750, %v2747
        %v3240 = vpack.c.b16 %v2754, %v2751
        %v3241 = vpack.c.b16 %v2755, %v2752
        %v3242 = vpack.c.b16 %v2756, %v2753
        %v3243 = vpack.c.b16 %v2760, %v2757
        %v3244 = vpack.c.b16 %v2761, %v2758
        %v3245 = vpack.c.b16 %v2762, %v2759
        %v3246 = vpack.c.b16 %v2766, %v2763
        %v3247 = vpack.c.b16 %v2767, %v2764
        %v3248 = vpack.c.b16 %v2768, %v2765
        %v3249 = vpack.c.b16 %v2772, %v2769
        %v3250 = vpack.c.b16 %v2773, %v2770
        %v3251 = vpack.c.b16 %v2774, %v2771
        %v3252 = vpack.c.b16 %v2778, %v2775
        %v3253 = vpack.c.b16 %v2779, %v2776
        %v3254 = vpack.c.b16 %v2780, %v2777
        %v3255 = vpack.c.b16 %v2784, %v2781
        %v3256 = vpack.c.b16 %v2785, %v2782
        %v3257 = vpack.c.b16 %v2786, %v2783
        %v3258 = vpack.c.b16 %v2790, %v2787
        %v3259 = vpack.c.b16 %v2791, %v2788
        %v3260 = vpack.c.b16 %v2792, %v2789
        %v3261 = vpack.c.b16 %v2796, %v2793
        %v3262 = vpack.c.b16 %v2797, %v2794
        %v3263 = vpack.c.b16 %v2798, %v2795
        %v3264 = vpack.c.b16 %v2802, %v2799
        %v3265 = vpack.c.b16 %v2803, %v2800
        %v3266 = vpack.c.b16 %v2804, %v2801
        %v3267 = vpack.c.b16 %v2808, %v2805
        %v3268 = vpack.c.b16 %v2809, %v2806
        %v3269 = vpack.c.b16 %v2810, %v2807
        %v3270 = vpack.c.b16 %v2814, %v2811
        %v3271 = vpack.c.b16 %v2815, %v2812
        %v3272 = vpack.c.b16 %v2816, %v2813
        %v3273 = vpack.c.b16 %v2820, %v2817
        %v3274 = vpack.c.b16 %v2821, %v2818
        %v3275 = vpack.c.b16 %v2822, %v2819
        %v3276 = vpack.c.b16 %v2826, %v2823
        %v3277 = vpack.c.b16 %v2827, %v2824
        %v3278 = vpack.c.b16 %v2828, %v2825
        %v3279 = vpack.c.b16 %v2832, %v2829
        %v3280 = vpack.c.b16 %v2833, %v2830
        %v3281 = vpack.c.b16 %v2834, %v2831
        %v3282 = vpack.c.b16 %v2838, %v2835
        %v3283 = vpack.c.b16 %v2839, %v2836
        %v3284 = vpack.c.b16 %v2840, %v2837
        %v3285 = vpack.c.b16 %v2844, %v2841
        %v3286 = vpack.c.b16 %v2845, %v2842
        %v3287 = vpack.c.b16 %v2846, %v2843
        %v3288 = vpack.c.b16 %v2850, %v2847
        %v3289 = vpack.c.b16 %v2851, %v2848
        %v3290 = vpack.c.b16 %v2852, %v2849
        %v3291 = vpack.c.b16 %v2856, %v2853
        %v3292 = vpack.c.b16 %v2857, %v2854
        %v3293 = vpack.c.b16 %v2858, %v2855
        %v3294 = vpack.c.b16 %v2862, %v2859
        %v3295 = vpack.c.b16 %v2863, %v2860
        %v3296 = vpack.c.b16 %v2864, %v2861
        %v3297 = vpack.c.b16 %v2868, %v2865
        %v3298 = vpack.c.b16 %v2869, %v2866
        %v3299 = vpack.c.b16 %v2870, %v2867
        %v3300 = vpack.c.b16 %v2874, %v2871
        %v3301 = vpack.c.b16 %v2875, %v2872
        %v3302 = vpack.c.b16 %v2876, %v2873
        %v3303 = vpack.c.b16 %v2880, %v2877
        %v3304 = vpack.c.b16 %v2881, %v2878
        %v3305 = vpack.c.b16 %v2882, %v2879
        %v3306 = vpack.c.b16 %v2886, %v2883
        %v3307 = vpack.c.b16 %v2887, %v2884
        %v3308 = vpack.c.b16 %v2888, %v2885
        %v3309 = vpack.c.b16 %v2892, %v2889
        %v3310 = vpack.c.b16 %v2893, %v2890
        %v3311 = vpack.c.b16 %v2894, %v2891
        %v3312 = vpack.c.b16 %v2898, %v2895
        %v3313 = vpack.c.b16 %v2899, %v2896
        %v3314 = vpack.c.b16 %v2900, %v2897
        %v3315 = vpack.c.b16 %v2904, %v2901
        %v3316 = vpack.c.b16 %v2905, %v2902
        %v3317 = vpack.c.b16 %v2906, %v2903
        %v3318 = vpack.c.b16 %v2910, %v2907
        %v3319 = vpack.c.b16 %v2911, %v2908
        %v3320 = vpack.c.b16 %v2912, %v2909
        %v3321 = vpack.c.b16 %v2916, %v2913
        %v3322 = vpack.c.b16 %v2917, %v2914
        %v3323 = vpack.c.b16 %v2918, %v2915
        %v3324 = vpack.c.b16 %v2922, %v2919
        %v3325 = vpack.c.b16 %v2923, %v2920
        %v3326 = vpack.c.b16 %v2924, %v2921
        %v3327 = vpack.c.b16 %v2928, %v2925
        %v3328 = vpack.c.b16 %v2929, %v2926
        %v3329 = vpack.c.b16 %v2930, %v2927
        %v3330 = vpack.c.b16 %v2934, %v2931
        %v3331 = vpack.c.b16 %v2935, %v2932
        %v3332 = vpack.c.b16 %v2936, %v2933
        %v3333 = vpack.c.b16 %v2940, %v2937
        %v3334 = vpack.c.b16 %v2941, %v2938
        %v3335 = vpack.c.b16 %v2942, %v2939
        %v3336 = vpack.c.b16 %v2946, %v2943
        %v3337 = vpack.c.b16 %v2947, %v2944
        %v3338 = vpack.c.b16 %v2948, %v2945
        %v3339 = vpack.c.b16 %v2952, %v2949
        %v3340 = vpack.c.b16 %v2953, %v2950
        %v3341 = vpack.c.b16 %v2954, %v2951
        %v3342 = vpack.c.b16 %v2958, %v2955
        %v3343 = vpack.c.b16 %v2959, %v2956
        %v3344 = vpack.c.b16 %v2960, %v2957
        %3729 = vmatprep.subr.bf16.mxu0 %v2962
        %3730 = vmatpush1.bf16.msra.mxu0 %v2961
        %3731 = vmatprep.subr.bf16.mxu0 %v2965
        %3732 = vmatpush1.bf16.msra.mxu0 %v2964
        %3733 = vmatprep.subr.bf16.mxu0 %v2968
        %3734 = vmatpush1.bf16.msra.mxu0 %v2967
        %3735 = vmatprep.subr.bf16.mxu0 %v2971
        %3736 = vmatpush1.bf16.msra.mxu0 %v2970
        %3737 = vmatprep.subr.bf16.mxu0 %v2974
        %3738 = vmatpush1.bf16.msra.mxu0 %v2973
        %3739 = vmatprep.subr.bf16.mxu0 %v2977
        %3740 = vmatpush1.bf16.msra.mxu0 %v2976
        %3741 = vmatprep.subr.bf16.mxu0 %v2980
        %3742 = vmatpush1.bf16.msra.mxu0 %v2979
        %3743 = vmatprep.subr.bf16.mxu0 %v2983
        %3744 = vmatpush1.bf16.msra.mxu0 %v2982
        %3745 = vmatprep.subr.bf16.mxu0 %v2986
        %3746 = vmatpush1.bf16.msra.mxu0 %v2985
        %3747 = vmatprep.subr.bf16.mxu0 %v2989
        %3748 = vmatpush1.bf16.msra.mxu0 %v2988
        %3749 = vmatprep.subr.bf16.mxu0 %v2992
        %3750 = vmatpush1.bf16.msra.mxu0 %v2991
        %3751 = vmatprep.subr.bf16.mxu0 %v2995
        %3752 = vmatpush1.bf16.msra.mxu0 %v2994
        %3753 = vmatprep.subr.bf16.mxu0 %v2998
        %3754 = vmatpush1.bf16.msra.mxu0 %v2997
        %3755 = vmatprep.subr.bf16.mxu0 %v3001
        %3756 = vmatpush1.bf16.msra.mxu0 %v3000
        %3757 = vmatprep.subr.bf16.mxu0 %v3004
        %3758 = vmatpush1.bf16.msra.mxu0 %v3003
        %3759 = vmatprep.subr.bf16.mxu0 %v3007
        %3760 = vmatpush1.bf16.msra.mxu0 %v3006
        %3761 = vmatprep.mubr.bf16.mxu0 %v1154
        %3762 = vmatmul.mubr.bf16.gmra.mrb[0].mxu0 %v1153
        %v3763 = vpop.f32.mrb[0].mxu0
        %v3764 = vadd.f32 0.0, %v3763
        %v3765 = vpop.f32.mrb[0].mxu0
        %v3766 = vadd.f32 0.0, %v3765
        %v3767 = vpop.f32.mrb[0].mxu0
        %v3768 = vpop.f32.mrb[0].mxu0
        %v3769 = vadd.f32 0.0, %v3768
        %3770 = vdwg.mxu0
        %3771 = vmatprep.subr.bf16.mxu0 %v3010
        %3772 = vmatpush1.bf16.msra.mxu0 %v3009
        %3773 = vmatprep.subr.bf16.mxu0 %v3013
        %3774 = vmatpush1.bf16.msra.mxu0 %v3012
        %3775 = vmatprep.subr.bf16.mxu0 %v3016
        %3776 = vmatpush1.bf16.msra.mxu0 %v3015
        %3777 = vmatprep.subr.bf16.mxu0 %v3019
        %3778 = vmatpush1.bf16.msra.mxu0 %v3018
        %3779 = vmatprep.subr.bf16.mxu0 %v3022
        %3780 = vmatpush1.bf16.msra.mxu0 %v3021
        %3781 = vmatprep.subr.bf16.mxu0 %v3025
        %3782 = vmatpush1.bf16.msra.mxu0 %v3024
        %3783 = vmatprep.subr.bf16.mxu0 %v3028
        %3784 = vmatpush1.bf16.msra.mxu0 %v3027
        %3785 = vmatprep.subr.bf16.mxu0 %v3031
        %3786 = vmatpush1.bf16.msra.mxu0 %v3030
        %3787 = vmatprep.subr.bf16.mxu0 %v3034
        %3788 = vmatpush1.bf16.msra.mxu0 %v3033
        %3789 = vmatprep.subr.bf16.mxu0 %v3037
        %3790 = vmatpush1.bf16.msra.mxu0 %v3036
        %3791 = vmatprep.subr.bf16.mxu0 %v3040
        %3792 = vmatpush1.bf16.msra.mxu0 %v3039
        %3793 = vmatprep.subr.bf16.mxu0 %v3043
        %3794 = vmatpush1.bf16.msra.mxu0 %v3042
        %3795 = vmatprep.subr.bf16.mxu0 %v3046
        %3796 = vmatpush1.bf16.msra.mxu0 %v3045
        %3797 = vmatprep.subr.bf16.mxu0 %v3049
        %3798 = vmatpush1.bf16.msra.mxu0 %v3048
        %3799 = vmatprep.subr.bf16.mxu0 %v3052
        %3800 = vmatpush1.bf16.msra.mxu0 %v3051
        %3801 = vmatprep.subr.bf16.mxu0 %v3055
        %3802 = vmatpush1.bf16.msra.mxu0 %v3054
        %3803 = vmatprep.mubr.bf16.mxu0 %v1156
        %3804 = vmatmul.mubr.bf16.gmra.mrb[0].mxu0 %v1155
        %v3805 = vpop.f32.mrb[0].mxu0
        %v3806 = vadd.f32 %v3764, %v3805
        %v3807 = vpop.f32.mrb[0].mxu0
        %v3808 = vadd.f32 %v3766, %v3807
        %v3809 = vpop.f32.mrb[0].mxu0
        %v3810 = vpop.f32.mrb[0].mxu0
        %v3811 = vadd.f32 %v3769, %v3810
        %3812 = vdwg.mxu0
        %3813 = vmatprep.subr.bf16.mxu0 %v3058
        %3814 = vmatpush1.bf16.msra.mxu0 %v3057
        %3815 = vmatprep.subr.bf16.mxu0 %v3061
        %3816 = vmatpush1.bf16.msra.mxu0 %v3060
        %3817 = vmatprep.subr.bf16.mxu0 %v3064
        %3818 = vmatpush1.bf16.msra.mxu0 %v3063
        %3819 = vmatprep.subr.bf16.mxu0 %v3067
        %3820 = vmatpush1.bf16.msra.mxu0 %v3066
        %3821 = vmatprep.subr.bf16.mxu0 %v3070
        %3822 = vmatpush1.bf16.msra.mxu0 %v3069
        %3823 = vmatprep.subr.bf16.mxu0 %v3073
        %3824 = vmatpush1.bf16.msra.mxu0 %v3072
        %3825 = vmatprep.subr.bf16.mxu0 %v3076
        %3826 = vmatpush1.bf16.msra.mxu0 %v3075
        %3827 = vmatprep.subr.bf16.mxu0 %v3079
        %3828 = vmatpush1.bf16.msra.mxu0 %v3078
        %3829 = vmatprep.subr.bf16.mxu0 %v3082
        %3830 = vmatpush1.bf16.msra.mxu0 %v3081
        %3831 = vmatprep.subr.bf16.mxu0 %v3085
        %3832 = vmatpush1.bf16.msra.mxu0 %v3084
        %3833 = vmatprep.subr.bf16.mxu0 %v3088
        %3834 = vmatpush1.bf16.msra.mxu0 %v3087
        %3835 = vmatprep.subr.bf16.mxu0 %v3091
        %3836 = vmatpush1.bf16.msra.mxu0 %v3090
        %3837 = vmatprep.subr.bf16.mxu0 %v3094
        %3838 = vmatpush1.bf16.msra.mxu0 %v3093
        %3839 = vmatprep.subr.bf16.mxu0 %v3097
        %3840 = vmatpush1.bf16.msra.mxu0 %v3096
        %3841 = vmatprep.subr.bf16.mxu0 %v3100
        %3842 = vmatpush1.bf16.msra.mxu0 %v3099
        %3843 = vmatprep.subr.bf16.mxu0 %v3103
        %3844 = vmatpush1.bf16.msra.mxu0 %v3102
        %3845 = vmatprep.mubr.bf16.mxu0 %v1158
        %3846 = vmatmul.mubr.bf16.gmra.mrb[0].mxu0 %v1157
        %v3847 = vpop.f32.mrb[0].mxu0
        %v3848 = vadd.f32 %v3806, %v3847
        %v3849 = vpop.f32.mrb[0].mxu0
        %v3850 = vadd.f32 %v3808, %v3849
        %v3851 = vpop.f32.mrb[0].mxu0
        %v3852 = vpop.f32.mrb[0].mxu0
        %v3853 = vadd.f32 %v3811, %v3852
        %3854 = vdwg.mxu0
        %3855 = vmatprep.subr.bf16.mxu0 %v3106
        %3856 = vmatpush1.bf16.msra.mxu0 %v3105
        %3857 = vmatprep.subr.bf16.mxu0 %v3109
        %3858 = vmatpush1.bf16.msra.mxu0 %v3108
        %3859 = vmatprep.subr.bf16.mxu0 %v3112
        %3860 = vmatpush1.bf16.msra.mxu0 %v3111
        %3861 = vmatprep.subr.bf16.mxu0 %v3115
        %3862 = vmatpush1.bf16.msra.mxu0 %v3114
        %3863 = vmatprep.subr.bf16.mxu0 %v3118
        %3864 = vmatpush1.bf16.msra.mxu0 %v3117
        %3865 = vmatprep.subr.bf16.mxu0 %v3121
        %3866 = vmatpush1.bf16.msra.mxu0 %v3120
        %3867 = vmatprep.subr.bf16.mxu0 %v3124
        %3868 = vmatpush1.bf16.msra.mxu0 %v3123
        %3869 = vmatprep.subr.bf16.mxu0 %v3127
        %3870 = vmatpush1.bf16.msra.mxu0 %v3126
        %3871 = vmatprep.subr.bf16.mxu0 %v3130
        %3872 = vmatpush1.bf16.msra.mxu0 %v3129
        %3873 = vmatprep.subr.bf16.mxu0 %v3133
        %3874 = vmatpush1.bf16.msra.mxu0 %v3132
        %3875 = vmatprep.subr.bf16.mxu0 %v3136
        %3876 = vmatpush1.bf16.msra.mxu0 %v3135
        %3877 = vmatprep.subr.bf16.mxu0 %v3139
        %3878 = vmatpush1.bf16.msra.mxu0 %v3138
        %3879 = vmatprep.subr.bf16.mxu0 %v3142
        %3880 = vmatpush1.bf16.msra.mxu0 %v3141
        %3881 = vmatprep.subr.bf16.mxu0 %v3145
        %3882 = vmatpush1.bf16.msra.mxu0 %v3144
        %3883 = vmatprep.subr.bf16.mxu0 %v3148
        %3884 = vmatpush1.bf16.msra.mxu0 %v3147
        %3885 = vmatprep.subr.bf16.mxu0 %v3151
        %3886 = vmatpush1.bf16.msra.mxu0 %v3150
        %3887 = vmatprep.mubr.bf16.mxu0 %v1160
        %3888 = vmatmul.mubr.bf16.gmra.mrb[0].mxu0 %v1159
        %v3889 = vpop.f32.mrb[0].mxu0
        %v3890 = vadd.f32 %v3848, %v3889
        %v3891 = vpop.f32.mrb[0].mxu0
        %v3892 = vadd.f32 %v3850, %v3891
        %v3893 = vpop.f32.mrb[0].mxu0
        %v3894 = vpop.f32.mrb[0].mxu0
        %v3895 = vadd.f32 %v3853, %v3894
        %3896 = vdwg.mxu0
        %3897 = vmatprep.subr.bf16.mxu0 %v3154
        %3898 = vmatpush1.bf16.msra.mxu0 %v3153
        %3899 = vmatprep.subr.bf16.mxu0 %v3157
        %3900 = vmatpush1.bf16.msra.mxu0 %v3156
        %3901 = vmatprep.subr.bf16.mxu0 %v3160
        %3902 = vmatpush1.bf16.msra.mxu0 %v3159
        %3903 = vmatprep.subr.bf16.mxu0 %v3163
        %3904 = vmatpush1.bf16.msra.mxu0 %v3162
        %3905 = vmatprep.subr.bf16.mxu0 %v3166
        %3906 = vmatpush1.bf16.msra.mxu0 %v3165
        %3907 = vmatprep.subr.bf16.mxu0 %v3169
        %3908 = vmatpush1.bf16.msra.mxu0 %v3168
        %3909 = vmatprep.subr.bf16.mxu0 %v3172
        %3910 = vmatpush1.bf16.msra.mxu0 %v3171
        %3911 = vmatprep.subr.bf16.mxu0 %v3175
        %3912 = vmatpush1.bf16.msra.mxu0 %v3174
        %3913 = vmatprep.subr.bf16.mxu0 %v3178
        %3914 = vmatpush1.bf16.msra.mxu0 %v3177
        %3915 = vmatprep.subr.bf16.mxu0 %v3181
        %3916 = vmatpush1.bf16.msra.mxu0 %v3180
        %3917 = vmatprep.subr.bf16.mxu0 %v3184
        %3918 = vmatpush1.bf16.msra.mxu0 %v3183
        %3919 = vmatprep.subr.bf16.mxu0 %v3187
        %3920 = vmatpush1.bf16.msra.mxu0 %v3186
        %3921 = vmatprep.subr.bf16.mxu0 %v3190
        %3922 = vmatpush1.bf16.msra.mxu0 %v3189
        %3923 = vmatprep.subr.bf16.mxu0 %v3193
        %3924 = vmatpush1.bf16.msra.mxu0 %v3192
        %3925 = vmatprep.subr.bf16.mxu0 %v3196
        %3926 = vmatpush1.bf16.msra.mxu0 %v3195
        %3927 = vmatprep.subr.bf16.mxu0 %v3199
        %3928 = vmatpush1.bf16.msra.mxu0 %v3198
        %3929 = vmatprep.mubr.bf16.mxu0 %v1162
        %3930 = vmatmul.mubr.bf16.gmra.mrb[0].mxu0 %v1161
        %v3931 = vpop.f32.mrb[0].mxu0
        %v3932 = vadd.f32 %v3890, %v3931
        %v3933 = vpop.f32.mrb[0].mxu0
        %v3934 = vadd.f32 %v3892, %v3933
        %v3935 = vpop.f32.mrb[0].mxu0
        %v3936 = vpop.f32.mrb[0].mxu0
        %v3937 = vadd.f32 %v3895, %v3936
        %3938 = vdwg.mxu0
        %3939 = vmatprep.subr.bf16.mxu0 %v3202
        %3940 = vmatpush1.bf16.msra.mxu0 %v3201
        %3941 = vmatprep.subr.bf16.mxu0 %v3205
        %3942 = vmatpush1.bf16.msra.mxu0 %v3204
        %3943 = vmatprep.subr.bf16.mxu0 %v3208
        %3944 = vmatpush1.bf16.msra.mxu0 %v3207
        %3945 = vmatprep.subr.bf16.mxu0 %v3211
        %3946 = vmatpush1.bf16.msra.mxu0 %v3210
        %3947 = vmatprep.subr.bf16.mxu0 %v3214
        %3948 = vmatpush1.bf16.msra.mxu0 %v3213
        %3949 = vmatprep.subr.bf16.mxu0 %v3217
        %3950 = vmatpush1.bf16.msra.mxu0 %v3216
        %3951 = vmatprep.subr.bf16.mxu0 %v3220
        %3952 = vmatpush1.bf16.msra.mxu0 %v3219
        %3953 = vmatprep.subr.bf16.mxu0 %v3223
        %3954 = vmatpush1.bf16.msra.mxu0 %v3222
        %3955 = vmatprep.subr.bf16.mxu0 %v3226
        %3956 = vmatpush1.bf16.msra.mxu0 %v3225
        %3957 = vmatprep.subr.bf16.mxu0 %v3229
        %3958 = vmatpush1.bf16.msra.mxu0 %v3228
        %3959 = vmatprep.subr.bf16.mxu0 %v3232
        %3960 = vmatpush1.bf16.msra.mxu0 %v3231
        %3961 = vmatprep.subr.bf16.mxu0 %v3235
        %3962 = vmatpush1.bf16.msra.mxu0 %v3234
        %3963 = vmatprep.subr.bf16.mxu0 %v3238
        %3964 = vmatpush1.bf16.msra.mxu0 %v3237
        %3965 = vmatprep.subr.bf16.mxu0 %v3241
        %3966 = vmatpush1.bf16.msra.mxu0 %v3240
        %3967 = vmatprep.subr.bf16.mxu0 %v3244
        %3968 = vmatpush1.bf16.msra.mxu0 %v3243
        %3969 = vmatprep.subr.bf16.mxu0 %v3247
        %3970 = vmatpush1.bf16.msra.mxu0 %v3246
        %3971 = vmatprep.mubr.bf16.mxu0 %v1164
        %3972 = vmatmul.mubr.bf16.gmra.mrb[0].mxu0 %v1163
        %v3973 = vpop.f32.mrb[0].mxu0
        %v3974 = vadd.f32 %v3932, %v3973
        %v3975 = vpop.f32.mrb[0].mxu0
        %v3976 = vadd.f32 %v3934, %v3975
        %v3977 = vpop.f32.mrb[0].mxu0
        %v3978 = vpop.f32.mrb[0].mxu0
        %v3979 = vadd.f32 %v3937, %v3978
        %3980 = vdwg.mxu0
        %3981 = vmatprep.subr.bf16.mxu0 %v3250
        %3982 = vmatpush1.bf16.msra.mxu0 %v3249
        %3983 = vmatprep.subr.bf16.mxu0 %v3253
        %3984 = vmatpush1.bf16.msra.mxu0 %v3252
        %3985 = vmatprep.subr.bf16.mxu0 %v3256
        %3986 = vmatpush1.bf16.msra.mxu0 %v3255
        %3987 = vmatprep.subr.bf16.mxu0 %v3259
        %3988 = vmatpush1.bf16.msra.mxu0 %v3258
        %3989 = vmatprep.subr.bf16.mxu0 %v3262
        %3990 = vmatpush1.bf16.msra.mxu0 %v3261
        %3991 = vmatprep.subr.bf16.mxu0 %v3265
        %3992 = vmatpush1.bf16.msra.mxu0 %v3264
        %3993 = vmatprep.subr.bf16.mxu0 %v3268
        %3994 = vmatpush1.bf16.msra.mxu0 %v3267
        %3995 = vmatprep.subr.bf16.mxu0 %v3271
        %3996 = vmatpush1.bf16.msra.mxu0 %v3270
        %3997 = vmatprep.subr.bf16.mxu0 %v3274
        %3998 = vmatpush1.bf16.msra.mxu0 %v3273
        %3999 = vmatprep.subr.bf16.mxu0 %v3277
        %4000 = vmatpush1.bf16.msra.mxu0 %v3276
        %4001 = vmatprep.subr.bf16.mxu0 %v3280
        %4002 = vmatpush1.bf16.msra.mxu0 %v3279
        %4003 = vmatprep.subr.bf16.mxu0 %v3283
        %4004 = vmatpush1.bf16.msra.mxu0 %v3282
        %4005 = vmatprep.subr.bf16.mxu0 %v3286
        %4006 = vmatpush1.bf16.msra.mxu0 %v3285
        %4007 = vmatprep.subr.bf16.mxu0 %v3289
        %4008 = vmatpush1.bf16.msra.mxu0 %v3288
        %4009 = vmatprep.subr.bf16.mxu0 %v3292
        %4010 = vmatpush1.bf16.msra.mxu0 %v3291
        %4011 = vmatprep.subr.bf16.mxu0 %v3295
        %4012 = vmatpush1.bf16.msra.mxu0 %v3294
        %4013 = vmatprep.mubr.bf16.mxu0 %v1166
        %4014 = vmatmul.mubr.bf16.gmra.mrb[0].mxu0 %v1165
        %v4015 = vpop.f32.mrb[0].mxu0
        %v4016 = vadd.f32 %v3974, %v4015
        %v4017 = vpop.f32.mrb[0].mxu0
        %v4018 = vadd.f32 %v3976, %v4017
        %v4019 = vpop.f32.mrb[0].mxu0
        %v4020 = vpop.f32.mrb[0].mxu0
        %v4021 = vadd.f32 %v3979, %v4020
        %4022 = vdwg.mxu0
        %4023 = vmatprep.subr.bf16.mxu0 %v3298
        %4024 = vmatpush1.bf16.msra.mxu0 %v3297
        %4025 = vmatprep.subr.bf16.mxu0 %v3301
        %4026 = vmatpush1.bf16.msra.mxu0 %v3300
        %4027 = vmatprep.subr.bf16.mxu0 %v3304
        %4028 = vmatpush1.bf16.msra.mxu0 %v3303
        %4029 = vmatprep.subr.bf16.mxu0 %v3307
        %4030 = vmatpush1.bf16.msra.mxu0 %v3306
        %4031 = vmatprep.subr.bf16.mxu0 %v3310
        %4032 = vmatpush1.bf16.msra.mxu0 %v3309
        %4033 = vmatprep.subr.bf16.mxu0 %v3313
        %4034 = vmatpush1.bf16.msra.mxu0 %v3312
        %4035 = vmatprep.subr.bf16.mxu0 %v3316
        %4036 = vmatpush1.bf16.msra.mxu0 %v3315
        %4037 = vmatprep.subr.bf16.mxu0 %v3319
        %4038 = vmatpush1.bf16.msra.mxu0 %v3318
        %4039 = vmatprep.subr.bf16.mxu0 %v3322
        %4040 = vmatpush1.bf16.msra.mxu0 %v3321
        %4041 = vmatprep.subr.bf16.mxu0 %v3325
        %4042 = vmatpush1.bf16.msra.mxu0 %v3324
        %4043 = vmatprep.subr.bf16.mxu0 %v3328
        %4044 = vmatpush1.bf16.msra.mxu0 %v3327
        %4045 = vmatprep.subr.bf16.mxu0 %v3331
        %4046 = vmatpush1.bf16.msra.mxu0 %v3330
        %4047 = vmatprep.subr.bf16.mxu0 %v3334
        %4048 = vmatpush1.bf16.msra.mxu0 %v3333
        %4049 = vmatprep.subr.bf16.mxu0 %v3337
        %4050 = vmatpush1.bf16.msra.mxu0 %v3336
        %4051 = vmatprep.subr.bf16.mxu0 %v3340
        %4052 = vmatpush1.bf16.msra.mxu0 %v3339
        %4053 = vmatprep.subr.bf16.mxu0 %v3343
        %4054 = vmatpush1.bf16.msra.mxu0 %v3342
        %4055 = vmatprep.mubr.bf16.mxu0 %v1168
        %4056 = vmatmul.mubr.bf16.gmra.mrb[0].mxu0 %v1167
        %v4057 = vpop.f32.mrb[0].mxu0
        %v4058 = vadd.f32 %v4016, %v4057
        %v4059 = vpop.f32.mrb[0].mxu0
        %v4060 = vadd.f32 %v4018, %v4059
        %v4061 = vpop.f32.mrb[0].mxu0
        %v4062 = vpop.f32.mrb[0].mxu0
        %v4063 = vadd.f32 %v4021, %v4062
        %4064 = vdwg.mxu0
        %4065 = vmatprep.subr.bf16.mxu0 0
        %4066 = vmatpush1.bf16.msra.mxu0 %v2963
        %4067 = vmatprep.subr.bf16.mxu0 0
        %4068 = vmatpush1.bf16.msra.mxu0 %v2966
        %4069 = vmatprep.subr.bf16.mxu0 0
        %4070 = vmatpush1.bf16.msra.mxu0 %v2969
        %4071 = vmatprep.subr.bf16.mxu0 0
        %4072 = vmatpush1.bf16.msra.mxu0 %v2972
        %4073 = vmatprep.subr.bf16.mxu0 0
        %4074 = vmatpush1.bf16.msra.mxu0 %v2975
        %4075 = vmatprep.subr.bf16.mxu0 0
        %4076 = vmatpush1.bf16.msra.mxu0 %v2978
        %4077 = vmatprep.subr.bf16.mxu0 0
        %4078 = vmatpush1.bf16.msra.mxu0 %v2981
        %4079 = vmatprep.subr.bf16.mxu0 0
        %4080 = vmatpush1.bf16.msra.mxu0 %v2984
        %4081 = vmatprep.subr.bf16.mxu0 0
        %4082 = vmatpush1.bf16.msra.mxu0 %v2987
        %4083 = vmatprep.subr.bf16.mxu0 0
        %4084 = vmatpush1.bf16.msra.mxu0 %v2990
        %4085 = vmatprep.subr.bf16.mxu0 0
        %4086 = vmatpush1.bf16.msra.mxu0 %v2993
        %4087 = vmatprep.subr.bf16.mxu0 0
        %4088 = vmatpush1.bf16.msra.mxu0 %v2996
        %4089 = vmatprep.subr.bf16.mxu0 0
        %4090 = vmatpush1.bf16.msra.mxu0 %v2999
        %4091 = vmatprep.subr.bf16.mxu0 0
        %4092 = vmatpush1.bf16.msra.mxu0 %v3002
        %4093 = vmatprep.subr.bf16.mxu0 0
        %4094 = vmatpush1.bf16.msra.mxu0 %v3005
        %4095 = vmatprep.subr.bf16.mxu0 0
        %4096 = vmatpush1.bf16.msra.mxu0 %v3008
        %4097 = vmatprep.mubr.bf16.mxu0 %v1154
        %4098 = vmatmul.mubr.bf16.gmra.mrb[0].mxu0 %v1153
        %v4099 = vpop.f32.mrb[0].mxu0
        %v4100 = vadd.f32 0.0, %v4099
        %v4101 = vpop.f32.mrb[0].mxu0
        %v4102 = vpop.f32.mrb[0].mxu0
        %v4103 = vadd.f32 0.0, %v4102
        %v4104 = vpop.f32.mrb[0].mxu0
        %4105 = vdwg.mxu0
        %4106 = vmatprep.subr.bf16.mxu0 0
        %4107 = vmatpush1.bf16.msra.mxu0 %v3011
        %4108 = vmatprep.subr.bf16.mxu0 0
        %4109 = vmatpush1.bf16.msra.mxu0 %v3014
        %4110 = vmatprep.subr.bf16.mxu0 0
        %4111 = vmatpush1.bf16.msra.mxu0 %v3017
        %4112 = vmatprep.subr.bf16.mxu0 0
        %4113 = vmatpush1.bf16.msra.mxu0 %v3020
        %4114 = vmatprep.subr.bf16.mxu0 0
        %4115 = vmatpush1.bf16.msra.mxu0 %v3023
        %4116 = vmatprep.subr.bf16.mxu0 0
        %4117 = vmatpush1.bf16.msra.mxu0 %v3026
        %4118 = vmatprep.subr.bf16.mxu0 0
        %4119 = vmatpush1.bf16.msra.mxu0 %v3029
        %4120 = vmatprep.subr.bf16.mxu0 0
        %4121 = vmatpush1.bf16.msra.mxu0 %v3032
        %4122 = vmatprep.subr.bf16.mxu0 0
        %4123 = vmatpush1.bf16.msra.mxu0 %v3035
        %4124 = vmatprep.subr.bf16.mxu0 0
        %4125 = vmatpush1.bf16.msra.mxu0 %v3038
        %4126 = vmatprep.subr.bf16.mxu0 0
        %4127 = vmatpush1.bf16.msra.mxu0 %v3041
        %4128 = vmatprep.subr.bf16.mxu0 0
        %4129 = vmatpush1.bf16.msra.mxu0 %v3044
        %4130 = vmatprep.subr.bf16.mxu0 0
        %4131 = vmatpush1.bf16.msra.mxu0 %v3047
        %4132 = vmatprep.subr.bf16.mxu0 0
        %4133 = vmatpush1.bf16.msra.mxu0 %v3050
        %4134 = vmatprep.subr.bf16.mxu0 0
        %4135 = vmatpush1.bf16.msra.mxu0 %v3053
        %4136 = vmatprep.subr.bf16.mxu0 0
        %4137 = vmatpush1.bf16.msra.mxu0 %v3056
        %4138 = vmatprep.mubr.bf16.mxu0 %v1156
        %4139 = vmatmul.mubr.bf16.gmra.mrb[0].mxu0 %v1155
        %v4140 = vpop.f32.mrb[0].mxu0
        %v4141 = vadd.f32 %v4100, %v4140
        %v4142 = vpop.f32.mrb[0].mxu0
        %v4143 = vpop.f32.mrb[0].mxu0
        %v4144 = vadd.f32 %v4103, %v4143
        %v4145 = vpop.f32.mrb[0].mxu0
        %4146 = vdwg.mxu0
        %4147 = vmatprep.subr.bf16.mxu0 0
        %4148 = vmatpush1.bf16.msra.mxu0 %v3059
        %4149 = vmatprep.subr.bf16.mxu0 0
        %4150 = vmatpush1.bf16.msra.mxu0 %v3062
        %4151 = vmatprep.subr.bf16.mxu0 0
        %4152 = vmatpush1.bf16.msra.mxu0 %v3065
        %4153 = vmatprep.subr.bf16.mxu0 0
        %4154 = vmatpush1.bf16.msra.mxu0 %v3068
        %4155 = vmatprep.subr.bf16.mxu0 0
        %4156 = vmatpush1.bf16.msra.mxu0 %v3071
        %4157 = vmatprep.subr.bf16.mxu0 0
        %4158 = vmatpush1.bf16.msra.mxu0 %v3074
        %4159 = vmatprep.subr.bf16.mxu0 0
        %4160 = vmatpush1.bf16.msra.mxu0 %v3077
        %4161 = vmatprep.subr.bf16.mxu0 0
        %4162 = vmatpush1.bf16.msra.mxu0 %v3080
        %4163 = vmatprep.subr.bf16.mxu0 0
        %4164 = vmatpush1.bf16.msra.mxu0 %v3083
        %4165 = vmatprep.subr.bf16.mxu0 0
        %4166 = vmatpush1.bf16.msra.mxu0 %v3086
        %4167 = vmatprep.subr.bf16.mxu0 0
        %4168 = vmatpush1.bf16.msra.mxu0 %v3089
        %4169 = vmatprep.subr.bf16.mxu0 0
        %4170 = vmatpush1.bf16.msra.mxu0 %v3092
        %4171 = vmatprep.subr.bf16.mxu0 0
        %4172 = vmatpush1.bf16.msra.mxu0 %v3095
        %4173 = vmatprep.subr.bf16.mxu0 0
        %4174 = vmatpush1.bf16.msra.mxu0 %v3098
        %4175 = vmatprep.subr.bf16.mxu0 0
        %4176 = vmatpush1.bf16.msra.mxu0 %v3101
        %4177 = vmatprep.subr.bf16.mxu0 0
        %4178 = vmatpush1.bf16.msra.mxu0 %v3104
        %4179 = vmatprep.mubr.bf16.mxu0 %v1158
        %4180 = vmatmul.mubr.bf16.gmra.mrb[0].mxu0 %v1157
        %v4181 = vpop.f32.mrb[0].mxu0
        %v4182 = vadd.f32 %v4141, %v4181
        %v4183 = vpop.f32.mrb[0].mxu0
        %v4184 = vpop.f32.mrb[0].mxu0
        %v4185 = vadd.f32 %v4144, %v4184
        %v4186 = vpop.f32.mrb[0].mxu0
        %4187 = vdwg.mxu0
        %4188 = vmatprep.subr.bf16.mxu0 0
        %4189 = vmatpush1.bf16.msra.mxu0 %v3107
        %4190 = vmatprep.subr.bf16.mxu0 0
        %4191 = vmatpush1.bf16.msra.mxu0 %v3110
        %4192 = vmatprep.subr.bf16.mxu0 0
        %4193 = vmatpush1.bf16.msra.mxu0 %v3113
        %4194 = vmatprep.subr.bf16.mxu0 0
        %4195 = vmatpush1.bf16.msra.mxu0 %v3116
        %4196 = vmatprep.subr.bf16.mxu0 0
        %4197 = vmatpush1.bf16.msra.mxu0 %v3119
        %4198 = vmatprep.subr.bf16.mxu0 0
        %4199 = vmatpush1.bf16.msra.mxu0 %v3122
        %4200 = vmatprep.subr.bf16.mxu0 0
        %4201 = vmatpush1.bf16.msra.mxu0 %v3125
        %4202 = vmatprep.subr.bf16.mxu0 0
        %4203 = vmatpush1.bf16.msra.mxu0 %v3128
        %4204 = vmatprep.subr.bf16.mxu0 0
        %4205 = vmatpush1.bf16.msra.mxu0 %v3131
        %4206 = vmatprep.subr.bf16.mxu0 0
        %4207 = vmatpush1.bf16.msra.mxu0 %v3134
        %4208 = vmatprep.subr.bf16.mxu0 0
        %4209 = vmatpush1.bf16.msra.mxu0 %v3137
        %4210 = vmatprep.subr.bf16.mxu0 0
        %4211 = vmatpush1.bf16.msra.mxu0 %v3140
        %4212 = vmatprep.subr.bf16.mxu0 0
        %4213 = vmatpush1.bf16.msra.mxu0 %v3143
        %4214 = vmatprep.subr.bf16.mxu0 0
        %4215 = vmatpush1.bf16.msra.mxu0 %v3146
        %4216 = vmatprep.subr.bf16.mxu0 0
        %4217 = vmatpush1.bf16.msra.mxu0 %v3149
        %4218 = vmatprep.subr.bf16.mxu0 0
        %4219 = vmatpush1.bf16.msra.mxu0 %v3152
        %4220 = vmatprep.mubr.bf16.mxu0 %v1160
        %4221 = vmatmul.mubr.bf16.gmra.mrb[0].mxu0 %v1159
        %v4222 = vpop.f32.mrb[0].mxu0
        %v4223 = vadd.f32 %v4182, %v4222
        %v4224 = vpop.f32.mrb[0].mxu0
        %v4225 = vpop.f32.mrb[0].mxu0
        %v4226 = vadd.f32 %v4185, %v4225
        %v4227 = vpop.f32.mrb[0].mxu0
        %4228 = vdwg.mxu0
        %4229 = vmatprep.subr.bf16.mxu0 0
        %4230 = vmatpush1.bf16.msra.mxu0 %v3155
        %4231 = vmatprep.subr.bf16.mxu0 0
        %4232 = vmatpush1.bf16.msra.mxu0 %v3158
        %4233 = vmatprep.subr.bf16.mxu0 0
        %4234 = vmatpush1.bf16.msra.mxu0 %v3161
        %4235 = vmatprep.subr.bf16.mxu0 0
        %4236 = vmatpush1.bf16.msra.mxu0 %v3164
        %4237 = vmatprep.subr.bf16.mxu0 0
        %4238 = vmatpush1.bf16.msra.mxu0 %v3167
        %4239 = vmatprep.subr.bf16.mxu0 0
        %4240 = vmatpush1.bf16.msra.mxu0 %v3170
        %4241 = vmatprep.subr.bf16.mxu0 0
        %4242 = vmatpush1.bf16.msra.mxu0 %v3173
        %4243 = vmatprep.subr.bf16.mxu0 0
        %4244 = vmatpush1.bf16.msra.mxu0 %v3176
        %4245 = vmatprep.subr.bf16.mxu0 0
        %4246 = vmatpush1.bf16.msra.mxu0 %v3179
        %4247 = vmatprep.subr.bf16.mxu0 0
        %4248 = vmatpush1.bf16.msra.mxu0 %v3182
        %4249 = vmatprep.subr.bf16.mxu0 0
        %4250 = vmatpush1.bf16.msra.mxu0 %v3185
        %4251 = vmatprep.subr.bf16.mxu0 0
        %4252 = vmatpush1.bf16.msra.mxu0 %v3188
        %4253 = vmatprep.subr.bf16.mxu0 0
        %4254 = vmatpush1.bf16.msra.mxu0 %v3191
        %4255 = vmatprep.subr.bf16.mxu0 0
        %4256 = vmatpush1.bf16.msra.mxu0 %v3194
        %4257 = vmatprep.subr.bf16.mxu0 0
        %4258 = vmatpush1.bf16.msra.mxu0 %v3197
        %4259 = vmatprep.subr.bf16.mxu0 0
        %4260 = vmatpush1.bf16.msra.mxu0 %v3200
        %4261 = vmatprep.mubr.bf16.mxu0 %v1162
        %4262 = vmatmul.mubr.bf16.gmra.mrb[0].mxu0 %v1161
        %v4263 = vpop.f32.mrb[0].mxu0
        %v4264 = vadd.f32 %v4223, %v4263
        %v4265 = vpop.f32.mrb[0].mxu0
        %v4266 = vpop.f32.mrb[0].mxu0
        %v4267 = vadd.f32 %v4226, %v4266
        %v4268 = vpop.f32.mrb[0].mxu0
        %4269 = vdwg.mxu0
        %4270 = vmatprep.subr.bf16.mxu0 0
        %4271 = vmatpush1.bf16.msra.mxu0 %v3203
        %4272 = vmatprep.subr.bf16.mxu0 0
        %4273 = vmatpush1.bf16.msra.mxu0 %v3206
        %4274 = vmatprep.subr.bf16.mxu0 0
        %4275 = vmatpush1.bf16.msra.mxu0 %v3209
        %4276 = vmatprep.subr.bf16.mxu0 0
        %4277 = vmatpush1.bf16.msra.mxu0 %v3212
        %4278 = vmatprep.subr.bf16.mxu0 0
        %4279 = vmatpush1.bf16.msra.mxu0 %v3215
        %4280 = vmatprep.subr.bf16.mxu0 0
        %4281 = vmatpush1.bf16.msra.mxu0 %v3218
        %4282 = vmatprep.subr.bf16.mxu0 0
        %4283 = vmatpush1.bf16.msra.mxu0 %v3221
        %4284 = vmatprep.subr.bf16.mxu0 0
        %4285 = vmatpush1.bf16.msra.mxu0 %v3224
        %4286 = vmatprep.subr.bf16.mxu0 0
        %4287 = vmatpush1.bf16.msra.mxu0 %v3227
        %4288 = vmatprep.subr.bf16.mxu0 0
        %4289 = vmatpush1.bf16.msra.mxu0 %v3230
        %4290 = vmatprep.subr.bf16.mxu0 0
        %4291 = vmatpush1.bf16.msra.mxu0 %v3233
        %4292 = vmatprep.subr.bf16.mxu0 0
        %4293 = vmatpush1.bf16.msra.mxu0 %v3236
        %4294 = vmatprep.subr.bf16.mxu0 0
        %4295 = vmatpush1.bf16.msra.mxu0 %v3239
        %4296 = vmatprep.subr.bf16.mxu0 0
        %4297 = vmatpush1.bf16.msra.mxu0 %v3242
        %4298 = vmatprep.subr.bf16.mxu0 0
        %4299 = vmatpush1.bf16.msra.mxu0 %v3245
        %4300 = vmatprep.subr.bf16.mxu0 0
        %4301 = vmatpush1.bf16.msra.mxu0 %v3248
        %4302 = vmatprep.mubr.bf16.mxu0 %v1164
        %4303 = vmatmul.mubr.bf16.gmra.mrb[0].mxu0 %v1163
        %v4304 = vpop.f32.mrb[0].mxu0
        %v4305 = vadd.f32 %v4264, %v4304
        %v4306 = vpop.f32.mrb[0].mxu0
        %v4307 = vpop.f32.mrb[0].mxu0
        %v4308 = vadd.f32 %v4267, %v4307
        %v4309 = vpop.f32.mrb[0].mxu0
        %4310 = vdwg.mxu0
        %4311 = vmatprep.subr.bf16.mxu0 0
        %4312 = vmatpush1.bf16.msra.mxu0 %v3251
        %4313 = vmatprep.subr.bf16.mxu0 0
        %4314 = vmatpush1.bf16.msra.mxu0 %v3254
        %4315 = vmatprep.subr.bf16.mxu0 0
        %4316 = vmatpush1.bf16.msra.mxu0 %v3257
        %4317 = vmatprep.subr.bf16.mxu0 0
        %4318 = vmatpush1.bf16.msra.mxu0 %v3260
        %4319 = vmatprep.subr.bf16.mxu0 0
        %4320 = vmatpush1.bf16.msra.mxu0 %v3263
        %4321 = vmatprep.subr.bf16.mxu0 0
        %4322 = vmatpush1.bf16.msra.mxu0 %v3266
        %4323 = vmatprep.subr.bf16.mxu0 0
        %4324 = vmatpush1.bf16.msra.mxu0 %v3269
        %4325 = vmatprep.subr.bf16.mxu0 0
        %4326 = vmatpush1.bf16.msra.mxu0 %v3272
        %4327 = vmatprep.subr.bf16.mxu0 0
        %4328 = vmatpush1.bf16.msra.mxu0 %v3275
        %4329 = vmatprep.subr.bf16.mxu0 0
        %4330 = vmatpush1.bf16.msra.mxu0 %v3278
        %4331 = vmatprep.subr.bf16.mxu0 0
        %4332 = vmatpush1.bf16.msra.mxu0 %v3281
        %4333 = vmatprep.subr.bf16.mxu0 0
        %4334 = vmatpush1.bf16.msra.mxu0 %v3284
        %4335 = vmatprep.subr.bf16.mxu0 0
        %4336 = vmatpush1.bf16.msra.mxu0 %v3287
        %4337 = vmatprep.subr.bf16.mxu0 0
        %4338 = vmatpush1.bf16.msra.mxu0 %v3290
        %4339 = vmatprep.subr.bf16.mxu0 0
        %4340 = vmatpush1.bf16.msra.mxu0 %v3293
        %4341 = vmatprep.subr.bf16.mxu0 0
        %4342 = vmatpush1.bf16.msra.mxu0 %v3296
        %4343 = vmatprep.mubr.bf16.mxu0 %v1166
        %4344 = vmatmul.mubr.bf16.gmra.mrb[0].mxu0 %v1165
        %v4345 = vpop.f32.mrb[0].mxu0
        %v4346 = vadd.f32 %v4305, %v4345
        %v4347 = vpop.f32.mrb[0].mxu0
        %v4348 = vpop.f32.mrb[0].mxu0
        %v4349 = vadd.f32 %v4308, %v4348
        %v4350 = vpop.f32.mrb[0].mxu0
        %4351 = vdwg.mxu0
        %4352 = vmatprep.subr.bf16.mxu0 0
        %4353 = vmatpush1.bf16.msra.mxu0 %v3299
        %4354 = vmatprep.subr.bf16.mxu0 0
        %4355 = vmatpush1.bf16.msra.mxu0 %v3302
        %4356 = vmatprep.subr.bf16.mxu0 0
        %4357 = vmatpush1.bf16.msra.mxu0 %v3305
        %4358 = vmatprep.subr.bf16.mxu0 0
        %4359 = vmatpush1.bf16.msra.mxu0 %v3308
        %4360 = vmatprep.subr.bf16.mxu0 0
        %4361 = vmatpush1.bf16.msra.mxu0 %v3311
        %4362 = vmatprep.subr.bf16.mxu0 0
        %4363 = vmatpush1.bf16.msra.mxu0 %v3314
        %4364 = vmatprep.subr.bf16.mxu0 0
        %4365 = vmatpush1.bf16.msra.mxu0 %v3317
        %4366 = vmatprep.subr.bf16.mxu0 0
        %4367 = vmatpush1.bf16.msra.mxu0 %v3320
        %4368 = vmatprep.subr.bf16.mxu0 0
        %4369 = vmatpush1.bf16.msra.mxu0 %v3323
        %4370 = vmatprep.subr.bf16.mxu0 0
        %4371 = vmatpush1.bf16.msra.mxu0 %v3326
        %4372 = vmatprep.subr.bf16.mxu0 0
        %4373 = vmatpush1.bf16.msra.mxu0 %v3329
        %4374 = vmatprep.subr.bf16.mxu0 0
        %4375 = vmatpush1.bf16.msra.mxu0 %v3332
        %4376 = vmatprep.subr.bf16.mxu0 0
        %4377 = vmatpush1.bf16.msra.mxu0 %v3335
        %4378 = vmatprep.subr.bf16.mxu0 0
        %4379 = vmatpush1.bf16.msra.mxu0 %v3338
        %4380 = vmatprep.subr.bf16.mxu0 0
        %4381 = vmatpush1.bf16.msra.mxu0 %v3341
        %4382 = vmatprep.subr.bf16.mxu0 0
        %4383 = vmatpush1.bf16.msra.mxu0 %v3344
        %4384 = vmatprep.mubr.bf16.mxu0 %v1168
        %4385 = vmatmul.mubr.bf16.gmra.mrb[0].mxu0 %v1167
        %v4386 = vpop.f32.mrb[0].mxu0
        %v4387 = vadd.f32 %v4346, %v4386
        %v4388 = vpop.f32.mrb[0].mxu0
        %v4389 = vpop.f32.mrb[0].mxu0
        %v4390 = vadd.f32 %v4349, %v4389
        %v4391 = vpop.f32.mrb[0].mxu0
        %4392 = vdwg.mxu0
        %v4393 = vsel %vm710, 0.0, %v4058
        %v4394 = vsel %vm710, 0.0, %v4060
        %v4395 = vsel %vm710, 0.0, %v4387
        %v4396 = vsel %vm710, 0.0, %v4063
        %v4397 = vsel %vm710, 0.0, %v4390
        %v4398 = vsel %vm943, %v4393, %v4058
        %v4399 = vsel %vm943, %v4394, %v4060
        %v4400 = vsel %vm943, %v4395, %v4387
        %v4401 = vsel %vm943, %v4063, %v4396
        %v4402 = vsel %vm943, %v4390, %v4397
        %vm4405 = vcmask 1046528
        %v4406 = vrot.slane %v4399, 1
        %v4407 = vrot.slane %v4401, 1
        %v4408 = vsel %vm4405, %v4406, %v4407
        %v4410 = vadd.f32 %v4398, %v4408
        %vm4413 = vcmask 1045504
        %v4414 = vrot.slane %v4400, 2
        %v4415 = vrot.slane %v4402, 2
        %v4416 = vsel %vm4413, %v4414, %v4415
        %v4418 = vadd.f32 %v4410, %v4416
        %v4419 = vld [vmem:[#allocation4] sm:$0x1]
        %v4421 = vlaneseq
        %v4422 = vshrl.u32 %v4421, 7
        %v4423 = vsub.s32 0, %v4422
        %v4424 = vrot.slane %v4419, %v4423
        %v4426 = vadd.f32 %v4418, %v4424
        %v4427 = vmax.f32 %v4426, 0.0
        %v4428 = vpack.c.bf16 %v4427, %v4427
        %4429 = vst [vmem:[%s410] sm:$0xf] %v4428
        %v4430 = vld [vmem:[%s413] sm:$0x1]
        %v4431 = vrot.slane %v4427, 4
        %v4432 = vadd.f32 %v4427, %v4431
        %v4433 = vrot.slane %v4432, 2
        %v4434 = vadd.f32 %v4432, %v4433
        %v4435 = vrot.slane %v4434, 1
        %v4436 = vadd.f32 %v4434, %v4435
        %v4437 = vadd.f32 %v4430, %v4436
        %4438 = vst [vmem:[%s413] sm:$0x1] %v4437
        %v4439 = vld [vmem:[%s416] sm:$0x1]
        %v4440 = vmul.f32 %v4427, %v4427
        %v4441 = vrot.slane %v4440, 4
        %v4442 = vadd.f32 %v4440, %v4441
        %v4443 = vrot.slane %v4442, 2
        %v4444 = vadd.f32 %v4442, %v4443
        %v4445 = vrot.slane %v4444, 1
        %v4446 = vadd.f32 %v4444, %v4445
        %v4447 = vadd.f32 %v4439, %v4446
        %4448 = vst [vmem:[%s416] sm:$0x1] %v4447
        %p4449 = scmp.lt.s32.totalorder %s26, 1
        %s4450 = scalar_select %p4449, %s26, 1
        %p4451 = scmp.lt.s32.totalorder %s27, 0
        %s4452 = scalar_select %p4451, %s27, 0
        %s4453 = sadd.s32 %s4452, %s4450
        %s4454 = smul.addr %s4453, 4
        %s4455 = scalar_lea.vmem %s6, %s4454
        %p4456 = scmp.lt.s32.totalorder %s26, 1
        %s4457 = scalar_select %p4456, %s26, 1
        %s4458 = scalar_lea.vmem %s7, %s4457
        %p4459 = scmp.lt.s32.totalorder %s26, 1
        %s4460 = scalar_select %p4459, %s26, 1
        %s4461 = scalar_lea.vmem %s8, %s4460
        // Predicated region
        $region57: #{encoder_forward.6} parent=43 // pred_check
          %p4462 = pneg %p194
        $region58: #{encoder_forward.6} parent=43 // pred_check_branch
          %4464 = sbr.rel (%p4462) target = $region60
        $region59: #{encoder_forward.6} parent=43 // pred_region
          _
        $region60: #{encoder_forward.6} parent=43 // pred_fallthru
          _
        // Predicated region
        $region61: #{encoder_forward.6} parent=43 // pred_check
          %p4465 = pneg %p220
        $region62: #{encoder_forward.6} parent=43 // pred_check_branch
          %4467 = sbr.rel (%p4465) target = $region64
        $region63: #{encoder_forward.6} parent=43 // pred_region
          _
        $region64: #{encoder_forward.6} parent=43 // pred_fallthru
          _
        // Predicated region
        $region65: #{encoder_forward.6} parent=43 // pred_check
          %p4468 = pneg %p246
        $region66: #{encoder_forward.6} parent=43 // pred_check_branch
          %4470 = sbr.rel (%p4468) target = $region68
        $region67: #{encoder_forward.6} parent=43 // pred_region
          _
        $region68: #{encoder_forward.6} parent=43 // pred_fallthru
          _
      $region44: #{encoder_forward.6} parent=5 // pred_fallthru
        _
      %p4471 = scmp.le.s32.totalorder 2, %s17
      // Predicated region
      $region69: #{encoder_forward.6} parent=5 // pred_check
        %p4472 = pneg %p4471
      $region70: #{encoder_forward.6} parent=5 // pred_check_branch
        %4474 = sbr.rel (%p4472) target = $region72
      $region71: #{encoder_forward.6} parent=5 // pred_region
        %s4475 = ssub.s32 %s17, 2
        // Predicated region
        $region73: #{encoder_forward.6} parent=71 // pred_check
          %p4476 = pneg %p200
        $region74: #{encoder_forward.6} parent=71 // pred_check_branch
          %4478 = sbr.rel (%p4476) target = $region76
        $region75: #{encoder_forward.6} parent=71 // pred_region
          %p4479 = scmp.lt.s32.totalorder %s28, 1
          %s4480 = scalar_select %p4479, %s28, 1
          %p4481 = scmp.lt.s32.totalorder %s29, 0
          %s4482 = scalar_select %p4481, %s29, 0
          %s4483 = sadd.s32 %s4482, %s4480
          %s4484 = smul.addr %s4483, 4
          %s4485 = scalar_lea.vmem %s6, %s4484
        $region76: #{encoder_forward.6} parent=71 // pred_fallthru
          _
        // Predicated region
        $region77: #{encoder_forward.6} parent=71 // pred_check
          %p4486 = pneg %p226
        $region78: #{encoder_forward.6} parent=71 // pred_check_branch
          %4488 = sbr.rel (%p4486) target = $region80
        $region79: #{encoder_forward.6} parent=71 // pred_region
          %p4489 = scmp.lt.s32.totalorder %s28, 1
          %s4490 = scalar_select %p4489, %s28, 1
          %s4491 = scalar_lea.vmem %s7, %s4490
        $region80: #{encoder_forward.6} parent=71 // pred_fallthru
          _
        // Predicated region
        $region81: #{encoder_forward.6} parent=71 // pred_check
          %p4492 = pneg %p252
        $region82: #{encoder_forward.6} parent=71 // pred_check_branch
          %4494 = sbr.rel (%p4492) target = $region84
        $region83: #{encoder_forward.6} parent=71 // pred_region
          %p4495 = scmp.lt.s32.totalorder %s28, 1
          %s4496 = scalar_select %p4495, %s28, 1
          %s4497 = scalar_lea.vmem %s8, %s4496
        $region84: #{encoder_forward.6} parent=71 // pred_fallthru
          _
      $region72: #{encoder_forward.6} parent=5 // pred_fallthru
        _
    $region6: #{encoder_forward.6} parent=1 // loop_footer
      %s21 = sadd.s32 1, %s17
    $region7: #{encoder_forward.6} parent=1 // loop_footer_branch
      %16 = sbr.rel target = $region3
    $region8: #{encoder_forward.6} parent=1 // loop_exit
      _
    %4498 = vsyncpa [#allocation3], 1
    %s4499 = scalar_lea.sflag [#allocation3], 1
    %4500 = vsyncpa %s4499, 1
    %4501 = vsyncpa [#allocation5], 1

// kernel: encoder_forward.9
$region0: #{encoder_forward.9}
  #allocation0 [shape = 'u32[]', space=smem, size = 0x4, offset = 0x4, fixed_abs, tag = 'smem constant byte address 0x4 - core index']
  #allocation1 [shape = 'u32[144,128]{1,0:T(1,128)}', space=vmem, size = 0x12000, scoped, tag = 'internal scratch']
  %s0 = inlined_call_operand.vmem [shape: bf16[2,8,768], index: 0, kind: input, shape index: {}]
  %s1 = inlined_call_operand.vmem [shape: bf16[256,768], index: 1, kind: input, shape index: {}]
  %s2 = inlined_call_operand.vmem [shape: f32[1,768], index: 2, kind: input, shape index: {}]
  %s3 = inlined_call_operand.hbm [shape: f32[2,8,256], index: 3, kind: output, shape index: {}]
  %s4 = sld [smem:[#allocation0]]
  $region29: #{encoder_forward.9} parent=0
    _
  %s6 = ssub.s32 1, %s4
  %s7 = scalar_select 0, %s6, %s4
  $region1: #{encoder_forward.9} parent=0
    #allocation2 [shape = 'u8[16384]{0}', space=vmem, size = 0x4000, scoped, tag = 'output window, operand 0, single buffered']
    #allocation3 [shape = 's32[1]{0}', space=sflag, size = 0x4, scoped, tag = 'scoped memory for encoder_forward.9']
    %8 = vsyncpa [#allocation3], 0
    // Predicated region
    $region2: #{encoder_forward.9} parent=1 // pred_check
      _
    $region3: #{encoder_forward.9} parent=1 // pred_check_branch
      %10 = sbr.rel (0) target = $region5
    $region4: #{encoder_forward.9} parent=1 // pred_region
      _
    $region5: #{encoder_forward.9} parent=1 // pred_fallthru
      _
    // Predicated region
    $region6: #{encoder_forward.9} parent=1 // pred_check
      _
    $region7: #{encoder_forward.9} parent=1 // pred_check_branch
      %12 = sbr.rel (0) target = $region9
    $region8: #{encoder_forward.9} parent=1 // pred_region
      _
    $region9: #{encoder_forward.9} parent=1 // pred_fallthru
      _
    // Predicated region
    $region10: #{encoder_forward.9} parent=1 // pred_check
      _
    $region11: #{encoder_forward.9} parent=1 // pred_check_branch
      %14 = sbr.rel (0) target = $region13
    $region12: #{encoder_forward.9} parent=1 // pred_region
      _
    $region13: #{encoder_forward.9} parent=1 // pred_fallthru
      _
    loop: start=0, step=1, limit=2
    $region14: #{encoder_forward.9} parent=1 // loop_pre_header
      _
    $region15: #{encoder_forward.9} parent=1 // loop_header
      %s16 = sphi 0, %s20
      %p17 = scmp.ge.s32.totalorder %s16, 2
      %v21 = vphi 0.0, %v793
      %v22 = vphi 0.0, %v814
    $region16: #{encoder_forward.9} parent=1 // loop_header_branch
      %19 = sbr.rel (%p17) target = $region20
    $region17: #{encoder_forward.9} parent=1 // loop_body
      %v23 = vpack.c.bf16 %v21, %v21
      %v24 = vpack.c.bf16 %v22, %v22
      %v25 = vld [vmem:[%s1] sm:$0xff]
      %v26 = vld [vmem:[%s1 + $0x8] sm:$0xff]
      %v27 = vld [vmem:[%s1 + $0x10] sm:$0xff]
      %v28 = vld [vmem:[%s1 + $0x18] sm:$0xff]
      %v29 = vld [vmem:[%s1 + $0x20] sm:$0xff]
      %v30 = vld [vmem:[%s1 + $0x28] sm:$0xff]
      %v31 = vld [vmem:[%s1 + $0x30] sm:$0xff]
      %v32 = vld [vmem:[%s1 + $0x38] sm:$0xff]
      %v33 = vld [vmem:[%s1 + $0x40] sm:$0xff]
      %v34 = vld [vmem:[%s1 + $0x48] sm:$0xff]
      %v35 = vld [vmem:[%s1 + $0x50] sm:$0xff]
      %v36 = vld [vmem:[%s1 + $0x58] sm:$0xff]
      %v37 = vld [vmem:[%s1 + $0x60] sm:$0xff]
      %v38 = vld [vmem:[%s1 + $0x68] sm:$0xff]
      %v39 = vld [vmem:[%s1 + $0x70] sm:$0xff]
      %v40 = vld [vmem:[%s1 + $0x78] sm:$0xff]
      %v41 = vld [vmem:[%s1 + $0x80] sm:$0xff]
      %v42 = vld [vmem:[%s1 + $0x88] sm:$0xff]
      %v43 = vld [vmem:[%s1 + $0x90] sm:$0xff]
      %v44 = vld [vmem:[%s1 + $0x98] sm:$0xff]
      %v45 = vld [vmem:[%s1 + $0xa0] sm:$0xff]
      %v46 = vld [vmem:[%s1 + $0xa8] sm:$0xff]
      %v47 = vld [vmem:[%s1 + $0xb0] sm:$0xff]
      %v48 = vld [vmem:[%s1 + $0xb8] sm:$0xff]
      %v49 = vld [vmem:[%s1 + $0xc0] sm:$0xff]
      %v50 = vld [vmem:[%s1 + $0xc8] sm:$0xff]
      %v51 = vld [vmem:[%s1 + $0xd0] sm:$0xff]
      %v52 = vld [vmem:[%s1 + $0xd8] sm:$0xff]
      %v53 = vld [vmem:[%s1 + $0xe0] sm:$0xff]
      %v54 = vld [vmem:[%s1 + $0xe8] sm:$0xff]
      %v55 = vld [vmem:[%s1 + $0xf0] sm:$0xff]
      %v56 = vld [vmem:[%s1 + $0xf8] sm:$0xff]
      %v57 = vld [vmem:[%s1 + $0x100] sm:$0xff]
      %v58 = vld [vmem:[%s1 + $0x108] sm:$0xff]
      %v59 = vld [vmem:[%s1 + $0x110] sm:$0xff]
      %v60 = vld [vmem:[%s1 + $0x118] sm:$0xff]
      %v61 = vld [vmem:[%s1 + $0x120] sm:$0xff]
      %v62 = vld [vmem:[%s1 + $0x128] sm:$0xff]
      %v63 = vld [vmem:[%s1 + $0x130] sm:$0xff]
      %v64 = vld [vmem:[%s1 + $0x138] sm:$0xff]
      %v65 = vld [vmem:[%s1 + $0x140] sm:$0xff]
      %v66 = vld [vmem:[%s1 + $0x148] sm:$0xff]
      %v67 = vld [vmem:[%s1 + $0x150] sm:$0xff]
      %v68 = vld [vmem:[%s1 + $0x158] sm:$0xff]
      %v69 = vld [vmem:[%s1 + $0x160] sm:$0xff]
      %v70 = vld [vmem:[%s1 + $0x168] sm:$0xff]
      %v71 = vld [vmem:[%s1 + $0x170] sm:$0xff]
      %v72 = vld [vmem:[%s1 + $0x178] sm:$0xff]
      %v73 = vld [vmem:[%s1 + $0x180] sm:$0xff]
      %v74 = vld [vmem:[%s1 + $0x188] sm:$0xff]
      %v75 = vld [vmem:[%s1 + $0x190] sm:$0xff]
      %v76 = vld [vmem:[%s1 + $0x198] sm:$0xff]
      %v77 = vld [vmem:[%s1 + $0x1a0] sm:$0xff]
      %v78 = vld [vmem:[%s1 + $0x1a8] sm:$0xff]
      %v79 = vld [vmem:[%s1 + $0x1b0] sm:$0xff]
      %v80 = vld [vmem:[%s1 + $0x1b8] sm:$0xff]
      %v81 = vld [vmem:[%s1 + $0x1c0] sm:$0xff]
      %v82 = vld [vmem:[%s1 + $0x1c8] sm:$0xff]
      %v83 = vld [vmem:[%s1 + $0x1d0] sm:$0xff]
      %v84 = vld [vmem:[%s1 + $0x1d8] sm:$0xff]
      %v85 = vld [vmem:[%s1 + $0x1e0] sm:$0xff]
      %v86 = vld [vmem:[%s1 + $0x1e8] sm:$0xff]
      %v87 = vld [vmem:[%s1 + $0x1f0] sm:$0xff]
      %v88 = vld [vmem:[%s1 + $0x1f8] sm:$0xff]
      %v89 = vld [vmem:[%s1 + $0x200] sm:$0xff]
      %v90 = vld [vmem:[%s1 + $0x208] sm:$0xff]
      %v91 = vld [vmem:[%s1 + $0x210] sm:$0xff]
      %v92 = vld [vmem:[%s1 + $0x218] sm:$0xff]
      %v93 = vld [vmem:[%s1 + $0x220] sm:$0xff]
      %v94 = vld [vmem:[%s1 + $0x228] sm:$0xff]
      %v95 = vld [vmem:[%s1 + $0x230] sm:$0xff]
      %v96 = vld [vmem:[%s1 + $0x238] sm:$0xff]
      %v97 = vld [vmem:[%s1 + $0x240] sm:$0xff]
      %v98 = vld [vmem:[%s1 + $0x248] sm:$0xff]
      %v99 = vld [vmem:[%s1 + $0x250] sm:$0xff]
      %v100 = vld [vmem:[%s1 + $0x258] sm:$0xff]
      %v101 = vld [vmem:[%s1 + $0x260] sm:$0xff]
      %v102 = vld [vmem:[%s1 + $0x268] sm:$0xff]
      %v103 = vld [vmem:[%s1 + $0x270] sm:$0xff]
      %v104 = vld [vmem:[%s1 + $0x278] sm:$0xff]
      %v105 = vld [vmem:[%s1 + $0x280] sm:$0xff]
      %v106 = vld [vmem:[%s1 + $0x288] sm:$0xff]
      %v107 = vld [vmem:[%s1 + $0x290] sm:$0xff]
      %v108 = vld [vmem:[%s1 + $0x298] sm:$0xff]
      %v109 = vld [vmem:[%s1 + $0x2a0] sm:$0xff]
      %v110 = vld [vmem:[%s1 + $0x2a8] sm:$0xff]
      %v111 = vld [vmem:[%s1 + $0x2b0] sm:$0xff]
      %v112 = vld [vmem:[%s1 + $0x2b8] sm:$0xff]
      %v113 = vld [vmem:[%s1 + $0x2c0] sm:$0xff]
      %v114 = vld [vmem:[%s1 + $0x2c8] sm:$0xff]
      %v115 = vld [vmem:[%s1 + $0x2d0] sm:$0xff]
      %v116 = vld [vmem:[%s1 + $0x2d8] sm:$0xff]
      %v117 = vld [vmem:[%s1 + $0x2e0] sm:$0xff]
      %v118 = vld [vmem:[%s1 + $0x2e8] sm:$0xff]
      %v119 = vld [vmem:[%s1 + $0x2f0] sm:$0xff]
      %v120 = vld [vmem:[%s1 + $0x2f8] sm:$0xff]
      %v121 = vld [vmem:[%s2] sm:$0x3f]
      %v123 = vlaneseq
      %v124 = vshrl.u32 %v123, 7
      %v125 = vsub.s32 0, %v124
      %v126 = vrot.slane %v121, %v125
      %v127 = vlaneseq
      %v128 = vshrl.u32 %v127, 7
      %v129 = vsub.s32 1, %v128
      %v130 = vrot.slane %v121, %v129
      %v131 = vlaneseq
      %v132 = vshrl.u32 %v131, 7
      %v133 = vsub.s32 2, %v132
      %v134 = vrot.slane %v121, %v133
      %v135 = vlaneseq
      %v136 = vshrl.u32 %v135, 7
      %v137 = vsub.s32 3, %v136
      %v138 = vrot.slane %v121, %v137
      %v139 = vlaneseq
      %v140 = vshrl.u32 %v139, 7
      %v141 = vsub.s32 4, %v140
      %v142 = vrot.slane %v121, %v141
      %v143 = vlaneseq
      %v144 = vshrl.u32 %v143, 7
      %v145 = vsub.s32 5, %v144
      %v146 = vrot.slane %v121, %v145
      %v249 = vunpack.c.l.b16 %v25
      %v250 = vunpack.c.h.b16 %v25
      %v251 = vunpack.c.l.b16 %v26
      %v252 = vunpack.c.h.b16 %v26
      %v253 = vunpack.c.l.b16 %v27
      %v254 = vunpack.c.h.b16 %v27
      %v255 = vunpack.c.l.b16 %v28
      %v256 = vunpack.c.h.b16 %v28
      %v257 = vunpack.c.l.b16 %v29
      %v258 = vunpack.c.h.b16 %v29
      %v259 = vunpack.c.l.b16 %v30
      %v260 = vunpack.c.h.b16 %v30
      %v261 = vunpack.c.l.b16 %v31
      %v262 = vunpack.c.h.b16 %v31
      %v263 = vunpack.c.l.b16 %v32
      %v264 = vunpack.c.h.b16 %v32
      %v265 = vunpack.c.l.b16 %v33
      %v266 = vunpack.c.h.b16 %v33
      %v267 = vunpack.c.l.b16 %v34
      %v268 = vunpack.c.h.b16 %v34
      %v269 = vunpack.c.l.b16 %v35
      %v270 = vunpack.c.h.b16 %v35
      %v271 = vunpack.c.l.b16 %v36
      %v272 = vunpack.c.h.b16 %v36
      %v273 = vunpack.c.l.b16 %v37
      %v274 = vunpack.c.h.b16 %v37
      %v275 = vunpack.c.l.b16 %v38
      %v276 = vunpack.c.h.b16 %v38
      %v277 = vunpack.c.l.b16 %v39
      %v278 = vunpack.c.h.b16 %v39
      %v279 = vunpack.c.l.b16 %v40
      %v280 = vunpack.c.h.b16 %v40
      %v281 = vunpack.c.l.b16 %v41
      %v282 = vunpack.c.h.b16 %v41
      %v283 = vunpack.c.l.b16 %v42
      %v284 = vunpack.c.h.b16 %v42
      %v285 = vunpack.c.l.b16 %v43
      %v286 = vunpack.c.h.b16 %v43
      %v287 = vunpack.c.l.b16 %v44
      %v288 = vunpack.c.h.b16 %v44
      %v289 = vunpack.c.l.b16 %v45
      %v290 = vunpack.c.h.b16 %v45
      %v291 = vunpack.c.l.b16 %v46
      %v292 = vunpack.c.h.b16 %v46
      %v293 = vunpack.c.l.b16 %v47
      %v294 = vunpack.c.h.b16 %v47
      %v295 = vunpack.c.l.b16 %v48
      %v296 = vunpack.c.h.b16 %v48
      %v297 = vunpack.c.l.b16 %v49
      %v298 = vunpack.c.h.b16 %v49
      %v299 = vunpack.c.l.b16 %v50
      %v300 = vunpack.c.h.b16 %v50
      %v301 = vunpack.c.l.b16 %v51
      %v302 = vunpack.c.h.b16 %v51
      %v303 = vunpack.c.l.b16 %v52
      %v304 = vunpack.c.h.b16 %v52
      %v305 = vunpack.c.l.b16 %v53
      %v306 = vunpack.c.h.b16 %v53
      %v307 = vunpack.c.l.b16 %v54
      %v308 = vunpack.c.h.b16 %v54
      %v309 = vunpack.c.l.b16 %v55
      %v310 = vunpack.c.h.b16 %v55
      %v311 = vunpack.c.l.b16 %v56
      %v312 = vunpack.c.h.b16 %v56
      %v313 = vunpack.c.l.b16 %v57
      %v314 = vunpack.c.h.b16 %v57
      %v315 = vunpack.c.l.b16 %v58
      %v316 = vunpack.c.h.b16 %v58
      %v317 = vunpack.c.l.b16 %v59
      %v318 = vunpack.c.h.b16 %v59
      %v319 = vunpack.c.l.b16 %v60
      %v320 = vunpack.c.h.b16 %v60
      %v321 = vunpack.c.l.b16 %v61
      %v322 = vunpack.c.h.b16 %v61
      %v323 = vunpack.c.l.b16 %v62
      %v324 = vunpack.c.h.b16 %v62
      %v325 = vunpack.c.l.b16 %v63
      %v326 = vunpack.c.h.b16 %v63
      %v327 = vunpack.c.l.b16 %v64
      %v328 = vunpack.c.h.b16 %v64
      %v329 = vunpack.c.l.b16 %v65
      %v330 = vunpack.c.h.b16 %v65
      %v331 = vunpack.c.l.b16 %v66
      %v332 = vunpack.c.h.b16 %v66
      %v333 = vunpack.c.l.b16 %v67
      %v334 = vunpack.c.h.b16 %v67
      %v335 = vunpack.c.l.b16 %v68
      %v336 = vunpack.c.h.b16 %v68
      %v337 = vunpack.c.l.b16 %v69
      %v338 = vunpack.c.h.b16 %v69
      %v339 = vunpack.c.l.b16 %v70
      %v340 = vunpack.c.h.b16 %v70
      %v341 = vunpack.c.l.b16 %v71
      %v342 = vunpack.c.h.b16 %v71
      %v343 = vunpack.c.l.b16 %v72
      %v344 = vunpack.c.h.b16 %v72
      %v345 = vunpack.c.l.b16 %v73
      %v346 = vunpack.c.h.b16 %v73
      %v347 = vunpack.c.l.b16 %v74
      %v348 = vunpack.c.h.b16 %v74
      %v349 = vunpack.c.l.b16 %v75
      %v350 = vunpack.c.h.b16 %v75
      %v351 = vunpack.c.l.b16 %v76
      %v352 = vunpack.c.h.b16 %v76
      %v353 = vunpack.c.l.b16 %v77
      %v354 = vunpack.c.h.b16 %v77
      %v355 = vunpack.c.l.b16 %v78
      %v356 = vunpack.c.h.b16 %v78
      %v357 = vunpack.c.l.b16 %v79
      %v358 = vunpack.c.h.b16 %v79
      %v359 = vunpack.c.l.b16 %v80
      %v360 = vunpack.c.h.b16 %v80
      %v361 = vunpack.c.l.b16 %v81
      %v362 = vunpack.c.h.b16 %v81
      %v363 = vunpack.c.l.b16 %v82
      %v364 = vunpack.c.h.b16 %v82
      %v365 = vunpack.c.l.b16 %v83
      %v366 = vunpack.c.h.b16 %v83
      %v367 = vunpack.c.l.b16 %v84
      %v368 = vunpack.c.h.b16 %v84
      %v369 = vunpack.c.l.b16 %v85
      %v370 = vunpack.c.h.b16 %v85
      %v371 = vunpack.c.l.b16 %v86
      %v372 = vunpack.c.h.b16 %v86
      %v373 = vunpack.c.l.b16 %v87
      %v374 = vunpack.c.h.b16 %v87
      %v375 = vunpack.c.l.b16 %v88
      %v376 = vunpack.c.h.b16 %v88
      %v377 = vunpack.c.l.b16 %v89
      %v378 = vunpack.c.h.b16 %v89
      %v379 = vunpack.c.l.b16 %v90
      %v380 = vunpack.c.h.b16 %v90
      %v381 = vunpack.c.l.b16 %v91
      %v382 = vunpack.c.h.b16 %v91
      %v383 = vunpack.c.l.b16 %v92
      %v384 = vunpack.c.h.b16 %v92
      %v385 = vunpack.c.l.b16 %v93
      %v386 = vunpack.c.h.b16 %v93
      %v387 = vunpack.c.l.b16 %v94
      %v388 = vunpack.c.h.b16 %v94
      %v389 = vunpack.c.l.b16 %v95
      %v390 = vunpack.c.h.b16 %v95
      %v391 = vunpack.c.l.b16 %v96
      %v392 = vunpack.c.h.b16 %v96
      %v393 = vunpack.c.l.b16 %v97
      %v394 = vunpack.c.h.b16 %v97
      %v395 = vunpack.c.l.b16 %v98
      %v396 = vunpack.c.h.b16 %v98
      %v397 = vunpack.c.l.b16 %v99
      %v398 = vunpack.c.h.b16 %v99
      %v399 = vunpack.c.l.b16 %v100
      %v400 = vunpack.c.h.b16 %v100
      %v401 = vunpack.c.l.b16 %v101
      %v402 = vunpack.c.h.b16 %v101
      %v403 = vunpack.c.l.b16 %v102
      %v404 = vunpack.c.h.b16 %v102
      %v405 = vunpack.c.l.b16 %v103
      %v406 = vunpack.c.h.b16 %v103
      %v407 = vunpack.c.l.b16 %v104
      %v408 = vunpack.c.h.b16 %v104
      %v409 = vunpack.c.l.b16 %v105
      %v410 = vunpack.c.h.b16 %v105
      %v411 = vunpack.c.l.b16 %v106
      %v412 = vunpack.c.h.b16 %v106
      %v413 = vunpack.c.l.b16 %v107
      %v414 = vunpack.c.h.b16 %v107
      %v415 = vunpack.c.l.b16 %v108
      %v416 = vunpack.c.h.b16 %v108
      %v417 = vunpack.c.l.b16 %v109
      %v418 = vunpack.c.h.b16 %v109
      %v419 = vunpack.c.l.b16 %v110
      %v420 = vunpack.c.h.b16 %v110
      %v421 = vunpack.c.l.b16 %v111
      %v422 = vunpack.c.h.b16 %v111
      %v423 = vunpack.c.l.b16 %v112
      %v424 = vunpack.c.h.b16 %v112
      %v425 = vunpack.c.l.b16 %v113
      %v426 = vunpack.c.h.b16 %v113
      %v427 = vunpack.c.l.b16 %v114
      %v428 = vunpack.c.h.b16 %v114
      %v429 = vunpack.c.l.b16 %v115
      %v430 = vunpack.c.h.b16 %v115
      %v431 = vunpack.c.l.b16 %v116
      %v432 = vunpack.c.h.b16 %v116
      %v433 = vunpack.c.l.b16 %v117
      %v434 = vunpack.c.h.b16 %v117
      %v435 = vunpack.c.l.b16 %v118
      %v436 = vunpack.c.h.b16 %v118
      %v437 = vunpack.c.l.b16 %v119
      %v438 = vunpack.c.h.b16 %v119
      %v439 = vunpack.c.l.b16 %v120
      %v440 = vunpack.c.h.b16 %v120
      %v441 = vpack.c.b16 %v255, %v249
      %v442 = vpack.c.b16 %v256, %v250
      %v443 = vpack.c.b16 %v257, %v251
      %v444 = vpack.c.b16 %v258, %v252
      %v445 = vpack.c.b16 %v259, %v253
      %v446 = vpack.c.b16 %v260, %v254
      %v447 = vpack.c.b16 %v267, %v261
      %v448 = vpack.c.b16 %v268, %v262
      %v449 = vpack.c.b16 %v269, %v263
      %v450 = vpack.c.b16 %v270, %v264
      %v451 = vpack.c.b16 %v271, %v265
      %v452 = vpack.c.b16 %v272, %v266
      %v453 = vpack.c.b16 %v279, %v273
      %v454 = vpack.c.b16 %v280, %v274
      %v455 = vpack.c.b16 %v281, %v275
      %v456 = vpack.c.b16 %v282, %v276
      %v457 = vpack.c.b16 %v283, %v277
      %v458 = vpack.c.b16 %v284, %v278
      %v459 = vpack.c.b16 %v291, %v285
      %v460 = vpack.c.b16 %v292, %v286
      %v461 = vpack.c.b16 %v293, %v287
      %v462 = vpack.c.b16 %v294, %v288
      %v463 = vpack.c.b16 %v295, %v289
      %v464 = vpack.c.b16 %v296, %v290
      %v465 = vpack.c.b16 %v303, %v297
      %v466 = vpack.c.b16 %v304, %v298
      %v467 = vpack.c.b16 %v305, %v299
      %v468 = vpack.c.b16 %v306, %v300
      %v469 = vpack.c.b16 %v307, %v301
      %v470 = vpack.c.b16 %v308, %v302
      %v471 = vpack.c.b16 %v315, %v309
      %v472 = vpack.c.b16 %v316, %v310
      %v473 = vpack.c.b16 %v317, %v311
      %v474 = vpack.c.b16 %v318, %v312
      %v475 = vpack.c.b16 %v319, %v313
      %v476 = vpack.c.b16 %v320, %v314
      %v477 = vpack.c.b16 %v327, %v321
      %v478 = vpack.c.b16 %v328, %v322
      %v479 = vpack.c.b16 %v329, %v323
      %v480 = vpack.c.b16 %v330, %v324
      %v481 = vpack.c.b16 %v331, %v325
      %v482 = vpack.c.b16 %v332, %v326
      %v483 = vpack.c.b16 %v339, %v333
      %v484 = vpack.c.b16 %v340, %v334
      %v485 = vpack.c.b16 %v341, %v335
      %v486 = vpack.c.b16 %v342, %v336
      %v487 = vpack.c.b16 %v343, %v337
      %v488 = vpack.c.b16 %v344, %v338
      %v489 = vpack.c.b16 %v351, %v345
      %v490 = vpack.c.b16 %v352, %v346
      %v491 = vpack.c.b16 %v353, %v347
      %v492 = vpack.c.b16 %v354, %v348
      %v493 = vpack.c.b16 %v355, %v349
      %v494 = vpack.c.b16 %v356, %v350
      %v495 = vpack.c.b16 %v363, %v357
      %v496 = vpack.c.b16 %v364, %v358
      %v497 = vpack.c.b16 %v365, %v359
      %v498 = vpack.c.b16 %v366, %v360
      %v499 = vpack.c.b16 %v367, %v361
      %v500 = vpack.c.b16 %v368, %v362
      %v501 = vpack.c.b16 %v375, %v369
      %v502 = vpack.c.b16 %v376, %v370
      %v503 = vpack.c.b16 %v377, %v371
      %v504 = vpack.c.b16 %v378, %v372
      %v505 = vpack.c.b16 %v379, %v373
      %v506 = vpack.c.b16 %v380, %v374
      %v507 = vpack.c.b16 %v387, %v381
      %v508 = vpack.c.b16 %v388, %v382
      %v509 = vpack.c.b16 %v389, %v383
      %v510 = vpack.c.b16 %v390, %v384
      %v511 = vpack.c.b16 %v391, %v385
      %v512 = vpack.c.b16 %v392, %v386
      %v513 = vpack.c.b16 %v399, %v393
      %v514 = vpack.c.b16 %v400, %v394
      %v515 = vpack.c.b16 %v401, %v395
      %v516 = vpack.c.b16 %v402, %v396
      %v517 = vpack.c.b16 %v403, %v397
      %v518 = vpack.c.b16 %v404, %v398
      %v519 = vpack.c.b16 %v411, %v405
      %v520 = vpack.c.b16 %v412, %v406
      %v521 = vpack.c.b16 %v413, %v407
      %v522 = vpack.c.b16 %v414, %v408
      %v523 = vpack.c.b16 %v415, %v409
      %v524 = vpack.c.b16 %v416, %v410
      %v525 = vpack.c.b16 %v423, %v417
      %v526 = vpack.c.b16 %v424, %v418
      %v527 = vpack.c.b16 %v425, %v419
      %v528 = vpack.c.b16 %v426, %v420
      %v529 = vpack.c.b16 %v427, %v421
      %v530 = vpack.c.b16 %v428, %v422
      %v531 = vpack.c.b16 %v435, %v429
      %v532 = vpack.c.b16 %v436, %v430
      %v533 = vpack.c.b16 %v437, %v431
      %v534 = vpack.c.b16 %v438, %v432
      %v535 = vpack.c.b16 %v439, %v433
      %v536 = vpack.c.b16 %v440, %v434
      %633 = vmatprep.subr.bf16.mxu0 %v442
      %634 = vmatpush1.bf16.msra.mxu0 %v441
      %635 = vmatprep.subr.bf16.mxu0 %v448
      %636 = vmatpush1.bf16.msra.mxu0 %v447
      %637 = vmatprep.subr.bf16.mxu0 %v454
      %638 = vmatpush1.bf16.msra.mxu0 %v453
      %639 = vmatprep.subr.bf16.mxu0 %v460
      %640 = vmatpush1.bf16.msra.mxu0 %v459
      %641 = vmatprep.subr.bf16.mxu0 %v466
      %642 = vmatpush1.bf16.msra.mxu0 %v465
      %643 = vmatprep.subr.bf16.mxu0 %v472
      %644 = vmatpush1.bf16.msra.mxu0 %v471
      %645 = vmatprep.subr.bf16.mxu0 %v478
      %646 = vmatpush1.bf16.msra.mxu0 %v477
      %647 = vmatprep.subr.bf16.mxu0 %v484
      %648 = vmatpush1.bf16.msra.mxu0 %v483
      %649 = vmatprep.subr.bf16.mxu0 %v490
      %650 = vmatpush1.bf16.msra.mxu0 %v489
      %651 = vmatprep.subr.bf16.mxu0 %v496
      %652 = vmatpush1.bf16.msra.mxu0 %v495
      %653 = vmatprep.subr.bf16.mxu0 %v502
      %654 = vmatpush1.bf16.msra.mxu0 %v501
      %655 = vmatprep.subr.bf16.mxu0 %v508
      %656 = vmatpush1.bf16.msra.mxu0 %v507
      %657 = vmatprep.subr.bf16.mxu0 %v514
      %658 = vmatpush1.bf16.msra.mxu0 %v513
      %659 = vmatprep.subr.bf16.mxu0 %v520
      %660 = vmatpush1.bf16.msra.mxu0 %v519
      %661 = vmatprep.subr.bf16.mxu0 %v526
      %662 = vmatpush1.bf16.msra.mxu0 %v525
      %663 = vmatprep.subr.bf16.mxu0 %v532
      %664 = vmatpush1.bf16.msra.mxu0 %v531
      %665 = vmatprep.mubr.bf16.mxu0 %v24
      %666 = vmatmul.mubr.bf16.gmra.mrb[0].mxu0 %v23
      %v667 = vpop.f32.mrb[0].mxu0
      %v668 = vadd.f32 %v126, %v667
      %v669 = vpop.f32.mrb[0].mxu0
      %v670 = vadd.f32 %v130, %v669
      %v671 = vpop.f32.mrb[0].mxu0
      %v672 = vpop.f32.mrb[0].mxu0
      %673 = vdwg.mxu0
      %674 = vmatprep.subr.bf16.mxu0 %v444
      %675 = vmatpush1.bf16.msra.mxu0 %v443
      %676 = vmatprep.subr.bf16.mxu0 %v450
      %677 = vmatpush1.bf16.msra.mxu0 %v449
      %678 = vmatprep.subr.bf16.mxu0 %v456
      %679 = vmatpush1.bf16.msra.mxu0 %v455
      %680 = vmatprep.subr.bf16.mxu0 %v462
      %681 = vmatpush1.bf16.msra.mxu0 %v461
      %682 = vmatprep.subr.bf16.mxu0 %v468
      %683 = vmatpush1.bf16.msra.mxu0 %v467
      %684 = vmatprep.subr.bf16.mxu0 %v474
      %685 = vmatpush1.bf16.msra.mxu0 %v473
      %686 = vmatprep.subr.bf16.mxu0 %v480
      %687 = vmatpush1.bf16.msra.mxu0 %v479
      %688 = vmatprep.subr.bf16.mxu0 %v486
      %689 = vmatpush1.bf16.msra.mxu0 %v485
      %690 = vmatprep.subr.bf16.mxu0 %v492
      %691 = vmatpush1.bf16.msra.mxu0 %v491
      %692 = vmatprep.subr.bf16.mxu0 %v498
      %693 = vmatpush1.bf16.msra.mxu0 %v497
      %694 = vmatprep.subr.bf16.mxu0 %v504
      %695 = vmatpush1.bf16.msra.mxu0 %v503
      %696 = vmatprep.subr.bf16.mxu0 %v510
      %697 = vmatpush1.bf16.msra.mxu0 %v509
      %698 = vmatprep.subr.bf16.mxu0 %v516
      %699 = vmatpush1.bf16.msra.mxu0 %v515
      %700 = vmatprep.subr.bf16.mxu0 %v522
      %701 = vmatpush1.bf16.msra.mxu0 %v521
      %702 = vmatprep.subr.bf16.mxu0 %v528
      %703 = vmatpush1.bf16.msra.mxu0 %v527
      %704 = vmatprep.subr.bf16.mxu0 %v534
      %705 = vmatpush1.bf16.msra.mxu0 %v533
      %706 = vmatprep.mubr.bf16.mxu0 %v24
      %707 = vmatmul.mubr.bf16.gmra.mrb[0].mxu0 %v23
      %v708 = vpop.f32.mrb[0].mxu0
      %v709 = vadd.f32 %v134, %v708
      %v710 = vpop.f32.mrb[0].mxu0
      %v711 = vadd.f32 %v138, %v710
      %v712 = vpop.f32.mrb[0].mxu0
      %v713 = vpop.f32.mrb[0].mxu0
      %714 = vdwg.mxu0
      %715 = vmatprep.subr.bf16.mxu0 %v446
      %716 = vmatpush1.bf16.msra.mxu0 %v445
      %717 = vmatprep.subr.bf16.mxu0 %v452
      %718 = vmatpush1.bf16.msra.mxu0 %v451
      %719 = vmatprep.subr.bf16.mxu0 %v458
      %720 = vmatpush1.bf16.msra.mxu0 %v457
      %721 = vmatprep.subr.bf16.mxu0 %v464
      %722 = vmatpush1.bf16.msra.mxu0 %v463
      %723 = vmatprep.subr.bf16.mxu0 %v470
      %724 = vmatpush1.bf16.msra.mxu0 %v469
      %725 = vmatprep.subr.bf16.mxu0 %v476
      %726 = vmatpush1.bf16.msra.mxu0 %v475
      %727 = vmatprep.subr.bf16.mxu0 %v482
      %728 = vmatpush1.bf16.msra.mxu0 %v481
      %729 = vmatprep.subr.bf16.mxu0 %v488
      %730 = vmatpush1.bf16.msra.mxu0 %v487
      %731 = vmatprep.subr.bf16.mxu0 %v494
      %732 = vmatpush1.bf16.msra.mxu0 %v493
      %733 = vmatprep.subr.bf16.mxu0 %v500
      %734 = vmatpush1.bf16.msra.mxu0 %v499
      %735 = vmatprep.subr.bf16.mxu0 %v506
      %736 = vmatpush1.bf16.msra.mxu0 %v505
      %737 = vmatprep.subr.bf16.mxu0 %v512
      %738 = vmatpush1.bf16.msra.mxu0 %v511
      %739 = vmatprep.subr.bf16.mxu0 %v518
      %740 = vmatpush1.bf16.msra.mxu0 %v517
      %741 = vmatprep.subr.bf16.mxu0 %v524
      %742 = vmatpush1.bf16.msra.mxu0 %v523
      %743 = vmatprep.subr.bf16.mxu0 %v530
      %744 = vmatpush1.bf16.msra.mxu0 %v529
      %745 = vmatprep.subr.bf16.mxu0 %v536
      %746 = vmatpush1.bf16.msra.mxu0 %v535
      %747 = vmatprep.mubr.bf16.mxu0 %v24
      %748 = vmatmul.mubr.bf16.gmra.mrb[0].mxu0 %v23
      %v749 = vpop.f32.mrb[0].mxu0
      %v750 = vadd.f32 %v142, %v749
      %v751 = vpop.f32.mrb[0].mxu0
      %v752 = vadd.f32 %v146, %v751
      %v753 = vpop.f32.mrb[0].mxu0
      %v754 = vpop.f32.mrb[0].mxu0
      %755 = vdwg.mxu0
      %s756 = smul.u32 %s16, 6
      %s757 = smul.addr %s756, 4
      %s758 = scalar_lea.vmem %s0, %s757
      %v759 = vld [vmem:[%s758] sm:$0xff]
      %v760 = vld [vmem:[%s758 + $0x8] sm:$0xff]
      %v761 = vunpack.c.l.bf16 %v759
      %v762 = vunpack.c.h.bf16 %v759
      %v763 = vunpack.c.l.bf16 %v760
      %s764 = ssub.s32 1, %s16
      %s765 = smul.u32 %s764, 6
      %s766 = smul.addr %s765, 4
      %s767 = scalar_lea.vmem %s0, %s766
      %v768 = vld [vmem:[%s767 + $0x8] sm:$0xff]
      %v769 = vld [vmem:[%s767 + $0x10] sm:$0xff]
      %v770 = vunpack.c.h.bf16 %v768
      %v771 = vunpack.c.l.bf16 %v769
      %v772 = vunpack.c.h.bf16 %v769
      %v773 = vadd.f32 %v761, %v668
      %v774 = vxor.u32 %v773, 2147483648
      %v775 = vmul.f32 %v774, 1.442695
      %v776 = vpow.pop %v775
      %v777 = vadd.f32 %v776, 1.0
      %v778 = vrcp.pop %v777
      %v779 = vmul.f32 1.0, %v778
      %v780 = vadd.f32 %v762, %v670
      %v781 = vxor.u32 %v780, 2147483648
      %v782 = vmul.f32 %v781, 1.442695
      %v783 = vpow.pop %v782
      %v784 = vadd.f32 %v783, 1.0
      %v785 = vrcp.pop %v784
      %v786 = vmul.f32 1.0, %v785
      %v787 = vmul.f32 %v779, %v709
      %v788 = vadd.f32 %v763, %v787
      %v789 = vtanh.pop %v788
      %v790 = vsub.f32 1.0, %v786
      %v791 = vmul.f32 %v790, %v789
      %v792 = vmul.f32 %v786, %v21
      %v793 = vadd.f32 %v791, %v792
      %v794 = vadd.f32 %v770, %v711
      %v795 = vxor.u32 %v794, 2147483648
      %v796 = vmul.f32 %v795, 1.442695
      %v797 = vpow.pop %v796
      %v798 = vadd.f32 %v797, 1.0
      %v799 = vrcp.pop %v798
      %v800 = vmul.f32 1.0, %v799
      %v801 = vadd.f32 %v771, %v750
      %v802 = vxor.u32 %v801, 2147483648
      %v803 = vmul.f32 %v802, 1.442695
      %v804 = vpow.pop %v803
      %v805 = vadd.f32 %v804, 1.0
      %v806 = vrcp.pop %v805
      %v807 = vmul.f32 1.0, %v806
      %v808 = vmul.f32 %v800, %v752
      %v809 = vadd.f32 %v772, %v808
      %v810 = vtanh.pop %v809
      %v811 = vsub.f32 1.0, %v807
      %v812 = vmul.f32 %v811, %v810
      %v813 = vmul.f32 %v807, %v22
      %v814 = vadd.f32 %v812, %v813
      %s815 = smul.u32 %s16, 2
      %s816 = smul.addr %s815, 8
      %s817 = scalar_lea.vmem [#allocation2], %s816
      %818 = vst [vmem:[%s817] sm:$0xff] %v793
      %s819 = smul.u32 %s764, 2
      %s820 = smul.addr %s819, 8
      %s821 = scalar_lea.vmem [#allocation2], %s820
      %822 = vst [vmem:[%s821 + $0x8] sm:$0xff] %v814
    $region18: #{encoder_forward.9} parent=1 // loop_footer
      %s20 = sadd.s32 1, %s16
    $region19: #{encoder_forward.9} parent=1 // loop_footer_branch
      %15 = sbr.rel target = $region15
    $region20: #{encoder_forward.9} parent=1 // loop_exit
      _
    // Predicated region
    $region21: #{encoder_forward.9} parent=1 // pred_check
      _
    $region22: #{encoder_forward.9} parent=1 // pred_check_branch
      %824 = sbr.rel (0) target = $region24
    $region23: #{encoder_forward.9} parent=1 // pred_region
      %s826 = ssub.s32 512, 512
      %827 = vsyncadd [#allocation3], %s826
      %s828 = sshll.u32 [#allocation2], 4
      %s829 = int_to_ptr.vmem [resolvable:$true] %s828
      %834 = dma.vmem_to_hbm [thread:$0]  %s829, 512, %s3, [#allocation3], 256, 256, 16
    $region24: #{encoder_forward.9} parent=1 // pred_fallthru
      _
    // Predicated region
    $region25: #{encoder_forward.9} parent=1 // pred_check
      _
    $region26: #{encoder_forward.9} parent=1 // pred_check_branch
      %836 = sbr.rel (0) target = $region28
    $region27: #{encoder_forward.9} parent=1 // pred_region
      %837 = dma.done [#allocation3], 512
    $region28: #{encoder_forward.9} parent=1 // pred_fallthru
      _
    %838 = vsyncpa [#allocation3], 1

// kernel: encoder_forward.8
$region0: #{encoder_forward.8}
  #allocation0 [shape = 'u32[]', space=smem, size = 0x4, offset = 0x4, fixed_abs, tag = 'smem constant byte address 0x4 - core index']
  #allocation1 [shape = 'u32[144,128]{1,0:T(1,128)}', space=vmem, size = 0x12000, scoped, tag = 'internal scratch']
  %s0 = inlined_call_operand.vmem [shape: f32[16,4], index: 0, kind: input, shape index: {}]
  %s1 = inlined_call_operand.vmem [shape: f32[16,4], index: 1, kind: input, shape index: {}]
  %s2 = inlined_call_operand.vmem [shape: f32[1,4], index: 2, kind: input, shape index: {}]
  %s3 = inlined_call_operand.vmem [shape: f32[1,4], index: 3, kind: input, shape index: {}]
  %s4 = inlined_call_operand.vmem [shape: bf16[4,128], index: 4, kind: input, shape index: {}]
  %s5 = inlined_call_operand.vmem [shape: f32[1,128], index: 5, kind: input, shape index: {}]
  %s6 = inlined_call_operand.vmem [shape: bf16[4,128,256], index: 6, kind: input, shape index: {}]
  %s7 = inlined_call_operand.vmem [shape: f32[4,1,256], index: 7, kind: input, shape index: {}]
  %s8 = inlined_call_operand.vmem [shape: bf16[128,768], index: 8, kind: input, shape index: {}]
  %s9 = inlined_call_operand.vmem [shape: f32[1,768], index: 9, kind: input, shape index: {}]
  %s10 = inlined_call_operand.vmem [shape: bf16[16,768], index: 10, kind: output, shape index: {}]
  %s11 = sld [smem:[#allocation0]]
  $region50: #{encoder_forward.8} parent=0
    _
  %s13 = ssub.s32 1, %s11
  %s14 = scalar_select 0, %s13, %s11
  // Predicated region
  $region2: #{encoder_forward.8} parent=0 // pred_check
    _
  $region3: #{encoder_forward.8} parent=0 // pred_check_branch
    %16 = sbr.rel (0) target = $region5
  $region4: #{encoder_forward.8} parent=0 // pred_region
    _
  $region5: #{encoder_forward.8} parent=0 // pred_fallthru
    _
  // Predicated region
  $region6: #{encoder_forward.8} parent=0 // pred_check
    _
  $region7: #{encoder_forward.8} parent=0 // pred_check_branch
    %18 = sbr.rel (0) target = $region9
  $region8: #{encoder_forward.8} parent=0 // pred_region
    _
  $region9: #{encoder_forward.8} parent=0 // pred_fallthru
    _
  // Predicated region
  $region10: #{encoder_forward.8} parent=0 // pred_check
    _
  $region11: #{encoder_forward.8} parent=0 // pred_check_branch
    %20 = sbr.rel (0) target = $region13
  $region12: #{encoder_forward.8} parent=0 // pred_region
    _
  $region13: #{encoder_forward.8} parent=0 // pred_fallthru
    _
  // Predicated region
  $region14: #{encoder_forward.8} parent=0 // pred_check
    _
  $region15: #{encoder_forward.8} parent=0 // pred_check_branch
    %22 = sbr.rel (0) target = $region17
  $region16: #{encoder_forward.8} parent=0 // pred_region
    _
  $region17: #{encoder_forward.8} parent=0 // pred_fallthru
    _
  // Predicated region
  $region18: #{encoder_forward.8} parent=0 // pred_check
    _
  $region19: #{encoder_forward.8} parent=0 // pred_check_branch
    %24 = sbr.rel (0) target = $region21
  $region20: #{encoder_forward.8} parent=0 // pred_region
    _
  $region21: #{encoder_forward.8} parent=0 // pred_fallthru
    _
  // Predicated region
  $region22: #{encoder_forward.8} parent=0 // pred_check
    _
  $region23: #{encoder_forward.8} parent=0 // pred_check_branch
    %26 = sbr.rel (0) target = $region25
  $region24: #{encoder_forward.8} parent=0 // pred_region
    _
  $region25: #{encoder_forward.8} parent=0 // pred_fallthru
    _
  // Predicated region
  $region26: #{encoder_forward.8} parent=0 // pred_check
    _
  $region27: #{encoder_forward.8} parent=0 // pred_check_branch
    %28 = sbr.rel (0) target = $region29
  $region28: #{encoder_forward.8} parent=0 // pred_region
    _
  $region29: #{encoder_forward.8} parent=0 // pred_fallthru
    _
  // Predicated region
  $region30: #{encoder_forward.8} parent=0 // pred_check
    _
  $region31: #{encoder_forward.8} parent=0 // pred_check_branch
    %30 = sbr.rel (0) target = $region33
  $region32: #{encoder_forward.8} parent=0 // pred_region
    _
  $region33: #{encoder_forward.8} parent=0 // pred_fallthru
    _
  // Predicated region
  $region34: #{encoder_forward.8} parent=0 // pred_check
    _
  $region35: #{encoder_forward.8} parent=0 // pred_check_branch
    %32 = sbr.rel (0) target = $region37
  $region36: #{encoder_forward.8} parent=0 // pred_region
    _
  $region37: #{encoder_forward.8} parent=0 // pred_fallthru
    _
  // Predicated region
  $region38: #{encoder_forward.8} parent=0 // pred_check
    _
  $region39: #{encoder_forward.8} parent=0 // pred_check_branch
    %34 = sbr.rel (0) target = $region41
  $region40: #{encoder_forward.8} parent=0 // pred_region
    _
  $region41: #{encoder_forward.8} parent=0 // pred_fallthru
    _
  %v36 = vld [vmem:[%s0] sm:$0xff]
  %v37 = vld [vmem:[%s0 + $0x8] sm:$0xff]
  %v38 = vld [vmem:[%s2] sm:$0x1]
  %v40 = vlaneseq
  %v41 = vshrl.u32 %v40, 7
  %v42 = vsub.s32 0, %v41
  %v43 = vrot.slane %v38, %v42
  %v45 = vmul.f32 %v36, %v43
  %v46 = vmul.f32 %v37, %v43
  %v47 = vld [vmem:[%s3] sm:$0x1]
  %v49 = vlaneseq
  %v50 = vshrl.u32 %v49, 7
  %v51 = vsub.s32 0, %v50
  %v52 = vrot.slane %v47, %v51
  %v54 = vadd.f32 %v45, %v52
  %v55 = vadd.f32 %v46, %v52
  %v56 = vld [vmem:[%s1] sm:$0xff]
  %v57 = vld [vmem:[%s1 + $0x8] sm:$0xff]
  %v58 = vadd.f32 %v54, %v56
  %v59 = vadd.f32 %v55, %v57
  %v60 = vpack.c.bf16 %v59, %v58
  %v61 = vld [vmem:[%s4] sm:$0x3]
  %v62 = vld [vmem:[%s5] sm:$0x1]
  %v64 = vlaneseq
  %v65 = vshrl.u32 %v64, 7
  %v66 = vsub.s32 0, %v65
  %v67 = vrot.slane %v62, %v66
  %vm69 = vcmask 31744
  %v71 = vsel %vm69, %v60, 0
  %vm73 = vcmask 1041408
  %v75 = vsel %vm73, %v61, 0
  %77 = vmatprep.subr.bf16.mxu0 0
  %78 = vmatpush1.bf16.msra.mxu0 %v75
  %79 = vmatprep.subr.bf16.mxu0 0
  %80 = vmatpush1.bf16.msra.mxu0 0
  %81 = vmatprep.subr.bf16.mxu0 0
  %82 = vmatpush1.bf16.msra.mxu0 0
  %83 = vmatprep.subr.bf16.mxu0 0
  %84 = vmatpush1.bf16.msra.mxu0 0
  %85 = vmatprep.subr.bf16.mxu0 0
  %86 = vmatpush1.bf16.msra.mxu0 0
  %87 = vmatprep.subr.bf16.mxu0 0
  %88 = vmatpush1.bf16.msra.mxu0 0
  %89 = vmatprep.subr.bf16.mxu0 0
  %90 = vmatpush1.bf16.msra.mxu0 0
  %91 = vmatprep.subr.bf16.mxu0 0
  %92 = vmatpush1.bf16.msra.mxu0 0
  %93 = vmatprep.subr.bf16.mxu0 0
  %94 = vmatpush1.bf16.msra.mxu0 0
  %95 = vmatprep.subr.bf16.mxu0 0
  %96 = vmatpush1.bf16.msra.mxu0 0
  %97 = vmatprep.subr.bf16.mxu0 0
  %98 = vmatpush1.bf16.msra.mxu0 0
  %99 = vmatprep.subr.bf16.mxu0 0
  %100 = vmatpush1.bf16.msra.mxu0 0
  %101 = vmatprep.subr.bf16.mxu0 0
  %102 = vmatpush1.bf16.msra.mxu0 0
  %103 = vmatprep.subr.bf16.mxu0 0
  %104 = vmatpush1.bf16.msra.mxu0 0
  %105 = vmatprep.subr.bf16.mxu0 0
  %106 = vmatpush1.bf16.msra.mxu0 0
  %107 = vmatprep.subr.bf16.mxu0 0
  %108 = vmatpush1.bf16.msra.mxu0 0
  %109 = vmatprep.mubr.bf16.mxu0 0
  %110 = vmatmul.mubr.bf16.gmra.mrb[0].mxu0 %v71
  %v111 = vpop.f32.mrb[0].mxu0
  %v112 = vadd.f32 %v67, %v111
  %v113 = vpop.f32.mrb[0].mxu0
  %v114 = vpop.f32.mrb[0].mxu0
  %v115 = vadd.f32 %v67, %v114
  %v116 = vpop.f32.mrb[0].mxu0
  %117 = vdwg.mxu0
  %v118 = vpack.c.bf16 %v115, %v112
  %v119 = vld [vmem:[%s6] sm:$0xff]
  %v120 = vld [vmem:[%s6 + $0x8] sm:$0xff]
  %v121 = vld [vmem:[%s6 + $0x10] sm:$0xff]
  %v122 = vld [vmem:[%s6 + $0x18] sm:$0xff]
  %v123 = vld [vmem:[%s6 + $0x20] sm:$0xff]
  %v124 = vld [vmem:[%s6 + $0x28] sm:$0xff]
  %v125 = vld [vmem:[%s6 + $0x30] sm:$0xff]
  %v126 = vld [vmem:[%s6 + $0x38] sm:$0xff]
  %v127 = vld [vmem:[%s6 + $0x40] sm:$0xff]
  %v128 = vld [vmem:[%s6 + $0x48] sm:$0xff]
  %v129 = vld [vmem:[%s6 + $0x50] sm:$0xff]
  %v130 = vld [vmem:[%s6 + $0x58] sm:$0xff]
  %v131 = vld [vmem:[%s6 + $0x60] sm:$0xff]
  %v132 = vld [vmem:[%s6 + $0x68] sm:$0xff]
  %v133 = vld [vmem:[%s6 + $0x70] sm:$0xff]
  %v134 = vld [vmem:[%s6 + $0x78] sm:$0xff]
  %v135 = vld [vmem:[%s7] sm:$0x3]
  %v137 = vlaneseq
  %v138 = vshrl.u32 %v137, 7
  %v139 = vsub.s32 0, %v138
  %v140 = vrot.slane %v135, %v139
  %v141 = vlaneseq
  %v142 = vshrl.u32 %v141, 7
  %v143 = vsub.s32 1, %v142
  %v144 = vrot.slane %v135, %v143
  %v163 = vunpack.c.l.b16 %v119
  %v164 = vunpack.c.h.b16 %v119
  %v165 = vunpack.c.l.b16 %v120
  %v166 = vunpack.c.h.b16 %v120
  %v167 = vunpack.c.l.b16 %v121
  %v168 = vunpack.c.h.b16 %v121
  %v169 = vunpack.c.l.b16 %v122
  %v170 = vunpack.c.h.b16 %v122
  %v171 = vunpack.c.l.b16 %v123
  %v172 = vunpack.c.h.b16 %v123
  %v173 = vunpack.c.l.b16 %v124
  %v174 = vunpack.c.h.b16 %v124
  %v175 = vunpack.c.l.b16 %v125
  %v176 = vunpack.c.h.b16 %v125
  %v177 = vunpack.c.l.b16 %v126
  %v178 = vunpack.c.h.b16 %v126
  %v179 = vunpack.c.l.b16 %v127
  %v180 = vunpack.c.h.b16 %v127
  %v181 = vunpack.c.l.b16 %v128
  %v182 = vunpack.c.h.b16 %v128
  %v183 = vunpack.c.l.b16 %v129
  %v184 = vunpack.c.h.b16 %v129
  %v185 = vunpack.c.l.b16 %v130
  %v186 = vunpack.c.h.b16 %v130
  %v187 = vunpack.c.l.b16 %v131
  %v188 = vunpack.c.h.b16 %v131
  %v189 = vunpack.c.l.b16 %v132
  %v190 = vunpack.c.h.b16 %v132
  %v191 = vunpack.c.l.b16 %v133
  %v192 = vunpack.c.h.b16 %v133
  %v193 = vunpack.c.l.b16 %v134
  %v194 = vunpack.c.h.b16 %v134
  %v195 = vpack.c.b16 %v165, %v163
  %v196 = vpack.c.b16 %v166, %v164
  %v197 = vpack.c.b16 %v169, %v167
  %v198 = vpack.c.b16 %v170, %v168
  %v199 = vpack.c.b16 %v173, %v171
  %v200 = vpack.c.b16 %v174, %v172
  %v201 = vpack.c.b16 %v177, %v175
  %v202 = vpack.c.b16 %v178, %v176
  %v203 = vpack.c.b16 %v181, %v179
  %v204 = vpack.c.b16 %v182, %v180
  %v205 = vpack.c.b16 %v185, %v183
  %v206 = vpack.c.b16 %v186, %v184
  %v207 = vpack.c.b16 %v189, %v187
  %v208 = vpack.c.b16 %v190, %v188
  %v209 = vpack.c.b16 %v193, %v191
  %v210 = vpack.c.b16 %v194, %v192
  %227 = vmatprep.subr.bf16.mxu0 %v196
  %228 = vmatpush1.bf16.msra.mxu0 %v195
  %229 = vmatprep.subr.bf16.mxu0 %v198
  %230 = vmatpush1.bf16.msra.mxu0 %v197
  %231 = vmatprep.subr.bf16.mxu0 %v200
  %232 = vmatpush1.bf16.msra.mxu0 %v199
  %233 = vmatprep.subr.bf16.mxu0 %v202
  %234 = vmatpush1.bf16.msra.mxu0 %v201
  %235 = vmatprep.subr.bf16.mxu0 %v204
  %236 = vmatpush1.bf16.msra.mxu0 %v203
  %237 = vmatprep.subr.bf16.mxu0 %v206
  %238 = vmatpush1.bf16.msra.mxu0 %v205
  %239 = vmatprep.subr.bf16.mxu0 %v208
  %240 = vmatpush1.bf16.msra.mxu0 %v207
  %241 = vmatprep.subr.bf16.mxu0 %v210
  %242 = vmatpush1.bf16.msra.mxu0 %v209
  %243 = vmatprep.subr.bf16.mxu0 0
  %244 = vmatpush1.bf16.msra.mxu0 0
  %245 = vmatprep.subr.bf16.mxu0 0
  %246 = vmatpush1.bf16.msra.mxu0 0
  %247 = vmatprep.subr.bf16.mxu0 0
  %248 = vmatpush1.bf16.msra.mxu0 0
  %249 = vmatprep.subr.bf16.mxu0 0
  %250 = vmatpush1.bf16.msra.mxu0 0
  %251 = vmatprep.subr.bf16.mxu0 0
  %252 = vmatpush1.bf16.msra.mxu0 0
  %253 = vmatprep.subr.bf16.mxu0 0
  %254 = vmatpush1.bf16.msra.mxu0 0
  %255 = vmatprep.subr.bf16.mxu0 0
  %256 = vmatpush1.bf16.msra.mxu0 0
  %257 = vmatprep.subr.bf16.mxu0 0
  %258 = vmatpush1.bf16.msra.mxu0 0
  %259 = vmatprep.mubr.bf16.mxu0 0
  %260 = vmatmul.mubr.bf16.gmra.mrb[0].mxu0 %v118
  %v261 = vpop.f32.mrb[0].mxu0
  %v262 = vadd.f32 %v140, %v261
  %v263 = vpop.f32.mrb[0].mxu0
  %v264 = vadd.f32 %v144, %v263
  %v265 = vpop.f32.mrb[0].mxu0
  %v266 = vadd.f32 %v140, %v265
  %v267 = vpop.f32.mrb[0].mxu0
  %v268 = vadd.f32 %v144, %v267
  %269 = vdwg.mxu0
  %v270 = vmax.f32 %v262, 0.0
  %v271 = vmax.f32 %v266, 0.0
  %v272 = vxor.u32 %v264, 2147483648
  %v273 = vxor.u32 %v268, 2147483648
  %v274 = vmul.f32 %v272, 1.442695
  %v275 = vpow.pop %v274
  %v276 = vmul.f32 %v273, 1.442695
  %v277 = vpow.pop %v276
  %v278 = vadd.f32 %v275, 1.0
  %v279 = vadd.f32 %v277, 1.0
  %v280 = vrcp.pop %v278
  %v281 = vmul.f32 1.0, %v280
  %v282 = vrcp.pop %v279
  %v283 = vmul.f32 1.0, %v282
  %v284 = vmul.f32 %v270, %v281
  %v285 = vmul.f32 %v271, %v283
  %v286 = vsub.f32 1.0, %v281
  %v287 = vsub.f32 1.0, %v283
  %v288 = vmul.f32 %v112, %v286
  %v289 = vmul.f32 %v115, %v287
  %v290 = vadd.f32 %v284, %v288
  %v291 = vadd.f32 %v285, %v289
  %v292 = vpack.c.bf16 %v291, %v290
  %s293 = scalar_lea.vmem %s6, 128
  %v294 = vld [vmem:[%s293] sm:$0xff]
  %v295 = vld [vmem:[%s293 + $0x8] sm:$0xff]
  %v296 = vld [vmem:[%s293 + $0x10] sm:$0xff]
  %v297 = vld [vmem:[%s293 + $0x18] sm:$0xff]
  %v298 = vld [vmem:[%s293 + $0x20] sm:$0xff]
  %v299 = vld [vmem:[%s293 + $0x28] sm:$0xff]
  %v300 = vld [vmem:[%s293 + $0x30] sm:$0xff]
  %v301 = vld [vmem:[%s293 + $0x38] sm:$0xff]
  %v302 = vld [vmem:[%s293 + $0x40] sm:$0xff]
  %v303 = vld [vmem:[%s293 + $0x48] sm:$0xff]
  %v304 = vld [vmem:[%s293 + $0x50] sm:$0xff]
  %v305 = vld [vmem:[%s293 + $0x58] sm:$0xff]
  %v306 = vld [vmem:[%s293 + $0x60] sm:$0xff]
  %v307 = vld [vmem:[%s293 + $0x68] sm:$0xff]
  %v308 = vld [vmem:[%s293 + $0x70] sm:$0xff]
  %v309 = vld [vmem:[%s293 + $0x78] sm:$0xff]
  %s310 = scalar_lea.vmem %s7, 2
  %v311 = vld [vmem:[%s310] sm:$0x3]
  %v313 = vlaneseq
  %v314 = vshrl.u32 %v313, 7
  %v315 = vsub.s32 0, %v314
  %v316 = vrot.slane %v311, %v315
  %v317 = vlaneseq
  %v318 = vshrl.u32 %v317, 7
  %v319 = vsub.s32 1, %v318
  %v320 = vrot.slane %v311, %v319
  %v339 = vunpack.c.l.b16 %v294
  %v340 = vunpack.c.h.b16 %v294
  %v341 = vunpack.c.l.b16 %v295
  %v342 = vunpack.c.h.b16 %v295
  %v343 = vunpack.c.l.b16 %v296
  %v344 = vunpack.c.h.b16 %v296
  %v345 = vunpack.c.l.b16 %v297
  %v346 = vunpack.c.h.b16 %v297
  %v347 = vunpack.c.l.b16 %v298
  %v348 = vunpack.c.h.b16 %v298
  %v349 = vunpack.c.l.b16 %v299
  %v350 = vunpack.c.h.b16 %v299
  %v351 = vunpack.c.l.b16 %v300
  %v352 = vunpack.c.h.b16 %v300
  %v353 = vunpack.c.l.b16 %v301
  %v354 = vunpack.c.h.b16 %v301
  %v355 = vunpack.c.l.b16 %v302
  %v356 = vunpack.c.h.b16 %v302
  %v357 = vunpack.c.l.b16 %v303
  %v358 = vunpack.c.h.b16 %v303
  %v359 = vunpack.c.l.b16 %v304
  %v360 = vunpack.c.h.b16 %v304
  %v361 = vunpack.c.l.b16 %v305
  %v362 = vunpack.c.h.b16 %v305
  %v363 = vunpack.c.l.b16 %v306
  %v364 = vunpack.c.h.b16 %v306
  %v365 = vunpack.c.l.b16 %v307
  %v366 = vunpack.c.h.b16 %v307
  %v367 = vunpack.c.l.b16 %v308
  %v368 = vunpack.c.h.b16 %v308
  %v369 = vunpack.c.l.b16 %v309
  %v370 = vunpack.c.h.b16 %v309
  %v371 = vpack.c.b16 %v341, %v339
  %v372 = vpack.c.b16 %v342, %v340
  %v373 = vpack.c.b16 %v345, %v343
  %v374 = vpack.c.b16 %v346, %v344
  %v375 = vpack.c.b16 %v349, %v347
  %v376 = vpack.c.b16 %v350, %v348
  %v377 = vpack.c.b16 %v353, %v351
  %v378 = vpack.c.b16 %v354, %v352
  %v379 = vpack.c.b16 %v357, %v355
  %v380 = vpack.c.b16 %v358, %v356
  %v381 = vpack.c.b16 %v361, %v359
  %v382 = vpack.c.b16 %v362, %v360
  %v383 = vpack.c.b16 %v365, %v363
  %v384 = vpack.c.b16 %v366, %v364
  %v385 = vpack.c.b16 %v369, %v367
  %v386 = vpack.c.b16 %v370, %v368
  %403 = vmatprep.subr.bf16.mxu0 %v372
  %404 = vmatpush1.bf16.msra.mxu0 %v371
  %405 = vmatprep.subr.bf16.mxu0 %v374
  %406 = vmatpush1.bf16.msra.mxu0 %v373
  %407 = vmatprep.subr.bf16.mxu0 %v376
  %408 = vmatpush1.bf16.msra.mxu0 %v375
  %409 = vmatprep.subr.bf16.mxu0 %v378
  %410 = vmatpush1.bf16.msra.mxu0 %v377
  %411 = vmatprep.subr.bf16.mxu0 %v380
  %412 = vmatpush1.bf16.msra.mxu0 %v379
  %413 = vmatprep.subr.bf16.mxu0 %v382
  %414 = vmatpush1.bf16.msra.mxu0 %v381
  %415 = vmatprep.subr.bf16.mxu0 %v384
  %416 = vmatpush1.bf16.msra.mxu0 %v383
  %417 = vmatprep.subr.bf16.mxu0 %v386
  %418 = vmatpush1.bf16.msra.mxu0 %v385
  %419 = vmatprep.subr.bf16.mxu0 0
  %420 = vmatpush1.bf16.msra.mxu0 0
  %421 = vmatprep.subr.bf16.mxu0 0
  %422 = vmatpush1.bf16.msra.mxu0 0
  %423 = vmatprep.subr.bf16.mxu0 0
  %424 = vmatpush1.bf16.msra.mxu0 0
  %425 = vmatprep.subr.bf16.mxu0 0
  %426 = vmatpush1.bf16.msra.mxu0 0
  %427 = vmatprep.subr.bf16.mxu0 0
  %428 = vmatpush1.bf16.msra.mxu0 0
  %429 = vmatprep.subr.bf16.mxu0 0
  %430 = vmatpush1.bf16.msra.mxu0 0
  %431 = vmatprep.subr.bf16.mxu0 0
  %432 = vmatpush1.bf16.msra.mxu0 0
  %433 = vmatprep.subr.bf16.mxu0 0
  %434 = vmatpush1.bf16.msra.mxu0 0
  %435 = vmatprep.mubr.bf16.mxu0 0
  %436 = vmatmul.mubr.bf16.gmra.mrb[0].mxu0 %v292
  %v437 = vpop.f32.mrb[0].mxu0
  %v438 = vadd.f32 %v316, %v437
  %v439 = vpop.f32.mrb[0].mxu0
  %v440 = vadd.f32 %v320, %v439
  %v441 = vpop.f32.mrb[0].mxu0
  %v442 = vadd.f32 %v316, %v441
  %v443 = vpop.f32.mrb[0].mxu0
  %v444 = vadd.f32 %v320, %v443
  %445 = vdwg.mxu0
  %v446 = vmax.f32 %v438, 0.0
  %v447 = vmax.f32 %v442, 0.0
  %v448 = vxor.u32 %v440, 2147483648
  %v449 = vxor.u32 %v444, 2147483648
  %v450 = vmul.f32 %v448, 1.442695
  %v451 = vpow.pop %v450
  %v452 = vmul.f32 %v449, 1.442695
  %v453 = vpow.pop %v452
  %v454 = vadd.f32 %v451, 1.0
  %v455 = vadd.f32 %v453, 1.0
  %v456 = vrcp.pop %v454
  %v457 = vmul.f32 1.0, %v456
  %v458 = vrcp.pop %v455
  %v459 = vmul.f32 1.0, %v458
  %v460 = vmul.f32 %v446, %v457
  %v461 = vmul.f32 %v447, %v459
  %v462 = vsub.f32 1.0, %v457
  %v463 = vsub.f32 1.0, %v459
  %v464 = vmul.f32 %v290, %v462
  %v465 = vmul.f32 %v291, %v463
  %v466 = vadd.f32 %v460, %v464
  %v467 = vadd.f32 %v461, %v465
  %v468 = vpack.c.bf16 %v467, %v466
  %s469 = scalar_lea.vmem %s6, 256
  %v470 = vld [vmem:[%s469] sm:$0xff]
  %v471 = vld [vmem:[%s469 + $0x8] sm:$0xff]
  %v472 = vld [vmem:[%s469 + $0x10] sm:$0xff]
  %v473 = vld [vmem:[%s469 + $0x18] sm:$0xff]
  %v474 = vld [vmem:[%s469 + $0x20] sm:$0xff]
  %v475 = vld [vmem:[%s469 + $0x28] sm:$0xff]
  %v476 = vld [vmem:[%s469 + $0x30] sm:$0xff]
  %v477 = vld [vmem:[%s469 + $0x38] sm:$0xff]
  %v478 = vld [vmem:[%s469 + $0x40] sm:$0xff]
  %v479 = vld [vmem:[%s469 + $0x48] sm:$0xff]
  %v480 = vld [vmem:[%s469 + $0x50] sm:$0xff]
  %v481 = vld [vmem:[%s469 + $0x58] sm:$0xff]
  %v482 = vld [vmem:[%s469 + $0x60] sm:$0xff]
  %v483 = vld [vmem:[%s469 + $0x68] sm:$0xff]
  %v484 = vld [vmem:[%s469 + $0x70] sm:$0xff]
  %v485 = vld [vmem:[%s469 + $0x78] sm:$0xff]
  %s486 = scalar_lea.vmem %s7, 4
  %v487 = vld [vmem:[%s486] sm:$0x3]
  %v489 = vlaneseq
  %v490 = vshrl.u32 %v489, 7
  %v491 = vsub.s32 0, %v490
  %v492 = vrot.slane %v487, %v491
  %v493 = vlaneseq
  %v494 = vshrl.u32 %v493, 7
  %v495 = vsub.s32 1, %v494
  %v496 = vrot.slane %v487, %v495
  %v515 = vunpack.c.l.b16 %v470
  %v516 = vunpack.c.h.b16 %v470
  %v517 = vunpack.c.l.b16 %v471
  %v518 = vunpack.c.h.b16 %v471
  %v519 = vunpack.c.l.b16 %v472
  %v520 = vunpack.c.h.b16 %v472
  %v521 = vunpack.c.l.b16 %v473
  %v522 = vunpack.c.h.b16 %v473
  %v523 = vunpack.c.l.b16 %v474
  %v524 = vunpack.c.h.b16 %v474
  %v525 = vunpack.c.l.b16 %v475
  %v526 = vunpack.c.h.b16 %v475
  %v527 = vunpack.c.l.b16 %v476
  %v528 = vunpack.c.h.b16 %v476
  %v529 = vunpack.c.l.b16 %v477
  %v530 = vunpack.c.h.b16 %v477
  %v531 = vunpack.c.l.b16 %v478
  %v532 = vunpack.c.h.b16 %v478
  %v533 = vunpack.c.l.b16 %v479
  %v534 = vunpack.c.h.b16 %v479
  %v535 = vunpack.c.l.b16 %v480
  %v536 = vunpack.c.h.b16 %v480
  %v537 = vunpack.c.l.b16 %v481
  %v538 = vunpack.c.h.b16 %v481
  %v539 = vunpack.c.l.b16 %v482
  %v540 = vunpack.c.h.b16 %v482
  %v541 = vunpack.c.l.b16 %v483
  %v542 = vunpack.c.h.b16 %v483
  %v543 = vunpack.c.l.b16 %v484
  %v544 = vunpack.c.h.b16 %v484
  %v545 = vunpack.c.l.b16 %v485
  %v546 = vunpack.c.h.b16 %v485
  %v547 = vpack.c.b16 %v517, %v515
  %v548 = vpack.c.b16 %v518, %v516
  %v549 = vpack.c.b16 %v521, %v519
  %v550 = vpack.c.b16 %v522, %v520
  %v551 = vpack.c.b16 %v525, %v523
  %v552 = vpack.c.b16 %v526, %v524
  %v553 = vpack.c.b16 %v529, %v527
  %v554 = vpack.c.b16 %v530, %v528
  %v555 = vpack.c.b16 %v533, %v531
  %v556 = vpack.c.b16 %v534, %v532
  %v557 = vpack.c.b16 %v537, %v535
  %v558 = vpack.c.b16 %v538, %v536
  %v559 = vpack.c.b16 %v541, %v539
  %v560 = vpack.c.b16 %v542, %v540
  %v561 = vpack.c.b16 %v545, %v543
  %v562 = vpack.c.b16 %v546, %v544
  %579 = vmatprep.subr.bf16.mxu0 %v548
  %580 = vmatpush1.bf16.msra.mxu0 %v547
  %581 = vmatprep.subr.bf16.mxu0 %v550
  %582 = vmatpush1.bf16.msra.mxu0 %v549
  %583 = vmatprep.subr.bf16.mxu0 %v552
  %584 = vmatpush1.bf16.msra.mxu0 %v551
  %585 = vmatprep.subr.bf16.mxu0 %v554
  %586 = vmatpush1.bf16.msra.mxu0 %v553
  %587 = vmatprep.subr.bf16.mxu0 %v556
  %588 = vmatpush1.bf16.msra.mxu0 %v555
  %589 = vmatprep.subr.bf16.mxu0 %v558
  %590 = vmatpush1.bf16.msra.mxu0 %v557
  %591 = vmatprep.subr.bf16.mxu0 %v560
  %592 = vmatpush1.bf16.msra.mxu0 %v559
  %593 = vmatprep.subr.bf16.mxu0 %v562
  %594 = vmatpush1.bf16.msra.mxu0 %v561
  %595 = vmatprep.subr.bf16.mxu0 0
  %596 = vmatpush1.bf16.msra.mxu0 0
  %597 = vmatprep.subr.bf16.mxu0 0
  %598 = vmatpush1.bf16.msra.mxu0 0
  %599 = vmatprep.subr.bf16.mxu0 0
  %600 = vmatpush1.bf16.msra.mxu0 0
  %601 = vmatprep.subr.bf16.mxu0 0
  %602 = vmatpush1.bf16.msra.mxu0 0
  %603 = vmatprep.subr.bf16.mxu0 0
  %604 = vmatpush1.bf16.msra.mxu0 0
  %605 = vmatprep.subr.bf16.mxu0 0
  %606 = vmatpush1.bf16.msra.mxu0 0
  %607 = vmatprep.subr.bf16.mxu0 0
  %608 = vmatpush1.bf16.msra.mxu0 0
  %609 = vmatprep.subr.bf16.mxu0 0
  %610 = vmatpush1.bf16.msra.mxu0 0
  %611 = vmatprep.mubr.bf16.mxu0 0
  %612 = vmatmul.mubr.bf16.gmra.mrb[0].mxu0 %v468
  %v613 = vpop.f32.mrb[0].mxu0
  %v614 = vadd.f32 %v492, %v613
  %v615 = vpop.f32.mrb[0].mxu0
  %v616 = vadd.f32 %v496, %v615
  %v617 = vpop.f32.mrb[0].mxu0
  %v618 = vadd.f32 %v492, %v617
  %v619 = vpop.f32.mrb[0].mxu0
  %v620 = vadd.f32 %v496, %v619
  %621 = vdwg.mxu0
  %v622 = vmax.f32 %v614, 0.0
  %v623 = vmax.f32 %v618, 0.0
  %v624 = vxor.u32 %v616, 2147483648
  %v625 = vxor.u32 %v620, 2147483648
  %v626 = vmul.f32 %v624, 1.442695
  %v627 = vpow.pop %v626
  %v628 = vmul.f32 %v625, 1.442695
  %v629 = vpow.pop %v628
  %v630 = vadd.f32 %v627, 1.0
  %v631 = vadd.f32 %v629, 1.0
  %v632 = vrcp.pop %v630
  %v633 = vmul.f32 1.0, %v632
  %v634 = vrcp.pop %v631
  %v635 = vmul.f32 1.0, %v634
  %v636 = vmul.f32 %v622, %v633
  %v637 = vmul.f32 %v623, %v635
  %v638 = vsub.f32 1.0, %v633
  %v639 = vsub.f32 1.0, %v635
  %v640 = vmul.f32 %v466, %v638
  %v641 = vmul.f32 %v467, %v639
  %v642 = vadd.f32 %v636, %v640
  %v643 = vadd.f32 %v637, %v641
  %v644 = vpack.c.bf16 %v643, %v642
  %s645 = scalar_lea.vmem %s6, 384
  %v646 = vld [vmem:[%s645] sm:$0xff]
  %v647 = vld [vmem:[%s645 + $0x8] sm:$0xff]
  %v648 = vld [vmem:[%s645 + $0x10] sm:$0xff]
  %v649 = vld [vmem:[%s645 + $0x18] sm:$0xff]
  %v650 = vld [vmem:[%s645 + $0x20] sm:$0xff]
  %v651 = vld [vmem:[%s645 + $0x28] sm:$0xff]
  %v652 = vld [vmem:[%s645 + $0x30] sm:$0xff]
  %v653 = vld [vmem:[%s645 + $0x38] sm:$0xff]
  %v654 = vld [vmem:[%s645 + $0x40] sm:$0xff]
  %v655 = vld [vmem:[%s645 + $0x48] sm:$0xff]
  %v656 = vld [vmem:[%s645 + $0x50] sm:$0xff]
  %v657 = vld [vmem:[%s645 + $0x58] sm:$0xff]
  %v658 = vld [vmem:[%s645 + $0x60] sm:$0xff]
  %v659 = vld [vmem:[%s645 + $0x68] sm:$0xff]
  %v660 = vld [vmem:[%s645 + $0x70] sm:$0xff]
  %v661 = vld [vmem:[%s645 + $0x78] sm:$0xff]
  %s662 = scalar_lea.vmem %s7, 6
  %v663 = vld [vmem:[%s662] sm:$0x3]
  %v665 = vlaneseq
  %v666 = vshrl.u32 %v665, 7
  %v667 = vsub.s32 0, %v666
  %v668 = vrot.slane %v663, %v667
  %v669 = vlaneseq
  %v670 = vshrl.u32 %v669, 7
  %v671 = vsub.s32 1, %v670
  %v672 = vrot.slane %v663, %v671
  %v691 = vunpack.c.l.b16 %v646
  %v692 = vunpack.c.h.b16 %v646
  %v693 = vunpack.c.l.b16 %v647
  %v694 = vunpack.c.h.b16 %v647
  %v695 = vunpack.c.l.b16 %v648
  %v696 = vunpack.c.h.b16 %v648
  %v697 = vunpack.c.l.b16 %v649
  %v698 = vunpack.c.h.b16 %v649
  %v699 = vunpack.c.l.b16 %v650
  %v700 = vunpack.c.h.b16 %v650
  %v701 = vunpack.c.l.b16 %v651
  %v702 = vunpack.c.h.b16 %v651
  %v703 = vunpack.c.l.b16 %v652
  %v704 = vunpack.c.h.b16 %v652
  %v705 = vunpack.c.l.b16 %v653
  %v706 = vunpack.c.h.b16 %v653
  %v707 = vunpack.c.l.b16 %v654
  %v708 = vunpack.c.h.b16 %v654
  %v709 = vunpack.c.l.b16 %v655
  %v710 = vunpack.c.h.b16 %v655
  %v711 = vunpack.c.l.b16 %v656
  %v712 = vunpack.c.h.b16 %v656
  %v713 = vunpack.c.l.b16 %v657
  %v714 = vunpack.c.h.b16 %v657
  %v715 = vunpack.c.l.b16 %v658
  %v716 = vunpack.c.h.b16 %v658
  %v717 = vunpack.c.l.b16 %v659
  %v718 = vunpack.c.h.b16 %v659
  %v719 = vunpack.c.l.b16 %v660
  %v720 = vunpack.c.h.b16 %v660
  %v721 = vunpack.c.l.b16 %v661
  %v722 = vunpack.c.h.b16 %v661
  %v723 = vpack.c.b16 %v693, %v691
  %v724 = vpack.c.b16 %v694, %v692
  %v725 = vpack.c.b16 %v697, %v695
  %v726 = vpack.c.b16 %v698, %v696
  %v727 = vpack.c.b16 %v701, %v699
  %v728 = vpack.c.b16 %v702, %v700
  %v729 = vpack.c.b16 %v705, %v703
  %v730 = vpack.c.b16 %v706, %v704
  %v731 = vpack.c.b16 %v709, %v707
  %v732 = vpack.c.b16 %v710, %v708
  %v733 = vpack.c.b16 %v713, %v711
  %v734 = vpack.c.b16 %v714, %v712
  %v735 = vpack.c.b16 %v717, %v715
  %v736 = vpack.c.b16 %v718, %v716
  %v737 = vpack.c.b16 %v721, %v719
  %v738 = vpack.c.b16 %v722, %v720
  %755 = vmatprep.subr.bf16.mxu0 %v724
  %756 = vmatpush1.bf16.msra.mxu0 %v723
  %757 = vmatprep.subr.bf16.mxu0 %v726
  %758 = vmatpush1.bf16.msra.mxu0 %v725
  %759 = vmatprep.subr.bf16.mxu0 %v728
  %760 = vmatpush1.bf16.msra.mxu0 %v727
  %761 = vmatprep.subr.bf16.mxu0 %v730
  %762 = vmatpush1.bf16.msra.mxu0 %v729
  %763 = vmatprep.subr.bf16.mxu0 %v732
  %764 = vmatpush1.bf16.msra.mxu0 %v731
  %765 = vmatprep.subr.bf16.mxu0 %v734
  %766 = vmatpush1.bf16.msra.mxu0 %v733
  %767 = vmatprep.subr.bf16.mxu0 %v736
  %768 = vmatpush1.bf16.msra.mxu0 %v735
  %769 = vmatprep.subr.bf16.mxu0 %v738
  %770 = vmatpush1.bf16.msra.mxu0 %v737
  %771 = vmatprep.subr.bf16.mxu0 0
  %772 = vmatpush1.bf16.msra.mxu0 0
  %773 = vmatprep.subr.bf16.mxu0 0
  %774 = vmatpush1.bf16.msra.mxu0 0
  %775 = vmatprep.subr.bf16.mxu0 0
  %776 = vmatpush1.bf16.msra.mxu0 0
  %777 = vmatprep.subr.bf16.mxu0 0
  %778 = vmatpush1.bf16.msra.mxu0 0
  %779 = vmatprep.subr.bf16.mxu0 0
  %780 = vmatpush1.bf16.msra.mxu0 0
  %781 = vmatprep.subr.bf16.mxu0 0
  %782 = vmatpush1.bf16.msra.mxu0 0
  %783 = vmatprep.subr.bf16.mxu0 0
  %784 = vmatpush1.bf16.msra.mxu0 0
  %785 = vmatprep.subr.bf16.mxu0 0
  %786 = vmatpush1.bf16.msra.mxu0 0
  %787 = vmatprep.mubr.bf16.mxu0 0
  %788 = vmatmul.mubr.bf16.gmra.mrb[0].mxu0 %v644
  %v789 = vpop.f32.mrb[0].mxu0
  %v790 = vadd.f32 %v668, %v789
  %v791 = vpop.f32.mrb[0].mxu0
  %v792 = vadd.f32 %v672, %v791
  %v793 = vpop.f32.mrb[0].mxu0
  %v794 = vadd.f32 %v668, %v793
  %v795 = vpop.f32.mrb[0].mxu0
  %v796 = vadd.f32 %v672, %v795
  %797 = vdwg.mxu0
  %v798 = vmax.f32 %v790, 0.0
  %v799 = vmax.f32 %v794, 0.0
  %v800 = vxor.u32 %v792, 2147483648
  %v801 = vxor.u32 %v796, 2147483648
  %v802 = vmul.f32 %v800, 1.442695
  %v803 = vpow.pop %v802
  %v804 = vmul.f32 %v801, 1.442695
  %v805 = vpow.pop %v804
  %v806 = vadd.f32 %v803, 1.0
  %v807 = vadd.f32 %v805, 1.0
  %v808 = vrcp.pop %v806
  %v809 = vmul.f32 1.0, %v808
  %v810 = vrcp.pop %v807
  %v811 = vmul.f32 1.0, %v810
  %v812 = vmul.f32 %v798, %v809
  %v813 = vmul.f32 %v799, %v811
  %v814 = vsub.f32 1.0, %v809
  %v815 = vsub.f32 1.0, %v811
  %v816 = vmul.f32 %v642, %v814
  %v817 = vmul.f32 %v643, %v815
  %v818 = vadd.f32 %v812, %v816
  %v819 = vadd.f32 %v813, %v817
  %v820 = vpack.c.bf16 %v819, %v818
  %v821 = vld [vmem:[%s8] sm:$0xff]
  %v822 = vld [vmem:[%s8 + $0x8] sm:$0xff]
  %v823 = vld [vmem:[%s8 + $0x10] sm:$0xff]
  %v824 = vld [vmem:[%s8 + $0x18] sm:$0xff]
  %v825 = vld [vmem:[%s8 + $0x20] sm:$0xff]
  %v826 = vld [vmem:[%s8 + $0x28] sm:$0xff]
  %v827 = vld [vmem:[%s8 + $0x30] sm:$0xff]
  %v828 = vld [vmem:[%s8 + $0x38] sm:$0xff]
  %v829 = vld [vmem:[%s8 + $0x40] sm:$0xff]
  %v830 = vld [vmem:[%s8 + $0x48] sm:$0xff]
  %v831 = vld [vmem:[%s8 + $0x50] sm:$0xff]
  %v832 = vld [vmem:[%s8 + $0x58] sm:$0xff]
  %v833 = vld [vmem:[%s8 + $0x60] sm:$0xff]
  %v834 = vld [vmem:[%s8 + $0x68] sm:$0xff]
  %v835 = vld [vmem:[%s8 + $0x70] sm:$0xff]
  %v836 = vld [vmem:[%s8 + $0x78] sm:$0xff]
  %v837 = vld [vmem:[%s8 + $0x80] sm:$0xff]
  %v838 = vld [vmem:[%s8 + $0x88] sm:$0xff]
  %v839 = vld [vmem:[%s8 + $0x90] sm:$0xff]
  %v840 = vld [vmem:[%s8 + $0x98] sm:$0xff]
  %v841 = vld [vmem:[%s8 + $0xa0] sm:$0xff]
  %v842 = vld [vmem:[%s8 + $0xa8] sm:$0xff]
  %v843 = vld [vmem:[%s8 + $0xb0] sm:$0xff]
  %v844 = vld [vmem:[%s8 + $0xb8] sm:$0xff]
  %v845 = vld [vmem:[%s8 + $0xc0] sm:$0xff]
  %v846 = vld [vmem:[%s8 + $0xc8] sm:$0xff]
  %v847 = vld [vmem:[%s8 + $0xd0] sm:$0xff]
  %v848 = vld [vmem:[%s8 + $0xd8] sm:$0xff]
  %v849 = vld [vmem:[%s8 + $0xe0] sm:$0xff]
  %v850 = vld [vmem:[%s8 + $0xe8] sm:$0xff]
  %v851 = vld [vmem:[%s8 + $0xf0] sm:$0xff]
  %v852 = vld [vmem:[%s8 + $0xf8] sm:$0xff]
  %v853 = vld [vmem:[%s8 + $0x100] sm:$0xff]
  %v854 = vld [vmem:[%s8 + $0x108] sm:$0xff]
  %v855 = vld [vmem:[%s8 + $0x110] sm:$0xff]
  %v856 = vld [vmem:[%s8 + $0x118] sm:$0xff]
  %v857 = vld [vmem:[%s8 + $0x120] sm:$0xff]
  %v858 = vld [vmem:[%s8 + $0x128] sm:$0xff]
  %v859 = vld [vmem:[%s8 + $0x130] sm:$0xff]
  %v860 = vld [vmem:[%s8 + $0x138] sm:$0xff]
  %v861 = vld [vmem:[%s8 + $0x140] sm:$0xff]
  %v862 = vld [vmem:[%s8 + $0x148] sm:$0xff]
  %v863 = vld [vmem:[%s8 + $0x150] sm:$0xff]
  %v864 = vld [vmem:[%s8 + $0x158] sm:$0xff]
  %v865 = vld [vmem:[%s8 + $0x160] sm:$0xff]
  %v866 = vld [vmem:[%s8 + $0x168] sm:$0xff]
  %v867 = vld [vmem:[%s8 + $0x170] sm:$0xff]
  %v868 = vld [vmem:[%s8 + $0x178] sm:$0xff]
  %v869 = vld [vmem:[%s9] sm:$0x3f]
  %v871 = vlaneseq
  %v872 = vshrl.u32 %v871, 7
  %v873 = vsub.s32 0, %v872
  %v874 = vrot.slane %v869, %v873
  %v875 = vlaneseq
  %v876 = vshrl.u32 %v875, 7
  %v877 = vsub.s32 1, %v876
  %v878 = vrot.slane %v869, %v877
  %v879 = vlaneseq
  %v880 = vshrl.u32 %v879, 7
  %v881 = vsub.s32 2, %v880
  %v882 = vrot.slane %v869, %v881
  %v883 = vlaneseq
  %v884 = vshrl.u32 %v883, 7
  %v885 = vsub.s32 3, %v884
  %v886 = vrot.slane %v869, %v885
  %v887 = vlaneseq
  %v888 = vshrl.u32 %v887, 7
  %v889 = vsub.s32 4, %v888
  %v890 = vrot.slane %v869, %v889
  %v891 = vlaneseq
  %v892 = vshrl.u32 %v891, 7
  %v893 = vsub.s32 5, %v892
  %v894 = vrot.slane %v869, %v893
  %v949 = vunpack.c.l.b16 %v821
  %v950 = vunpack.c.h.b16 %v821
  %v951 = vunpack.c.l.b16 %v822
  %v952 = vunpack.c.h.b16 %v822
  %v953 = vunpack.c.l.b16 %v823
  %v954 = vunpack.c.h.b16 %v823
  %v955 = vunpack.c.l.b16 %v824
  %v956 = vunpack.c.h.b16 %v824
  %v957 = vunpack.c.l.b16 %v825
  %v958 = vunpack.c.h.b16 %v825
  %v959 = vunpack.c.l.b16 %v826
  %v960 = vunpack.c.h.b16 %v826
  %v961 = vunpack.c.l.b16 %v827
  %v962 = vunpack.c.h.b16 %v827
  %v963 = vunpack.c.l.b16 %v828
  %v964 = vunpack.c.h.b16 %v828
  %v965 = vunpack.c.l.b16 %v829
  %v966 = vunpack.c.h.b16 %v829
  %v967 = vunpack.c.l.b16 %v830
  %v968 = vunpack.c.h.b16 %v830
  %v969 = vunpack.c.l.b16 %v831
  %v970 = vunpack.c.h.b16 %v831
  %v971 = vunpack.c.l.b16 %v832
  %v972 = vunpack.c.h.b16 %v832
  %v973 = vunpack.c.l.b16 %v833
  %v974 = vunpack.c.h.b16 %v833
  %v975 = vunpack.c.l.b16 %v834
  %v976 = vunpack.c.h.b16 %v834
  %v977 = vunpack.c.l.b16 %v835
  %v978 = vunpack.c.h.b16 %v835
  %v979 = vunpack.c.l.b16 %v836
  %v980 = vunpack.c.h.b16 %v836
  %v981 = vunpack.c.l.b16 %v837
  %v982 = vunpack.c.h.b16 %v837
  %v983 = vunpack.c.l.b16 %v838
  %v984 = vunpack.c.h.b16 %v838
  %v985 = vunpack.c.l.b16 %v839
  %v986 = vunpack.c.h.b16 %v839
  %v987 = vunpack.c.l.b16 %v840
  %v988 = vunpack.c.h.b16 %v840
  %v989 = vunpack.c.l.b16 %v841
  %v990 = vunpack.c.h.b16 %v841
  %v991 = vunpack.c.l.b16 %v842
  %v992 = vunpack.c.h.b16 %v842
  %v993 = vunpack.c.l.b16 %v843
  %v994 = vunpack.c.h.b16 %v843
  %v995 = vunpack.c.l.b16 %v844
  %v996 = vunpack.c.h.b16 %v844
  %v997 = vunpack.c.l.b16 %v845
  %v998 = vunpack.c.h.b16 %v845
  %v999 = vunpack.c.l.b16 %v846
  %v1000 = vunpack.c.h.b16 %v846
  %v1001 = vunpack.c.l.b16 %v847
  %v1002 = vunpack.c.h.b16 %v847
  %v1003 = vunpack.c.l.b16 %v848
  %v1004 = vunpack.c.h.b16 %v848
  %v1005 = vunpack.c.l.b16 %v849
  %v1006 = vunpack.c.h.b16 %v849
  %v1007 = vunpack.c.l.b16 %v850
  %v1008 = vunpack.c.h.b16 %v850
  %v1009 = vunpack.c.l.b16 %v851
  %v1010 = vunpack.c.h.b16 %v851
  %v1011 = vunpack.c.l.b16 %v852
  %v1012 = vunpack.c.h.b16 %v852
  %v1013 = vunpack.c.l.b16 %v853
  %v1014 = vunpack.c.h.b16 %v853
  %v1015 = vunpack.c.l.b16 %v854
  %v1016 = vunpack.c.h.b16 %v854
  %v1017 = vunpack.c.l.b16 %v855
  %v1018 = vunpack.c.h.b16 %v855
  %v1019 = vunpack.c.l.b16 %v856
  %v1020 = vunpack.c.h.b16 %v856
  %v1021 = vunpack.c.l.b16 %v857
  %v1022 = vunpack.c.h.b16 %v857
  %v1023 = vunpack.c.l.b16 %v858
  %v1024 = vunpack.c.h.b16 %v858
  %v1025 = vunpack.c.l.b16 %v859
  %v1026 = vunpack.c.h.b16 %v859
  %v1027 = vunpack.c.l.b16 %v860
  %v1028 = vunpack.c.h.b16 %v860
  %v1029 = vunpack.c.l.b16 %v861
  %v1030 = vunpack.c.h.b16 %v861
  %v1031 = vunpack.c.l.b16 %v862
  %v1032 = vunpack.c.h.b16 %v862
  %v1033 = vunpack.c.l.b16 %v863
  %v1034 = vunpack.c.h.b16 %v863
  %v1035 = vunpack.c.l.b16 %v864
  %v1036 = vunpack.c.h.b16 %v864
  %v1037 = vunpack.c.l.b16 %v865
  %v1038 = vunpack.c.h.b16 %v865
  %v1039 = vunpack.c.l.b16 %v866
  %v1040 = vunpack.c.h.b16 %v866
  %v1041 = vunpack.c.l.b16 %v867
  %v1042 = vunpack.c.h.b16 %v867
  %v1043 = vunpack.c.l.b16 %v868
  %v1044 = vunpack.c.h.b16 %v868
  %v1045 = vpack.c.b16 %v955, %v949
  %v1046 = vpack.c.b16 %v956, %v950
  %v1047 = vpack.c.b16 %v957, %v951
  %v1048 = vpack.c.b16 %v958, %v952
  %v1049 = vpack.c.b16 %v959, %v953
  %v1050 = vpack.c.b16 %v960, %v954
  %v1051 = vpack.c.b16 %v967, %v961
  %v1052 = vpack.c.b16 %v968, %v962
  %v1053 = vpack.c.b16 %v969, %v963
  %v1054 = vpack.c.b16 %v970, %v964
  %v1055 = vpack.c.b16 %v971, %v965
  %v1056 = vpack.c.b16 %v972, %v966
  %v1057 = vpack.c.b16 %v979, %v973
  %v1058 = vpack.c.b16 %v980, %v974
  %v1059 = vpack.c.b16 %v981, %v975
  %v1060 = vpack.c.b16 %v982, %v976
  %v1061 = vpack.c.b16 %v983, %v977
  %v1062 = vpack.c.b16 %v984, %v978
  %v1063 = vpack.c.b16 %v991, %v985
  %v1064 = vpack.c.b16 %v992, %v986
  %v1065 = vpack.c.b16 %v993, %v987
  %v1066 = vpack.c.b16 %v994, %v988
  %v1067 = vpack.c.b16 %v995, %v989
  %v1068 = vpack.c.b16 %v996, %v990
  %v1069 = vpack.c.b16 %v1003, %v997
  %v1070 = vpack.c.b16 %v1004, %v998
  %v1071 = vpack.c.b16 %v1005, %v999
  %v1072 = vpack.c.b16 %v1006, %v1000
  %v1073 = vpack.c.b16 %v1007, %v1001
  %v1074 = vpack.c.b16 %v1008, %v1002
  %v1075 = vpack.c.b16 %v1015, %v1009
  %v1076 = vpack.c.b16 %v1016, %v1010
  %v1077 = vpack.c.b16 %v1017, %v1011
  %v1078 = vpack.c.b16 %v1018, %v1012
  %v1079 = vpack.c.b16 %v1019, %v1013
  %v1080 = vpack.c.b16 %v1020, %v1014
  %v1081 = vpack.c.b16 %v1027, %v1021
  %v1082 = vpack.c.b16 %v1028, %v1022
  %v1083 = vpack.c.b16 %v1029, %v1023
  %v1084 = vpack.c.b16 %v1030, %v1024
  %v1085 = vpack.c.b16 %v1031, %v1025
  %v1086 = vpack.c.b16 %v1032, %v1026
  %v1087 = vpack.c.b16 %v1039, %v1033
  %v1088 = vpack.c.b16 %v1040, %v1034
  %v1089 = vpack.c.b16 %v1041, %v1035
  %v1090 = vpack.c.b16 %v1042, %v1036
  %v1091 = vpack.c.b16 %v1043, %v1037
  %v1092 = vpack.c.b16 %v1044, %v1038
  %1141 = vmatprep.subr.bf16.mxu0 %v1046
  %1142 = vmatpush1.bf16.msra.mxu0 %v1045
  %1143 = vmatprep.subr.bf16.mxu0 %v1052
  %1144 = vmatpush1.bf16.msra.mxu0 %v1051
  %1145 = vmatprep.subr.bf16.mxu0 %v1058
  %1146 = vmatpush1.bf16.msra.mxu0 %v1057
  %1147 = vmatprep.subr.bf16.mxu0 %v1064
  %1148 = vmatpush1.bf16.msra.mxu0 %v1063
  %1149 = vmatprep.subr.bf16.mxu0 %v1070
  %1150 = vmatpush1.bf16.msra.mxu0 %v1069
  %1151 = vmatprep.subr.bf16.mxu0 %v1076
  %1152 = vmatpush1.bf16.msra.mxu0 %v1075
  %1153 = vmatprep.subr.bf16.mxu0 %v1082
  %1154 = vmatpush1.bf16.msra.mxu0 %v1081
  %1155 = vmatprep.subr.bf16.mxu0 %v1088
  %1156 = vmatpush1.bf16.msra.mxu0 %v1087
  %1157 = vmatprep.subr.bf16.mxu0 0
  %1158 = vmatpush1.bf16.msra.mxu0 0
  %1159 = vmatprep.subr.bf16.mxu0 0
  %1160 = vmatpush1.bf16.msra.mxu0 0
  %1161 = vmatprep.subr.bf16.mxu0 0
  %1162 = vmatpush1.bf16.msra.mxu0 0
  %1163 = vmatprep.subr.bf16.mxu0 0
  %1164 = vmatpush1.bf16.msra.mxu0 0
  %1165 = vmatprep.subr.bf16.mxu0 0
  %1166 = vmatpush1.bf16.msra.mxu0 0
  %1167 = vmatprep.subr.bf16.mxu0 0
  %1168 = vmatpush1.bf16.msra.mxu0 0
  %1169 = vmatprep.subr.bf16.mxu0 0
  %1170 = vmatpush1.bf16.msra.mxu0 0
  %1171 = vmatprep.subr.bf16.mxu0 0
  %1172 = vmatpush1.bf16.msra.mxu0 0
  %1173 = vmatprep.mubr.bf16.mxu0 0
  %1174 = vmatmul.mubr.bf16.gmra.mrb[0].mxu0 %v820
  %v1175 = vpop.f32.mrb[0].mxu0
  %v1176 = vadd.f32 %v874, %v1175
  %v1177 = vpop.f32.mrb[0].mxu0
  %v1178 = vadd.f32 %v878, %v1177
  %v1179 = vpop.f32.mrb[0].mxu0
  %v1180 = vadd.f32 %v874, %v1179
  %v1181 = vpop.f32.mrb[0].mxu0
  %v1182 = vadd.f32 %v878, %v1181
  %1183 = vdwg.mxu0
  %1184 = vmatprep.subr.bf16.mxu0 %v1048
  %1185 = vmatpush1.bf16.msra.mxu0 %v1047
  %1186 = vmatprep.subr.bf16.mxu0 %v1054
  %1187 = vmatpush1.bf16.msra.mxu0 %v1053
  %1188 = vmatprep.subr.bf16.mxu0 %v1060
  %1189 = vmatpush1.bf16.msra.mxu0 %v1059
  %1190 = vmatprep.subr.bf16.mxu0 %v1066
  %1191 = vmatpush1.bf16.msra.mxu0 %v1065
  %1192 = vmatprep.subr.bf16.mxu0 %v1072
  %1193 = vmatpush1.bf16.msra.mxu0 %v1071
  %1194 = vmatprep.subr.bf16.mxu0 %v1078
  %1195 = vmatpush1.bf16.msra.mxu0 %v1077
  %1196 = vmatprep.subr.bf16.mxu0 %v1084
  %1197 = vmatpush1.bf16.msra.mxu0 %v1083
  %1198 = vmatprep.subr.bf16.mxu0 %v1090
  %1199 = vmatpush1.bf16.msra.mxu0 %v1089
  %1200 = vmatprep.subr.bf16.mxu0 0
  %1201 = vmatpush1.bf16.msra.mxu0 0
  %1202 = vmatprep.subr.bf16.mxu0 0
  %1203 = vmatpush1.bf16.msra.mxu0 0
  %1204 = vmatprep.subr.bf16.mxu0 0
  %1205 = vmatpush1.bf16.msra.mxu0 0
  %1206 = vmatprep.subr.bf16.mxu0 0
  %1207 = vmatpush1.bf16.msra.mxu0 0
  %1208 = vmatprep.subr.bf16.mxu0 0
  %1209 = vmatpush1.bf16.msra.mxu0 0
  %1210 = vmatprep.subr.bf16.mxu0 0
  %1211 = vmatpush1.bf16.msra.mxu0 0
  %1212 = vmatprep.subr.bf16.mxu0 0
  %1213 = vmatpush1.bf16.msra.mxu0 0
  %1214 = vmatprep.subr.bf16.mxu0 0
  %1215 = vmatpush1.bf16.msra.mxu0 0
  %1216 = vmatprep.mubr.bf16.mxu0 0
  %1217 = vmatmul.mubr.bf16.gmra.mrb[0].mxu0 %v820
  %v1218 = vpop.f32.mrb[0].mxu0
  %v1219 = vadd.f32 %v882, %v1218
  %v1220 = vpop.f32.mrb[0].mxu0
  %v1221 = vadd.f32 %v886, %v1220
  %v1222 = vpop.f32.mrb[0].mxu0
  %v1223 = vadd.f32 %v882, %v1222
  %v1224 = vpop.f32.mrb[0].mxu0
  %v1225 = vadd.f32 %v886, %v1224
  %1226 = vdwg.mxu0
  %1227 = vmatprep.subr.bf16.mxu0 %v1050
  %1228 = vmatpush1.bf16.msra.mxu0 %v1049
  %1229 = vmatprep.subr.bf16.mxu0 %v1056
  %1230 = vmatpush1.bf16.msra.mxu0 %v1055
  %1231 = vmatprep.subr.bf16.mxu0 %v1062
  %1232 = vmatpush1.bf16.msra.mxu0 %v1061
  %1233 = vmatprep.subr.bf16.mxu0 %v1068
  %1234 = vmatpush1.bf16.msra.mxu0 %v1067
  %1235 = vmatprep.subr.bf16.mxu0 %v1074
  %1236 = vmatpush1.bf16.msra.mxu0 %v1073
  %1237 = vmatprep.subr.bf16.mxu0 %v1080
  %1238 = vmatpush1.bf16.msra.mxu0 %v1079
  %1239 = vmatprep.subr.bf16.mxu0 %v1086
  %1240 = vmatpush1.bf16.msra.mxu0 %v1085
  %1241 = vmatprep.subr.bf16.mxu0 %v1092
  %1242 = vmatpush1.bf16.msra.mxu0 %v1091
  %1243 = vmatprep.subr.bf16.mxu0 0
  %1244 = vmatpush1.bf16.msra.mxu0 0
  %1245 = vmatprep.subr.bf16.mxu0 0
  %1246 = vmatpush1.bf16.msra.mxu0 0
  %1247 = vmatprep.subr.bf16.mxu0 0
  %1248 = vmatpush1.bf16.msra.mxu0 0
  %1249 = vmatprep.subr.bf16.mxu0 0
  %1250 = vmatpush1.bf16.msra.mxu0 0
  %1251 = vmatprep.subr.bf16.mxu0 0
  %1252 = vmatpush1.bf16.msra.mxu0 0
  %1253 = vmatprep.subr.bf16.mxu0 0
  %1254 = vmatpush1.bf16.msra.mxu0 0
  %1255 = vmatprep.subr.bf16.mxu0 0
  %1256 = vmatpush1.bf16.msra.mxu0 0
  %1257 = vmatprep.subr.bf16.mxu0 0
  %1258 = vmatpush1.bf16.msra.mxu0 0
  %1259 = vmatprep.mubr.bf16.mxu0 0
  %1260 = vmatmul.mubr.bf16.gmra.mrb[0].mxu0 %v820
  %v1261 = vpop.f32.mrb[0].mxu0
  %v1262 = vadd.f32 %v890, %v1261
  %v1263 = vpop.f32.mrb[0].mxu0
  %v1264 = vadd.f32 %v894, %v1263
  %v1265 = vpop.f32.mrb[0].mxu0
  %v1266 = vadd.f32 %v890, %v1265
  %v1267 = vpop.f32.mrb[0].mxu0
  %v1268 = vadd.f32 %v894, %v1267
  %1269 = vdwg.mxu0
  %v1270 = vpack.c.bf16 %v1180, %v1176
  %v1271 = vpack.c.bf16 %v1182, %v1178
  %v1272 = vpack.c.bf16 %v1223, %v1219
  %v1273 = vpack.c.bf16 %v1225, %v1221
  %v1274 = vpack.c.bf16 %v1266, %v1262
  %v1275 = vpack.c.bf16 %v1268, %v1264
  %v1282 = vunpack.c.l.b16 %v1270
  %v1283 = vunpack.c.l.b16 %v1271
  %v1284 = vunpack.c.l.b16 %v1272
  %v1285 = vunpack.c.l.b16 %v1273
  %v1286 = vunpack.c.l.b16 %v1274
  %v1287 = vunpack.c.l.b16 %v1275
  %v1288 = vunpack.c.h.b16 %v1270
  %v1289 = vunpack.c.h.b16 %v1271
  %v1290 = vunpack.c.h.b16 %v1272
  %v1291 = vunpack.c.h.b16 %v1273
  %v1292 = vunpack.c.h.b16 %v1274
  %v1293 = vunpack.c.h.b16 %v1275
  %v1294 = vpack.c.b16 %v1283, %v1282
  %v1295 = vpack.c.b16 %v1285, %v1284
  %v1296 = vpack.c.b16 %v1287, %v1286
  %v1297 = vpack.c.b16 %v1289, %v1288
  %v1298 = vpack.c.b16 %v1291, %v1290
  %v1299 = vpack.c.b16 %v1293, %v1292
  %1306 = vst [vmem:[%s10] sm:$0xff] %v1294
  %1307 = vst [vmem:[%s10 + $0x8] sm:$0xff] %v1295
  %1308 = vst [vmem:[%s10 + $0x10] sm:$0xff] %v1296
  %1309 = vst [vmem:[%s10 + $0x18] sm:$0xff] %v1297
  %1310 = vst [vmem:[%s10 + $0x20] sm:$0xff] %v1298
  %1311 = vst [vmem:[%s10 + $0x28] sm:$0xff] %v1299
  // Predicated region
  $region42: #{encoder_forward.8} parent=0 // pred_check
    _
  $region43: #{encoder_forward.8} parent=0 // pred_check_branch
    %1313 = sbr.rel (0) target = $region45
  $region44: #{encoder_forward.8} parent=0 // pred_region
    _
  $region45: #{encoder_forward.8} parent=0 // pred_fallthru
    _
  // Predicated region
  $region46: #{encoder_forward.8} parent=0 // pred_check
    _
  $region47: #{encoder_forward.8} parent=0 // pred_check_branch
    %1315 = sbr.rel (0) target = $region49
  $region48: #{encoder_forward.8} parent=0 // pred_region
    _
  $region49: #{encoder_forward.8} parent=0 // pred_fallthru
    _

</llo_original>
